<compile_context>
chip_gen: v7x
topology: tpu7x:2x2x1
jax: 0.10.0
libtpu: 0.0.40
codegen_flags: <defaults>
</compile_context>

<pallas_src>
import jax
import jax.numpy as jnp
from jax.experimental import pallas as pl
from jax.experimental.pallas import tpu as pltpu

MXU_DTYPE = jnp.bfloat16            # matmul operand dtype (f32 accumulation everywhere)
ACT_DTYPE = jnp.bfloat16            # intermediate activation slab dtype
VMEM_LIMIT = 32 * 1024 * 1024       # well below v7x's 64 MiB physical VMEM, >> working set
TN_CAP = 512
TK_SINGLE_MAX = 2048                # single-K (no accumulator) path whenever Kp <= this
TK_CAP = 512                        # only used by the multi-K fallback


def _cdiv(a, b):
    return -(-a // b)


def _round_up(x, m):
    return ((x + m - 1) // m) * m


def _default_tm_cap():
    """Bigger M tiles on 128 MiB-VMEM chips (v5e/v6e); conservative 512 on v7x (64 MiB)."""
    try:
        info = pltpu.get_tpu_info()
        vmem = int(getattr(info, "vmem_capacity_bytes", 64 * 1024 * 1024))
        return 1024 if vmem >= 100 * 1024 * 1024 else 512
    except Exception:
        return 512


TM_CAP = _default_tm_cap()


def _pick_tile(dim, cap, unit):
    """largest multiple of `unit` that divides `dim` (a multiple of unit) and is <= cap."""
    q = dim // unit
    best = 1
    for d in range(1, cap // unit + 1):
        if q % d == 0:
            best = d
    return best * unit


def _m_tiling(m):
    """-> (Mp, tm).  tm is a multiple of 16 (bf16 sublane packing) and the M axis is split
       into >= 2 blocks whenever Mp >= 32 so the 'parallel' grid axis can shard across
       v7x's two TensorCores (harmless single extra grid step on v5e/v6e)."""
    m16 = _round_up(max(m, 16), 16)
    if m16 <= 16:
        return 16, 16
    nb = max(2, _cdiv(m16, TM_CAP))
    tm = min(_round_up(_cdiv(m16, nb), 16), TM_CAP)
    Mp = tm * _cdiv(m16, tm)
    return Mp, tm


# ----------------------------------------------------------------------------
# Pallas kernel: fused (act -> matmul -> bias [+ tanh head] [+ BN moments])
# ----------------------------------------------------------------------------
def _make_conv_kernel(*, act, with_mask, with_moments, multi_k):
    """Matmul with fused input activation, bias, optional tanh head and BN moments.
       multi_k=False: 2-D grid, single K tile, no accumulator scratch (fast path here).
       multi_k=True : 3-D grid with f32 VMEM accumulator (fallback, not hit at these sizes)."""

    def kernel(*refs):
        a_ref, w_ref, b_ref = refs[0], refs[1], refs[2]
        i = 3
        mask_ref = None
        if with_mask:
            mask_ref = refs[i]
            i += 1
        o_ref = refs[i]
        i += 1
        mom_ref = refs[i] if with_moments else None
        acc_ref = refs[-1] if multi_k else None

        def activated_a():
            a = a_ref[...]
            if act != "none":
                a32 = a.astype(jnp.float32)        # element-wise math in f32 (v5e-safe)
                if act == "lrelu":
                    a32 = jnp.where(a32 > 0, a32, 0.2 * a32)
                else:                              # "relu"
                    a32 = jnp.maximum(a32, 0.0)
                a = a32.astype(a_ref.dtype)
            return a

        def epilogue(acc):
            z = acc + b_ref[...]                                  # (tm, tn) f32
            if with_mask:                                          # fused tanh head
                z = jnp.where(mask_ref[...] > 0.0, jnp.tanh(z), z)
            o_ref[...] = z.astype(o_ref.dtype)
            if with_moments:                                       # fused BN statistics
                s1 = jnp.sum(z, axis=0, keepdims=True)             # (1, tn)
                s2 = jnp.sum(z * z, axis=0, keepdims=True)
                row = jax.lax.broadcasted_iota(jnp.int32, (8, z.shape[1]), 0)
                mom = jnp.where(row == 0, s1, jnp.where(row == 1, s2, 0.0))
                mom_ref[...] = mom[None, :, :]

        if not multi_k:
            epilogue(jnp.dot(activated_a(), w_ref[...],
                             preferred_element_type=jnp.float32))
        else:
            k = pl.program_id(2)

            @pl.when(k == 0)
            def _init():
                acc_ref[...] = jnp.zeros_like(acc_ref)

            acc_ref[...] += jnp.dot(activated_a(), w_ref[...],
                                    preferred_element_type=jnp.float32)

            @pl.when(k == pl.num_programs(2) - 1)
            def _finalize():
                epilogue(acc_ref[...])

    return kernel


# ----------------------------------------------------------------------------
# Pallas wrapper
# ----------------------------------------------------------------------------
def _conv_matmul(patches, w_slab, bias_row, *, act, tanh_mask=None,
                 want_moments=False, out_dtype=ACT_DTYPE):
    """patches: (M, K).  w_slab: (Kp, Np) MXU_DTYPE (K,N pre-padded to x128).
       bias_row / tanh_mask: (1, Np) f32.
       Returns (out (Mp, Np) out_dtype, moments (Mp//tm, 8, Np) f32 or None)."""
    M, K = patches.shape
    Kp, Np = w_slab.shape
    Mp, tm = _m_tiling(M)
    tn = _pick_tile(Np, TN_CAP, 128)

    a = patches
    if (Mp != M) or (Kp != K):
        a = jnp.pad(a, ((0, Mp - M), (0, Kp - K)))
    a = a.astype(MXU_DTYPE)

    multi_k = Kp > TK_SINGLE_MAX
    tk = _pick_tile(Kp, TK_CAP, 128) if multi_k else Kp

    with_mask = tanh_mask is not None
    kernel = _make_conv_kernel(act=act, with_mask=with_mask,
                               with_moments=want_moments, multi_k=multi_k)

    if not multi_k:
        grid = (Mp // tm, Np // tn)
        a_map = lambda m, n: (m, 0)
        w_map = lambda m, n: (0, n)
        r_map = lambda m, n: (0, n)
        o_map = lambda m, n: (m, n)
        mom_map = lambda m, n: (m, 0, n)
        dims = ("parallel", "parallel")
        scratch = []
    else:
        grid = (Mp // tm, Np // tn, Kp // tk)
        a_map = lambda m, n, k: (m, k)
        w_map = lambda m, n, k: (k, n)
        r_map = lambda m, n, k: (0, n)
        o_map = lambda m, n, k: (m, n)
        mom_map = lambda m, n, k: (m, 0, n)
        dims = ("parallel", "parallel", "arbitrary")
        scratch = [pltpu.VMEM((tm, tn), jnp.float32)]

    in_specs = [
        pl.BlockSpec((tm, tk), a_map),
        pl.BlockSpec((tk, tn), w_map),
        pl.BlockSpec((1, tn), r_map),
    ]
    inputs = [a, w_slab, bias_row]
    if with_mask:
        in_specs.append(pl.BlockSpec((1, tn), r_map))
        inputs.append(tanh_mask)

    if want_moments:
        out_shape = (jax.ShapeDtypeStruct((Mp, Np), out_dtype),
                     jax.ShapeDtypeStruct((Mp // tm, 8, Np), jnp.float32))
        out_specs = (pl.BlockSpec((tm, tn), o_map),
                     pl.BlockSpec((1, 8, tn), mom_map))
    else:
        out_shape = jax.ShapeDtypeStruct((Mp, Np), out_dtype)
        out_specs = pl.BlockSpec((tm, tn), o_map)

    itm = jnp.dtype(MXU_DTYPE).itemsize
    oitm = jnp.dtype(out_dtype).itemsize
    cost = pl.CostEstimate(
        flops=2 * Mp * Kp * Np,
        transcendentals=Mp * Np if with_mask else 0,
        bytes_accessed=Mp * Kp * itm + Kp * Np * itm + Mp * Np * oitm,
    )

    outs = pl.pallas_call(
        kernel,
        out_shape=out_shape,
        grid=grid,
        in_specs=in_specs,
        out_specs=out_specs,
        scratch_shapes=scratch,
        compiler_params=pltpu.CompilerParams(
            dimension_semantics=dims,
            vmem_limit_bytes=VMEM_LIMIT),
        cost_estimate=cost,
    )(*inputs)

    if want_moments:
        return outs[0], outs[1]
    return outs, None


# ----------------------------------------------------------------------------
# conv layers (XLA glue: patch extraction, BN affine, concat, pixel shuffle)
# ----------------------------------------------------------------------------
def _im2col(x_nhwc, k, stride, pad):
    """-> (N*Ho*Wo, k*k*C) patch matrix, feature order (kh, kw, c)."""
    x = jnp.pad(x_nhwc, ((0, 0), (pad, pad), (pad, pad), (0, 0)))
    N, H, W, C = x.shape
    Ho = (H - k) // stride + 1
    Wo = (W - k) // stride + 1
    cols = []
    for i in range(k):
        for j in range(k):
            cols.append(x[:, i:i + stride * Ho:stride, j:j + stride * Wo:stride, :])
    patches = jnp.stack(cols, axis=3)                      # (N, Ho, Wo, k*k, C)
    return patches.reshape(N * Ho * Wo, k * k * C), (N, Ho, Wo)


def _bn_scale_shift(sum_c, sumsq_c, count, gamma, beta, eps=1e-5):
    """Training-mode BatchNorm2d: biased batch variance, like an un-eval()'d module."""
    mean = sum_c / count
    var = jnp.maximum(sumsq_c / count - mean * mean, 0.0)
    inv = jax.lax.rsqrt(var + eps)
    scale = gamma * inv
    shift = beta - mean * scale
    return scale, shift


def conv_down(x_nhwc, layer, act):
    """nn.Conv2d(Cin, Cout, 4, 2, 1, bias=False)  [+ fused input act, fused BN stats]."""
    N = x_nhwc.shape[0]
    patches, (_, Ho, Wo) = _im2col(x_nhwc, 4, stride=2, pad=1)
    want_m = layer["bn"] is not None
    out, mom = _conv_matmul(patches, layer["w"], layer["b"], act=act,
                            want_moments=want_m, out_dtype=ACT_DTYPE)
    Cout = layer["cout"]
    M = N * Ho * Wo
    y = out[:M, :Cout]
    if want_m:
        gamma, beta = layer["bn"]
        s1 = jnp.sum(mom[:, 0, :Cout], axis=0)
        s2 = jnp.sum(mom[:, 1, :Cout], axis=0)
        scale, shift = _bn_scale_shift(s1, s2, float(M), gamma, beta)
        # BN affine applied inline: XLA fuses this element-wise op with the adjacent
        # slice / reshape / concat / im2col glue, so the slab is touched only once.
        y = (y.astype(jnp.float32) * scale[None] + shift[None]).astype(ACT_DTYPE)
    return y.reshape(N, Ho, Wo, Cout)


def conv_up(x_nhwc, layer, out_dtype=ACT_DTYPE):
    """nn.ConvTranspose2d(Cin, Cout, 4, 2, 1) via 4-phase decomposition.
       Input ReLU fused; tanh head / BN stats fused in the epilogue when requested."""
    N, H, W, _ = x_nhwc.shape
    patches, _ = _im2col(x_nhwc, 3, stride=1, pad=1)              # (N*H*W, 9*Cin)
    want_m = layer["bn"] is not None
    out, mom = _conv_matmul(patches, layer["w"], layer["b"], act="relu",
                            tanh_mask=layer["tanh_mask"],
                            want_moments=want_m, out_dtype=out_dtype)
    Cout = layer["cout"]
    M = N * H * W
    y = out[:M, :4 * Cout]
    if want_m:
        gamma, beta = layer["bn"]
        s1 = jnp.sum(mom[:, 0, :4 * Cout].reshape(-1, 4, Cout), axis=(0, 1))
        s2 = jnp.sum(mom[:, 1, :4 * Cout].reshape(-1, 4, Cout), axis=(0, 1))
        scale, shift = _bn_scale_shift(s1, s2, float(4 * M), gamma, beta)
        y = (y.astype(jnp.float32) * jnp.tile(scale, 4)[None]
             + jnp.tile(shift, 4)[None]).astype(out_dtype)
    y = y.reshape(N, H, W, 2, 2, Cout)
    y = jnp.transpose(y, (0, 1, 3, 2, 4, 5)).reshape(N, 2 * H, 2 * W, Cout)   # pixel shuffle
    return y


# ----------------------------------------------------------------------------
# parameter construction (weights pre-laid-out, pre-padded, MXU dtype)
# ----------------------------------------------------------------------------
def _norm_params(key, c):
    k1, k2 = jax.random.split(key)
    gamma = 1.0 + 0.02 * jax.random.normal(k1, (c,), jnp.float32)
    beta = 0.02 * jax.random.normal(k2, (c,), jnp.float32)
    return gamma, beta


def _tconv_phase_slab(w):
    """ConvTranspose2d weight (Cin, Cout, 4, 4) -> (9*Cin, 4*Cout) phase slab.
       K order (dh, dw, ci) over a 3x3 window of the 1-padded input; N order (ph, pw, co)
       where output pixel (2a+ph, 2b+pw) is produced by phase column block (ph, pw)."""
    cin, cout = w.shape[0], w.shape[1]
    tap_of = {0: {0: 3, 1: 1}, 1: {1: 2, 2: 0}}     # phase -> {window offset: kernel tap}
    slab = jnp.zeros((3, 3, cin, 2, 2, cout), jnp.float32)
    for ph in (0, 1):
        for pw in (0, 1):
            for dh, kh in tap_of[ph].items():
                for dw, kw in tap_of[pw].items():
                    slab = slab.at[dh, dw, :, ph, pw, :].set(w[:, :, kh, kw])
    return slab.reshape(9 * cin, 4 * cout)


def _make_down_layer(key, cin, cout, with_bn):
    kw, kg = jax.random.split(key)
    w = 0.05 * jax.random.normal(kw, (cout, cin, 4, 4), jnp.float32)        # OIHW
    slab = jnp.transpose(w, (2, 3, 1, 0)).reshape(16 * cin, cout)           # (K, Cout)
    Kp, Np = _round_up(16 * cin, 128), _round_up(cout, 128)
    slab = jnp.pad(slab, ((0, Kp - 16 * cin), (0, Np - cout))).astype(MXU_DTYPE)
    b_row = jnp.zeros((1, Np), jnp.float32)                                 # bias=False (BN)
    layer = {"w": slab, "b": b_row, "cout": cout, "bn": None, "tanh_mask": None}
    if with_bn:
        layer["bn"] = _norm_params(kg, cout)
    return layer


def _make_up_layer(key, cin, cout, with_bn, bias, tanh_head):
    # BN moments are computed from z after the bias add, so bias must be zero for BN layers.
    assert not (with_bn and bias), "BN layers must have bias=False (matches use_bias logic)"
    kw, kb, kg = jax.random.split(key, 3)
    w = 0.05 * jax.random.normal(kw, (cin, cout, 4, 4), jnp.float32)        # (Cin, Cout, kh, kw)
    slab = _tconv_phase_slab(w)
    K, Ncols = 9 * cin, 4 * cout
    Kp, Np = _round_up(K, 128), _round_up(Ncols, 128)
    slab = jnp.pad(slab, ((0, Kp - K), (0, Np - Ncols))).astype(MXU_DTYPE)
    b = (0.05 * jax.random.normal(kb, (cout,), jnp.float32) if bias
         else jnp.zeros((cout,), jnp.float32))
    b_row = jnp.pad(jnp.tile(b, 4), (0, Np - Ncols))[None]
    layer = {"w": slab, "b": b_row, "cout": cout, "bn": None, "tanh_mask": None}
    if with_bn:
        layer["bn"] = _norm_params(kg, cout)
    if tanh_head:
        # The reference forward is cat([tanh(out[:, :3]), out[:, 3:]], 1): tanh is applied
        # only to the first 3 output channels (per phase column block).
        c = jnp.arange(Np)
        layer["tanh_mask"] = ((c < Ncols) &
                              ((c % cout) < min(3, cout))).astype(jnp.float32)[None]
    return layer


def make_block(key, outer_nc, inner_nc, input_nc=None, submodule=None,
               outermost=False, innermost=False):
    if input_nc is None:
        input_nc = outer_nc
    kd, ku = jax.random.split(key)
    down_bn = (not outermost) and (not innermost)
    up_in = inner_nc if innermost else inner_nc * 2
    return {
        "outermost": outermost,
        "innermost": innermost,
        "sub": submodule,
        "down": _make_down_layer(kd, input_nc, inner_nc, with_bn=down_bn),
        "up": _make_up_layer(ku, up_in, outer_nc, with_bn=not outermost,
                             bias=outermost, tanh_head=outermost),
    }


def init_unet_generator(key, input_nc, output_nc, num_downs, ngf):
    keys = jax.random.split(key, num_downs + 1)
    ki = iter(range(num_downs + 1))
    blk = make_block(keys[next(ki)], ngf * 8, ngf * 8, innermost=True)
    for _ in range(num_downs - 5):
        blk = make_block(keys[next(ki)], ngf * 8, ngf * 8, submodule=blk)
    blk = make_block(keys[next(ki)], ngf * 4, ngf * 8, submodule=blk)
    blk = make_block(keys[next(ki)], ngf * 2, ngf * 4, submodule=blk)
    blk = make_block(keys[next(ki)], ngf, ngf * 2, submodule=blk)
    blk = make_block(keys[next(ki)], output_nc, ngf, input_nc=input_nc,
                     submodule=blk, outermost=True)
    return blk


# ----------------------------------------------------------------------------
# forward pass (mirrors UnetSkipConnectionBlock / UnetGenerator)
# ----------------------------------------------------------------------------
def run_block(p, x_nhwc):
    down_act = "none" if p["outermost"] else "lrelu"            # LeakyReLU(0.2) fused
    h = conv_down(x_nhwc, p["down"], down_act)                  # conv (+ inline BN)
    mid = h if p["innermost"] else run_block(p["sub"], h)
    u = conv_up(mid, p["up"],
                out_dtype=jnp.float32 if p["outermost"] else ACT_DTYPE)
    if p["outermost"]:
        return u                                                # tanh head fused in upconv
    return jnp.concatenate([x_nhwc, u], axis=-1)                # torch.cat([x, model(x)], 1)


def unet_generator_forward(params, x_nchw):
    x = jnp.transpose(x_nchw, (0, 2, 3, 1)).astype(jnp.float32)   # NCHW -> NHWC
    out = run_block(params, x)
    return jnp.transpose(out, (0, 3, 1, 2))                       # NHWC -> NCHW, f32


# ----------------------------------------------------------------------------
if __name__ == "__main__":
    # num_downs=5 -> 32x32 input becomes 1x1 at the bottleneck.
    INPUT_NC, OUTPUT_NC, NUM_DOWNS, NGF = 4, 4, 5, 8
    B, H, W = 2, 32, 32

    key = jax.random.PRNGKey(0)
    kparam, kdata = jax.random.split(key)
    params = init_unet_generator(kparam, INPUT_NC, OUTPUT_NC, NUM_DOWNS, NGF)
    x = jax.random.normal(kdata, (B, INPUT_NC, H, W), jnp.float32)

    fwd = jax.jit(lambda inp: unet_generator_forward(params, inp))
    out = jax.block_until_ready(fwd(x))
    assert out.shape == (B, OUTPUT_NC, H, W), out.shape
    assert bool(jnp.all(jnp.isfinite(out)))
    print("KERNEL_OK")
</pallas_src>

<mosaic_0001>
module attributes {stable_mosaic.version = 11 : i64} {
  func.func @kernel(%arg0: i32, %arg1: i32, %arg2: memref<256x128xbf16, #tpu.memory_space<vmem>>, %arg3: memref<128x128xbf16, #tpu.memory_space<vmem>>, %arg4: memref<1x128xf32, #tpu.memory_space<vmem>>, %arg5: memref<256x128xbf16, #tpu.memory_space<vmem>>) attributes {dimension_semantics = [#tpu.dimension_semantics<parallel>, #tpu.dimension_semantics<parallel>], iteration_bounds = array<i64: 2, 1>, scalar_prefetch = 0 : i64, scratch_operands = 0 : i64, tpu.core_type = #tpu.core_type<tc>, window_params = [{transform_indices = @transform_0, window_bounds = array<i64: 256, 128>}, {transform_indices = @transform_1, window_bounds = array<i64: 128, 128>}, {transform_indices = @transform_2, window_bounds = array<i64: 1, 128>}, {transform_indices = @transform_3, window_bounds = array<i64: 256, 128>}]} {
    %c0 = arith.constant 0 : index
    %c0_0 = arith.constant 0 : index
    %0 = vector.load %arg2[%c0, %c0_0] : memref<256x128xbf16, #tpu.memory_space<vmem>>, vector<256x128xbf16>
    %c0_1 = arith.constant 0 : index
    %c0_2 = arith.constant 0 : index
    %1 = vector.load %arg3[%c0_1, %c0_2] : memref<128x128xbf16, #tpu.memory_space<vmem>>, vector<128x128xbf16>
    %cst = arith.constant dense<0.000000e+00> : vector<256x128xf32>
    %2 = tpu.matmul %0, %1, %cst {dimension_numbers = #tpu.dot_dimension_numbers<[1], [0], [0], [1], [0, 0, 1, 1], [], []>} : vector<256x128xbf16>, vector<128x128xbf16>, vector<256x128xf32> -> vector<256x128xf32>
    %c0_3 = arith.constant 0 : index
    %c0_4 = arith.constant 0 : index
    %3 = vector.load %arg4[%c0_3, %c0_4] : memref<1x128xf32, #tpu.memory_space<vmem>>, vector<1x128xf32>
    %4 = vector.broadcast %3 : vector<1x128xf32> to vector<256x128xf32>
    %5 = arith.addf %2, %4 : vector<256x128xf32>
    %6 = arith.truncf %5 : vector<256x128xf32> to vector<256x128xbf16>
    %c0_5 = arith.constant 0 : index
    %c0_6 = arith.constant 0 : index
    %7 = vector.load %arg5[%c0_5, %c0_6] : memref<256x128xbf16, #tpu.memory_space<vmem>>, vector<256x128xbf16>
    tpu.vector_store %arg5[%c0_5, %c0_6], %6 {strides = array<i32>} : memref<256x128xbf16, #tpu.memory_space<vmem>>, vector<256x128xbf16>,
    return
  }
  func.func @transform_0(%arg0: i32, %arg1: i32) -> (i32, i32) {
    %c0_i32 = arith.constant 0 : i32
    %c0_i32_0 = arith.constant 0 : i32
    return %arg0, %c0_i32 : i32, i32
  }
  func.func @transform_1(%arg0: i32, %arg1: i32) -> (i32, i32) {
    %c0_i32 = arith.constant 0 : i32
    %c0_i32_0 = arith.constant 0 : i32
    return %c0_i32, %arg1 : i32, i32
  }
  func.func @transform_2(%arg0: i32, %arg1: i32) -> (i32, i32) {
    %c0_i32 = arith.constant 0 : i32
    %c0_i32_0 = arith.constant 0 : i32
    return %c0_i32, %arg1 : i32, i32
  }
  func.func @transform_3(%arg0: i32, %arg1: i32) -> (i32, i32) {
    %c0_i32 = arith.constant 0 : i32
    return %arg0, %arg1 : i32, i32
  }
}

module attributes {stable_mosaic.version = 11 : i64} {
  func.func @kernel(%arg0: i32, %arg1: i32, %arg2: memref<64x128xbf16, #tpu.memory_space<vmem>>, %arg3: memref<128x128xbf16, #tpu.memory_space<vmem>>, %arg4: memref<1x128xf32, #tpu.memory_space<vmem>>, %arg5: memref<64x128xbf16, #tpu.memory_space<vmem>>, %arg6: memref<1x8x128xf32, #tpu.memory_space<vmem>>) attributes {dimension_semantics = [#tpu.dimension_semantics<parallel>, #tpu.dimension_semantics<parallel>], iteration_bounds = array<i64: 2, 1>, scalar_prefetch = 0 : i64, scratch_operands = 0 : i64, tpu.core_type = #tpu.core_type<tc>, window_params = [{transform_indices = @transform_0, window_bounds = array<i64: 64, 128>}, {transform_indices = @transform_1, window_bounds = array<i64: 128, 128>}, {transform_indices = @transform_2, window_bounds = array<i64: 1, 128>}, {transform_indices = @transform_3, window_bounds = array<i64: 64, 128>}, {transform_indices = @transform_4, window_bounds = array<i64: 1, 8, 128>}]} {
    %c0 = arith.constant 0 : index
    %c0_0 = arith.constant 0 : index
    %0 = vector.load %arg2[%c0, %c0_0] : memref<64x128xbf16, #tpu.memory_space<vmem>>, vector<64x128xbf16>
    %1 = arith.extf %0 : vector<64x128xbf16> to vector<64x128xf32>
    %cst = arith.constant 0.000000e+00 : f32
    %2 = vector.broadcast %cst : f32 to vector<64x128xf32>
    %3 = arith.cmpf ogt, %1, %2 : vector<64x128xf32>
    %cst_1 = arith.constant 2.000000e-01 : f32
    %4 = vector.broadcast %cst_1 : f32 to vector<64x128xf32>
    %5 = arith.mulf %4, %1 : vector<64x128xf32>
    %6 = arith.select %3, %1, %5 : vector<64x128xi1>, vector<64x128xf32>
    %7 = arith.truncf %6 : vector<64x128xf32> to vector<64x128xbf16>
    %c0_2 = arith.constant 0 : index
    %c0_3 = arith.constant 0 : index
    %8 = vector.load %arg3[%c0_2, %c0_3] : memref<128x128xbf16, #tpu.memory_space<vmem>>, vector<128x128xbf16>
    %cst_4 = arith.constant dense<0.000000e+00> : vector<64x128xf32>
    %9 = tpu.matmul %7, %8, %cst_4 {dimension_numbers = #tpu.dot_dimension_numbers<[1], [0], [0], [1], [0, 0, 1, 1], [], []>} : vector<64x128xbf16>, vector<128x128xbf16>, vector<64x128xf32> -> vector<64x128xf32>
    %c0_5 = arith.constant 0 : index
    %c0_6 = arith.constant 0 : index
    %10 = vector.load %arg4[%c0_5, %c0_6] : memref<1x128xf32, #tpu.memory_space<vmem>>, vector<1x128xf32>
    %11 = vector.broadcast %10 : vector<1x128xf32> to vector<64x128xf32>
    %12 = arith.addf %9, %11 : vector<64x128xf32>
    %13 = arith.truncf %12 : vector<64x128xf32> to vector<64x128xbf16>
    %c0_7 = arith.constant 0 : index
    %c0_8 = arith.constant 0 : index
    %14 = vector.load %arg5[%c0_7, %c0_8] : memref<64x128xbf16, #tpu.memory_space<vmem>>, vector<64x128xbf16>
    tpu.vector_store %arg5[%c0_7, %c0_8], %13 {strides = array<i32>} : memref<64x128xbf16, #tpu.memory_space<vmem>>, vector<64x128xbf16>,
    %cst_9 = arith.constant dense<0.000000e+00> : vector<128xf32>
    %15 = vector.multi_reduction <add>, %12, %cst_9 [0] : vector<64x128xf32> to vector<128xf32>
    %16 = vector.shape_cast %15 : vector<128xf32> to vector<1x128xf32>
    %17 = arith.mulf %12, %12 : vector<64x128xf32>
    %cst_10 = arith.constant dense<0.000000e+00> : vector<128xf32>
    %18 = vector.multi_reduction <add>, %17, %cst_10 [0] : vector<64x128xf32> to vector<128xf32>
    %19 = vector.shape_cast %18 : vector<128xf32> to vector<1x128xf32>
    %20 = tpu.iota {dimensions = array<i32: 0>} : vector<8x128xi32>
    %c0_i32 = arith.constant 0 : i32
    %21 = vector.broadcast %c0_i32 : i32 to vector<8x128xi32>
    %22 = arith.cmpi eq, %20, %21 : vector<8x128xi32>
    %c1_i32 = arith.constant 1 : i32
    %23 = vector.broadcast %c1_i32 : i32 to vector<8x128xi32>
    %24 = arith.cmpi eq, %20, %23 : vector<8x128xi32>
    %cst_11 = arith.constant 0.000000e+00 : f32
    %25 = vector.shape_cast %19 : vector<1x128xf32> to vector<1x128xf32>
    %26 = vector.broadcast %25 : vector<1x128xf32> to vector<8x128xf32>
    %27 = vector.broadcast %cst_11 : f32 to vector<8x128xf32>
    %28 = arith.select %24, %26, %27 : vector<8x128xi1>, vector<8x128xf32>
    %29 = vector.shape_cast %16 : vector<1x128xf32> to vector<1x128xf32>
    %30 = vector.broadcast %29 : vector<1x128xf32> to vector<8x128xf32>
    %31 = arith.select %22, %30, %28 : vector<8x128xi1>, vector<8x128xf32>
    %32 = vector.shape_cast %31 : vector<8x128xf32> to vector<1x8x128xf32>
    %c0_12 = arith.constant 0 : index
    %c0_13 = arith.constant 0 : index
    %c0_14 = arith.constant 0 : index
    %33 = vector.load %arg6[%c0_12, %c0_13, %c0_14] : memref<1x8x128xf32, #tpu.memory_space<vmem>>, vector<1x8x128xf32>
    tpu.vector_store %arg6[%c0_12, %c0_13, %c0_14], %32 {strides = array<i32>} : memref<1x8x128xf32, #tpu.memory_space<vmem>>, vector<1x8x128xf32>,
    return
  }
  func.func @transform_0(%arg0: i32, %arg1: i32) -> (i32, i32) {
    %c0_i32 = arith.constant 0 : i32
    %c0_i32_0 = arith.constant 0 : i32
    return %arg0, %c0_i32 : i32, i32
  }
  func.func @transform_1(%arg0: i32, %arg1: i32) -> (i32, i32) {
    %c0_i32 = arith.constant 0 : i32
    %c0_i32_0 = arith.constant 0 : i32
    return %c0_i32, %arg1 : i32, i32
  }
  func.func @transform_2(%arg0: i32, %arg1: i32) -> (i32, i32) {
    %c0_i32 = arith.constant 0 : i32
    %c0_i32_0 = arith.constant 0 : i32
    return %c0_i32, %arg1 : i32, i32
  }
  func.func @transform_3(%arg0: i32, %arg1: i32) -> (i32, i32) {
    %c0_i32 = arith.constant 0 : i32
    return %arg0, %arg1 : i32, i32
  }
  func.func @transform_4(%arg0: i32, %arg1: i32) -> (i32, i32, i32) {
    %c0_i32 = arith.constant 0 : i32
    %c0_i32_0 = arith.constant 0 : i32
    return %arg0, %c0_i32, %arg1 : i32, i32, i32
  }
}

module attributes {stable_mosaic.version = 11 : i64} {
  func.func @kernel(%arg0: i32, %arg1: i32, %arg2: memref<16x256xbf16, #tpu.memory_space<vmem>>, %arg3: memref<256x128xbf16, #tpu.memory_space<vmem>>, %arg4: memref<1x128xf32, #tpu.memory_space<vmem>>, %arg5: memref<16x128xbf16, #tpu.memory_space<vmem>>, %arg6: memref<1x8x128xf32, #tpu.memory_space<vmem>>) attributes {dimension_semantics = [#tpu.dimension_semantics<parallel>, #tpu.dimension_semantics<parallel>], iteration_bounds = array<i64: 2, 1>, scalar_prefetch = 0 : i64, scratch_operands = 0 : i64, tpu.core_type = #tpu.core_type<tc>, window_params = [{transform_indices = @transform_0, window_bounds = array<i64: 16, 256>}, {transform_indices = @transform_1, window_bounds = array<i64: 256, 128>}, {transform_indices = @transform_2, window_bounds = array<i64: 1, 128>}, {transform_indices = @transform_3, window_bounds = array<i64: 16, 128>}, {transform_indices = @transform_4, window_bounds = array<i64: 1, 8, 128>}]} {
    %c0 = arith.constant 0 : index
    %c0_0 = arith.constant 0 : index
    %0 = vector.load %arg2[%c0, %c0_0] : memref<16x256xbf16, #tpu.memory_space<vmem>>, vector<16x256xbf16>
    %1 = arith.extf %0 : vector<16x256xbf16> to vector<16x256xf32>
    %cst = arith.constant 0.000000e+00 : f32
    %2 = vector.broadcast %cst : f32 to vector<16x256xf32>
    %3 = arith.cmpf ogt, %1, %2 : vector<16x256xf32>
    %cst_1 = arith.constant 2.000000e-01 : f32
    %4 = vector.broadcast %cst_1 : f32 to vector<16x256xf32>
    %5 = arith.mulf %4, %1 : vector<16x256xf32>
    %6 = arith.select %3, %1, %5 : vector<16x256xi1>, vector<16x256xf32>
    %7 = arith.truncf %6 : vector<16x256xf32> to vector<16x256xbf16>
    %c0_2 = arith.constant 0 : index
    %c0_3 = arith.constant 0 : index
    %8 = vector.load %arg3[%c0_2, %c0_3] : memref<256x128xbf16, #tpu.memory_space<vmem>>, vector<256x128xbf16>
    %cst_4 = arith.constant dense<0.000000e+00> : vector<16x128xf32>
    %9 = tpu.matmul %7, %8, %cst_4 {dimension_numbers = #tpu.dot_dimension_numbers<[1], [0], [0], [1], [0, 0, 1, 1], [], []>} : vector<16x256xbf16>, vector<256x128xbf16>, vector<16x128xf32> -> vector<16x128xf32>
    %c0_5 = arith.constant 0 : index
    %c0_6 = arith.constant 0 : index
    %10 = vector.load %arg4[%c0_5, %c0_6] : memref<1x128xf32, #tpu.memory_space<vmem>>, vector<1x128xf32>
    %11 = vector.broadcast %10 : vector<1x128xf32> to vector<16x128xf32>
    %12 = arith.addf %9, %11 : vector<16x128xf32>
    %13 = arith.truncf %12 : vector<16x128xf32> to vector<16x128xbf16>
    %c0_7 = arith.constant 0 : index
    %c0_8 = arith.constant 0 : index
    %14 = vector.load %arg5[%c0_7, %c0_8] : memref<16x128xbf16, #tpu.memory_space<vmem>>, vector<16x128xbf16>
    tpu.vector_store %arg5[%c0_7, %c0_8], %13 {strides = array<i32>} : memref<16x128xbf16, #tpu.memory_space<vmem>>, vector<16x128xbf16>,
    %cst_9 = arith.constant dense<0.000000e+00> : vector<128xf32>
    %15 = vector.multi_reduction <add>, %12, %cst_9 [0] : vector<16x128xf32> to vector<128xf32>
    %16 = vector.shape_cast %15 : vector<128xf32> to vector<1x128xf32>
    %17 = arith.mulf %12, %12 : vector<16x128xf32>
    %cst_10 = arith.constant dense<0.000000e+00> : vector<128xf32>
    %18 = vector.multi_reduction <add>, %17, %cst_10 [0] : vector<16x128xf32> to vector<128xf32>
    %19 = vector.shape_cast %18 : vector<128xf32> to vector<1x128xf32>
    %20 = tpu.iota {dimensions = array<i32: 0>} : vector<8x128xi32>
    %c0_i32 = arith.constant 0 : i32
    %21 = vector.broadcast %c0_i32 : i32 to vector<8x128xi32>
    %22 = arith.cmpi eq, %20, %21 : vector<8x128xi32>
    %c1_i32 = arith.constant 1 : i32
    %23 = vector.broadcast %c1_i32 : i32 to vector<8x128xi32>
    %24 = arith.cmpi eq, %20, %23 : vector<8x128xi32>
    %cst_11 = arith.constant 0.000000e+00 : f32
    %25 = vector.shape_cast %19 : vector<1x128xf32> to vector<1x128xf32>
    %26 = vector.broadcast %25 : vector<1x128xf32> to vector<8x128xf32>
    %27 = vector.broadcast %cst_11 : f32 to vector<8x128xf32>
    %28 = arith.select %24, %26, %27 : vector<8x128xi1>, vector<8x128xf32>
    %29 = vector.shape_cast %16 : vector<1x128xf32> to vector<1x128xf32>
    %30 = vector.broadcast %29 : vector<1x128xf32> to vector<8x128xf32>
    %31 = arith.select %22, %30, %28 : vector<8x128xi1>, vector<8x128xf32>
    %32 = vector.shape_cast %31 : vector<8x128xf32> to vector<1x8x128xf32>
    %c0_12 = arith.constant 0 : index
    %c0_13 = arith.constant 0 : index
    %c0_14 = arith.constant 0 : index
    %33 = vector.load %arg6[%c0_12, %c0_13, %c0_14] : memref<1x8x128xf32, #tpu.memory_space<vmem>>, vector<1x8x128xf32>
    tpu.vector_store %arg6[%c0_12, %c0_13, %c0_14], %32 {strides = array<i32>} : memref<1x8x128xf32, #tpu.memory_space<vmem>>, vector<1x8x128xf32>,
    return
  }
  func.func @transform_0(%arg0: i32, %arg1: i32) -> (i32, i32) {
    %c0_i32 = arith.constant 0 : i32
    %c0_i32_0 = arith.constant 0 : i32
    return %arg0, %c0_i32 : i32, i32
  }
  func.func @transform_1(%arg0: i32, %arg1: i32) -> (i32, i32) {
    %c0_i32 = arith.constant 0 : i32
    %c0_i32_0 = arith.constant 0 : i32
    return %c0_i32, %arg1 : i32, i32
  }
  func.func @transform_2(%arg0: i32, %arg1: i32) -> (i32, i32) {
    %c0_i32 = arith.constant 0 : i32
    %c0_i32_0 = arith.constant 0 : i32
    return %c0_i32, %arg1 : i32, i32
  }
  func.func @transform_3(%arg0: i32, %arg1: i32) -> (i32, i32) {
    %c0_i32 = arith.constant 0 : i32
    return %arg0, %arg1 : i32, i32
  }
  func.func @transform_4(%arg0: i32, %arg1: i32) -> (i32, i32, i32) {
    %c0_i32 = arith.constant 0 : i32
    %c0_i32_0 = arith.constant 0 : i32
    return %arg0, %c0_i32, %arg1 : i32, i32, i32
  }
}

module attributes {stable_mosaic.version = 11 : i64} {
  func.func @kernel(%arg0: i32, %arg1: i32, %arg2: memref<16x512xbf16, #tpu.memory_space<vmem>>, %arg3: memref<512x128xbf16, #tpu.memory_space<vmem>>, %arg4: memref<1x128xf32, #tpu.memory_space<vmem>>, %arg5: memref<16x128xbf16, #tpu.memory_space<vmem>>, %arg6: memref<1x8x128xf32, #tpu.memory_space<vmem>>) attributes {dimension_semantics = [#tpu.dimension_semantics<parallel>, #tpu.dimension_semantics<parallel>], iteration_bounds = array<i64: 1, 1>, scalar_prefetch = 0 : i64, scratch_operands = 0 : i64, tpu.core_type = #tpu.core_type<tc>, window_params = [{transform_indices = @transform_0, window_bounds = array<i64: 16, 512>}, {transform_indices = @transform_1, window_bounds = array<i64: 512, 128>}, {transform_indices = @transform_2, window_bounds = array<i64: 1, 128>}, {transform_indices = @transform_3, window_bounds = array<i64: 16, 128>}, {transform_indices = @transform_4, window_bounds = array<i64: 1, 8, 128>}]} {
    %c0 = arith.constant 0 : index
    %c0_0 = arith.constant 0 : index
    %0 = vector.load %arg2[%c0, %c0_0] : memref<16x512xbf16, #tpu.memory_space<vmem>>, vector<16x512xbf16>
    %1 = arith.extf %0 : vector<16x512xbf16> to vector<16x512xf32>
    %cst = arith.constant 0.000000e+00 : f32
    %2 = vector.broadcast %cst : f32 to vector<16x512xf32>
    %3 = arith.cmpf ogt, %1, %2 : vector<16x512xf32>
    %cst_1 = arith.constant 2.000000e-01 : f32
    %4 = vector.broadcast %cst_1 : f32 to vector<16x512xf32>
    %5 = arith.mulf %4, %1 : vector<16x512xf32>
    %6 = arith.select %3, %1, %5 : vector<16x512xi1>, vector<16x512xf32>
    %7 = arith.truncf %6 : vector<16x512xf32> to vector<16x512xbf16>
    %c0_2 = arith.constant 0 : index
    %c0_3 = arith.constant 0 : index
    %8 = vector.load %arg3[%c0_2, %c0_3] : memref<512x128xbf16, #tpu.memory_space<vmem>>, vector<512x128xbf16>
    %cst_4 = arith.constant dense<0.000000e+00> : vector<16x128xf32>
    %9 = tpu.matmul %7, %8, %cst_4 {dimension_numbers = #tpu.dot_dimension_numbers<[1], [0], [0], [1], [0, 0, 1, 1], [], []>} : vector<16x512xbf16>, vector<512x128xbf16>, vector<16x128xf32> -> vector<16x128xf32>
    %c0_5 = arith.constant 0 : index
    %c0_6 = arith.constant 0 : index
    %10 = vector.load %arg4[%c0_5, %c0_6] : memref<1x128xf32, #tpu.memory_space<vmem>>, vector<1x128xf32>
    %11 = vector.broadcast %10 : vector<1x128xf32> to vector<16x128xf32>
    %12 = arith.addf %9, %11 : vector<16x128xf32>
    %13 = arith.truncf %12 : vector<16x128xf32> to vector<16x128xbf16>
    %c0_7 = arith.constant 0 : index
    %c0_8 = arith.constant 0 : index
    %14 = vector.load %arg5[%c0_7, %c0_8] : memref<16x128xbf16, #tpu.memory_space<vmem>>, vector<16x128xbf16>
    tpu.vector_store %arg5[%c0_7, %c0_8], %13 {strides = array<i32>} : memref<16x128xbf16, #tpu.memory_space<vmem>>, vector<16x128xbf16>,
    %cst_9 = arith.constant dense<0.000000e+00> : vector<128xf32>
    %15 = vector.multi_reduction <add>, %12, %cst_9 [0] : vector<16x128xf32> to vector<128xf32>
    %16 = vector.shape_cast %15 : vector<128xf32> to vector<1x128xf32>
    %17 = arith.mulf %12, %12 : vector<16x128xf32>
    %cst_10 = arith.constant dense<0.000000e+00> : vector<128xf32>
    %18 = vector.multi_reduction <add>, %17, %cst_10 [0] : vector<16x128xf32> to vector<128xf32>
    %19 = vector.shape_cast %18 : vector<128xf32> to vector<1x128xf32>
    %20 = tpu.iota {dimensions = array<i32: 0>} : vector<8x128xi32>
    %c0_i32 = arith.constant 0 : i32
    %21 = vector.broadcast %c0_i32 : i32 to vector<8x128xi32>
    %22 = arith.cmpi eq, %20, %21 : vector<8x128xi32>
    %c1_i32 = arith.constant 1 : i32
    %23 = vector.broadcast %c1_i32 : i32 to vector<8x128xi32>
    %24 = arith.cmpi eq, %20, %23 : vector<8x128xi32>
    %cst_11 = arith.constant 0.000000e+00 : f32
    %25 = vector.shape_cast %19 : vector<1x128xf32> to vector<1x128xf32>
    %26 = vector.broadcast %25 : vector<1x128xf32> to vector<8x128xf32>
    %27 = vector.broadcast %cst_11 : f32 to vector<8x128xf32>
    %28 = arith.select %24, %26, %27 : vector<8x128xi1>, vector<8x128xf32>
    %29 = vector.shape_cast %16 : vector<1x128xf32> to vector<1x128xf32>
    %30 = vector.broadcast %29 : vector<1x128xf32> to vector<8x128xf32>
    %31 = arith.select %22, %30, %28 : vector<8x128xi1>, vector<8x128xf32>
    %32 = vector.shape_cast %31 : vector<8x128xf32> to vector<1x8x128xf32>
    %c0_12 = arith.constant 0 : index
    %c0_13 = arith.constant 0 : index
    %c0_14 = arith.constant 0 : index
    %33 = vector.load %arg6[%c0_12, %c0_13, %c0_14] : memref<1x8x128xf32, #tpu.memory_space<vmem>>, vector<1x8x128xf32>
    tpu.vector_store %arg6[%c0_12, %c0_13, %c0_14], %32 {strides = array<i32>} : memref<1x8x128xf32, #tpu.memory_space<vmem>>, vector<1x8x128xf32>,
    return
  }
  func.func @transform_0(%arg0: i32, %arg1: i32) -> (i32, i32) {
    %c0_i32 = arith.constant 0 : i32
    %c0_i32_0 = arith.constant 0 : i32
    return %arg0, %c0_i32 : i32, i32
  }
  func.func @transform_1(%arg0: i32, %arg1: i32) -> (i32, i32) {
    %c0_i32 = arith.constant 0 : i32
    %c0_i32_0 = arith.constant 0 : i32
    return %c0_i32, %arg1 : i32, i32
  }
  func.func @transform_2(%arg0: i32, %arg1: i32) -> (i32, i32) {
    %c0_i32 = arith.constant 0 : i32
    %c0_i32_0 = arith.constant 0 : i32
    return %c0_i32, %arg1 : i32, i32
  }
  func.func @transform_3(%arg0: i32, %arg1: i32) -> (i32, i32) {
    %c0_i32 = arith.constant 0 : i32
    return %arg0, %arg1 : i32, i32
  }
  func.func @transform_4(%arg0: i32, %arg1: i32) -> (i32, i32, i32) {
    %c0_i32 = arith.constant 0 : i32
    %c0_i32_0 = arith.constant 0 : i32
    return %arg0, %c0_i32, %arg1 : i32, i32, i32
  }
}

module attributes {stable_mosaic.version = 11 : i64} {
  func.func @kernel(%arg0: i32, %arg1: i32, %arg2: memref<16x640xbf16, #tpu.memory_space<vmem>>, %arg3: memref<640x256xbf16, #tpu.memory_space<vmem>>, %arg4: memref<1x256xf32, #tpu.memory_space<vmem>>, %arg5: memref<16x256xbf16, #tpu.memory_space<vmem>>, %arg6: memref<1x8x256xf32, #tpu.memory_space<vmem>>) attributes {dimension_semantics = [#tpu.dimension_semantics<parallel>, #tpu.dimension_semantics<parallel>], iteration_bounds = array<i64: 1, 1>, scalar_prefetch = 0 : i64, scratch_operands = 0 : i64, tpu.core_type = #tpu.core_type<tc>, window_params = [{transform_indices = @transform_0, window_bounds = array<i64: 16, 640>}, {transform_indices = @transform_1, window_bounds = array<i64: 640, 256>}, {transform_indices = @transform_2, window_bounds = array<i64: 1, 256>}, {transform_indices = @transform_3, window_bounds = array<i64: 16, 256>}, {transform_indices = @transform_4, window_bounds = array<i64: 1, 8, 256>}]} {
    %c0 = arith.constant 0 : index
    %c0_0 = arith.constant 0 : index
    %0 = vector.load %arg2[%c0, %c0_0] : memref<16x640xbf16, #tpu.memory_space<vmem>>, vector<16x640xbf16>
    %1 = arith.extf %0 : vector<16x640xbf16> to vector<16x640xf32>
    %cst = arith.constant 0.000000e+00 : f32
    %2 = vector.broadcast %cst : f32 to vector<16x640xf32>
    %3 = arith.maximumf %1, %2 : vector<16x640xf32>
    %4 = arith.truncf %3 : vector<16x640xf32> to vector<16x640xbf16>
    %c0_1 = arith.constant 0 : index
    %c0_2 = arith.constant 0 : index
    %5 = vector.load %arg3[%c0_1, %c0_2] : memref<640x256xbf16, #tpu.memory_space<vmem>>, vector<640x256xbf16>
    %cst_3 = arith.constant dense<0.000000e+00> : vector<16x256xf32>
    %6 = tpu.matmul %4, %5, %cst_3 {dimension_numbers = #tpu.dot_dimension_numbers<[1], [0], [0], [1], [0, 0, 1, 1], [], []>} : vector<16x640xbf16>, vector<640x256xbf16>, vector<16x256xf32> -> vector<16x256xf32>
    %c0_4 = arith.constant 0 : index
    %c0_5 = arith.constant 0 : index
    %7 = vector.load %arg4[%c0_4, %c0_5] : memref<1x256xf32, #tpu.memory_space<vmem>>, vector<1x256xf32>
    %8 = vector.broadcast %7 : vector<1x256xf32> to vector<16x256xf32>
    %9 = arith.addf %6, %8 : vector<16x256xf32>
    %10 = arith.truncf %9 : vector<16x256xf32> to vector<16x256xbf16>
    %c0_6 = arith.constant 0 : index
    %c0_7 = arith.constant 0 : index
    %11 = vector.load %arg5[%c0_6, %c0_7] : memref<16x256xbf16, #tpu.memory_space<vmem>>, vector<16x256xbf16>
    tpu.vector_store %arg5[%c0_6, %c0_7], %10 {strides = array<i32>} : memref<16x256xbf16, #tpu.memory_space<vmem>>, vector<16x256xbf16>,
    %cst_8 = arith.constant dense<0.000000e+00> : vector<256xf32>
    %12 = vector.multi_reduction <add>, %9, %cst_8 [0] : vector<16x256xf32> to vector<256xf32>
    %13 = vector.shape_cast %12 : vector<256xf32> to vector<1x256xf32>
    %14 = arith.mulf %9, %9 : vector<16x256xf32>
    %cst_9 = arith.constant dense<0.000000e+00> : vector<256xf32>
    %15 = vector.multi_reduction <add>, %14, %cst_9 [0] : vector<16x256xf32> to vector<256xf32>
    %16 = vector.shape_cast %15 : vector<256xf32> to vector<1x256xf32>
    %17 = tpu.iota {dimensions = array<i32: 0>} : vector<8x256xi32>
    %c0_i32 = arith.constant 0 : i32
    %18 = vector.broadcast %c0_i32 : i32 to vector<8x256xi32>
    %19 = arith.cmpi eq, %17, %18 : vector<8x256xi32>
    %c1_i32 = arith.constant 1 : i32
    %20 = vector.broadcast %c1_i32 : i32 to vector<8x256xi32>
    %21 = arith.cmpi eq, %17, %20 : vector<8x256xi32>
    %cst_10 = arith.constant 0.000000e+00 : f32
    %22 = vector.shape_cast %16 : vector<1x256xf32> to vector<1x256xf32>
    %23 = vector.broadcast %22 : vector<1x256xf32> to vector<8x256xf32>
    %24 = vector.broadcast %cst_10 : f32 to vector<8x256xf32>
    %25 = arith.select %21, %23, %24 : vector<8x256xi1>, vector<8x256xf32>
    %26 = vector.shape_cast %13 : vector<1x256xf32> to vector<1x256xf32>
    %27 = vector.broadcast %26 : vector<1x256xf32> to vector<8x256xf32>
    %28 = arith.select %19, %27, %25 : vector<8x256xi1>, vector<8x256xf32>
    %29 = vector.shape_cast %28 : vector<8x256xf32> to vector<1x8x256xf32>
    %c0_11 = arith.constant 0 : index
    %c0_12 = arith.constant 0 : index
    %c0_13 = arith.constant 0 : index
    %30 = vector.load %arg6[%c0_11, %c0_12, %c0_13] : memref<1x8x256xf32, #tpu.memory_space<vmem>>, vector<1x8x256xf32>
    tpu.vector_store %arg6[%c0_11, %c0_12, %c0_13], %29 {strides = array<i32>} : memref<1x8x256xf32, #tpu.memory_space<vmem>>, vector<1x8x256xf32>,
    return
  }
  func.func @transform_0(%arg0: i32, %arg1: i32) -> (i32, i32) {
    %c0_i32 = arith.constant 0 : i32
    %c0_i32_0 = arith.constant 0 : i32
    return %arg0, %c0_i32 : i32, i32
  }
  func.func @transform_1(%arg0: i32, %arg1: i32) -> (i32, i32) {
    %c0_i32 = arith.constant 0 : i32
    %c0_i32_0 = arith.constant 0 : i32
    return %c0_i32, %arg1 : i32, i32
  }
  func.func @transform_2(%arg0: i32, %arg1: i32) -> (i32, i32) {
    %c0_i32 = arith.constant 0 : i32
    %c0_i32_0 = arith.constant 0 : i32
    return %c0_i32, %arg1 : i32, i32
  }
  func.func @transform_3(%arg0: i32, %arg1: i32) -> (i32, i32) {
    %c0_i32 = arith.constant 0 : i32
    return %arg0, %arg1 : i32, i32
  }
  func.func @transform_4(%arg0: i32, %arg1: i32) -> (i32, i32, i32) {
    %c0_i32 = arith.constant 0 : i32
    %c0_i32_0 = arith.constant 0 : i32
    return %arg0, %c0_i32, %arg1 : i32, i32, i32
  }
}

module attributes {stable_mosaic.version = 11 : i64} {
  func.func @kernel(%arg0: i32, %arg1: i32, %arg2: memref<16x1024xbf16, #tpu.memory_space<vmem>>, %arg3: memref<1024x128xbf16, #tpu.memory_space<vmem>>, %arg4: memref<1x128xf32, #tpu.memory_space<vmem>>, %arg5: memref<16x128xbf16, #tpu.memory_space<vmem>>) attributes {dimension_semantics = [#tpu.dimension_semantics<parallel>, #tpu.dimension_semantics<parallel>], iteration_bounds = array<i64: 1, 1>, scalar_prefetch = 0 : i64, scratch_operands = 0 : i64, tpu.core_type = #tpu.core_type<tc>, window_params = [{transform_indices = @transform_0, window_bounds = array<i64: 16, 1024>}, {transform_indices = @transform_1, window_bounds = array<i64: 1024, 128>}, {transform_indices = @transform_2, window_bounds = array<i64: 1, 128>}, {transform_indices = @transform_3, window_bounds = array<i64: 16, 128>}]} {
    %c0 = arith.constant 0 : index
    %c0_0 = arith.constant 0 : index
    %0 = vector.load %arg2[%c0, %c0_0] : memref<16x1024xbf16, #tpu.memory_space<vmem>>, vector<16x1024xbf16>
    %1 = arith.extf %0 : vector<16x1024xbf16> to vector<16x1024xf32>
    %cst = arith.constant 0.000000e+00 : f32
    %2 = vector.broadcast %cst : f32 to vector<16x1024xf32>
    %3 = arith.cmpf ogt, %1, %2 : vector<16x1024xf32>
    %cst_1 = arith.constant 2.000000e-01 : f32
    %4 = vector.broadcast %cst_1 : f32 to vector<16x1024xf32>
    %5 = arith.mulf %4, %1 : vector<16x1024xf32>
    %6 = arith.select %3, %1, %5 : vector<16x1024xi1>, vector<16x1024xf32>
    %7 = arith.truncf %6 : vector<16x1024xf32> to vector<16x1024xbf16>
    %c0_2 = arith.constant 0 : index
    %c0_3 = arith.constant 0 : index
    %8 = vector.load %arg3[%c0_2, %c0_3] : memref<1024x128xbf16, #tpu.memory_space<vmem>>, vector<1024x128xbf16>
    %cst_4 = arith.constant dense<0.000000e+00> : vector<16x128xf32>
    %9 = tpu.matmul %7, %8, %cst_4 {dimension_numbers = #tpu.dot_dimension_numbers<[1], [0], [0], [1], [0, 0, 1, 1], [], []>} : vector<16x1024xbf16>, vector<1024x128xbf16>, vector<16x128xf32> -> vector<16x128xf32>
    %c0_5 = arith.constant 0 : index
    %c0_6 = arith.constant 0 : index
    %10 = vector.load %arg4[%c0_5, %c0_6] : memref<1x128xf32, #tpu.memory_space<vmem>>, vector<1x128xf32>
    %11 = vector.broadcast %10 : vector<1x128xf32> to vector<16x128xf32>
    %12 = arith.addf %9, %11 : vector<16x128xf32>
    %13 = arith.truncf %12 : vector<16x128xf32> to vector<16x128xbf16>
    %c0_7 = arith.constant 0 : index
    %c0_8 = arith.constant 0 : index
    %14 = vector.load %arg5[%c0_7, %c0_8] : memref<16x128xbf16, #tpu.memory_space<vmem>>, vector<16x128xbf16>
    tpu.vector_store %arg5[%c0_7, %c0_8], %13 {strides = array<i32>} : memref<16x128xbf16, #tpu.memory_space<vmem>>, vector<16x128xbf16>,
    return
  }
  func.func @transform_0(%arg0: i32, %arg1: i32) -> (i32, i32) {
    %c0_i32 = arith.constant 0 : i32
    %c0_i32_0 = arith.constant 0 : i32
    return %arg0, %c0_i32 : i32, i32
  }
  func.func @transform_1(%arg0: i32, %arg1: i32) -> (i32, i32) {
    %c0_i32 = arith.constant 0 : i32
    %c0_i32_0 = arith.constant 0 : i32
    return %c0_i32, %arg1 : i32, i32
  }
  func.func @transform_2(%arg0: i32, %arg1: i32) -> (i32, i32) {
    %c0_i32 = arith.constant 0 : i32
    %c0_i32_0 = arith.constant 0 : i32
    return %c0_i32, %arg1 : i32, i32
  }
  func.func @transform_3(%arg0: i32, %arg1: i32) -> (i32, i32) {
    %c0_i32 = arith.constant 0 : i32
    return %arg0, %arg1 : i32, i32
  }
}

module attributes {stable_mosaic.version = 11 : i64} {
  func.func @kernel(%arg0: i32, %arg1: i32, %arg2: memref<16x1152xbf16, #tpu.memory_space<vmem>>, %arg3: memref<1152x128xbf16, #tpu.memory_space<vmem>>, %arg4: memref<1x128xf32, #tpu.memory_space<vmem>>, %arg5: memref<16x128xbf16, #tpu.memory_space<vmem>>, %arg6: memref<1x8x128xf32, #tpu.memory_space<vmem>>) attributes {dimension_semantics = [#tpu.dimension_semantics<parallel>, #tpu.dimension_semantics<parallel>], iteration_bounds = array<i64: 1, 1>, scalar_prefetch = 0 : i64, scratch_operands = 0 : i64, tpu.core_type = #tpu.core_type<tc>, window_params = [{transform_indices = @transform_0, window_bounds = array<i64: 16, 1152>}, {transform_indices = @transform_1, window_bounds = array<i64: 1152, 128>}, {transform_indices = @transform_2, window_bounds = array<i64: 1, 128>}, {transform_indices = @transform_3, window_bounds = array<i64: 16, 128>}, {transform_indices = @transform_4, window_bounds = array<i64: 1, 8, 128>}]} {
    %c0 = arith.constant 0 : index
    %c0_0 = arith.constant 0 : index
    %0 = vector.load %arg2[%c0, %c0_0] : memref<16x1152xbf16, #tpu.memory_space<vmem>>, vector<16x1152xbf16>
    %1 = arith.extf %0 : vector<16x1152xbf16> to vector<16x1152xf32>
    %cst = arith.constant 0.000000e+00 : f32
    %2 = vector.broadcast %cst : f32 to vector<16x1152xf32>
    %3 = arith.maximumf %1, %2 : vector<16x1152xf32>
    %4 = arith.truncf %3 : vector<16x1152xf32> to vector<16x1152xbf16>
    %c0_1 = arith.constant 0 : index
    %c0_2 = arith.constant 0 : index
    %5 = vector.load %arg3[%c0_1, %c0_2] : memref<1152x128xbf16, #tpu.memory_space<vmem>>, vector<1152x128xbf16>
    %cst_3 = arith.constant dense<0.000000e+00> : vector<16x128xf32>
    %6 = tpu.matmul %4, %5, %cst_3 {dimension_numbers = #tpu.dot_dimension_numbers<[1], [0], [0], [1], [0, 0, 1, 1], [], []>} : vector<16x1152xbf16>, vector<1152x128xbf16>, vector<16x128xf32> -> vector<16x128xf32>
    %c0_4 = arith.constant 0 : index
    %c0_5 = arith.constant 0 : index
    %7 = vector.load %arg4[%c0_4, %c0_5] : memref<1x128xf32, #tpu.memory_space<vmem>>, vector<1x128xf32>
    %8 = vector.broadcast %7 : vector<1x128xf32> to vector<16x128xf32>
    %9 = arith.addf %6, %8 : vector<16x128xf32>
    %10 = arith.truncf %9 : vector<16x128xf32> to vector<16x128xbf16>
    %c0_6 = arith.constant 0 : index
    %c0_7 = arith.constant 0 : index
    %11 = vector.load %arg5[%c0_6, %c0_7] : memref<16x128xbf16, #tpu.memory_space<vmem>>, vector<16x128xbf16>
    tpu.vector_store %arg5[%c0_6, %c0_7], %10 {strides = array<i32>} : memref<16x128xbf16, #tpu.memory_space<vmem>>, vector<16x128xbf16>,
    %cst_8 = arith.constant dense<0.000000e+00> : vector<128xf32>
    %12 = vector.multi_reduction <add>, %9, %cst_8 [0] : vector<16x128xf32> to vector<128xf32>
    %13 = vector.shape_cast %12 : vector<128xf32> to vector<1x128xf32>
    %14 = arith.mulf %9, %9 : vector<16x128xf32>
    %cst_9 = arith.constant dense<0.000000e+00> : vector<128xf32>
    %15 = vector.multi_reduction <add>, %14, %cst_9 [0] : vector<16x128xf32> to vector<128xf32>
    %16 = vector.shape_cast %15 : vector<128xf32> to vector<1x128xf32>
    %17 = tpu.iota {dimensions = array<i32: 0>} : vector<8x128xi32>
    %c0_i32 = arith.constant 0 : i32
    %18 = vector.broadcast %c0_i32 : i32 to vector<8x128xi32>
    %19 = arith.cmpi eq, %17, %18 : vector<8x128xi32>
    %c1_i32 = arith.constant 1 : i32
    %20 = vector.broadcast %c1_i32 : i32 to vector<8x128xi32>
    %21 = arith.cmpi eq, %17, %20 : vector<8x128xi32>
    %cst_10 = arith.constant 0.000000e+00 : f32
    %22 = vector.shape_cast %16 : vector<1x128xf32> to vector<1x128xf32>
    %23 = vector.broadcast %22 : vector<1x128xf32> to vector<8x128xf32>
    %24 = vector.broadcast %cst_10 : f32 to vector<8x128xf32>
    %25 = arith.select %21, %23, %24 : vector<8x128xi1>, vector<8x128xf32>
    %26 = vector.shape_cast %13 : vector<1x128xf32> to vector<1x128xf32>
    %27 = vector.broadcast %26 : vector<1x128xf32> to vector<8x128xf32>
    %28 = arith.select %19, %27, %25 : vector<8x128xi1>, vector<8x128xf32>
    %29 = vector.shape_cast %28 : vector<8x128xf32> to vector<1x8x128xf32>
    %c0_11 = arith.constant 0 : index
    %c0_12 = arith.constant 0 : index
    %c0_13 = arith.constant 0 : index
    %30 = vector.load %arg6[%c0_11, %c0_12, %c0_13] : memref<1x8x128xf32, #tpu.memory_space<vmem>>, vector<1x8x128xf32>
    tpu.vector_store %arg6[%c0_11, %c0_12, %c0_13], %29 {strides = array<i32>} : memref<1x8x128xf32, #tpu.memory_space<vmem>>, vector<1x8x128xf32>,
    return
  }
  func.func @transform_0(%arg0: i32, %arg1: i32) -> (i32, i32) {
    %c0_i32 = arith.constant 0 : i32
    %c0_i32_0 = arith.constant 0 : i32
    return %arg0, %c0_i32 : i32, i32
  }
  func.func @transform_1(%arg0: i32, %arg1: i32) -> (i32, i32) {
    %c0_i32 = arith.constant 0 : i32
    %c0_i32_0 = arith.constant 0 : i32
    return %c0_i32, %arg1 : i32, i32
  }
  func.func @transform_2(%arg0: i32, %arg1: i32) -> (i32, i32) {
    %c0_i32 = arith.constant 0 : i32
    %c0_i32_0 = arith.constant 0 : i32
    return %c0_i32, %arg1 : i32, i32
  }
  func.func @transform_3(%arg0: i32, %arg1: i32) -> (i32, i32) {
    %c0_i32 = arith.constant 0 : i32
    return %arg0, %arg1 : i32, i32
  }
  func.func @transform_4(%arg0: i32, %arg1: i32) -> (i32, i32, i32) {
    %c0_i32 = arith.constant 0 : i32
    %c0_i32_0 = arith.constant 0 : i32
    return %arg0, %c0_i32, %arg1 : i32, i32, i32
  }
}

module attributes {stable_mosaic.version = 11 : i64} {
  func.func @kernel(%arg0: i32, %arg1: i32, %arg2: memref<16x640xbf16, #tpu.memory_space<vmem>>, %arg3: memref<640x128xbf16, #tpu.memory_space<vmem>>, %arg4: memref<1x128xf32, #tpu.memory_space<vmem>>, %arg5: memref<16x128xbf16, #tpu.memory_space<vmem>>, %arg6: memref<1x8x128xf32, #tpu.memory_space<vmem>>) attributes {dimension_semantics = [#tpu.dimension_semantics<parallel>, #tpu.dimension_semantics<parallel>], iteration_bounds = array<i64: 2, 1>, scalar_prefetch = 0 : i64, scratch_operands = 0 : i64, tpu.core_type = #tpu.core_type<tc>, window_params = [{transform_indices = @transform_0, window_bounds = array<i64: 16, 640>}, {transform_indices = @transform_1, window_bounds = array<i64: 640, 128>}, {transform_indices = @transform_2, window_bounds = array<i64: 1, 128>}, {transform_indices = @transform_3, window_bounds = array<i64: 16, 128>}, {transform_indices = @transform_4, window_bounds = array<i64: 1, 8, 128>}]} {
    %c0 = arith.constant 0 : index
    %c0_0 = arith.constant 0 : index
    %0 = vector.load %arg2[%c0, %c0_0] : memref<16x640xbf16, #tpu.memory_space<vmem>>, vector<16x640xbf16>
    %1 = arith.extf %0 : vector<16x640xbf16> to vector<16x640xf32>
    %cst = arith.constant 0.000000e+00 : f32
    %2 = vector.broadcast %cst : f32 to vector<16x640xf32>
    %3 = arith.maximumf %1, %2 : vector<16x640xf32>
    %4 = arith.truncf %3 : vector<16x640xf32> to vector<16x640xbf16>
    %c0_1 = arith.constant 0 : index
    %c0_2 = arith.constant 0 : index
    %5 = vector.load %arg3[%c0_1, %c0_2] : memref<640x128xbf16, #tpu.memory_space<vmem>>, vector<640x128xbf16>
    %cst_3 = arith.constant dense<0.000000e+00> : vector<16x128xf32>
    %6 = tpu.matmul %4, %5, %cst_3 {dimension_numbers = #tpu.dot_dimension_numbers<[1], [0], [0], [1], [0, 0, 1, 1], [], []>} : vector<16x640xbf16>, vector<640x128xbf16>, vector<16x128xf32> -> vector<16x128xf32>
    %c0_4 = arith.constant 0 : index
    %c0_5 = arith.constant 0 : index
    %7 = vector.load %arg4[%c0_4, %c0_5] : memref<1x128xf32, #tpu.memory_space<vmem>>, vector<1x128xf32>
    %8 = vector.broadcast %7 : vector<1x128xf32> to vector<16x128xf32>
    %9 = arith.addf %6, %8 : vector<16x128xf32>
    %10 = arith.truncf %9 : vector<16x128xf32> to vector<16x128xbf16>
    %c0_6 = arith.constant 0 : index
    %c0_7 = arith.constant 0 : index
    %11 = vector.load %arg5[%c0_6, %c0_7] : memref<16x128xbf16, #tpu.memory_space<vmem>>, vector<16x128xbf16>
    tpu.vector_store %arg5[%c0_6, %c0_7], %10 {strides = array<i32>} : memref<16x128xbf16, #tpu.memory_space<vmem>>, vector<16x128xbf16>,
    %cst_8 = arith.constant dense<0.000000e+00> : vector<128xf32>
    %12 = vector.multi_reduction <add>, %9, %cst_8 [0] : vector<16x128xf32> to vector<128xf32>
    %13 = vector.shape_cast %12 : vector<128xf32> to vector<1x128xf32>
    %14 = arith.mulf %9, %9 : vector<16x128xf32>
    %cst_9 = arith.constant dense<0.000000e+00> : vector<128xf32>
    %15 = vector.multi_reduction <add>, %14, %cst_9 [0] : vector<16x128xf32> to vector<128xf32>
    %16 = vector.shape_cast %15 : vector<128xf32> to vector<1x128xf32>
    %17 = tpu.iota {dimensions = array<i32: 0>} : vector<8x128xi32>
    %c0_i32 = arith.constant 0 : i32
    %18 = vector.broadcast %c0_i32 : i32 to vector<8x128xi32>
    %19 = arith.cmpi eq, %17, %18 : vector<8x128xi32>
    %c1_i32 = arith.constant 1 : i32
    %20 = vector.broadcast %c1_i32 : i32 to vector<8x128xi32>
    %21 = arith.cmpi eq, %17, %20 : vector<8x128xi32>
    %cst_10 = arith.constant 0.000000e+00 : f32
    %22 = vector.shape_cast %16 : vector<1x128xf32> to vector<1x128xf32>
    %23 = vector.broadcast %22 : vector<1x128xf32> to vector<8x128xf32>
    %24 = vector.broadcast %cst_10 : f32 to vector<8x128xf32>
    %25 = arith.select %21, %23, %24 : vector<8x128xi1>, vector<8x128xf32>
    %26 = vector.shape_cast %13 : vector<1x128xf32> to vector<1x128xf32>
    %27 = vector.broadcast %26 : vector<1x128xf32> to vector<8x128xf32>
    %28 = arith.select %19, %27, %25 : vector<8x128xi1>, vector<8x128xf32>
    %29 = vector.shape_cast %28 : vector<8x128xf32> to vector<1x8x128xf32>
    %c0_11 = arith.constant 0 : index
    %c0_12 = arith.constant 0 : index
    %c0_13 = arith.constant 0 : index
    %30 = vector.load %arg6[%c0_11, %c0_12, %c0_13] : memref<1x8x128xf32, #tpu.memory_space<vmem>>, vector<1x8x128xf32>
    tpu.vector_store %arg6[%c0_11, %c0_12, %c0_13], %29 {strides = array<i32>} : memref<1x8x128xf32, #tpu.memory_space<vmem>>, vector<1x8x128xf32>,
    return
  }
  func.func @transform_0(%arg0: i32, %arg1: i32) -> (i32, i32) {
    %c0_i32 = arith.constant 0 : i32
    %c0_i32_0 = arith.constant 0 : i32
    return %arg0, %c0_i32 : i32, i32
  }
  func.func @transform_1(%arg0: i32, %arg1: i32) -> (i32, i32) {
    %c0_i32 = arith.constant 0 : i32
    %c0_i32_0 = arith.constant 0 : i32
    return %c0_i32, %arg1 : i32, i32
  }
  func.func @transform_2(%arg0: i32, %arg1: i32) -> (i32, i32) {
    %c0_i32 = arith.constant 0 : i32
    %c0_i32_0 = arith.constant 0 : i32
    return %c0_i32, %arg1 : i32, i32
  }
  func.func @transform_3(%arg0: i32, %arg1: i32) -> (i32, i32) {
    %c0_i32 = arith.constant 0 : i32
    return %arg0, %arg1 : i32, i32
  }
  func.func @transform_4(%arg0: i32, %arg1: i32) -> (i32, i32, i32) {
    %c0_i32 = arith.constant 0 : i32
    %c0_i32_0 = arith.constant 0 : i32
    return %arg0, %c0_i32, %arg1 : i32, i32, i32
  }
}

module attributes {stable_mosaic.version = 11 : i64} {
  func.func @kernel(%arg0: i32, %arg1: i32, %arg2: memref<64x384xbf16, #tpu.memory_space<vmem>>, %arg3: memref<384x128xbf16, #tpu.memory_space<vmem>>, %arg4: memref<1x128xf32, #tpu.memory_space<vmem>>, %arg5: memref<64x128xbf16, #tpu.memory_space<vmem>>, %arg6: memref<1x8x128xf32, #tpu.memory_space<vmem>>) attributes {dimension_semantics = [#tpu.dimension_semantics<parallel>, #tpu.dimension_semantics<parallel>], iteration_bounds = array<i64: 2, 1>, scalar_prefetch = 0 : i64, scratch_operands = 0 : i64, tpu.core_type = #tpu.core_type<tc>, window_params = [{transform_indices = @transform_0, window_bounds = array<i64: 64, 384>}, {transform_indices = @transform_1, window_bounds = array<i64: 384, 128>}, {transform_indices = @transform_2, window_bounds = array<i64: 1, 128>}, {transform_indices = @transform_3, window_bounds = array<i64: 64, 128>}, {transform_indices = @transform_4, window_bounds = array<i64: 1, 8, 128>}]} {
    %c0 = arith.constant 0 : index
    %c0_0 = arith.constant 0 : index
    %0 = vector.load %arg2[%c0, %c0_0] : memref<64x384xbf16, #tpu.memory_space<vmem>>, vector<64x384xbf16>
    %1 = arith.extf %0 : vector<64x384xbf16> to vector<64x384xf32>
    %cst = arith.constant 0.000000e+00 : f32
    %2 = vector.broadcast %cst : f32 to vector<64x384xf32>
    %3 = arith.maximumf %1, %2 : vector<64x384xf32>
    %4 = arith.truncf %3 : vector<64x384xf32> to vector<64x384xbf16>
    %c0_1 = arith.constant 0 : index
    %c0_2 = arith.constant 0 : index
    %5 = vector.load %arg3[%c0_1, %c0_2] : memref<384x128xbf16, #tpu.memory_space<vmem>>, vector<384x128xbf16>
    %cst_3 = arith.constant dense<0.000000e+00> : vector<64x128xf32>
    %6 = tpu.matmul %4, %5, %cst_3 {dimension_numbers = #tpu.dot_dimension_numbers<[1], [0], [0], [1], [0, 0, 1, 1], [], []>} : vector<64x384xbf16>, vector<384x128xbf16>, vector<64x128xf32> -> vector<64x128xf32>
    %c0_4 = arith.constant 0 : index
    %c0_5 = arith.constant 0 : index
    %7 = vector.load %arg4[%c0_4, %c0_5] : memref<1x128xf32, #tpu.memory_space<vmem>>, vector<1x128xf32>
    %8 = vector.broadcast %7 : vector<1x128xf32> to vector<64x128xf32>
    %9 = arith.addf %6, %8 : vector<64x128xf32>
    %10 = arith.truncf %9 : vector<64x128xf32> to vector<64x128xbf16>
    %c0_6 = arith.constant 0 : index
    %c0_7 = arith.constant 0 : index
    %11 = vector.load %arg5[%c0_6, %c0_7] : memref<64x128xbf16, #tpu.memory_space<vmem>>, vector<64x128xbf16>
    tpu.vector_store %arg5[%c0_6, %c0_7], %10 {strides = array<i32>} : memref<64x128xbf16, #tpu.memory_space<vmem>>, vector<64x128xbf16>,
    %cst_8 = arith.constant dense<0.000000e+00> : vector<128xf32>
    %12 = vector.multi_reduction <add>, %9, %cst_8 [0] : vector<64x128xf32> to vector<128xf32>
    %13 = vector.shape_cast %12 : vector<128xf32> to vector<1x128xf32>
    %14 = arith.mulf %9, %9 : vector<64x128xf32>
    %cst_9 = arith.constant dense<0.000000e+00> : vector<128xf32>
    %15 = vector.multi_reduction <add>, %14, %cst_9 [0] : vector<64x128xf32> to vector<128xf32>
    %16 = vector.shape_cast %15 : vector<128xf32> to vector<1x128xf32>
    %17 = tpu.iota {dimensions = array<i32: 0>} : vector<8x128xi32>
    %c0_i32 = arith.constant 0 : i32
    %18 = vector.broadcast %c0_i32 : i32 to vector<8x128xi32>
    %19 = arith.cmpi eq, %17, %18 : vector<8x128xi32>
    %c1_i32 = arith.constant 1 : i32
    %20 = vector.broadcast %c1_i32 : i32 to vector<8x128xi32>
    %21 = arith.cmpi eq, %17, %20 : vector<8x128xi32>
    %cst_10 = arith.constant 0.000000e+00 : f32
    %22 = vector.shape_cast %16 : vector<1x128xf32> to vector<1x128xf32>
    %23 = vector.broadcast %22 : vector<1x128xf32> to vector<8x128xf32>
    %24 = vector.broadcast %cst_10 : f32 to vector<8x128xf32>
    %25 = arith.select %21, %23, %24 : vector<8x128xi1>, vector<8x128xf32>
    %26 = vector.shape_cast %13 : vector<1x128xf32> to vector<1x128xf32>
    %27 = vector.broadcast %26 : vector<1x128xf32> to vector<8x128xf32>
    %28 = arith.select %19, %27, %25 : vector<8x128xi1>, vector<8x128xf32>
    %29 = vector.shape_cast %28 : vector<8x128xf32> to vector<1x8x128xf32>
    %c0_11 = arith.constant 0 : index
    %c0_12 = arith.constant 0 : index
    %c0_13 = arith.constant 0 : index
    %30 = vector.load %arg6[%c0_11, %c0_12, %c0_13] : memref<1x8x128xf32, #tpu.memory_space<vmem>>, vector<1x8x128xf32>
    tpu.vector_store %arg6[%c0_11, %c0_12, %c0_13], %29 {strides = array<i32>} : memref<1x8x128xf32, #tpu.memory_space<vmem>>, vector<1x8x128xf32>,
    return
  }
  func.func @transform_0(%arg0: i32, %arg1: i32) -> (i32, i32) {
    %c0_i32 = arith.constant 0 : i32
    %c0_i32_0 = arith.constant 0 : i32
    return %arg0, %c0_i32 : i32, i32
  }
  func.func @transform_1(%arg0: i32, %arg1: i32) -> (i32, i32) {
    %c0_i32 = arith.constant 0 : i32
    %c0_i32_0 = arith.constant 0 : i32
    return %c0_i32, %arg1 : i32, i32
  }
  func.func @transform_2(%arg0: i32, %arg1: i32) -> (i32, i32) {
    %c0_i32 = arith.constant 0 : i32
    %c0_i32_0 = arith.constant 0 : i32
    return %c0_i32, %arg1 : i32, i32
  }
  func.func @transform_3(%arg0: i32, %arg1: i32) -> (i32, i32) {
    %c0_i32 = arith.constant 0 : i32
    return %arg0, %arg1 : i32, i32
  }
  func.func @transform_4(%arg0: i32, %arg1: i32) -> (i32, i32, i32) {
    %c0_i32 = arith.constant 0 : i32
    %c0_i32_0 = arith.constant 0 : i32
    return %arg0, %c0_i32, %arg1 : i32, i32, i32
  }
}

module attributes {stable_mosaic.version = 11 : i64} {
  func.func @kernel(%arg0: i32, %arg1: i32, %arg2: memref<256x256xbf16, #tpu.memory_space<vmem>>, %arg3: memref<256x128xbf16, #tpu.memory_space<vmem>>, %arg4: memref<1x128xf32, #tpu.memory_space<vmem>>, %arg5: memref<1x128xf32, #tpu.memory_space<vmem>>, %arg6: memref<256x128xf32, #tpu.memory_space<vmem>>) attributes {dimension_semantics = [#tpu.dimension_semantics<parallel>, #tpu.dimension_semantics<parallel>], iteration_bounds = array<i64: 2, 1>, scalar_prefetch = 0 : i64, scratch_operands = 0 : i64, tpu.core_type = #tpu.core_type<tc>, window_params = [{transform_indices = @transform_0, window_bounds = array<i64: 256, 256>}, {transform_indices = @transform_1, window_bounds = array<i64: 256, 128>}, {transform_indices = @transform_2, window_bounds = array<i64: 1, 128>}, {transform_indices = @transform_3, window_bounds = array<i64: 1, 128>}, {transform_indices = @transform_4, window_bounds = array<i64: 256, 128>}]} {
    %c0 = arith.constant 0 : index
    %c0_0 = arith.constant 0 : index
    %0 = vector.load %arg2[%c0, %c0_0] : memref<256x256xbf16, #tpu.memory_space<vmem>>, vector<256x256xbf16>
    %1 = arith.extf %0 : vector<256x256xbf16> to vector<256x256xf32>
    %cst = arith.constant 0.000000e+00 : f32
    %2 = vector.broadcast %cst : f32 to vector<256x256xf32>
    %3 = arith.maximumf %1, %2 : vector<256x256xf32>
    %4 = arith.truncf %3 : vector<256x256xf32> to vector<256x256xbf16>
    %c0_1 = arith.constant 0 : index
    %c0_2 = arith.constant 0 : index
    %5 = vector.load %arg3[%c0_1, %c0_2] : memref<256x128xbf16, #tpu.memory_space<vmem>>, vector<256x128xbf16>
    %cst_3 = arith.constant dense<0.000000e+00> : vector<256x128xf32>
    %6 = tpu.matmul %4, %5, %cst_3 {dimension_numbers = #tpu.dot_dimension_numbers<[1], [0], [0], [1], [0, 0, 1, 1], [], []>} : vector<256x256xbf16>, vector<256x128xbf16>, vector<256x128xf32> -> vector<256x128xf32>
    %c0_4 = arith.constant 0 : index
    %c0_5 = arith.constant 0 : index
    %7 = vector.load %arg4[%c0_4, %c0_5] : memref<1x128xf32, #tpu.memory_space<vmem>>, vector<1x128xf32>
    %8 = vector.broadcast %7 : vector<1x128xf32> to vector<256x128xf32>
    %9 = arith.addf %6, %8 : vector<256x128xf32>
    %c0_6 = arith.constant 0 : index
    %c0_7 = arith.constant 0 : index
    %10 = vector.load %arg5[%c0_6, %c0_7] : memref<1x128xf32, #tpu.memory_space<vmem>>, vector<1x128xf32>
    %cst_8 = arith.constant 0.000000e+00 : f32
    %11 = vector.broadcast %cst_8 : f32 to vector<1x128xf32>
    %12 = arith.cmpf ogt, %10, %11 : vector<1x128xf32>
    %13 = math.tanh %9 : vector<256x128xf32>
    %14 = vector.shape_cast %12 : vector<1x128xi1> to vector<1x128xi1>
    %15 = vector.broadcast %14 : vector<1x128xi1> to vector<256x128xi1>
    %16 = arith.select %15, %13, %9 : vector<256x128xi1>, vector<256x128xf32>
    %c0_9 = arith.constant 0 : index
    %c0_10 = arith.constant 0 : index
    %17 = vector.load %arg6[%c0_9, %c0_10] : memref<256x128xf32, #tpu.memory_space<vmem>>, vector<256x128xf32>
    tpu.vector_store %arg6[%c0_9, %c0_10], %16 {strides = array<i32>} : memref<256x128xf32, #tpu.memory_space<vmem>>, vector<256x128xf32>,
    return
  }
  func.func @transform_0(%arg0: i32, %arg1: i32) -> (i32, i32) {
    %c0_i32 = arith.constant 0 : i32
    %c0_i32_0 = arith.constant 0 : i32
    return %arg0, %c0_i32 : i32, i32
  }
  func.func @transform_1(%arg0: i32, %arg1: i32) -> (i32, i32) {
    %c0_i32 = arith.constant 0 : i32
    %c0_i32_0 = arith.constant 0 : i32
    return %c0_i32, %arg1 : i32, i32
  }
  func.func @transform_2(%arg0: i32, %arg1: i32) -> (i32, i32) {
    %c0_i32 = arith.constant 0 : i32
    %c0_i32_0 = arith.constant 0 : i32
    return %c0_i32, %arg1 : i32, i32
  }
  func.func @transform_3(%arg0: i32, %arg1: i32) -> (i32, i32) {
    %c0_i32 = arith.constant 0 : i32
    %c0_i32_0 = arith.constant 0 : i32
    return %c0_i32, %arg1 : i32, i32
  }
  func.func @transform_4(%arg0: i32, %arg1: i32) -> (i32, i32) {
    %c0_i32 = arith.constant 0 : i32
    return %arg0, %arg1 : i32, i32
  }
}

</mosaic_0001>

<llo_original>
// kernel: _lambda_.10
$region0: #{_lambda_.10}
  #allocation0 [shape = 'u32[]', space=smem, size = 0x4, offset = 0x4, fixed_abs, tag = 'smem constant byte address 0x4 - core index']
  #allocation1 [shape = 'u32[144,128]{1,0:T(1,128)}', space=vmem, size = 0x12000, scoped, tag = 'internal scratch']
  %s0 = inlined_call_operand.vmem [shape: bf16[512,128], index: 0, kind: input, shape index: {}]
  %s1 = inlined_call_operand.vmem [shape: bf16[128,128], index: 1, kind: input, shape index: {}]
  %s2 = inlined_call_operand.vmem [shape: f32[1,128], index: 2, kind: input, shape index: {}]
  %s3 = inlined_call_operand.vmem [shape: bf16[512,128], index: 3, kind: output, shape index: {}]
  %s4 = sld [smem:[#allocation0]]
  $region45: #{_lambda_.10} parent=0
    _
  %s6 = ssub.s32 1, %s4
  %s7 = scalar_select 0, %s6, %s4
  loop: start=0, step=1, limit=4
  $region2: #{_lambda_.10} parent=0 // loop_pre_header
    _
  $region3: #{_lambda_.10} parent=0 // loop_header
    %s9 = sphi 0, %s13
    %p10 = scmp.ge.s32.totalorder %s9, 4
    %s16 = sphi 0, %s28
    %s17 = sphi 0, %s24
    %s18 = sphi 0, %s16
    %s19 = sphi 0, %s17
    %s20 = sphi 0, %s18
    %s21 = sphi 0, %s19
    %s31 = sphi 0, %s33
    %s34 = sphi 0, %s31
    %s35 = sphi 0, %s34
    %s51 = sphi 0, %s35
    %s57 = sphi 0, %s59
    %s60 = sphi 0, %s57
    %s61 = sphi 0, %s60
    %s77 = sphi 0, %s61
    %s83 = sphi 0, %s85
    %s86 = sphi 0, %s83
    %s87 = sphi 0, %s86
    %s103 = sphi 0, %s87
    %s111 = sphi 0, %s113
    %s114 = sphi 0, %s111
    %s115 = sphi 0, %s114
    %s131 = sphi 0, %s115
  $region4: #{_lambda_.10} parent=0 // loop_header_branch
    %12 = sbr.rel (%p10) target = $region8
  $region5: #{_lambda_.10} parent=0 // loop_body
    %s14 = ssub.s32 %s9, 1
    %s15 = ssub.s32 %s9, 2
    %s22 = sadd.s32 1, %s17
    %p23 = scmp.ge.s32.totalorder %s22, 1
    %s24 = scalar_select %p23, 0, %s22
    %s25 = sadd.s32 1, %s16
    %s26 = scalar_select %p23, %s25, %s16
    %p27 = scmp.ge.s32.totalorder %s26, 2
    %s28 = scalar_select %p27, 0, %s26
    %s29 = ssub.s32 %s16, %s28
    %p30 = scmp.eq.s32.totalorder %s29, 0
    %s32 = sadd.s32 %s31, 1
    %s33 = scalar_select %p30, %s31, %s32
    %p36 = pneg %p30
    %p37 = scmp.eq.s32.totalorder %s9, 1
    %p38 = por %p36, %p37
    %p39 = scmp.ne.s32.totalorder %s31, %s34
    %p40 = scmp.eq.s32.totalorder %s9, 0
    %p41 = por %p39, %p40
    %p42 = scmp.ne.s32.totalorder %s31, %s34
    %p43 = scmp.eq.s32.totalorder %s14, 1
    %p44 = por %p42, %p43
    %p45 = scmp.ne.s32.totalorder %s34, %s35
    %p46 = scmp.eq.s32.totalorder %s14, 0
    %p47 = por %p45, %p46
    %p48 = scmp.ne.s32.totalorder %s34, %s35
    %p49 = scmp.eq.s32.totalorder %s15, 1
    %p50 = por %p48, %p49
    %p52 = scmp.ne.s32.totalorder %s35, %s51
    %p53 = scmp.eq.s32.totalorder %s15, 0
    %p54 = por %p52, %p53
    %s55 = ssub.s32 %s17, %s24
    %p56 = scmp.eq.s32.totalorder %s55, 0
    %s58 = sadd.s32 %s57, 1
    %s59 = scalar_select %p56, %s57, %s58
    %p62 = pneg %p56
    %p63 = scmp.eq.s32.totalorder %s9, 1
    %p64 = por %p62, %p63
    %p65 = scmp.ne.s32.totalorder %s57, %s60
    %p66 = scmp.eq.s32.totalorder %s9, 0
    %p67 = por %p65, %p66
    %p68 = scmp.ne.s32.totalorder %s57, %s60
    %p69 = scmp.eq.s32.totalorder %s14, 1
    %p70 = por %p68, %p69
    %p71 = scmp.ne.s32.totalorder %s60, %s61
    %p72 = scmp.eq.s32.totalorder %s14, 0
    %p73 = por %p71, %p72
    %p74 = scmp.ne.s32.totalorder %s60, %s61
    %p75 = scmp.eq.s32.totalorder %s15, 1
    %p76 = por %p74, %p75
    %p78 = scmp.ne.s32.totalorder %s61, %s77
    %p79 = scmp.eq.s32.totalorder %s15, 0
    %p80 = por %p78, %p79
    %s81 = ssub.s32 %s17, %s24
    %p82 = scmp.eq.s32.totalorder %s81, 0
    %s84 = sadd.s32 %s83, 1
    %s85 = scalar_select %p82, %s83, %s84
    %p88 = pneg %p82
    %p89 = scmp.eq.s32.totalorder %s9, 1
    %p90 = por %p88, %p89
    %p91 = scmp.ne.s32.totalorder %s83, %s86
    %p92 = scmp.eq.s32.totalorder %s9, 0
    %p93 = por %p91, %p92
    %p94 = scmp.ne.s32.totalorder %s83, %s86
    %p95 = scmp.eq.s32.totalorder %s14, 1
    %p96 = por %p94, %p95
    %p97 = scmp.ne.s32.totalorder %s86, %s87
    %p98 = scmp.eq.s32.totalorder %s14, 0
    %p99 = por %p97, %p98
    %p100 = scmp.ne.s32.totalorder %s86, %s87
    %p101 = scmp.eq.s32.totalorder %s15, 1
    %p102 = por %p100, %p101
    %p104 = scmp.ne.s32.totalorder %s87, %s103
    %p105 = scmp.eq.s32.totalorder %s15, 0
    %p106 = por %p104, %p105
    %s107 = ssub.s32 %s16, %s28
    %s108 = ssub.s32 %s17, %s24
    %s109 = sor.u32 %s107, %s108
    %p110 = scmp.eq.s32.totalorder %s109, 0
    %s112 = sadd.s32 %s111, 1
    %s113 = scalar_select %p110, %s111, %s112
    %p116 = pneg %p110
    %p117 = scmp.eq.s32.totalorder %s9, 1
    %p118 = por %p116, %p117
    %p119 = scmp.ne.s32.totalorder %s111, %s114
    %p120 = scmp.eq.s32.totalorder %s9, 0
    %p121 = por %p119, %p120
    %p122 = scmp.ne.s32.totalorder %s111, %s114
    %p123 = scmp.eq.s32.totalorder %s14, 1
    %p124 = por %p122, %p123
    %p125 = scmp.ne.s32.totalorder %s114, %s115
    %p126 = scmp.eq.s32.totalorder %s14, 0
    %p127 = por %p125, %p126
    %p128 = scmp.ne.s32.totalorder %s114, %s115
    %p129 = scmp.eq.s32.totalorder %s15, 1
    %p130 = por %p128, %p129
    %p132 = scmp.ne.s32.totalorder %s115, %s131
    %p133 = scmp.eq.s32.totalorder %s15, 0
    %p134 = por %p132, %p133
    %p135 = scmp.le.s32.totalorder 1, %s9
    %p136 = scmp.lt.s32.totalorder %s9, 3
    %p137 = pnand %p135, %p136
    %p138 = pneg %p137
    // Predicated region
    $region9: #{_lambda_.10} parent=5 // pred_check
      _
    $region10: #{_lambda_.10} parent=5 // pred_check_branch
      %140 = sbr.rel (%p137) target = $region12
    $region11: #{_lambda_.10} parent=5 // pred_region
      %s141 = ssub.s32 %s9, 1
      // Predicated region
      $region13: #{_lambda_.10} parent=11 // pred_check
        %p142 = pneg %p73
      $region14: #{_lambda_.10} parent=11 // pred_check_branch
        %144 = sbr.rel (%p142) target = $region16
      $region15: #{_lambda_.10} parent=11 // pred_region
        %p145 = scmp.lt.s32.totalorder %s19, 0
        %s146 = scalar_select %p145, %s19, 0
        %s147 = smul.addr %s146, 4
        %s148 = scalar_lea.vmem %s1, %s147
      $region16: #{_lambda_.10} parent=11 // pred_fallthru
        _
      // Predicated region
      $region17: #{_lambda_.10} parent=11 // pred_check
        %p149 = pneg %p99
      $region18: #{_lambda_.10} parent=11 // pred_check_branch
        %151 = sbr.rel (%p149) target = $region20
      $region19: #{_lambda_.10} parent=11 // pred_region
        %p152 = scmp.lt.s32.totalorder %s19, 0
        %s153 = scalar_select %p152, %s19, 0
        %s154 = scalar_lea.vmem %s2, %s153
      $region20: #{_lambda_.10} parent=11 // pred_fallthru
        _
    $region12: #{_lambda_.10} parent=5 // pred_fallthru
      _
    %p155 = scmp.lt.s32.totalorder %s9, 2
    // Predicated region
    $region21: #{_lambda_.10} parent=5 // pred_check
      %p156 = pneg %p155
    $region22: #{_lambda_.10} parent=5 // pred_check_branch
      %158 = sbr.rel (%p156) target = $region24
    $region23: #{_lambda_.10} parent=5 // pred_region
      // Predicated region
      $region25: #{_lambda_.10} parent=23 // pred_check
        %p159 = pneg %p41
      $region26: #{_lambda_.10} parent=23 // pred_check_branch
        %161 = sbr.rel (%p159) target = $region28
      $region27: #{_lambda_.10} parent=23 // pred_region
        %s162 = smul.u32 32, %s16
        %p163 = scmp.lt.s32.totalorder %s162, 63
        %s164 = scalar_select %p163, %s162, 63
        %s165 = smul.addr %s164, 4
        %s166 = scalar_lea.vmem %s0, %s165
        %s167 = smul.u32 32, %s16
      $region28: #{_lambda_.10} parent=23 // pred_fallthru
        _
    $region24: #{_lambda_.10} parent=5 // pred_fallthru
      _
    %p168 = scmp.le.s32.totalorder 1, %s9
    %p169 = scmp.lt.s32.totalorder %s9, 3
    %p170 = pnand %p168, %p169
    %p171 = pneg %p170
    // Predicated region
    $region29: #{_lambda_.10} parent=5 // pred_check
      _
    $region30: #{_lambda_.10} parent=5 // pred_check_branch
      %173 = sbr.rel (%p170) target = $region32
    $region31: #{_lambda_.10} parent=5 // pred_region
      %s174 = ssub.s32 %s9, 1
      %s175 = smul.u32 32, %s18
      %p176 = scmp.lt.s32.totalorder %s175, 63
      %s177 = scalar_select %p176, %s175, 63
      %s178 = smul.addr %s177, 4
      %s179 = scalar_lea.vmem %s0, %s178
      %p180 = pneg %p47
      %p181 = pneg %p44
      %p182 = scmp.lt.s32.totalorder %s19, 0
      %s183 = scalar_select %p182, %s19, 0
      %s184 = smul.addr %s183, 4
      %s185 = scalar_lea.vmem %s1, %s184
      %p186 = pneg %p73
      %p187 = pneg %p70
      %p188 = scmp.lt.s32.totalorder %s19, 0
      %s189 = scalar_select %p188, %s19, 0
      %s190 = scalar_lea.vmem %s2, %s189
      %p191 = pneg %p99
      %p192 = pneg %p96
      %p193 = pneg %p127
      %p194 = pneg %p124
      %s195 = smul.u32 32, %s18
      %p196 = scmp.lt.s32.totalorder %s195, 63
      %s197 = scalar_select %p196, %s195, 63
      %p198 = scmp.lt.s32.totalorder %s19, 0
      %s199 = scalar_select %p198, %s19, 0
      %s200 = sadd.s32 %s199, %s197
      %s201 = smul.addr %s200, 4
      %s202 = scalar_lea.vmem %s3, %s201
      %s203 = smul.u32 32, %s18
      %p204 = scmp.lt.s32.totalorder %s203, 63
      %s205 = scalar_select %p204, %s203, 63
      %s206 = smul.addr %s205, 4
      %s207 = scalar_lea.vmem %s0, %s206
      %s208 = smul.u32 32, %s18
      %p209 = scmp.lt.s32.totalorder %s19, 0
      %s210 = scalar_select %p209, %s19, 0
      %s211 = smul.addr %s210, 4
      %s212 = scalar_lea.vmem %s1, %s211
      %p213 = scmp.lt.s32.totalorder %s19, 0
      %s214 = scalar_select %p213, %s19, 0
      %s215 = scalar_lea.vmem %s2, %s214
      %s216 = smul.u32 32, %s18
      %p217 = scmp.lt.s32.totalorder %s216, 63
      %s218 = scalar_select %p217, %s216, 63
      %p219 = scmp.lt.s32.totalorder %s19, 0
      %s220 = scalar_select %p219, %s19, 0
      %s221 = sadd.s32 %s220, %s218
      %s222 = smul.addr %s221, 4
      %s223 = scalar_lea.vmem %s3, %s222
      %s224 = smul.u32 32, %s18
      %v226 = vld [vmem:[%s207] sm:$0xf]
      %v227 = vld [vmem:[%s207 + $0x4] sm:$0xf]
      %v228 = vld [vmem:[%s207 + $0x8] sm:$0xf]
      %v229 = vld [vmem:[%s207 + $0xc] sm:$0xf]
      %v230 = vld [vmem:[%s207 + $0x10] sm:$0xf]
      %v231 = vld [vmem:[%s207 + $0x14] sm:$0xf]
      %v232 = vld [vmem:[%s207 + $0x18] sm:$0xf]
      %v233 = vld [vmem:[%s207 + $0x1c] sm:$0xf]
      %v234 = vld [vmem:[%s207 + $0x20] sm:$0xf]
      %v235 = vld [vmem:[%s207 + $0x24] sm:$0xf]
      %v236 = vld [vmem:[%s207 + $0x28] sm:$0xf]
      %v237 = vld [vmem:[%s207 + $0x2c] sm:$0xf]
      %v238 = vld [vmem:[%s207 + $0x30] sm:$0xf]
      %v239 = vld [vmem:[%s207 + $0x34] sm:$0xf]
      %v240 = vld [vmem:[%s207 + $0x38] sm:$0xf]
      %v241 = vld [vmem:[%s207 + $0x3c] sm:$0xf]
      %v242 = vld [vmem:[%s207 + $0x40] sm:$0xf]
      %v243 = vld [vmem:[%s207 + $0x44] sm:$0xf]
      %v244 = vld [vmem:[%s207 + $0x48] sm:$0xf]
      %v245 = vld [vmem:[%s207 + $0x4c] sm:$0xf]
      %v246 = vld [vmem:[%s207 + $0x50] sm:$0xf]
      %v247 = vld [vmem:[%s207 + $0x54] sm:$0xf]
      %v248 = vld [vmem:[%s207 + $0x58] sm:$0xf]
      %v249 = vld [vmem:[%s207 + $0x5c] sm:$0xf]
      %v250 = vld [vmem:[%s207 + $0x60] sm:$0xf]
      %v251 = vld [vmem:[%s207 + $0x64] sm:$0xf]
      %v252 = vld [vmem:[%s207 + $0x68] sm:$0xf]
      %v253 = vld [vmem:[%s207 + $0x6c] sm:$0xf]
      %v254 = vld [vmem:[%s207 + $0x70] sm:$0xf]
      %v255 = vld [vmem:[%s207 + $0x74] sm:$0xf]
      %v256 = vld [vmem:[%s207 + $0x78] sm:$0xf]
      %v257 = vld [vmem:[%s207 + $0x7c] sm:$0xf]
      %v258 = vld [vmem:[%s212] sm:$0xf]
      %v259 = vld [vmem:[%s212 + $0x4] sm:$0xf]
      %v260 = vld [vmem:[%s212 + $0x8] sm:$0xf]
      %v261 = vld [vmem:[%s212 + $0xc] sm:$0xf]
      %v262 = vld [vmem:[%s212 + $0x10] sm:$0xf]
      %v263 = vld [vmem:[%s212 + $0x14] sm:$0xf]
      %v264 = vld [vmem:[%s212 + $0x18] sm:$0xf]
      %v265 = vld [vmem:[%s212 + $0x1c] sm:$0xf]
      %v266 = vld [vmem:[%s212 + $0x20] sm:$0xf]
      %v267 = vld [vmem:[%s212 + $0x24] sm:$0xf]
      %v268 = vld [vmem:[%s212 + $0x28] sm:$0xf]
      %v269 = vld [vmem:[%s212 + $0x2c] sm:$0xf]
      %v270 = vld [vmem:[%s212 + $0x30] sm:$0xf]
      %v271 = vld [vmem:[%s212 + $0x34] sm:$0xf]
      %v272 = vld [vmem:[%s212 + $0x38] sm:$0xf]
      %v273 = vld [vmem:[%s212 + $0x3c] sm:$0xf]
      %v274 = vld [vmem:[%s215] sm:$0x1]
      %v276 = vlaneseq
      %v277 = vshrl.u32 %v276, 7
      %v278 = vsub.s32 0, %v277
      %v279 = vrot.slane %v274, %v278
      %v313 = vunpack.c.l.b16 %v226
      %v314 = vunpack.c.l.b16 %v227
      %v315 = vunpack.c.l.b16 %v228
      %v316 = vunpack.c.l.b16 %v229
      %v317 = vunpack.c.l.b16 %v230
      %v318 = vunpack.c.l.b16 %v231
      %v319 = vunpack.c.l.b16 %v232
      %v320 = vunpack.c.l.b16 %v233
      %v321 = vunpack.c.l.b16 %v234
      %v322 = vunpack.c.l.b16 %v235
      %v323 = vunpack.c.l.b16 %v236
      %v324 = vunpack.c.l.b16 %v237
      %v325 = vunpack.c.l.b16 %v238
      %v326 = vunpack.c.l.b16 %v239
      %v327 = vunpack.c.l.b16 %v240
      %v328 = vunpack.c.l.b16 %v241
      %v329 = vunpack.c.l.b16 %v242
      %v330 = vunpack.c.l.b16 %v243
      %v331 = vunpack.c.l.b16 %v244
      %v332 = vunpack.c.l.b16 %v245
      %v333 = vunpack.c.l.b16 %v246
      %v334 = vunpack.c.l.b16 %v247
      %v335 = vunpack.c.l.b16 %v248
      %v336 = vunpack.c.l.b16 %v249
      %v337 = vunpack.c.l.b16 %v250
      %v338 = vunpack.c.l.b16 %v251
      %v339 = vunpack.c.l.b16 %v252
      %v340 = vunpack.c.l.b16 %v253
      %v341 = vunpack.c.l.b16 %v254
      %v342 = vunpack.c.l.b16 %v255
      %v343 = vunpack.c.l.b16 %v256
      %v344 = vunpack.c.l.b16 %v257
      %v345 = vpack.c.b16 %v314, %v313
      %v346 = vpack.c.b16 %v316, %v315
      %v347 = vpack.c.b16 %v318, %v317
      %v348 = vpack.c.b16 %v320, %v319
      %v349 = vpack.c.b16 %v322, %v321
      %v350 = vpack.c.b16 %v324, %v323
      %v351 = vpack.c.b16 %v326, %v325
      %v352 = vpack.c.b16 %v328, %v327
      %v353 = vpack.c.b16 %v330, %v329
      %v354 = vpack.c.b16 %v332, %v331
      %v355 = vpack.c.b16 %v334, %v333
      %v356 = vpack.c.b16 %v336, %v335
      %v357 = vpack.c.b16 %v338, %v337
      %v358 = vpack.c.b16 %v340, %v339
      %v359 = vpack.c.b16 %v342, %v341
      %v360 = vpack.c.b16 %v344, %v343
      %v393 = vunpack.c.l.b16 %v258
      %v394 = vunpack.c.l.b16 %v259
      %v395 = vunpack.c.l.b16 %v260
      %v396 = vunpack.c.l.b16 %v261
      %v397 = vunpack.c.l.b16 %v262
      %v398 = vunpack.c.l.b16 %v263
      %v399 = vunpack.c.l.b16 %v264
      %v400 = vunpack.c.l.b16 %v265
      %v401 = vunpack.c.l.b16 %v266
      %v402 = vunpack.c.l.b16 %v267
      %v403 = vunpack.c.l.b16 %v268
      %v404 = vunpack.c.l.b16 %v269
      %v405 = vunpack.c.l.b16 %v270
      %v406 = vunpack.c.l.b16 %v271
      %v407 = vunpack.c.l.b16 %v272
      %v408 = vunpack.c.l.b16 %v273
      %v409 = vpack.c.b16 %v394, %v393
      %v410 = vpack.c.b16 %v396, %v395
      %v411 = vpack.c.b16 %v398, %v397
      %v412 = vpack.c.b16 %v400, %v399
      %v413 = vpack.c.b16 %v402, %v401
      %v414 = vpack.c.b16 %v404, %v403
      %v415 = vpack.c.b16 %v406, %v405
      %v416 = vpack.c.b16 %v408, %v407
      %425 = vmatprep.subr.bf16.mxu0 0
      %426 = vmatpush1.bf16.msra.mxu0 %v409
      %427 = vmatprep.subr.bf16.mxu0 0
      %428 = vmatpush1.bf16.msra.mxu0 %v410
      %429 = vmatprep.subr.bf16.mxu0 0
      %430 = vmatpush1.bf16.msra.mxu0 %v411
      %431 = vmatprep.subr.bf16.mxu0 0
      %432 = vmatpush1.bf16.msra.mxu0 %v412
      %433 = vmatprep.subr.bf16.mxu0 0
      %434 = vmatpush1.bf16.msra.mxu0 %v413
      %435 = vmatprep.subr.bf16.mxu0 0
      %436 = vmatpush1.bf16.msra.mxu0 %v414
      %437 = vmatprep.subr.bf16.mxu0 0
      %438 = vmatpush1.bf16.msra.mxu0 %v415
      %439 = vmatprep.subr.bf16.mxu0 0
      %440 = vmatpush1.bf16.msra.mxu0 %v416
      %441 = vmatprep.subr.bf16.mxu0 0
      %442 = vmatpush1.bf16.msra.mxu0 0
      %443 = vmatprep.subr.bf16.mxu0 0
      %444 = vmatpush1.bf16.msra.mxu0 0
      %445 = vmatprep.subr.bf16.mxu0 0
      %446 = vmatpush1.bf16.msra.mxu0 0
      %447 = vmatprep.subr.bf16.mxu0 0
      %448 = vmatpush1.bf16.msra.mxu0 0
      %449 = vmatprep.subr.bf16.mxu0 0
      %450 = vmatpush1.bf16.msra.mxu0 0
      %451 = vmatprep.subr.bf16.mxu0 0
      %452 = vmatpush1.bf16.msra.mxu0 0
      %453 = vmatprep.subr.bf16.mxu0 0
      %454 = vmatpush1.bf16.msra.mxu0 0
      %455 = vmatprep.subr.bf16.mxu0 0
      %456 = vmatpush1.bf16.msra.mxu0 0
      %457 = vmatprep.mubr.bf16.mxu0 0
      %458 = vmatmul.mubr.bf16.gmra.mrb[0].mxu0 %v345
      %v459 = vpop.f32.mrb[0].mxu0
      %v460 = vadd.f32 %v279, %v459
      %v461 = vpop.f32.mrb[0].mxu0
      %v462 = vpop.f32.mrb[0].mxu0
      %v463 = vadd.f32 %v279, %v462
      %v464 = vpop.f32.mrb[0].mxu0
      %465 = vmatprep.mubr.bf16.mxu0 0
      %466 = vmatmul.mubr.bf16.gmra.mrb[0].mxu0 %v346
      %v467 = vpop.f32.mrb[0].mxu0
      %v468 = vadd.f32 %v279, %v467
      %v469 = vpop.f32.mrb[0].mxu0
      %v470 = vpop.f32.mrb[0].mxu0
      %v471 = vadd.f32 %v279, %v470
      %v472 = vpop.f32.mrb[0].mxu0
      %473 = vmatprep.mubr.bf16.mxu0 0
      %474 = vmatmul.mubr.bf16.gmra.mrb[0].mxu0 %v347
      %v475 = vpop.f32.mrb[0].mxu0
      %v476 = vadd.f32 %v279, %v475
      %v477 = vpop.f32.mrb[0].mxu0
      %v478 = vpop.f32.mrb[0].mxu0
      %v479 = vadd.f32 %v279, %v478
      %v480 = vpop.f32.mrb[0].mxu0
      %481 = vmatprep.mubr.bf16.mxu0 0
      %482 = vmatmul.mubr.bf16.gmra.mrb[0].mxu0 %v348
      %v483 = vpop.f32.mrb[0].mxu0
      %v484 = vadd.f32 %v279, %v483
      %v485 = vpop.f32.mrb[0].mxu0
      %v486 = vpop.f32.mrb[0].mxu0
      %v487 = vadd.f32 %v279, %v486
      %v488 = vpop.f32.mrb[0].mxu0
      %489 = vmatprep.mubr.bf16.mxu0 0
      %490 = vmatmul.mubr.bf16.gmra.mrb[0].mxu0 %v349
      %v491 = vpop.f32.mrb[0].mxu0
      %v492 = vadd.f32 %v279, %v491
      %v493 = vpop.f32.mrb[0].mxu0
      %v494 = vpop.f32.mrb[0].mxu0
      %v495 = vadd.f32 %v279, %v494
      %v496 = vpop.f32.mrb[0].mxu0
      %497 = vmatprep.mubr.bf16.mxu0 0
      %498 = vmatmul.mubr.bf16.gmra.mrb[0].mxu0 %v350
      %v499 = vpop.f32.mrb[0].mxu0
      %v500 = vadd.f32 %v279, %v499
      %v501 = vpop.f32.mrb[0].mxu0
      %v502 = vpop.f32.mrb[0].mxu0
      %v503 = vadd.f32 %v279, %v502
      %v504 = vpop.f32.mrb[0].mxu0
      %505 = vmatprep.mubr.bf16.mxu0 0
      %506 = vmatmul.mubr.bf16.gmra.mrb[0].mxu0 %v351
      %v507 = vpop.f32.mrb[0].mxu0
      %v508 = vadd.f32 %v279, %v507
      %v509 = vpop.f32.mrb[0].mxu0
      %v510 = vpop.f32.mrb[0].mxu0
      %v511 = vadd.f32 %v279, %v510
      %v512 = vpop.f32.mrb[0].mxu0
      %513 = vmatprep.mubr.bf16.mxu0 0
      %514 = vmatmul.mubr.bf16.gmra.mrb[0].mxu0 %v352
      %v515 = vpop.f32.mrb[0].mxu0
      %v516 = vadd.f32 %v279, %v515
      %v517 = vpop.f32.mrb[0].mxu0
      %v518 = vpop.f32.mrb[0].mxu0
      %v519 = vadd.f32 %v279, %v518
      %v520 = vpop.f32.mrb[0].mxu0
      %521 = vmatprep.mubr.bf16.mxu0 0
      %522 = vmatmul.mubr.bf16.gmra.mrb[0].mxu0 %v353
      %v523 = vpop.f32.mrb[0].mxu0
      %v524 = vadd.f32 %v279, %v523
      %v525 = vpop.f32.mrb[0].mxu0
      %v526 = vpop.f32.mrb[0].mxu0
      %v527 = vadd.f32 %v279, %v526
      %v528 = vpop.f32.mrb[0].mxu0
      %529 = vmatprep.mubr.bf16.mxu0 0
      %530 = vmatmul.mubr.bf16.gmra.mrb[0].mxu0 %v354
      %v531 = vpop.f32.mrb[0].mxu0
      %v532 = vadd.f32 %v279, %v531
      %v533 = vpop.f32.mrb[0].mxu0
      %v534 = vpop.f32.mrb[0].mxu0
      %v535 = vadd.f32 %v279, %v534
      %v536 = vpop.f32.mrb[0].mxu0
      %537 = vmatprep.mubr.bf16.mxu0 0
      %538 = vmatmul.mubr.bf16.gmra.mrb[0].mxu0 %v355
      %v539 = vpop.f32.mrb[0].mxu0
      %v540 = vadd.f32 %v279, %v539
      %v541 = vpop.f32.mrb[0].mxu0
      %v542 = vpop.f32.mrb[0].mxu0
      %v543 = vadd.f32 %v279, %v542
      %v544 = vpop.f32.mrb[0].mxu0
      %545 = vmatprep.mubr.bf16.mxu0 0
      %546 = vmatmul.mubr.bf16.gmra.mrb[0].mxu0 %v356
      %v547 = vpop.f32.mrb[0].mxu0
      %v548 = vadd.f32 %v279, %v547
      %v549 = vpop.f32.mrb[0].mxu0
      %v550 = vpop.f32.mrb[0].mxu0
      %v551 = vadd.f32 %v279, %v550
      %v552 = vpop.f32.mrb[0].mxu0
      %553 = vmatprep.mubr.bf16.mxu0 0
      %554 = vmatmul.mubr.bf16.gmra.mrb[0].mxu0 %v357
      %v555 = vpop.f32.mrb[0].mxu0
      %v556 = vadd.f32 %v279, %v555
      %v557 = vpop.f32.mrb[0].mxu0
      %v558 = vpop.f32.mrb[0].mxu0
      %v559 = vadd.f32 %v279, %v558
      %v560 = vpop.f32.mrb[0].mxu0
      %561 = vmatprep.mubr.bf16.mxu0 0
      %562 = vmatmul.mubr.bf16.gmra.mrb[0].mxu0 %v358
      %v563 = vpop.f32.mrb[0].mxu0
      %v564 = vadd.f32 %v279, %v563
      %v565 = vpop.f32.mrb[0].mxu0
      %v566 = vpop.f32.mrb[0].mxu0
      %v567 = vadd.f32 %v279, %v566
      %v568 = vpop.f32.mrb[0].mxu0
      %569 = vmatprep.mubr.bf16.mxu0 0
      %570 = vmatmul.mubr.bf16.gmra.mrb[0].mxu0 %v359
      %v571 = vpop.f32.mrb[0].mxu0
      %v572 = vadd.f32 %v279, %v571
      %v573 = vpop.f32.mrb[0].mxu0
      %v574 = vpop.f32.mrb[0].mxu0
      %v575 = vadd.f32 %v279, %v574
      %v576 = vpop.f32.mrb[0].mxu0
      %577 = vmatprep.mubr.bf16.mxu0 0
      %578 = vmatmul.mubr.bf16.gmra.mrb[0].mxu0 %v360
      %v579 = vpop.f32.mrb[0].mxu0
      %v580 = vadd.f32 %v279, %v579
      %v581 = vpop.f32.mrb[0].mxu0
      %v582 = vpop.f32.mrb[0].mxu0
      %v583 = vadd.f32 %v279, %v582
      %v584 = vpop.f32.mrb[0].mxu0
      %585 = vdwg.mxu0
      %v586 = vpack.c.bf16 %v463, %v460
      %v587 = vpack.c.bf16 %v471, %v468
      %v588 = vpack.c.bf16 %v479, %v476
      %v589 = vpack.c.bf16 %v487, %v484
      %v590 = vpack.c.bf16 %v495, %v492
      %v591 = vpack.c.bf16 %v503, %v500
      %v592 = vpack.c.bf16 %v511, %v508
      %v593 = vpack.c.bf16 %v519, %v516
      %v594 = vpack.c.bf16 %v527, %v524
      %v595 = vpack.c.bf16 %v535, %v532
      %v596 = vpack.c.bf16 %v543, %v540
      %v597 = vpack.c.bf16 %v551, %v548
      %v598 = vpack.c.bf16 %v559, %v556
      %v599 = vpack.c.bf16 %v567, %v564
      %v600 = vpack.c.bf16 %v575, %v572
      %v601 = vpack.c.bf16 %v583, %v580
      %v618 = vunpack.c.l.b16 %v586
      %v619 = vunpack.c.h.b16 %v586
      %v620 = vunpack.c.l.b16 %v587
      %v621 = vunpack.c.h.b16 %v587
      %v622 = vunpack.c.l.b16 %v588
      %v623 = vunpack.c.h.b16 %v588
      %v624 = vunpack.c.l.b16 %v589
      %v625 = vunpack.c.h.b16 %v589
      %v626 = vunpack.c.l.b16 %v590
      %v627 = vunpack.c.h.b16 %v590
      %v628 = vunpack.c.l.b16 %v591
      %v629 = vunpack.c.h.b16 %v591
      %v630 = vunpack.c.l.b16 %v592
      %v631 = vunpack.c.h.b16 %v592
      %v632 = vunpack.c.l.b16 %v593
      %v633 = vunpack.c.h.b16 %v593
      %v634 = vunpack.c.l.b16 %v594
      %v635 = vunpack.c.h.b16 %v594
      %v636 = vunpack.c.l.b16 %v595
      %v637 = vunpack.c.h.b16 %v595
      %v638 = vunpack.c.l.b16 %v596
      %v639 = vunpack.c.h.b16 %v596
      %v640 = vunpack.c.l.b16 %v597
      %v641 = vunpack.c.h.b16 %v597
      %v642 = vunpack.c.l.b16 %v598
      %v643 = vunpack.c.h.b16 %v598
      %v644 = vunpack.c.l.b16 %v599
      %v645 = vunpack.c.h.b16 %v599
      %v646 = vunpack.c.l.b16 %v600
      %v647 = vunpack.c.h.b16 %v600
      %v648 = vunpack.c.l.b16 %v601
      %v649 = vunpack.c.h.b16 %v601
      %v650 = vpack.c.b16 %v618, %v618
      %v651 = vpack.c.b16 %v619, %v619
      %v652 = vpack.c.b16 %v620, %v620
      %v653 = vpack.c.b16 %v621, %v621
      %v654 = vpack.c.b16 %v622, %v622
      %v655 = vpack.c.b16 %v623, %v623
      %v656 = vpack.c.b16 %v624, %v624
      %v657 = vpack.c.b16 %v625, %v625
      %v658 = vpack.c.b16 %v626, %v626
      %v659 = vpack.c.b16 %v627, %v627
      %v660 = vpack.c.b16 %v628, %v628
      %v661 = vpack.c.b16 %v629, %v629
      %v662 = vpack.c.b16 %v630, %v630
      %v663 = vpack.c.b16 %v631, %v631
      %v664 = vpack.c.b16 %v632, %v632
      %v665 = vpack.c.b16 %v633, %v633
      %v666 = vpack.c.b16 %v634, %v634
      %v667 = vpack.c.b16 %v635, %v635
      %v668 = vpack.c.b16 %v636, %v636
      %v669 = vpack.c.b16 %v637, %v637
      %v670 = vpack.c.b16 %v638, %v638
      %v671 = vpack.c.b16 %v639, %v639
      %v672 = vpack.c.b16 %v640, %v640
      %v673 = vpack.c.b16 %v641, %v641
      %v674 = vpack.c.b16 %v642, %v642
      %v675 = vpack.c.b16 %v643, %v643
      %v676 = vpack.c.b16 %v644, %v644
      %v677 = vpack.c.b16 %v645, %v645
      %v678 = vpack.c.b16 %v646, %v646
      %v679 = vpack.c.b16 %v647, %v647
      %v680 = vpack.c.b16 %v648, %v648
      %v681 = vpack.c.b16 %v649, %v649
      %714 = vst [vmem:[%s223] sm:$0xf] %v650
      %715 = vst [vmem:[%s223 + $0x4] sm:$0xf] %v651
      %716 = vst [vmem:[%s223 + $0x8] sm:$0xf] %v652
      %717 = vst [vmem:[%s223 + $0xc] sm:$0xf] %v653
      %718 = vst [vmem:[%s223 + $0x10] sm:$0xf] %v654
      %719 = vst [vmem:[%s223 + $0x14] sm:$0xf] %v655
      %720 = vst [vmem:[%s223 + $0x18] sm:$0xf] %v656
      %721 = vst [vmem:[%s223 + $0x1c] sm:$0xf] %v657
      %722 = vst [vmem:[%s223 + $0x20] sm:$0xf] %v658
      %723 = vst [vmem:[%s223 + $0x24] sm:$0xf] %v659
      %724 = vst [vmem:[%s223 + $0x28] sm:$0xf] %v660
      %725 = vst [vmem:[%s223 + $0x2c] sm:$0xf] %v661
      %726 = vst [vmem:[%s223 + $0x30] sm:$0xf] %v662
      %727 = vst [vmem:[%s223 + $0x34] sm:$0xf] %v663
      %728 = vst [vmem:[%s223 + $0x38] sm:$0xf] %v664
      %729 = vst [vmem:[%s223 + $0x3c] sm:$0xf] %v665
      %730 = vst [vmem:[%s223 + $0x40] sm:$0xf] %v666
      %731 = vst [vmem:[%s223 + $0x44] sm:$0xf] %v667
      %732 = vst [vmem:[%s223 + $0x48] sm:$0xf] %v668
      %733 = vst [vmem:[%s223 + $0x4c] sm:$0xf] %v669
      %734 = vst [vmem:[%s223 + $0x50] sm:$0xf] %v670
      %735 = vst [vmem:[%s223 + $0x54] sm:$0xf] %v671
      %736 = vst [vmem:[%s223 + $0x58] sm:$0xf] %v672
      %737 = vst [vmem:[%s223 + $0x5c] sm:$0xf] %v673
      %738 = vst [vmem:[%s223 + $0x60] sm:$0xf] %v674
      %739 = vst [vmem:[%s223 + $0x64] sm:$0xf] %v675
      %740 = vst [vmem:[%s223 + $0x68] sm:$0xf] %v676
      %741 = vst [vmem:[%s223 + $0x6c] sm:$0xf] %v677
      %742 = vst [vmem:[%s223 + $0x70] sm:$0xf] %v678
      %743 = vst [vmem:[%s223 + $0x74] sm:$0xf] %v679
      %744 = vst [vmem:[%s223 + $0x78] sm:$0xf] %v680
      %745 = vst [vmem:[%s223 + $0x7c] sm:$0xf] %v681
      %s746 = smul.u32 32, %s18
      %p747 = scmp.lt.s32.totalorder %s746, 63
      %s748 = scalar_select %p747, %s746, 63
      %p749 = scmp.lt.s32.totalorder %s19, 0
      %s750 = scalar_select %p749, %s19, 0
      %s751 = sadd.s32 %s750, %s748
      %s752 = smul.addr %s751, 4
      %s753 = scalar_lea.vmem %s3, %s752
      // Predicated region
      $region33: #{_lambda_.10} parent=31 // pred_check
        %p754 = pneg %p124
      $region34: #{_lambda_.10} parent=31 // pred_check_branch
        %756 = sbr.rel (%p754) target = $region36
      $region35: #{_lambda_.10} parent=31 // pred_region
        %s757 = smul.u32 32, %s18
      $region36: #{_lambda_.10} parent=31 // pred_fallthru
        _
    $region32: #{_lambda_.10} parent=5 // pred_fallthru
      _
    %p758 = scmp.le.s32.totalorder 2, %s9
    // Predicated region
    $region37: #{_lambda_.10} parent=5 // pred_check
      %p759 = pneg %p758
    $region38: #{_lambda_.10} parent=5 // pred_check_branch
      %761 = sbr.rel (%p759) target = $region40
    $region39: #{_lambda_.10} parent=5 // pred_region
      %s762 = ssub.s32 %s9, 2
      // Predicated region
      $region41: #{_lambda_.10} parent=39 // pred_check
        %p763 = pneg %p130
      $region42: #{_lambda_.10} parent=39 // pred_check_branch
        %765 = sbr.rel (%p763) target = $region44
      $region43: #{_lambda_.10} parent=39 // pred_region
        %s766 = smul.u32 32, %s20
        %p767 = scmp.lt.s32.totalorder %s766, 63
        %s768 = scalar_select %p767, %s766, 63
        %p769 = scmp.lt.s32.totalorder %s21, 0
        %s770 = scalar_select %p769, %s21, 0
        %s771 = sadd.s32 %s770, %s768
        %s772 = smul.addr %s771, 4
        %s773 = scalar_lea.vmem %s3, %s772
      $region44: #{_lambda_.10} parent=39 // pred_fallthru
        _
    $region40: #{_lambda_.10} parent=5 // pred_fallthru
      _
  $region6: #{_lambda_.10} parent=0 // loop_footer
    %s13 = sadd.s32 1, %s9
  $region7: #{_lambda_.10} parent=0 // loop_footer_branch
    %8 = sbr.rel target = $region3
  $region8: #{_lambda_.10} parent=0 // loop_exit
    _

// kernel: _lambda_.11
$region0: #{_lambda_.11}
  #allocation0 [shape = 'u32[]', space=smem, size = 0x4, offset = 0x4, fixed_abs, tag = 'smem constant byte address 0x4 - core index']
  #allocation1 [shape = 'u32[144,128]{1,0:T(1,128)}', space=vmem, size = 0x12000, scoped, tag = 'internal scratch']
  %s0 = inlined_call_operand.vmem [shape: bf16[128,128], index: 0, kind: input, shape index: {}]
  %s1 = inlined_call_operand.vmem [shape: bf16[128,128], index: 1, kind: input, shape index: {}]
  %s2 = inlined_call_operand.vmem [shape: f32[1,128], index: 2, kind: input, shape index: {}]
  %s3 = inlined_call_operand.vmem [shape: bf16[128,128], index: 3, kind: output, shape index: {0}]
  %s4 = inlined_call_operand.vmem [shape: f32[2,8,128], index: 4, kind: output, shape index: {1}]
  %5 = xla_tuple %s3, %s4
  %s6 = sld [smem:[#allocation0]]
  $region53: #{_lambda_.11} parent=0
    _
  %s8 = ssub.s32 1, %s6
  %s9 = scalar_select 0, %s8, %s6
  loop: start=0, step=1, limit=4
  $region2: #{_lambda_.11} parent=0 // loop_pre_header
    _
  $region3: #{_lambda_.11} parent=0 // loop_header
    %s11 = sphi 0, %s15
    %p12 = scmp.ge.s32.totalorder %s11, 4
    %s18 = sphi 0, %s30
    %s19 = sphi 0, %s26
    %s20 = sphi 0, %s18
    %s21 = sphi 0, %s19
    %s22 = sphi 0, %s20
    %s23 = sphi 0, %s21
    %s33 = sphi 0, %s35
    %s36 = sphi 0, %s33
    %s37 = sphi 0, %s36
    %s53 = sphi 0, %s37
    %s59 = sphi 0, %s61
    %s62 = sphi 0, %s59
    %s63 = sphi 0, %s62
    %s79 = sphi 0, %s63
    %s85 = sphi 0, %s87
    %s88 = sphi 0, %s85
    %s89 = sphi 0, %s88
    %s105 = sphi 0, %s89
    %s113 = sphi 0, %s115
    %s116 = sphi 0, %s113
    %s117 = sphi 0, %s116
    %s133 = sphi 0, %s117
    %s141 = sphi 0, %s143
    %s144 = sphi 0, %s141
    %s145 = sphi 0, %s144
    %s161 = sphi 0, %s145
  $region4: #{_lambda_.11} parent=0 // loop_header_branch
    %14 = sbr.rel (%p12) target = $region8
  $region5: #{_lambda_.11} parent=0 // loop_body
    %s16 = ssub.s32 %s11, 1
    %s17 = ssub.s32 %s11, 2
    %s24 = sadd.s32 1, %s19
    %p25 = scmp.ge.s32.totalorder %s24, 1
    %s26 = scalar_select %p25, 0, %s24
    %s27 = sadd.s32 1, %s18
    %s28 = scalar_select %p25, %s27, %s18
    %p29 = scmp.ge.s32.totalorder %s28, 2
    %s30 = scalar_select %p29, 0, %s28
    %s31 = ssub.s32 %s18, %s30
    %p32 = scmp.eq.s32.totalorder %s31, 0
    %s34 = sadd.s32 %s33, 1
    %s35 = scalar_select %p32, %s33, %s34
    %p38 = pneg %p32
    %p39 = scmp.eq.s32.totalorder %s11, 1
    %p40 = por %p38, %p39
    %p41 = scmp.ne.s32.totalorder %s33, %s36
    %p42 = scmp.eq.s32.totalorder %s11, 0
    %p43 = por %p41, %p42
    %p44 = scmp.ne.s32.totalorder %s33, %s36
    %p45 = scmp.eq.s32.totalorder %s16, 1
    %p46 = por %p44, %p45
    %p47 = scmp.ne.s32.totalorder %s36, %s37
    %p48 = scmp.eq.s32.totalorder %s16, 0
    %p49 = por %p47, %p48
    %p50 = scmp.ne.s32.totalorder %s36, %s37
    %p51 = scmp.eq.s32.totalorder %s17, 1
    %p52 = por %p50, %p51
    %p54 = scmp.ne.s32.totalorder %s37, %s53
    %p55 = scmp.eq.s32.totalorder %s17, 0
    %p56 = por %p54, %p55
    %s57 = ssub.s32 %s19, %s26
    %p58 = scmp.eq.s32.totalorder %s57, 0
    %s60 = sadd.s32 %s59, 1
    %s61 = scalar_select %p58, %s59, %s60
    %p64 = pneg %p58
    %p65 = scmp.eq.s32.totalorder %s11, 1
    %p66 = por %p64, %p65
    %p67 = scmp.ne.s32.totalorder %s59, %s62
    %p68 = scmp.eq.s32.totalorder %s11, 0
    %p69 = por %p67, %p68
    %p70 = scmp.ne.s32.totalorder %s59, %s62
    %p71 = scmp.eq.s32.totalorder %s16, 1
    %p72 = por %p70, %p71
    %p73 = scmp.ne.s32.totalorder %s62, %s63
    %p74 = scmp.eq.s32.totalorder %s16, 0
    %p75 = por %p73, %p74
    %p76 = scmp.ne.s32.totalorder %s62, %s63
    %p77 = scmp.eq.s32.totalorder %s17, 1
    %p78 = por %p76, %p77
    %p80 = scmp.ne.s32.totalorder %s63, %s79
    %p81 = scmp.eq.s32.totalorder %s17, 0
    %p82 = por %p80, %p81
    %s83 = ssub.s32 %s19, %s26
    %p84 = scmp.eq.s32.totalorder %s83, 0
    %s86 = sadd.s32 %s85, 1
    %s87 = scalar_select %p84, %s85, %s86
    %p90 = pneg %p84
    %p91 = scmp.eq.s32.totalorder %s11, 1
    %p92 = por %p90, %p91
    %p93 = scmp.ne.s32.totalorder %s85, %s88
    %p94 = scmp.eq.s32.totalorder %s11, 0
    %p95 = por %p93, %p94
    %p96 = scmp.ne.s32.totalorder %s85, %s88
    %p97 = scmp.eq.s32.totalorder %s16, 1
    %p98 = por %p96, %p97
    %p99 = scmp.ne.s32.totalorder %s88, %s89
    %p100 = scmp.eq.s32.totalorder %s16, 0
    %p101 = por %p99, %p100
    %p102 = scmp.ne.s32.totalorder %s88, %s89
    %p103 = scmp.eq.s32.totalorder %s17, 1
    %p104 = por %p102, %p103
    %p106 = scmp.ne.s32.totalorder %s89, %s105
    %p107 = scmp.eq.s32.totalorder %s17, 0
    %p108 = por %p106, %p107
    %s109 = ssub.s32 %s18, %s30
    %s110 = ssub.s32 %s19, %s26
    %s111 = sor.u32 %s109, %s110
    %p112 = scmp.eq.s32.totalorder %s111, 0
    %s114 = sadd.s32 %s113, 1
    %s115 = scalar_select %p112, %s113, %s114
    %p118 = pneg %p112
    %p119 = scmp.eq.s32.totalorder %s11, 1
    %p120 = por %p118, %p119
    %p121 = scmp.ne.s32.totalorder %s113, %s116
    %p122 = scmp.eq.s32.totalorder %s11, 0
    %p123 = por %p121, %p122
    %p124 = scmp.ne.s32.totalorder %s113, %s116
    %p125 = scmp.eq.s32.totalorder %s16, 1
    %p126 = por %p124, %p125
    %p127 = scmp.ne.s32.totalorder %s116, %s117
    %p128 = scmp.eq.s32.totalorder %s16, 0
    %p129 = por %p127, %p128
    %p130 = scmp.ne.s32.totalorder %s116, %s117
    %p131 = scmp.eq.s32.totalorder %s17, 1
    %p132 = por %p130, %p131
    %p134 = scmp.ne.s32.totalorder %s117, %s133
    %p135 = scmp.eq.s32.totalorder %s17, 0
    %p136 = por %p134, %p135
    %s137 = ssub.s32 %s18, %s30
    %s138 = ssub.s32 %s19, %s26
    %s139 = sor.u32 %s137, %s138
    %p140 = scmp.eq.s32.totalorder %s139, 0
    %s142 = sadd.s32 %s141, 1
    %s143 = scalar_select %p140, %s141, %s142
    %p146 = pneg %p140
    %p147 = scmp.eq.s32.totalorder %s11, 1
    %p148 = por %p146, %p147
    %p149 = scmp.ne.s32.totalorder %s141, %s144
    %p150 = scmp.eq.s32.totalorder %s11, 0
    %p151 = por %p149, %p150
    %p152 = scmp.ne.s32.totalorder %s141, %s144
    %p153 = scmp.eq.s32.totalorder %s16, 1
    %p154 = por %p152, %p153
    %p155 = scmp.ne.s32.totalorder %s144, %s145
    %p156 = scmp.eq.s32.totalorder %s16, 0
    %p157 = por %p155, %p156
    %p158 = scmp.ne.s32.totalorder %s144, %s145
    %p159 = scmp.eq.s32.totalorder %s17, 1
    %p160 = por %p158, %p159
    %p162 = scmp.ne.s32.totalorder %s145, %s161
    %p163 = scmp.eq.s32.totalorder %s17, 0
    %p164 = por %p162, %p163
    %p165 = scmp.le.s32.totalorder 1, %s11
    %p166 = scmp.lt.s32.totalorder %s11, 3
    %p167 = pnand %p165, %p166
    %p168 = pneg %p167
    // Predicated region
    $region9: #{_lambda_.11} parent=5 // pred_check
      _
    $region10: #{_lambda_.11} parent=5 // pred_check_branch
      %170 = sbr.rel (%p167) target = $region12
    $region11: #{_lambda_.11} parent=5 // pred_region
      %s171 = ssub.s32 %s11, 1
      // Predicated region
      $region13: #{_lambda_.11} parent=11 // pred_check
        %p172 = pneg %p75
      $region14: #{_lambda_.11} parent=11 // pred_check_branch
        %174 = sbr.rel (%p172) target = $region16
      $region15: #{_lambda_.11} parent=11 // pred_region
        %p175 = scmp.lt.s32.totalorder %s21, 0
        %s176 = scalar_select %p175, %s21, 0
        %s177 = smul.addr %s176, 4
        %s178 = scalar_lea.vmem %s1, %s177
      $region16: #{_lambda_.11} parent=11 // pred_fallthru
        _
      // Predicated region
      $region17: #{_lambda_.11} parent=11 // pred_check
        %p179 = pneg %p101
      $region18: #{_lambda_.11} parent=11 // pred_check_branch
        %181 = sbr.rel (%p179) target = $region20
      $region19: #{_lambda_.11} parent=11 // pred_region
        %p182 = scmp.lt.s32.totalorder %s21, 0
        %s183 = scalar_select %p182, %s21, 0
        %s184 = scalar_lea.vmem %s2, %s183
      $region20: #{_lambda_.11} parent=11 // pred_fallthru
        _
    $region12: #{_lambda_.11} parent=5 // pred_fallthru
      _
    %p185 = scmp.lt.s32.totalorder %s11, 2
    // Predicated region
    $region21: #{_lambda_.11} parent=5 // pred_check
      %p186 = pneg %p185
    $region22: #{_lambda_.11} parent=5 // pred_check_branch
      %188 = sbr.rel (%p186) target = $region24
    $region23: #{_lambda_.11} parent=5 // pred_region
      // Predicated region
      $region25: #{_lambda_.11} parent=23 // pred_check
        %p189 = pneg %p43
      $region26: #{_lambda_.11} parent=23 // pred_check_branch
        %191 = sbr.rel (%p189) target = $region28
      $region27: #{_lambda_.11} parent=23 // pred_region
        %s192 = smul.u32 8, %s18
        %p193 = scmp.lt.s32.totalorder %s192, 15
        %s194 = scalar_select %p193, %s192, 15
        %s195 = smul.addr %s194, 4
        %s196 = scalar_lea.vmem %s0, %s195
        %s197 = smul.u32 8, %s18
      $region28: #{_lambda_.11} parent=23 // pred_fallthru
        _
    $region24: #{_lambda_.11} parent=5 // pred_fallthru
      _
    %p198 = scmp.le.s32.totalorder 1, %s11
    %p199 = scmp.lt.s32.totalorder %s11, 3
    %p200 = pnand %p198, %p199
    %p201 = pneg %p200
    // Predicated region
    $region29: #{_lambda_.11} parent=5 // pred_check
      _
    $region30: #{_lambda_.11} parent=5 // pred_check_branch
      %203 = sbr.rel (%p200) target = $region32
    $region31: #{_lambda_.11} parent=5 // pred_region
      %s204 = ssub.s32 %s11, 1
      %s205 = smul.u32 8, %s20
      %p206 = scmp.lt.s32.totalorder %s205, 15
      %s207 = scalar_select %p206, %s205, 15
      %s208 = smul.addr %s207, 4
      %s209 = scalar_lea.vmem %s0, %s208
      %p210 = pneg %p49
      %p211 = pneg %p46
      %p212 = scmp.lt.s32.totalorder %s21, 0
      %s213 = scalar_select %p212, %s21, 0
      %s214 = smul.addr %s213, 4
      %s215 = scalar_lea.vmem %s1, %s214
      %p216 = pneg %p75
      %p217 = pneg %p72
      %p218 = scmp.lt.s32.totalorder %s21, 0
      %s219 = scalar_select %p218, %s21, 0
      %s220 = scalar_lea.vmem %s2, %s219
      %p221 = pneg %p101
      %p222 = pneg %p98
      %p223 = pneg %p129
      %p224 = pneg %p126
      %s225 = smul.u32 8, %s20
      %p226 = scmp.lt.s32.totalorder %s225, 15
      %s227 = scalar_select %p226, %s225, 15
      %p228 = scmp.lt.s32.totalorder %s21, 0
      %s229 = scalar_select %p228, %s21, 0
      %s230 = sadd.s32 %s229, %s227
      %s231 = smul.addr %s230, 4
      %s232 = scalar_lea.vmem %s3, %s231
      %p233 = pneg %p157
      %p234 = pneg %p154
      %p235 = scmp.lt.s32.totalorder %s20, 1
      %s236 = scalar_select %p235, %s20, 1
      %p237 = scmp.lt.s32.totalorder %s21, 0
      %s238 = scalar_select %p237, %s21, 0
      %s239 = sadd.s32 %s238, %s236
      %s240 = smul.addr %s239, 8
      %s241 = scalar_lea.vmem %s4, %s240
      %s242 = smul.u32 8, %s20
      %p243 = scmp.lt.s32.totalorder %s242, 15
      %s244 = scalar_select %p243, %s242, 15
      %s245 = smul.addr %s244, 4
      %s246 = scalar_lea.vmem %s0, %s245
      %s247 = smul.u32 8, %s20
      %p248 = scmp.lt.s32.totalorder %s21, 0
      %s249 = scalar_select %p248, %s21, 0
      %s250 = smul.addr %s249, 4
      %s251 = scalar_lea.vmem %s1, %s250
      %p252 = scmp.lt.s32.totalorder %s21, 0
      %s253 = scalar_select %p252, %s21, 0
      %s254 = scalar_lea.vmem %s2, %s253
      %s255 = smul.u32 8, %s20
      %p256 = scmp.lt.s32.totalorder %s255, 15
      %s257 = scalar_select %p256, %s255, 15
      %p258 = scmp.lt.s32.totalorder %s21, 0
      %s259 = scalar_select %p258, %s21, 0
      %s260 = sadd.s32 %s259, %s257
      %s261 = smul.addr %s260, 4
      %s262 = scalar_lea.vmem %s3, %s261
      %s263 = smul.u32 8, %s20
      %p264 = scmp.lt.s32.totalorder %s20, 1
      %s265 = scalar_select %p264, %s20, 1
      %p266 = scmp.lt.s32.totalorder %s21, 0
      %s267 = scalar_select %p266, %s21, 0
      %s268 = sadd.s32 %s267, %s265
      %s269 = smul.addr %s268, 8
      %s270 = scalar_lea.vmem %s4, %s269
      %v272 = vld [vmem:[%s246] sm:$0xf]
      %v273 = vld [vmem:[%s246 + $0x4] sm:$0xf]
      %v274 = vld [vmem:[%s246 + $0x8] sm:$0xf]
      %v275 = vld [vmem:[%s246 + $0xc] sm:$0xf]
      %v276 = vld [vmem:[%s246 + $0x10] sm:$0xf]
      %v277 = vld [vmem:[%s246 + $0x14] sm:$0xf]
      %v278 = vld [vmem:[%s246 + $0x18] sm:$0xf]
      %v279 = vld [vmem:[%s246 + $0x1c] sm:$0xf]
      %v280 = vunpack.c.l.bf16 %v272
      %v281 = vunpack.c.l.bf16 %v273
      %v282 = vunpack.c.l.bf16 %v274
      %v283 = vunpack.c.l.bf16 %v275
      %v284 = vunpack.c.l.bf16 %v276
      %v285 = vunpack.c.l.bf16 %v277
      %v286 = vunpack.c.l.bf16 %v278
      %v287 = vunpack.c.l.bf16 %v279
      %vm288 = vcmp.gt.f32.partialorder %v280, 0.0
      %vm289 = vcmp.gt.f32.partialorder %v281, 0.0
      %vm290 = vcmp.gt.f32.partialorder %v282, 0.0
      %vm291 = vcmp.gt.f32.partialorder %v283, 0.0
      %vm292 = vcmp.gt.f32.partialorder %v284, 0.0
      %vm293 = vcmp.gt.f32.partialorder %v285, 0.0
      %vm294 = vcmp.gt.f32.partialorder %v286, 0.0
      %vm295 = vcmp.gt.f32.partialorder %v287, 0.0
      %v296 = vmul.f32 %v280, 0.2
      %v297 = vmul.f32 %v281, 0.2
      %v298 = vmul.f32 %v282, 0.2
      %v299 = vmul.f32 %v283, 0.2
      %v300 = vmul.f32 %v284, 0.2
      %v301 = vmul.f32 %v285, 0.2
      %v302 = vmul.f32 %v286, 0.2
      %v303 = vmul.f32 %v287, 0.2
      %v304 = vsel %vm288, %v280, %v296
      %v305 = vsel %vm289, %v281, %v297
      %v306 = vsel %vm290, %v282, %v298
      %v307 = vsel %vm291, %v283, %v299
      %v308 = vsel %vm292, %v284, %v300
      %v309 = vsel %vm293, %v285, %v301
      %v310 = vsel %vm294, %v286, %v302
      %v311 = vsel %vm295, %v287, %v303
      %v312 = vpack.c.bf16 %v305, %v304
      %v313 = vpack.c.bf16 %v307, %v306
      %v314 = vpack.c.bf16 %v309, %v308
      %v315 = vpack.c.bf16 %v311, %v310
      %v316 = vld [vmem:[%s251] sm:$0xf]
      %v317 = vld [vmem:[%s251 + $0x4] sm:$0xf]
      %v318 = vld [vmem:[%s251 + $0x8] sm:$0xf]
      %v319 = vld [vmem:[%s251 + $0xc] sm:$0xf]
      %v320 = vld [vmem:[%s251 + $0x10] sm:$0xf]
      %v321 = vld [vmem:[%s251 + $0x14] sm:$0xf]
      %v322 = vld [vmem:[%s251 + $0x18] sm:$0xf]
      %v323 = vld [vmem:[%s251 + $0x1c] sm:$0xf]
      %v324 = vld [vmem:[%s251 + $0x20] sm:$0xf]
      %v325 = vld [vmem:[%s251 + $0x24] sm:$0xf]
      %v326 = vld [vmem:[%s251 + $0x28] sm:$0xf]
      %v327 = vld [vmem:[%s251 + $0x2c] sm:$0xf]
      %v328 = vld [vmem:[%s251 + $0x30] sm:$0xf]
      %v329 = vld [vmem:[%s251 + $0x34] sm:$0xf]
      %v330 = vld [vmem:[%s251 + $0x38] sm:$0xf]
      %v331 = vld [vmem:[%s251 + $0x3c] sm:$0xf]
      %v332 = vld [vmem:[%s254] sm:$0x1]
      %v334 = vlaneseq
      %v335 = vshrl.u32 %v334, 7
      %v336 = vsub.s32 0, %v335
      %v337 = vrot.slane %v332, %v336
      %v355 = vunpack.c.l.b16 %v316
      %v356 = vunpack.c.l.b16 %v317
      %v357 = vunpack.c.l.b16 %v318
      %v358 = vunpack.c.l.b16 %v319
      %v359 = vunpack.c.l.b16 %v320
      %v360 = vunpack.c.l.b16 %v321
      %v361 = vunpack.c.l.b16 %v322
      %v362 = vunpack.c.l.b16 %v323
      %v363 = vunpack.c.l.b16 %v324
      %v364 = vunpack.c.l.b16 %v325
      %v365 = vunpack.c.l.b16 %v326
      %v366 = vunpack.c.l.b16 %v327
      %v367 = vunpack.c.l.b16 %v328
      %v368 = vunpack.c.l.b16 %v329
      %v369 = vunpack.c.l.b16 %v330
      %v370 = vunpack.c.l.b16 %v331
      %v371 = vpack.c.b16 %v356, %v355
      %v372 = vpack.c.b16 %v358, %v357
      %v373 = vpack.c.b16 %v360, %v359
      %v374 = vpack.c.b16 %v362, %v361
      %v375 = vpack.c.b16 %v364, %v363
      %v376 = vpack.c.b16 %v366, %v365
      %v377 = vpack.c.b16 %v368, %v367
      %v378 = vpack.c.b16 %v370, %v369
      %387 = vmatprep.subr.bf16.mxu0 0
      %388 = vmatpush1.bf16.msra.mxu0 %v371
      %389 = vmatprep.subr.bf16.mxu0 0
      %390 = vmatpush1.bf16.msra.mxu0 %v372
      %391 = vmatprep.subr.bf16.mxu0 0
      %392 = vmatpush1.bf16.msra.mxu0 %v373
      %393 = vmatprep.subr.bf16.mxu0 0
      %394 = vmatpush1.bf16.msra.mxu0 %v374
      %395 = vmatprep.subr.bf16.mxu0 0
      %396 = vmatpush1.bf16.msra.mxu0 %v375
      %397 = vmatprep.subr.bf16.mxu0 0
      %398 = vmatpush1.bf16.msra.mxu0 %v376
      %399 = vmatprep.subr.bf16.mxu0 0
      %400 = vmatpush1.bf16.msra.mxu0 %v377
      %401 = vmatprep.subr.bf16.mxu0 0
      %402 = vmatpush1.bf16.msra.mxu0 %v378
      %403 = vmatprep.subr.bf16.mxu0 0
      %404 = vmatpush1.bf16.msra.mxu0 0
      %405 = vmatprep.subr.bf16.mxu0 0
      %406 = vmatpush1.bf16.msra.mxu0 0
      %407 = vmatprep.subr.bf16.mxu0 0
      %408 = vmatpush1.bf16.msra.mxu0 0
      %409 = vmatprep.subr.bf16.mxu0 0
      %410 = vmatpush1.bf16.msra.mxu0 0
      %411 = vmatprep.subr.bf16.mxu0 0
      %412 = vmatpush1.bf16.msra.mxu0 0
      %413 = vmatprep.subr.bf16.mxu0 0
      %414 = vmatpush1.bf16.msra.mxu0 0
      %415 = vmatprep.subr.bf16.mxu0 0
      %416 = vmatpush1.bf16.msra.mxu0 0
      %417 = vmatprep.subr.bf16.mxu0 0
      %418 = vmatpush1.bf16.msra.mxu0 0
      %419 = vmatprep.mubr.bf16.mxu0 0
      %420 = vmatmul.mubr.bf16.gmra.mrb[0].mxu0 %v312
      %v421 = vpop.f32.mrb[0].mxu0
      %v422 = vadd.f32 %v337, %v421
      %v423 = vpop.f32.mrb[0].mxu0
      %v424 = vpop.f32.mrb[0].mxu0
      %v425 = vadd.f32 %v337, %v424
      %v426 = vpop.f32.mrb[0].mxu0
      %427 = vmatprep.mubr.bf16.mxu0 0
      %428 = vmatmul.mubr.bf16.gmra.mrb[0].mxu0 %v313
      %v429 = vpop.f32.mrb[0].mxu0
      %v430 = vadd.f32 %v337, %v429
      %v431 = vpop.f32.mrb[0].mxu0
      %v432 = vpop.f32.mrb[0].mxu0
      %v433 = vadd.f32 %v337, %v432
      %v434 = vpop.f32.mrb[0].mxu0
      %435 = vmatprep.mubr.bf16.mxu0 0
      %436 = vmatmul.mubr.bf16.gmra.mrb[0].mxu0 %v314
      %v437 = vpop.f32.mrb[0].mxu0
      %v438 = vadd.f32 %v337, %v437
      %v439 = vpop.f32.mrb[0].mxu0
      %v440 = vpop.f32.mrb[0].mxu0
      %v441 = vadd.f32 %v337, %v440
      %v442 = vpop.f32.mrb[0].mxu0
      %443 = vmatprep.mubr.bf16.mxu0 0
      %444 = vmatmul.mubr.bf16.gmra.mrb[0].mxu0 %v315
      %v445 = vpop.f32.mrb[0].mxu0
      %v446 = vadd.f32 %v337, %v445
      %v447 = vpop.f32.mrb[0].mxu0
      %v448 = vpop.f32.mrb[0].mxu0
      %v449 = vadd.f32 %v337, %v448
      %v450 = vpop.f32.mrb[0].mxu0
      %451 = vdwg.mxu0
      %v452 = vpack.c.bf16 %v425, %v422
      %v453 = vpack.c.bf16 %v433, %v430
      %v454 = vpack.c.bf16 %v441, %v438
      %v455 = vpack.c.bf16 %v449, %v446
      %v460 = vunpack.c.l.b16 %v452
      %v461 = vunpack.c.h.b16 %v452
      %v462 = vunpack.c.l.b16 %v453
      %v463 = vunpack.c.h.b16 %v453
      %v464 = vunpack.c.l.b16 %v454
      %v465 = vunpack.c.h.b16 %v454
      %v466 = vunpack.c.l.b16 %v455
      %v467 = vunpack.c.h.b16 %v455
      %v468 = vpack.c.b16 %v460, %v460
      %v469 = vpack.c.b16 %v461, %v461
      %v470 = vpack.c.b16 %v462, %v462
      %v471 = vpack.c.b16 %v463, %v463
      %v472 = vpack.c.b16 %v464, %v464
      %v473 = vpack.c.b16 %v465, %v465
      %v474 = vpack.c.b16 %v466, %v466
      %v475 = vpack.c.b16 %v467, %v467
      %484 = vst [vmem:[%s262] sm:$0xf] %v468
      %485 = vst [vmem:[%s262 + $0x4] sm:$0xf] %v469
      %486 = vst [vmem:[%s262 + $0x8] sm:$0xf] %v470
      %487 = vst [vmem:[%s262 + $0xc] sm:$0xf] %v471
      %488 = vst [vmem:[%s262 + $0x10] sm:$0xf] %v472
      %489 = vst [vmem:[%s262 + $0x14] sm:$0xf] %v473
      %490 = vst [vmem:[%s262 + $0x18] sm:$0xf] %v474
      %491 = vst [vmem:[%s262 + $0x1c] sm:$0xf] %v475
      %v492 = vadd.f32 %v422, %v425
      %v493 = vadd.f32 %v492, %v430
      %v494 = vadd.f32 %v493, %v433
      %v495 = vadd.f32 %v494, %v438
      %v496 = vadd.f32 %v495, %v441
      %v497 = vadd.f32 %v496, %v446
      %v498 = vadd.f32 %v497, %v449
      %v499 = vrot.slane %v498, 4
      %v500 = vadd.f32 %v498, %v499
      %v501 = vrot.slane %v500, 2
      %v502 = vadd.f32 %v500, %v501
      %v503 = vrot.slane %v502, 1
      %v504 = vadd.f32 %v502, %v503
      %v505 = vmul.f32 %v422, %v422
      %v506 = vmul.f32 %v425, %v425
      %v507 = vmul.f32 %v430, %v430
      %v508 = vmul.f32 %v433, %v433
      %v509 = vmul.f32 %v438, %v438
      %v510 = vmul.f32 %v441, %v441
      %v511 = vmul.f32 %v446, %v446
      %v512 = vmul.f32 %v449, %v449
      %v513 = vadd.f32 %v505, %v506
      %v514 = vadd.f32 %v513, %v507
      %v515 = vadd.f32 %v514, %v508
      %v516 = vadd.f32 %v515, %v509
      %v517 = vadd.f32 %v516, %v510
      %v518 = vadd.f32 %v517, %v511
      %v519 = vadd.f32 %v518, %v512
      %v520 = vrot.slane %v519, 4
      %v521 = vadd.f32 %v519, %v520
      %v522 = vrot.slane %v521, 2
      %v523 = vadd.f32 %v521, %v522
      %v524 = vrot.slane %v523, 1
      %v525 = vadd.f32 %v523, %v524
      %v526 = vlaneseq
      %v527 = vshrl.u32 %v526, 7
      %vm528 = vcmp.eq.s32.totalorder %v527, 0
      %vm529 = vcmp.eq.s32.totalorder %v527, 1
      %v530 = vsel %vm529, %v525, 0.0
      %v531 = vsel %vm528, %v504, %v530
      %532 = vst [vmem:[%s270] sm:$0xff] %v531
      %s533 = smul.u32 8, %s20
      %p534 = scmp.lt.s32.totalorder %s533, 15
      %s535 = scalar_select %p534, %s533, 15
      %p536 = scmp.lt.s32.totalorder %s21, 0
      %s537 = scalar_select %p536, %s21, 0
      %s538 = sadd.s32 %s537, %s535
      %s539 = smul.addr %s538, 4
      %s540 = scalar_lea.vmem %s3, %s539
      %p541 = scmp.lt.s32.totalorder %s20, 1
      %s542 = scalar_select %p541, %s20, 1
      %p543 = scmp.lt.s32.totalorder %s21, 0
      %s544 = scalar_select %p543, %s21, 0
      %s545 = sadd.s32 %s544, %s542
      %s546 = smul.addr %s545, 8
      %s547 = scalar_lea.vmem %s4, %s546
      // Predicated region
      $region33: #{_lambda_.11} parent=31 // pred_check
        %p548 = pneg %p126
      $region34: #{_lambda_.11} parent=31 // pred_check_branch
        %550 = sbr.rel (%p548) target = $region36
      $region35: #{_lambda_.11} parent=31 // pred_region
        %s551 = smul.u32 8, %s20
      $region36: #{_lambda_.11} parent=31 // pred_fallthru
        _
      // Predicated region
      $region37: #{_lambda_.11} parent=31 // pred_check
        %p552 = pneg %p154
      $region38: #{_lambda_.11} parent=31 // pred_check_branch
        %554 = sbr.rel (%p552) target = $region40
      $region39: #{_lambda_.11} parent=31 // pred_region
        _
      $region40: #{_lambda_.11} parent=31 // pred_fallthru
        _
    $region32: #{_lambda_.11} parent=5 // pred_fallthru
      _
    %p555 = scmp.le.s32.totalorder 2, %s11
    // Predicated region
    $region41: #{_lambda_.11} parent=5 // pred_check
      %p556 = pneg %p555
    $region42: #{_lambda_.11} parent=5 // pred_check_branch
      %558 = sbr.rel (%p556) target = $region44
    $region43: #{_lambda_.11} parent=5 // pred_region
      %s559 = ssub.s32 %s11, 2
      // Predicated region
      $region45: #{_lambda_.11} parent=43 // pred_check
        %p560 = pneg %p132
      $region46: #{_lambda_.11} parent=43 // pred_check_branch
        %562 = sbr.rel (%p560) target = $region48
      $region47: #{_lambda_.11} parent=43 // pred_region
        %s563 = smul.u32 8, %s22
        %p564 = scmp.lt.s32.totalorder %s563, 15
        %s565 = scalar_select %p564, %s563, 15
        %p566 = scmp.lt.s32.totalorder %s23, 0
        %s567 = scalar_select %p566, %s23, 0
        %s568 = sadd.s32 %s567, %s565
        %s569 = smul.addr %s568, 4
        %s570 = scalar_lea.vmem %s3, %s569
      $region48: #{_lambda_.11} parent=43 // pred_fallthru
        _
      // Predicated region
      $region49: #{_lambda_.11} parent=43 // pred_check
        %p571 = pneg %p160
      $region50: #{_lambda_.11} parent=43 // pred_check_branch
        %573 = sbr.rel (%p571) target = $region52
      $region51: #{_lambda_.11} parent=43 // pred_region
        %p574 = scmp.lt.s32.totalorder %s22, 1
        %s575 = scalar_select %p574, %s22, 1
        %p576 = scmp.lt.s32.totalorder %s23, 0
        %s577 = scalar_select %p576, %s23, 0
        %s578 = sadd.s32 %s577, %s575
        %s579 = smul.addr %s578, 8
        %s580 = scalar_lea.vmem %s4, %s579
      $region52: #{_lambda_.11} parent=43 // pred_fallthru
        _
    $region44: #{_lambda_.11} parent=5 // pred_fallthru
      _
  $region6: #{_lambda_.11} parent=0 // loop_footer
    %s15 = sadd.s32 1, %s11
  $region7: #{_lambda_.11} parent=0 // loop_footer_branch
    %10 = sbr.rel target = $region3
  $region8: #{_lambda_.11} parent=0 // loop_exit
    _

// kernel: _lambda_.12
$region0: #{_lambda_.12}
  #allocation0 [shape = 'u32[]', space=smem, size = 0x4, offset = 0x4, fixed_abs, tag = 'smem constant byte address 0x4 - core index']
  #allocation1 [shape = 'u32[144,128]{1,0:T(1,128)}', space=vmem, size = 0x12000, scoped, tag = 'internal scratch']
  %s0 = inlined_call_operand.vmem [shape: bf16[32,256], index: 0, kind: input, shape index: {}]
  %s1 = inlined_call_operand.vmem [shape: bf16[256,128], index: 1, kind: input, shape index: {}]
  %s2 = inlined_call_operand.vmem [shape: f32[1,128], index: 2, kind: input, shape index: {}]
  %s3 = inlined_call_operand.vmem [shape: bf16[32,128], index: 3, kind: output, shape index: {0}]
  %s4 = inlined_call_operand.vmem [shape: f32[2,8,128], index: 4, kind: output, shape index: {1}]
  %5 = xla_tuple %s3, %s4
  %s6 = sld [smem:[#allocation0]]
  $region53: #{_lambda_.12} parent=0
    _
  %s8 = ssub.s32 1, %s6
  %s9 = scalar_select 0, %s8, %s6
  loop: start=0, step=1, limit=4
  $region2: #{_lambda_.12} parent=0 // loop_pre_header
    _
  $region3: #{_lambda_.12} parent=0 // loop_header
    %s11 = sphi 0, %s15
    %p12 = scmp.ge.s32.totalorder %s11, 4
    %s18 = sphi 0, %s30
    %s19 = sphi 0, %s26
    %s20 = sphi 0, %s18
    %s21 = sphi 0, %s19
    %s22 = sphi 0, %s20
    %s23 = sphi 0, %s21
    %s33 = sphi 0, %s35
    %s36 = sphi 0, %s33
    %s37 = sphi 0, %s36
    %s53 = sphi 0, %s37
    %s59 = sphi 0, %s61
    %s62 = sphi 0, %s59
    %s63 = sphi 0, %s62
    %s79 = sphi 0, %s63
    %s85 = sphi 0, %s87
    %s88 = sphi 0, %s85
    %s89 = sphi 0, %s88
    %s105 = sphi 0, %s89
    %s113 = sphi 0, %s115
    %s116 = sphi 0, %s113
    %s117 = sphi 0, %s116
    %s133 = sphi 0, %s117
    %s141 = sphi 0, %s143
    %s144 = sphi 0, %s141
    %s145 = sphi 0, %s144
    %s161 = sphi 0, %s145
  $region4: #{_lambda_.12} parent=0 // loop_header_branch
    %14 = sbr.rel (%p12) target = $region8
  $region5: #{_lambda_.12} parent=0 // loop_body
    %s16 = ssub.s32 %s11, 1
    %s17 = ssub.s32 %s11, 2
    %s24 = sadd.s32 1, %s19
    %p25 = scmp.ge.s32.totalorder %s24, 1
    %s26 = scalar_select %p25, 0, %s24
    %s27 = sadd.s32 1, %s18
    %s28 = scalar_select %p25, %s27, %s18
    %p29 = scmp.ge.s32.totalorder %s28, 2
    %s30 = scalar_select %p29, 0, %s28
    %s31 = ssub.s32 %s18, %s30
    %p32 = scmp.eq.s32.totalorder %s31, 0
    %s34 = sadd.s32 %s33, 1
    %s35 = scalar_select %p32, %s33, %s34
    %p38 = pneg %p32
    %p39 = scmp.eq.s32.totalorder %s11, 1
    %p40 = por %p38, %p39
    %p41 = scmp.ne.s32.totalorder %s33, %s36
    %p42 = scmp.eq.s32.totalorder %s11, 0
    %p43 = por %p41, %p42
    %p44 = scmp.ne.s32.totalorder %s33, %s36
    %p45 = scmp.eq.s32.totalorder %s16, 1
    %p46 = por %p44, %p45
    %p47 = scmp.ne.s32.totalorder %s36, %s37
    %p48 = scmp.eq.s32.totalorder %s16, 0
    %p49 = por %p47, %p48
    %p50 = scmp.ne.s32.totalorder %s36, %s37
    %p51 = scmp.eq.s32.totalorder %s17, 1
    %p52 = por %p50, %p51
    %p54 = scmp.ne.s32.totalorder %s37, %s53
    %p55 = scmp.eq.s32.totalorder %s17, 0
    %p56 = por %p54, %p55
    %s57 = ssub.s32 %s19, %s26
    %p58 = scmp.eq.s32.totalorder %s57, 0
    %s60 = sadd.s32 %s59, 1
    %s61 = scalar_select %p58, %s59, %s60
    %p64 = pneg %p58
    %p65 = scmp.eq.s32.totalorder %s11, 1
    %p66 = por %p64, %p65
    %p67 = scmp.ne.s32.totalorder %s59, %s62
    %p68 = scmp.eq.s32.totalorder %s11, 0
    %p69 = por %p67, %p68
    %p70 = scmp.ne.s32.totalorder %s59, %s62
    %p71 = scmp.eq.s32.totalorder %s16, 1
    %p72 = por %p70, %p71
    %p73 = scmp.ne.s32.totalorder %s62, %s63
    %p74 = scmp.eq.s32.totalorder %s16, 0
    %p75 = por %p73, %p74
    %p76 = scmp.ne.s32.totalorder %s62, %s63
    %p77 = scmp.eq.s32.totalorder %s17, 1
    %p78 = por %p76, %p77
    %p80 = scmp.ne.s32.totalorder %s63, %s79
    %p81 = scmp.eq.s32.totalorder %s17, 0
    %p82 = por %p80, %p81
    %s83 = ssub.s32 %s19, %s26
    %p84 = scmp.eq.s32.totalorder %s83, 0
    %s86 = sadd.s32 %s85, 1
    %s87 = scalar_select %p84, %s85, %s86
    %p90 = pneg %p84
    %p91 = scmp.eq.s32.totalorder %s11, 1
    %p92 = por %p90, %p91
    %p93 = scmp.ne.s32.totalorder %s85, %s88
    %p94 = scmp.eq.s32.totalorder %s11, 0
    %p95 = por %p93, %p94
    %p96 = scmp.ne.s32.totalorder %s85, %s88
    %p97 = scmp.eq.s32.totalorder %s16, 1
    %p98 = por %p96, %p97
    %p99 = scmp.ne.s32.totalorder %s88, %s89
    %p100 = scmp.eq.s32.totalorder %s16, 0
    %p101 = por %p99, %p100
    %p102 = scmp.ne.s32.totalorder %s88, %s89
    %p103 = scmp.eq.s32.totalorder %s17, 1
    %p104 = por %p102, %p103
    %p106 = scmp.ne.s32.totalorder %s89, %s105
    %p107 = scmp.eq.s32.totalorder %s17, 0
    %p108 = por %p106, %p107
    %s109 = ssub.s32 %s18, %s30
    %s110 = ssub.s32 %s19, %s26
    %s111 = sor.u32 %s109, %s110
    %p112 = scmp.eq.s32.totalorder %s111, 0
    %s114 = sadd.s32 %s113, 1
    %s115 = scalar_select %p112, %s113, %s114
    %p118 = pneg %p112
    %p119 = scmp.eq.s32.totalorder %s11, 1
    %p120 = por %p118, %p119
    %p121 = scmp.ne.s32.totalorder %s113, %s116
    %p122 = scmp.eq.s32.totalorder %s11, 0
    %p123 = por %p121, %p122
    %p124 = scmp.ne.s32.totalorder %s113, %s116
    %p125 = scmp.eq.s32.totalorder %s16, 1
    %p126 = por %p124, %p125
    %p127 = scmp.ne.s32.totalorder %s116, %s117
    %p128 = scmp.eq.s32.totalorder %s16, 0
    %p129 = por %p127, %p128
    %p130 = scmp.ne.s32.totalorder %s116, %s117
    %p131 = scmp.eq.s32.totalorder %s17, 1
    %p132 = por %p130, %p131
    %p134 = scmp.ne.s32.totalorder %s117, %s133
    %p135 = scmp.eq.s32.totalorder %s17, 0
    %p136 = por %p134, %p135
    %s137 = ssub.s32 %s18, %s30
    %s138 = ssub.s32 %s19, %s26
    %s139 = sor.u32 %s137, %s138
    %p140 = scmp.eq.s32.totalorder %s139, 0
    %s142 = sadd.s32 %s141, 1
    %s143 = scalar_select %p140, %s141, %s142
    %p146 = pneg %p140
    %p147 = scmp.eq.s32.totalorder %s11, 1
    %p148 = por %p146, %p147
    %p149 = scmp.ne.s32.totalorder %s141, %s144
    %p150 = scmp.eq.s32.totalorder %s11, 0
    %p151 = por %p149, %p150
    %p152 = scmp.ne.s32.totalorder %s141, %s144
    %p153 = scmp.eq.s32.totalorder %s16, 1
    %p154 = por %p152, %p153
    %p155 = scmp.ne.s32.totalorder %s144, %s145
    %p156 = scmp.eq.s32.totalorder %s16, 0
    %p157 = por %p155, %p156
    %p158 = scmp.ne.s32.totalorder %s144, %s145
    %p159 = scmp.eq.s32.totalorder %s17, 1
    %p160 = por %p158, %p159
    %p162 = scmp.ne.s32.totalorder %s145, %s161
    %p163 = scmp.eq.s32.totalorder %s17, 0
    %p164 = por %p162, %p163
    %p165 = scmp.le.s32.totalorder 1, %s11
    %p166 = scmp.lt.s32.totalorder %s11, 3
    %p167 = pnand %p165, %p166
    %p168 = pneg %p167
    // Predicated region
    $region9: #{_lambda_.12} parent=5 // pred_check
      _
    $region10: #{_lambda_.12} parent=5 // pred_check_branch
      %170 = sbr.rel (%p167) target = $region12
    $region11: #{_lambda_.12} parent=5 // pred_region
      %s171 = ssub.s32 %s11, 1
      // Predicated region
      $region13: #{_lambda_.12} parent=11 // pred_check
        %p172 = pneg %p75
      $region14: #{_lambda_.12} parent=11 // pred_check_branch
        %174 = sbr.rel (%p172) target = $region16
      $region15: #{_lambda_.12} parent=11 // pred_region
        %p175 = scmp.lt.s32.totalorder %s21, 0
        %s176 = scalar_select %p175, %s21, 0
        %s177 = smul.addr %s176, 4
        %s178 = scalar_lea.vmem %s1, %s177
      $region16: #{_lambda_.12} parent=11 // pred_fallthru
        _
      // Predicated region
      $region17: #{_lambda_.12} parent=11 // pred_check
        %p179 = pneg %p101
      $region18: #{_lambda_.12} parent=11 // pred_check_branch
        %181 = sbr.rel (%p179) target = $region20
      $region19: #{_lambda_.12} parent=11 // pred_region
        %p182 = scmp.lt.s32.totalorder %s21, 0
        %s183 = scalar_select %p182, %s21, 0
        %s184 = scalar_lea.vmem %s2, %s183
      $region20: #{_lambda_.12} parent=11 // pred_fallthru
        _
    $region12: #{_lambda_.12} parent=5 // pred_fallthru
      _
    %p185 = scmp.lt.s32.totalorder %s11, 2
    // Predicated region
    $region21: #{_lambda_.12} parent=5 // pred_check
      %p186 = pneg %p185
    $region22: #{_lambda_.12} parent=5 // pred_check_branch
      %188 = sbr.rel (%p186) target = $region24
    $region23: #{_lambda_.12} parent=5 // pred_region
      // Predicated region
      $region25: #{_lambda_.12} parent=23 // pred_check
        %p189 = pneg %p43
      $region26: #{_lambda_.12} parent=23 // pred_check_branch
        %191 = sbr.rel (%p189) target = $region28
      $region27: #{_lambda_.12} parent=23 // pred_region
        %s192 = smul.u32 2, %s18
        %p193 = scmp.lt.s32.totalorder %s192, 3
        %s194 = scalar_select %p193, %s192, 3
        %s195 = smul.addr %s194, 2
        %s196 = smul.addr %s195, 4
        %s197 = scalar_lea.vmem %s0, %s196
        %s198 = smul.u32 2, %s18
      $region28: #{_lambda_.12} parent=23 // pred_fallthru
        _
    $region24: #{_lambda_.12} parent=5 // pred_fallthru
      _
    %p199 = scmp.le.s32.totalorder 1, %s11
    %p200 = scmp.lt.s32.totalorder %s11, 3
    %p201 = pnand %p199, %p200
    %p202 = pneg %p201
    // Predicated region
    $region29: #{_lambda_.12} parent=5 // pred_check
      _
    $region30: #{_lambda_.12} parent=5 // pred_check_branch
      %204 = sbr.rel (%p201) target = $region32
    $region31: #{_lambda_.12} parent=5 // pred_region
      %s205 = ssub.s32 %s11, 1
      %s206 = smul.u32 2, %s20
      %p207 = scmp.lt.s32.totalorder %s206, 3
      %s208 = scalar_select %p207, %s206, 3
      %s209 = smul.addr %s208, 2
      %s210 = smul.addr %s209, 4
      %s211 = scalar_lea.vmem %s0, %s210
      %p212 = pneg %p49
      %p213 = pneg %p46
      %p214 = scmp.lt.s32.totalorder %s21, 0
      %s215 = scalar_select %p214, %s21, 0
      %s216 = smul.addr %s215, 4
      %s217 = scalar_lea.vmem %s1, %s216
      %p218 = pneg %p75
      %p219 = pneg %p72
      %p220 = scmp.lt.s32.totalorder %s21, 0
      %s221 = scalar_select %p220, %s21, 0
      %s222 = scalar_lea.vmem %s2, %s221
      %p223 = pneg %p101
      %p224 = pneg %p98
      %p225 = pneg %p129
      %p226 = pneg %p126
      %s227 = smul.u32 2, %s20
      %p228 = scmp.lt.s32.totalorder %s227, 3
      %s229 = scalar_select %p228, %s227, 3
      %p230 = scmp.lt.s32.totalorder %s21, 0
      %s231 = scalar_select %p230, %s21, 0
      %s232 = sadd.s32 %s231, %s229
      %s233 = smul.addr %s232, 4
      %s234 = scalar_lea.vmem %s3, %s233
      %p235 = pneg %p157
      %p236 = pneg %p154
      %p237 = scmp.lt.s32.totalorder %s20, 1
      %s238 = scalar_select %p237, %s20, 1
      %p239 = scmp.lt.s32.totalorder %s21, 0
      %s240 = scalar_select %p239, %s21, 0
      %s241 = sadd.s32 %s240, %s238
      %s242 = smul.addr %s241, 8
      %s243 = scalar_lea.vmem %s4, %s242
      %s244 = smul.u32 2, %s20
      %p245 = scmp.lt.s32.totalorder %s244, 3
      %s246 = scalar_select %p245, %s244, 3
      %s247 = smul.addr %s246, 2
      %s248 = smul.addr %s247, 4
      %s249 = scalar_lea.vmem %s0, %s248
      %s250 = smul.u32 2, %s20
      %p251 = scmp.lt.s32.totalorder %s21, 0
      %s252 = scalar_select %p251, %s21, 0
      %s253 = smul.addr %s252, 4
      %s254 = scalar_lea.vmem %s1, %s253
      %p255 = scmp.lt.s32.totalorder %s21, 0
      %s256 = scalar_select %p255, %s21, 0
      %s257 = scalar_lea.vmem %s2, %s256
      %s258 = smul.u32 2, %s20
      %p259 = scmp.lt.s32.totalorder %s258, 3
      %s260 = scalar_select %p259, %s258, 3
      %p261 = scmp.lt.s32.totalorder %s21, 0
      %s262 = scalar_select %p261, %s21, 0
      %s263 = sadd.s32 %s262, %s260
      %s264 = smul.addr %s263, 4
      %s265 = scalar_lea.vmem %s3, %s264
      %s266 = smul.u32 2, %s20
      %p267 = scmp.lt.s32.totalorder %s20, 1
      %s268 = scalar_select %p267, %s20, 1
      %p269 = scmp.lt.s32.totalorder %s21, 0
      %s270 = scalar_select %p269, %s21, 0
      %s271 = sadd.s32 %s270, %s268
      %s272 = smul.addr %s271, 8
      %s273 = scalar_lea.vmem %s4, %s272
      %v275 = vld [vmem:[%s249] sm:$0xff]
      %v276 = vld [vmem:[%s249 + $0x8] sm:$0xff]
      %v277 = vunpack.c.l.bf16 %v275
      %v278 = vunpack.c.h.bf16 %v275
      %v279 = vunpack.c.l.bf16 %v276
      %v280 = vunpack.c.h.bf16 %v276
      %vm281 = vcmp.gt.f32.partialorder %v277, 0.0
      %vm282 = vcmp.gt.f32.partialorder %v278, 0.0
      %vm283 = vcmp.gt.f32.partialorder %v279, 0.0
      %vm284 = vcmp.gt.f32.partialorder %v280, 0.0
      %v285 = vmul.f32 %v277, 0.2
      %v286 = vmul.f32 %v278, 0.2
      %v287 = vmul.f32 %v279, 0.2
      %v288 = vmul.f32 %v280, 0.2
      %v289 = vsel %vm281, %v277, %v285
      %v290 = vsel %vm282, %v278, %v286
      %v291 = vsel %vm283, %v279, %v287
      %v292 = vsel %vm284, %v280, %v288
      %v293 = vpack.c.bf16 %v291, %v289
      %v294 = vpack.c.bf16 %v292, %v290
      %v295 = vld [vmem:[%s254] sm:$0xf]
      %v296 = vld [vmem:[%s254 + $0x4] sm:$0xf]
      %v297 = vld [vmem:[%s254 + $0x8] sm:$0xf]
      %v298 = vld [vmem:[%s254 + $0xc] sm:$0xf]
      %v299 = vld [vmem:[%s254 + $0x10] sm:$0xf]
      %v300 = vld [vmem:[%s254 + $0x14] sm:$0xf]
      %v301 = vld [vmem:[%s254 + $0x18] sm:$0xf]
      %v302 = vld [vmem:[%s254 + $0x1c] sm:$0xf]
      %v303 = vld [vmem:[%s254 + $0x20] sm:$0xf]
      %v304 = vld [vmem:[%s254 + $0x24] sm:$0xf]
      %v305 = vld [vmem:[%s254 + $0x28] sm:$0xf]
      %v306 = vld [vmem:[%s254 + $0x2c] sm:$0xf]
      %v307 = vld [vmem:[%s254 + $0x30] sm:$0xf]
      %v308 = vld [vmem:[%s254 + $0x34] sm:$0xf]
      %v309 = vld [vmem:[%s254 + $0x38] sm:$0xf]
      %v310 = vld [vmem:[%s254 + $0x3c] sm:$0xf]
      %v311 = vld [vmem:[%s254 + $0x40] sm:$0xf]
      %v312 = vld [vmem:[%s254 + $0x44] sm:$0xf]
      %v313 = vld [vmem:[%s254 + $0x48] sm:$0xf]
      %v314 = vld [vmem:[%s254 + $0x4c] sm:$0xf]
      %v315 = vld [vmem:[%s254 + $0x50] sm:$0xf]
      %v316 = vld [vmem:[%s254 + $0x54] sm:$0xf]
      %v317 = vld [vmem:[%s254 + $0x58] sm:$0xf]
      %v318 = vld [vmem:[%s254 + $0x5c] sm:$0xf]
      %v319 = vld [vmem:[%s254 + $0x60] sm:$0xf]
      %v320 = vld [vmem:[%s254 + $0x64] sm:$0xf]
      %v321 = vld [vmem:[%s254 + $0x68] sm:$0xf]
      %v322 = vld [vmem:[%s254 + $0x6c] sm:$0xf]
      %v323 = vld [vmem:[%s254 + $0x70] sm:$0xf]
      %v324 = vld [vmem:[%s254 + $0x74] sm:$0xf]
      %v325 = vld [vmem:[%s254 + $0x78] sm:$0xf]
      %v326 = vld [vmem:[%s254 + $0x7c] sm:$0xf]
      %v327 = vld [vmem:[%s257] sm:$0x1]
      %v329 = vlaneseq
      %v330 = vshrl.u32 %v329, 7
      %v331 = vsub.s32 0, %v330
      %v332 = vrot.slane %v327, %v331
      %v366 = vunpack.c.l.b16 %v295
      %v367 = vunpack.c.l.b16 %v296
      %v368 = vunpack.c.l.b16 %v297
      %v369 = vunpack.c.l.b16 %v298
      %v370 = vunpack.c.l.b16 %v299
      %v371 = vunpack.c.l.b16 %v300
      %v372 = vunpack.c.l.b16 %v301
      %v373 = vunpack.c.l.b16 %v302
      %v374 = vunpack.c.l.b16 %v303
      %v375 = vunpack.c.l.b16 %v304
      %v376 = vunpack.c.l.b16 %v305
      %v377 = vunpack.c.l.b16 %v306
      %v378 = vunpack.c.l.b16 %v307
      %v379 = vunpack.c.l.b16 %v308
      %v380 = vunpack.c.l.b16 %v309
      %v381 = vunpack.c.l.b16 %v310
      %v382 = vunpack.c.l.b16 %v311
      %v383 = vunpack.c.l.b16 %v312
      %v384 = vunpack.c.l.b16 %v313
      %v385 = vunpack.c.l.b16 %v314
      %v386 = vunpack.c.l.b16 %v315
      %v387 = vunpack.c.l.b16 %v316
      %v388 = vunpack.c.l.b16 %v317
      %v389 = vunpack.c.l.b16 %v318
      %v390 = vunpack.c.l.b16 %v319
      %v391 = vunpack.c.l.b16 %v320
      %v392 = vunpack.c.l.b16 %v321
      %v393 = vunpack.c.l.b16 %v322
      %v394 = vunpack.c.l.b16 %v323
      %v395 = vunpack.c.l.b16 %v324
      %v396 = vunpack.c.l.b16 %v325
      %v397 = vunpack.c.l.b16 %v326
      %v398 = vpack.c.b16 %v367, %v366
      %v399 = vpack.c.b16 %v369, %v368
      %v400 = vpack.c.b16 %v371, %v370
      %v401 = vpack.c.b16 %v373, %v372
      %v402 = vpack.c.b16 %v375, %v374
      %v403 = vpack.c.b16 %v377, %v376
      %v404 = vpack.c.b16 %v379, %v378
      %v405 = vpack.c.b16 %v381, %v380
      %v406 = vpack.c.b16 %v383, %v382
      %v407 = vpack.c.b16 %v385, %v384
      %v408 = vpack.c.b16 %v387, %v386
      %v409 = vpack.c.b16 %v389, %v388
      %v410 = vpack.c.b16 %v391, %v390
      %v411 = vpack.c.b16 %v393, %v392
      %v412 = vpack.c.b16 %v395, %v394
      %v413 = vpack.c.b16 %v397, %v396
      %430 = vmatprep.subr.bf16.mxu0 0
      %431 = vmatpush1.bf16.msra.mxu0 %v398
      %432 = vmatprep.subr.bf16.mxu0 0
      %433 = vmatpush1.bf16.msra.mxu0 %v399
      %434 = vmatprep.subr.bf16.mxu0 0
      %435 = vmatpush1.bf16.msra.mxu0 %v400
      %436 = vmatprep.subr.bf16.mxu0 0
      %437 = vmatpush1.bf16.msra.mxu0 %v401
      %438 = vmatprep.subr.bf16.mxu0 0
      %439 = vmatpush1.bf16.msra.mxu0 %v402
      %440 = vmatprep.subr.bf16.mxu0 0
      %441 = vmatpush1.bf16.msra.mxu0 %v403
      %442 = vmatprep.subr.bf16.mxu0 0
      %443 = vmatpush1.bf16.msra.mxu0 %v404
      %444 = vmatprep.subr.bf16.mxu0 0
      %445 = vmatpush1.bf16.msra.mxu0 %v405
      %446 = vmatprep.subr.bf16.mxu0 0
      %447 = vmatpush1.bf16.msra.mxu0 %v406
      %448 = vmatprep.subr.bf16.mxu0 0
      %449 = vmatpush1.bf16.msra.mxu0 %v407
      %450 = vmatprep.subr.bf16.mxu0 0
      %451 = vmatpush1.bf16.msra.mxu0 %v408
      %452 = vmatprep.subr.bf16.mxu0 0
      %453 = vmatpush1.bf16.msra.mxu0 %v409
      %454 = vmatprep.subr.bf16.mxu0 0
      %455 = vmatpush1.bf16.msra.mxu0 %v410
      %456 = vmatprep.subr.bf16.mxu0 0
      %457 = vmatpush1.bf16.msra.mxu0 %v411
      %458 = vmatprep.subr.bf16.mxu0 0
      %459 = vmatpush1.bf16.msra.mxu0 %v412
      %460 = vmatprep.subr.bf16.mxu0 0
      %461 = vmatpush1.bf16.msra.mxu0 %v413
      %462 = vmatprep.mubr.bf16.mxu0 %v294
      %463 = vmatmul.mubr.bf16.gmra.mrb[0].mxu0 %v293
      %v464 = vpop.f32.mrb[0].mxu0
      %v465 = vadd.f32 %v332, %v464
      %v466 = vpop.f32.mrb[0].mxu0
      %v467 = vpop.f32.mrb[0].mxu0
      %v468 = vadd.f32 %v332, %v467
      %v469 = vpop.f32.mrb[0].mxu0
      %470 = vdwg.mxu0
      %v471 = vpack.c.bf16 %v468, %v465
      %v473 = vunpack.c.l.b16 %v471
      %v474 = vunpack.c.h.b16 %v471
      %v475 = vpack.c.b16 %v473, %v473
      %v476 = vpack.c.b16 %v474, %v474
      %479 = vst [vmem:[%s265] sm:$0xf] %v475
      %480 = vst [vmem:[%s265 + $0x4] sm:$0xf] %v476
      %v481 = vadd.f32 %v465, %v468
      %v482 = vrot.slane %v481, 4
      %v483 = vadd.f32 %v481, %v482
      %v484 = vrot.slane %v483, 2
      %v485 = vadd.f32 %v483, %v484
      %v486 = vrot.slane %v485, 1
      %v487 = vadd.f32 %v485, %v486
      %v488 = vmul.f32 %v465, %v465
      %v489 = vmul.f32 %v468, %v468
      %v490 = vadd.f32 %v488, %v489
      %v491 = vrot.slane %v490, 4
      %v492 = vadd.f32 %v490, %v491
      %v493 = vrot.slane %v492, 2
      %v494 = vadd.f32 %v492, %v493
      %v495 = vrot.slane %v494, 1
      %v496 = vadd.f32 %v494, %v495
      %v497 = vlaneseq
      %v498 = vshrl.u32 %v497, 7
      %vm499 = vcmp.eq.s32.totalorder %v498, 0
      %vm500 = vcmp.eq.s32.totalorder %v498, 1
      %v501 = vsel %vm500, %v496, 0.0
      %v502 = vsel %vm499, %v487, %v501
      %503 = vst [vmem:[%s273] sm:$0xff] %v502
      %s504 = smul.u32 2, %s20
      %p505 = scmp.lt.s32.totalorder %s504, 3
      %s506 = scalar_select %p505, %s504, 3
      %p507 = scmp.lt.s32.totalorder %s21, 0
      %s508 = scalar_select %p507, %s21, 0
      %s509 = sadd.s32 %s508, %s506
      %s510 = smul.addr %s509, 4
      %s511 = scalar_lea.vmem %s3, %s510
      %p512 = scmp.lt.s32.totalorder %s20, 1
      %s513 = scalar_select %p512, %s20, 1
      %p514 = scmp.lt.s32.totalorder %s21, 0
      %s515 = scalar_select %p514, %s21, 0
      %s516 = sadd.s32 %s515, %s513
      %s517 = smul.addr %s516, 8
      %s518 = scalar_lea.vmem %s4, %s517
      // Predicated region
      $region33: #{_lambda_.12} parent=31 // pred_check
        %p519 = pneg %p126
      $region34: #{_lambda_.12} parent=31 // pred_check_branch
        %521 = sbr.rel (%p519) target = $region36
      $region35: #{_lambda_.12} parent=31 // pred_region
        %s522 = smul.u32 2, %s20
      $region36: #{_lambda_.12} parent=31 // pred_fallthru
        _
      // Predicated region
      $region37: #{_lambda_.12} parent=31 // pred_check
        %p523 = pneg %p154
      $region38: #{_lambda_.12} parent=31 // pred_check_branch
        %525 = sbr.rel (%p523) target = $region40
      $region39: #{_lambda_.12} parent=31 // pred_region
        _
      $region40: #{_lambda_.12} parent=31 // pred_fallthru
        _
    $region32: #{_lambda_.12} parent=5 // pred_fallthru
      _
    %p526 = scmp.le.s32.totalorder 2, %s11
    // Predicated region
    $region41: #{_lambda_.12} parent=5 // pred_check
      %p527 = pneg %p526
    $region42: #{_lambda_.12} parent=5 // pred_check_branch
      %529 = sbr.rel (%p527) target = $region44
    $region43: #{_lambda_.12} parent=5 // pred_region
      %s530 = ssub.s32 %s11, 2
      // Predicated region
      $region45: #{_lambda_.12} parent=43 // pred_check
        %p531 = pneg %p132
      $region46: #{_lambda_.12} parent=43 // pred_check_branch
        %533 = sbr.rel (%p531) target = $region48
      $region47: #{_lambda_.12} parent=43 // pred_region
        %s534 = smul.u32 2, %s22
        %p535 = scmp.lt.s32.totalorder %s534, 3
        %s536 = scalar_select %p535, %s534, 3
        %p537 = scmp.lt.s32.totalorder %s23, 0
        %s538 = scalar_select %p537, %s23, 0
        %s539 = sadd.s32 %s538, %s536
        %s540 = smul.addr %s539, 4
        %s541 = scalar_lea.vmem %s3, %s540
      $region48: #{_lambda_.12} parent=43 // pred_fallthru
        _
      // Predicated region
      $region49: #{_lambda_.12} parent=43 // pred_check
        %p542 = pneg %p160
      $region50: #{_lambda_.12} parent=43 // pred_check_branch
        %544 = sbr.rel (%p542) target = $region52
      $region51: #{_lambda_.12} parent=43 // pred_region
        %p545 = scmp.lt.s32.totalorder %s22, 1
        %s546 = scalar_select %p545, %s22, 1
        %p547 = scmp.lt.s32.totalorder %s23, 0
        %s548 = scalar_select %p547, %s23, 0
        %s549 = sadd.s32 %s548, %s546
        %s550 = smul.addr %s549, 8
        %s551 = scalar_lea.vmem %s4, %s550
      $region52: #{_lambda_.12} parent=43 // pred_fallthru
        _
    $region44: #{_lambda_.12} parent=5 // pred_fallthru
      _
  $region6: #{_lambda_.12} parent=0 // loop_footer
    %s15 = sadd.s32 1, %s11
  $region7: #{_lambda_.12} parent=0 // loop_footer_branch
    %10 = sbr.rel target = $region3
  $region8: #{_lambda_.12} parent=0 // loop_exit
    _

// kernel: _lambda_.13
$region0: #{_lambda_.13}
  #allocation0 [shape = 'u32[]', space=smem, size = 0x4, offset = 0x4, fixed_abs, tag = 'smem constant byte address 0x4 - core index']
  #allocation1 [shape = 'u32[144,128]{1,0:T(1,128)}', space=vmem, size = 0x12000, scoped, tag = 'internal scratch']
  %s0 = inlined_call_operand.vmem [shape: bf16[16,512], index: 0, kind: input, shape index: {}]
  %s1 = inlined_call_operand.vmem [shape: bf16[512,128], index: 1, kind: input, shape index: {}]
  %s2 = inlined_call_operand.vmem [shape: f32[1,128], index: 2, kind: input, shape index: {}]
  %s3 = inlined_call_operand.vmem [shape: bf16[16,128], index: 3, kind: output, shape index: {0}]
  %s4 = inlined_call_operand.vmem [shape: f32[1,8,128], index: 4, kind: output, shape index: {1}]
  %5 = xla_tuple %s3, %s4
  %s6 = sld [smem:[#allocation0]]
  $region30: #{_lambda_.13} parent=0
    _
  %s8 = ssub.s32 1, %s6
  %s9 = scalar_select 0, %s8, %s6
  // Predicated region
  $region2: #{_lambda_.13} parent=0 // pred_check
    _
  $region3: #{_lambda_.13} parent=0 // pred_check_branch
    %11 = sbr.rel (0) target = $region5
  $region4: #{_lambda_.13} parent=0 // pred_region
    _
  $region5: #{_lambda_.13} parent=0 // pred_fallthru
    _
  // Predicated region
  $region6: #{_lambda_.13} parent=0 // pred_check
    _
  $region7: #{_lambda_.13} parent=0 // pred_check_branch
    %13 = sbr.rel (0) target = $region9
  $region8: #{_lambda_.13} parent=0 // pred_region
    _
  $region9: #{_lambda_.13} parent=0 // pred_fallthru
    _
  // Predicated region
  $region10: #{_lambda_.13} parent=0 // pred_check
    _
  $region11: #{_lambda_.13} parent=0 // pred_check_branch
    %15 = sbr.rel (0) target = $region13
  $region12: #{_lambda_.13} parent=0 // pred_region
    _
  $region13: #{_lambda_.13} parent=0 // pred_fallthru
    _
  %v17 = vld [vmem:[%s0] sm:$0xff]
  %v18 = vld [vmem:[%s0 + $0x8] sm:$0xff]
  %v19 = vld [vmem:[%s0 + $0x10] sm:$0xff]
  %v20 = vld [vmem:[%s0 + $0x18] sm:$0xff]
  %v21 = vunpack.c.l.bf16 %v17
  %v22 = vunpack.c.h.bf16 %v17
  %v23 = vunpack.c.l.bf16 %v18
  %v24 = vunpack.c.h.bf16 %v18
  %v25 = vunpack.c.l.bf16 %v19
  %v26 = vunpack.c.h.bf16 %v19
  %v27 = vunpack.c.l.bf16 %v20
  %v28 = vunpack.c.h.bf16 %v20
  %vm29 = vcmp.gt.f32.partialorder %v21, 0.0
  %vm30 = vcmp.gt.f32.partialorder %v22, 0.0
  %vm31 = vcmp.gt.f32.partialorder %v23, 0.0
  %vm32 = vcmp.gt.f32.partialorder %v24, 0.0
  %vm33 = vcmp.gt.f32.partialorder %v25, 0.0
  %vm34 = vcmp.gt.f32.partialorder %v26, 0.0
  %vm35 = vcmp.gt.f32.partialorder %v27, 0.0
  %vm36 = vcmp.gt.f32.partialorder %v28, 0.0
  %v37 = vmul.f32 %v21, 0.2
  %v38 = vmul.f32 %v22, 0.2
  %v39 = vmul.f32 %v23, 0.2
  %v40 = vmul.f32 %v24, 0.2
  %v41 = vmul.f32 %v25, 0.2
  %v42 = vmul.f32 %v26, 0.2
  %v43 = vmul.f32 %v27, 0.2
  %v44 = vmul.f32 %v28, 0.2
  %v45 = vsel %vm29, %v21, %v37
  %v46 = vsel %vm30, %v22, %v38
  %v47 = vsel %vm31, %v23, %v39
  %v48 = vsel %vm32, %v24, %v40
  %v49 = vsel %vm33, %v25, %v41
  %v50 = vsel %vm34, %v26, %v42
  %v51 = vsel %vm35, %v27, %v43
  %v52 = vsel %vm36, %v28, %v44
  %v53 = vpack.c.bf16 %v49, %v45
  %v54 = vpack.c.bf16 %v50, %v46
  %v55 = vpack.c.bf16 %v51, %v47
  %v56 = vpack.c.bf16 %v52, %v48
  %v57 = vld [vmem:[%s1] sm:$0xf]
  %v58 = vld [vmem:[%s1 + $0x4] sm:$0xf]
  %v59 = vld [vmem:[%s1 + $0x8] sm:$0xf]
  %v60 = vld [vmem:[%s1 + $0xc] sm:$0xf]
  %v61 = vld [vmem:[%s1 + $0x10] sm:$0xf]
  %v62 = vld [vmem:[%s1 + $0x14] sm:$0xf]
  %v63 = vld [vmem:[%s1 + $0x18] sm:$0xf]
  %v64 = vld [vmem:[%s1 + $0x1c] sm:$0xf]
  %v65 = vld [vmem:[%s1 + $0x20] sm:$0xf]
  %v66 = vld [vmem:[%s1 + $0x24] sm:$0xf]
  %v67 = vld [vmem:[%s1 + $0x28] sm:$0xf]
  %v68 = vld [vmem:[%s1 + $0x2c] sm:$0xf]
  %v69 = vld [vmem:[%s1 + $0x30] sm:$0xf]
  %v70 = vld [vmem:[%s1 + $0x34] sm:$0xf]
  %v71 = vld [vmem:[%s1 + $0x38] sm:$0xf]
  %v72 = vld [vmem:[%s1 + $0x3c] sm:$0xf]
  %v73 = vld [vmem:[%s1 + $0x40] sm:$0xf]
  %v74 = vld [vmem:[%s1 + $0x44] sm:$0xf]
  %v75 = vld [vmem:[%s1 + $0x48] sm:$0xf]
  %v76 = vld [vmem:[%s1 + $0x4c] sm:$0xf]
  %v77 = vld [vmem:[%s1 + $0x50] sm:$0xf]
  %v78 = vld [vmem:[%s1 + $0x54] sm:$0xf]
  %v79 = vld [vmem:[%s1 + $0x58] sm:$0xf]
  %v80 = vld [vmem:[%s1 + $0x5c] sm:$0xf]
  %v81 = vld [vmem:[%s1 + $0x60] sm:$0xf]
  %v82 = vld [vmem:[%s1 + $0x64] sm:$0xf]
  %v83 = vld [vmem:[%s1 + $0x68] sm:$0xf]
  %v84 = vld [vmem:[%s1 + $0x6c] sm:$0xf]
  %v85 = vld [vmem:[%s1 + $0x70] sm:$0xf]
  %v86 = vld [vmem:[%s1 + $0x74] sm:$0xf]
  %v87 = vld [vmem:[%s1 + $0x78] sm:$0xf]
  %v88 = vld [vmem:[%s1 + $0x7c] sm:$0xf]
  %v89 = vld [vmem:[%s1 + $0x80] sm:$0xf]
  %v90 = vld [vmem:[%s1 + $0x84] sm:$0xf]
  %v91 = vld [vmem:[%s1 + $0x88] sm:$0xf]
  %v92 = vld [vmem:[%s1 + $0x8c] sm:$0xf]
  %v93 = vld [vmem:[%s1 + $0x90] sm:$0xf]
  %v94 = vld [vmem:[%s1 + $0x94] sm:$0xf]
  %v95 = vld [vmem:[%s1 + $0x98] sm:$0xf]
  %v96 = vld [vmem:[%s1 + $0x9c] sm:$0xf]
  %v97 = vld [vmem:[%s1 + $0xa0] sm:$0xf]
  %v98 = vld [vmem:[%s1 + $0xa4] sm:$0xf]
  %v99 = vld [vmem:[%s1 + $0xa8] sm:$0xf]
  %v100 = vld [vmem:[%s1 + $0xac] sm:$0xf]
  %v101 = vld [vmem:[%s1 + $0xb0] sm:$0xf]
  %v102 = vld [vmem:[%s1 + $0xb4] sm:$0xf]
  %v103 = vld [vmem:[%s1 + $0xb8] sm:$0xf]
  %v104 = vld [vmem:[%s1 + $0xbc] sm:$0xf]
  %v105 = vld [vmem:[%s1 + $0xc0] sm:$0xf]
  %v106 = vld [vmem:[%s1 + $0xc4] sm:$0xf]
  %v107 = vld [vmem:[%s1 + $0xc8] sm:$0xf]
  %v108 = vld [vmem:[%s1 + $0xcc] sm:$0xf]
  %v109 = vld [vmem:[%s1 + $0xd0] sm:$0xf]
  %v110 = vld [vmem:[%s1 + $0xd4] sm:$0xf]
  %v111 = vld [vmem:[%s1 + $0xd8] sm:$0xf]
  %v112 = vld [vmem:[%s1 + $0xdc] sm:$0xf]
  %v113 = vld [vmem:[%s1 + $0xe0] sm:$0xf]
  %v114 = vld [vmem:[%s1 + $0xe4] sm:$0xf]
  %v115 = vld [vmem:[%s1 + $0xe8] sm:$0xf]
  %v116 = vld [vmem:[%s1 + $0xec] sm:$0xf]
  %v117 = vld [vmem:[%s1 + $0xf0] sm:$0xf]
  %v118 = vld [vmem:[%s1 + $0xf4] sm:$0xf]
  %v119 = vld [vmem:[%s1 + $0xf8] sm:$0xf]
  %v120 = vld [vmem:[%s1 + $0xfc] sm:$0xf]
  %v121 = vld [vmem:[%s2] sm:$0x1]
  %v123 = vlaneseq
  %v124 = vshrl.u32 %v123, 7
  %v125 = vsub.s32 0, %v124
  %v126 = vrot.slane %v121, %v125
  %v192 = vunpack.c.l.b16 %v57
  %v193 = vunpack.c.l.b16 %v58
  %v194 = vunpack.c.l.b16 %v59
  %v195 = vunpack.c.l.b16 %v60
  %v196 = vunpack.c.l.b16 %v61
  %v197 = vunpack.c.l.b16 %v62
  %v198 = vunpack.c.l.b16 %v63
  %v199 = vunpack.c.l.b16 %v64
  %v200 = vunpack.c.l.b16 %v65
  %v201 = vunpack.c.l.b16 %v66
  %v202 = vunpack.c.l.b16 %v67
  %v203 = vunpack.c.l.b16 %v68
  %v204 = vunpack.c.l.b16 %v69
  %v205 = vunpack.c.l.b16 %v70
  %v206 = vunpack.c.l.b16 %v71
  %v207 = vunpack.c.l.b16 %v72
  %v208 = vunpack.c.l.b16 %v73
  %v209 = vunpack.c.l.b16 %v74
  %v210 = vunpack.c.l.b16 %v75
  %v211 = vunpack.c.l.b16 %v76
  %v212 = vunpack.c.l.b16 %v77
  %v213 = vunpack.c.l.b16 %v78
  %v214 = vunpack.c.l.b16 %v79
  %v215 = vunpack.c.l.b16 %v80
  %v216 = vunpack.c.l.b16 %v81
  %v217 = vunpack.c.l.b16 %v82
  %v218 = vunpack.c.l.b16 %v83
  %v219 = vunpack.c.l.b16 %v84
  %v220 = vunpack.c.l.b16 %v85
  %v221 = vunpack.c.l.b16 %v86
  %v222 = vunpack.c.l.b16 %v87
  %v223 = vunpack.c.l.b16 %v88
  %v224 = vunpack.c.l.b16 %v89
  %v225 = vunpack.c.l.b16 %v90
  %v226 = vunpack.c.l.b16 %v91
  %v227 = vunpack.c.l.b16 %v92
  %v228 = vunpack.c.l.b16 %v93
  %v229 = vunpack.c.l.b16 %v94
  %v230 = vunpack.c.l.b16 %v95
  %v231 = vunpack.c.l.b16 %v96
  %v232 = vunpack.c.l.b16 %v97
  %v233 = vunpack.c.l.b16 %v98
  %v234 = vunpack.c.l.b16 %v99
  %v235 = vunpack.c.l.b16 %v100
  %v236 = vunpack.c.l.b16 %v101
  %v237 = vunpack.c.l.b16 %v102
  %v238 = vunpack.c.l.b16 %v103
  %v239 = vunpack.c.l.b16 %v104
  %v240 = vunpack.c.l.b16 %v105
  %v241 = vunpack.c.l.b16 %v106
  %v242 = vunpack.c.l.b16 %v107
  %v243 = vunpack.c.l.b16 %v108
  %v244 = vunpack.c.l.b16 %v109
  %v245 = vunpack.c.l.b16 %v110
  %v246 = vunpack.c.l.b16 %v111
  %v247 = vunpack.c.l.b16 %v112
  %v248 = vunpack.c.l.b16 %v113
  %v249 = vunpack.c.l.b16 %v114
  %v250 = vunpack.c.l.b16 %v115
  %v251 = vunpack.c.l.b16 %v116
  %v252 = vunpack.c.l.b16 %v117
  %v253 = vunpack.c.l.b16 %v118
  %v254 = vunpack.c.l.b16 %v119
  %v255 = vunpack.c.l.b16 %v120
  %v256 = vpack.c.b16 %v193, %v192
  %v257 = vpack.c.b16 %v195, %v194
  %v258 = vpack.c.b16 %v197, %v196
  %v259 = vpack.c.b16 %v199, %v198
  %v260 = vpack.c.b16 %v201, %v200
  %v261 = vpack.c.b16 %v203, %v202
  %v262 = vpack.c.b16 %v205, %v204
  %v263 = vpack.c.b16 %v207, %v206
  %v264 = vpack.c.b16 %v209, %v208
  %v265 = vpack.c.b16 %v211, %v210
  %v266 = vpack.c.b16 %v213, %v212
  %v267 = vpack.c.b16 %v215, %v214
  %v268 = vpack.c.b16 %v217, %v216
  %v269 = vpack.c.b16 %v219, %v218
  %v270 = vpack.c.b16 %v221, %v220
  %v271 = vpack.c.b16 %v223, %v222
  %v272 = vpack.c.b16 %v225, %v224
  %v273 = vpack.c.b16 %v227, %v226
  %v274 = vpack.c.b16 %v229, %v228
  %v275 = vpack.c.b16 %v231, %v230
  %v276 = vpack.c.b16 %v233, %v232
  %v277 = vpack.c.b16 %v235, %v234
  %v278 = vpack.c.b16 %v237, %v236
  %v279 = vpack.c.b16 %v239, %v238
  %v280 = vpack.c.b16 %v241, %v240
  %v281 = vpack.c.b16 %v243, %v242
  %v282 = vpack.c.b16 %v245, %v244
  %v283 = vpack.c.b16 %v247, %v246
  %v284 = vpack.c.b16 %v249, %v248
  %v285 = vpack.c.b16 %v251, %v250
  %v286 = vpack.c.b16 %v253, %v252
  %v287 = vpack.c.b16 %v255, %v254
  %320 = vmatprep.subr.bf16.mxu0 0
  %321 = vmatpush1.bf16.msra.mxu0 %v256
  %322 = vmatprep.subr.bf16.mxu0 0
  %323 = vmatpush1.bf16.msra.mxu0 %v257
  %324 = vmatprep.subr.bf16.mxu0 0
  %325 = vmatpush1.bf16.msra.mxu0 %v258
  %326 = vmatprep.subr.bf16.mxu0 0
  %327 = vmatpush1.bf16.msra.mxu0 %v259
  %328 = vmatprep.subr.bf16.mxu0 0
  %329 = vmatpush1.bf16.msra.mxu0 %v260
  %330 = vmatprep.subr.bf16.mxu0 0
  %331 = vmatpush1.bf16.msra.mxu0 %v261
  %332 = vmatprep.subr.bf16.mxu0 0
  %333 = vmatpush1.bf16.msra.mxu0 %v262
  %334 = vmatprep.subr.bf16.mxu0 0
  %335 = vmatpush1.bf16.msra.mxu0 %v263
  %336 = vmatprep.subr.bf16.mxu0 0
  %337 = vmatpush1.bf16.msra.mxu0 %v264
  %338 = vmatprep.subr.bf16.mxu0 0
  %339 = vmatpush1.bf16.msra.mxu0 %v265
  %340 = vmatprep.subr.bf16.mxu0 0
  %341 = vmatpush1.bf16.msra.mxu0 %v266
  %342 = vmatprep.subr.bf16.mxu0 0
  %343 = vmatpush1.bf16.msra.mxu0 %v267
  %344 = vmatprep.subr.bf16.mxu0 0
  %345 = vmatpush1.bf16.msra.mxu0 %v268
  %346 = vmatprep.subr.bf16.mxu0 0
  %347 = vmatpush1.bf16.msra.mxu0 %v269
  %348 = vmatprep.subr.bf16.mxu0 0
  %349 = vmatpush1.bf16.msra.mxu0 %v270
  %350 = vmatprep.subr.bf16.mxu0 0
  %351 = vmatpush1.bf16.msra.mxu0 %v271
  %352 = vmatprep.mubr.bf16.mxu0 %v54
  %353 = vmatmul.mubr.bf16.gmra.mrb[0].mxu0 %v53
  %v354 = vpop.f32.mrb[0].mxu0
  %v355 = vadd.f32 %v126, %v354
  %v356 = vpop.f32.mrb[0].mxu0
  %v357 = vpop.f32.mrb[0].mxu0
  %v358 = vadd.f32 %v126, %v357
  %v359 = vpop.f32.mrb[0].mxu0
  %360 = vdwg.mxu0
  %361 = vmatprep.subr.bf16.mxu0 0
  %362 = vmatpush1.bf16.msra.mxu0 %v272
  %363 = vmatprep.subr.bf16.mxu0 0
  %364 = vmatpush1.bf16.msra.mxu0 %v273
  %365 = vmatprep.subr.bf16.mxu0 0
  %366 = vmatpush1.bf16.msra.mxu0 %v274
  %367 = vmatprep.subr.bf16.mxu0 0
  %368 = vmatpush1.bf16.msra.mxu0 %v275
  %369 = vmatprep.subr.bf16.mxu0 0
  %370 = vmatpush1.bf16.msra.mxu0 %v276
  %371 = vmatprep.subr.bf16.mxu0 0
  %372 = vmatpush1.bf16.msra.mxu0 %v277
  %373 = vmatprep.subr.bf16.mxu0 0
  %374 = vmatpush1.bf16.msra.mxu0 %v278
  %375 = vmatprep.subr.bf16.mxu0 0
  %376 = vmatpush1.bf16.msra.mxu0 %v279
  %377 = vmatprep.subr.bf16.mxu0 0
  %378 = vmatpush1.bf16.msra.mxu0 %v280
  %379 = vmatprep.subr.bf16.mxu0 0
  %380 = vmatpush1.bf16.msra.mxu0 %v281
  %381 = vmatprep.subr.bf16.mxu0 0
  %382 = vmatpush1.bf16.msra.mxu0 %v282
  %383 = vmatprep.subr.bf16.mxu0 0
  %384 = vmatpush1.bf16.msra.mxu0 %v283
  %385 = vmatprep.subr.bf16.mxu0 0
  %386 = vmatpush1.bf16.msra.mxu0 %v284
  %387 = vmatprep.subr.bf16.mxu0 0
  %388 = vmatpush1.bf16.msra.mxu0 %v285
  %389 = vmatprep.subr.bf16.mxu0 0
  %390 = vmatpush1.bf16.msra.mxu0 %v286
  %391 = vmatprep.subr.bf16.mxu0 0
  %392 = vmatpush1.bf16.msra.mxu0 %v287
  %393 = vmatprep.mubr.bf16.mxu0 %v56
  %394 = vmatmul.mubr.bf16.gmra.mrb[0].mxu0 %v55
  %v395 = vpop.f32.mrb[0].mxu0
  %v396 = vadd.f32 %v355, %v395
  %v397 = vpop.f32.mrb[0].mxu0
  %v398 = vpop.f32.mrb[0].mxu0
  %v399 = vadd.f32 %v358, %v398
  %v400 = vpop.f32.mrb[0].mxu0
  %401 = vdwg.mxu0
  %v402 = vpack.c.bf16 %v399, %v396
  %v404 = vunpack.c.l.b16 %v402
  %v405 = vunpack.c.h.b16 %v402
  %v406 = vpack.c.b16 %v404, %v404
  %v407 = vpack.c.b16 %v405, %v405
  %410 = vst [vmem:[%s3] sm:$0xf] %v406
  %411 = vst [vmem:[%s3 + $0x4] sm:$0xf] %v407
  %v412 = vadd.f32 %v396, %v399
  %v413 = vrot.slane %v412, 4
  %v414 = vadd.f32 %v412, %v413
  %v415 = vrot.slane %v414, 2
  %v416 = vadd.f32 %v414, %v415
  %v417 = vrot.slane %v416, 1
  %v418 = vadd.f32 %v416, %v417
  %v419 = vmul.f32 %v396, %v396
  %v420 = vmul.f32 %v399, %v399
  %v421 = vadd.f32 %v419, %v420
  %v422 = vrot.slane %v421, 4
  %v423 = vadd.f32 %v421, %v422
  %v424 = vrot.slane %v423, 2
  %v425 = vadd.f32 %v423, %v424
  %v426 = vrot.slane %v425, 1
  %v427 = vadd.f32 %v425, %v426
  %v428 = vlaneseq
  %v429 = vshrl.u32 %v428, 7
  %vm430 = vcmp.eq.s32.totalorder %v429, 0
  %vm431 = vcmp.eq.s32.totalorder %v429, 1
  %v432 = vsel %vm431, %v427, 0.0
  %v433 = vsel %vm430, %v418, %v432
  %434 = vst [vmem:[%s4] sm:$0xff] %v433
  // Predicated region
  $region14: #{_lambda_.13} parent=0 // pred_check
    _
  $region15: #{_lambda_.13} parent=0 // pred_check_branch
    %436 = sbr.rel (0) target = $region17
  $region16: #{_lambda_.13} parent=0 // pred_region
    _
  $region17: #{_lambda_.13} parent=0 // pred_fallthru
    _
  // Predicated region
  $region18: #{_lambda_.13} parent=0 // pred_check
    _
  $region19: #{_lambda_.13} parent=0 // pred_check_branch
    %438 = sbr.rel (0) target = $region21
  $region20: #{_lambda_.13} parent=0 // pred_region
    _
  $region21: #{_lambda_.13} parent=0 // pred_fallthru
    _
  // Predicated region
  $region22: #{_lambda_.13} parent=0 // pred_check
    _
  $region23: #{_lambda_.13} parent=0 // pred_check_branch
    %440 = sbr.rel (0) target = $region25
  $region24: #{_lambda_.13} parent=0 // pred_region
    _
  $region25: #{_lambda_.13} parent=0 // pred_fallthru
    _
  // Predicated region
  $region26: #{_lambda_.13} parent=0 // pred_check
    _
  $region27: #{_lambda_.13} parent=0 // pred_check_branch
    %442 = sbr.rel (0) target = $region29
  $region28: #{_lambda_.13} parent=0 // pred_region
    _
  $region29: #{_lambda_.13} parent=0 // pred_fallthru
    _

// kernel: squeeze.20
$region0: #{squeeze.20}
  %s0 = inlined_call_operand.vmem [shape: f32[256], index: 0, kind: input, shape index: {}]
  %s1 = inlined_call_operand.vmem [shape: f32[4,64], index: 1, kind: output, shape index: {}]
  $region1: #{squeeze.20} parent=0
    #allocation0 [shape = 'u8[4096]{0}', space=vmem, size = 0x1000, scoped, tag = 'scoped mem for output reshape']
    #allocation1 [shape = 'u8[4096]{0}', space=vmem, size = 0x1000, scoped, tag = 'scoped mem for input reshape']
    %s3 = sshllo.u32 0, 2
    %v4 = vld [vmem:[%s0] sm:%s3]
    %5 = vst [vmem:[#allocation1] sm:%s3] %v4
    %v6 = vld [vmem:[#allocation1] sm:$0x3]
    %vm7 = vcmask 523264
    %8 = vst.msk [vmem:[#allocation0] ss:$2 sm:$0x3] %vm7, %v6
    %v9 = vld [vmem:[#allocation1] sm:$0x3]
    %10 = vrot.lane.b32.xlu0 %v9, 64
    %v11 = vpop.permute.xlu0 %10
    %vm12 = vcmask 523264
    %s13 = scalar_lea.vmem [#allocation0], 1
    %14 = vst.msk [vmem:[%s13] ss:$2 sm:$0x3] %vm12, %v11
    %s16 = sshllo.u32 0, 4
    %v18 = vld [vmem:[#allocation0] sm:%s16]
    %s19 = sshllo.u32 0, 4
    %20 = vst [vmem:[%s1] sm:%s19] %v18

// kernel: tile.48
$region0: #{tile.48}
  #allocation0 [shape = 's32[1]{0}', space=sflag, size = 0x4, scoped, tag = 'scoped memory for tile.48']
  %s0 = inlined_call_operand.vmem [shape: f32[64], index: 0, kind: input, shape index: {}]
  %s1 = inlined_call_operand.vmem [shape: f32[4,64], index: 1, kind: output, shape index: {}]
  // Predicated region
  $region2: #{tile.48} parent=0 // pred_check
    _
  $region3: #{tile.48} parent=0 // pred_check_branch
    %3 = sbr.rel (0) target = $region5
  $region4: #{tile.48} parent=0 // pred_region
    _
  $region5: #{tile.48} parent=0 // pred_fallthru
    _
  %v4 = vld [vmem:[%s0] ss:$0 sm:$0xff]
  %5 = vst [vmem:[%s1] sm:$0xf] %v4

// kernel: squeeze.22
$region0: #{squeeze.22}
  %s0 = inlined_call_operand.vmem [shape: f32[128], index: 0, kind: input, shape index: {}]
  %s1 = inlined_call_operand.vmem [shape: f32[4,32], index: 1, kind: output, shape index: {}]
  $region1: #{squeeze.22} parent=0
    #allocation0 [shape = 'u8[4096]{0}', space=vmem, size = 0x1000, scoped, tag = 'scoped mem for output reshape']
    #allocation1 [shape = 'u8[4096]{0}', space=vmem, size = 0x1000, scoped, tag = 'scoped mem for input reshape']
    %s3 = sshllo.u32 0, 1
    %v4 = vld [vmem:[%s0] sm:%s3]
    %5 = vst [vmem:[#allocation1] sm:%s3] %v4
    %v6 = vld [vmem:[#allocation1] sm:$0x1]
    %vm7 = vcmask 261120
    %8 = vst.msk [vmem:[#allocation0] sm:$0x1] %vm7, %v6
    %v9 = vld [vmem:[#allocation1] sm:$0x1]
    %10 = vrot.lane.b32.xlu0 %v9, 96
    %v11 = vpop.permute.xlu0 %10
    %vm12 = vcmask 261120
    %s13 = scalar_lea.vmem [#allocation0], 1
    %14 = vst.msk [vmem:[%s13] sm:$0x1] %vm12, %v11
    %v15 = vld [vmem:[#allocation1] sm:$0x1]
    %16 = vrot.lane.b32.xlu0 %v15, 64
    %v17 = vpop.permute.xlu0 %16
    %vm18 = vcmask 261120
    %s19 = scalar_lea.vmem [#allocation0], 2
    %20 = vst.msk [vmem:[%s19] sm:$0x1] %vm18, %v17
    %v21 = vld [vmem:[#allocation1] sm:$0x1]
    %22 = vrot.lane.b32.xlu0 %v21, 32
    %v23 = vpop.permute.xlu0 %22
    %vm24 = vcmask 261120
    %s25 = scalar_lea.vmem [#allocation0], 3
    %26 = vst.msk [vmem:[%s25] sm:$0x1] %vm24, %v23
    %s28 = sshllo.u32 0, 4
    %v30 = vld [vmem:[#allocation0] sm:%s28]
    %s31 = sshllo.u32 0, 4
    %32 = vst [vmem:[%s1] sm:%s31] %v30

// kernel: _lambda_.15
$region0: #{_lambda_.15}
  #allocation0 [shape = 'u32[]', space=smem, size = 0x4, offset = 0x4, fixed_abs, tag = 'smem constant byte address 0x4 - core index']
  #allocation1 [shape = 'u32[144,128]{1,0:T(1,128)}', space=vmem, size = 0x12000, scoped, tag = 'internal scratch']
  %s0 = inlined_call_operand.vmem [shape: bf16[16,640], index: 0, kind: input, shape index: {}]
  %s1 = inlined_call_operand.vmem [shape: bf16[640,256], index: 1, kind: input, shape index: {}]
  %s2 = inlined_call_operand.vmem [shape: f32[1,256], index: 2, kind: input, shape index: {}]
  %s3 = inlined_call_operand.vmem [shape: bf16[16,256], index: 3, kind: output, shape index: {0}]
  %s4 = inlined_call_operand.vmem [shape: f32[1,8,256], index: 4, kind: output, shape index: {1}]
  %5 = xla_tuple %s3, %s4
  %s6 = sld [smem:[#allocation0]]
  $region30: #{_lambda_.15} parent=0
    _
  %s8 = ssub.s32 1, %s6
  %s9 = scalar_select 0, %s8, %s6
  // Predicated region
  $region2: #{_lambda_.15} parent=0 // pred_check
    _
  $region3: #{_lambda_.15} parent=0 // pred_check_branch
    %11 = sbr.rel (0) target = $region5
  $region4: #{_lambda_.15} parent=0 // pred_region
    _
  $region5: #{_lambda_.15} parent=0 // pred_fallthru
    _
  // Predicated region
  $region6: #{_lambda_.15} parent=0 // pred_check
    _
  $region7: #{_lambda_.15} parent=0 // pred_check_branch
    %13 = sbr.rel (0) target = $region9
  $region8: #{_lambda_.15} parent=0 // pred_region
    _
  $region9: #{_lambda_.15} parent=0 // pred_fallthru
    _
  // Predicated region
  $region10: #{_lambda_.15} parent=0 // pred_check
    _
  $region11: #{_lambda_.15} parent=0 // pred_check_branch
    %15 = sbr.rel (0) target = $region13
  $region12: #{_lambda_.15} parent=0 // pred_region
    _
  $region13: #{_lambda_.15} parent=0 // pred_fallthru
    _
  %v17 = vld [vmem:[%s0] sm:$0xff]
  %v18 = vld [vmem:[%s0 + $0x8] sm:$0xff]
  %v19 = vld [vmem:[%s0 + $0x10] sm:$0xf]
  %v20 = vld [vmem:[%s0 + $0x14] sm:$0xff]
  %v21 = vld [vmem:[%s0 + $0x1c] sm:$0xff]
  %v22 = vld [vmem:[%s0 + $0x24] sm:$0xf]
  %v23 = vunpack.c.l.bf16 %v17
  %v24 = vunpack.c.h.bf16 %v17
  %v25 = vunpack.c.l.bf16 %v18
  %v26 = vunpack.c.h.bf16 %v18
  %v27 = vunpack.c.l.bf16 %v19
  %v28 = vunpack.c.l.bf16 %v20
  %v29 = vunpack.c.h.bf16 %v20
  %v30 = vunpack.c.l.bf16 %v21
  %v31 = vunpack.c.h.bf16 %v21
  %v32 = vunpack.c.l.bf16 %v22
  %v33 = vmax.f32 %v23, 0.0
  %v34 = vmax.f32 %v24, 0.0
  %v35 = vmax.f32 %v25, 0.0
  %v36 = vmax.f32 %v26, 0.0
  %v37 = vmax.f32 %v27, 0.0
  %v38 = vmax.f32 %v28, 0.0
  %v39 = vmax.f32 %v29, 0.0
  %v40 = vmax.f32 %v30, 0.0
  %v41 = vmax.f32 %v31, 0.0
  %v42 = vmax.f32 %v32, 0.0
  %v43 = vpack.c.bf16 %v38, %v33
  %v44 = vpack.c.bf16 %v39, %v34
  %v45 = vpack.c.bf16 %v40, %v35
  %v46 = vpack.c.bf16 %v41, %v36
  %v47 = vpack.c.bf16 %v42, %v37
  %v48 = vld [vmem:[%s1] sm:$0xff]
  %v49 = vld [vmem:[%s1 + $0x8] sm:$0xff]
  %v50 = vld [vmem:[%s1 + $0x10] sm:$0xff]
  %v51 = vld [vmem:[%s1 + $0x18] sm:$0xff]
  %v52 = vld [vmem:[%s1 + $0x20] sm:$0xff]
  %v53 = vld [vmem:[%s1 + $0x28] sm:$0xff]
  %v54 = vld [vmem:[%s1 + $0x30] sm:$0xff]
  %v55 = vld [vmem:[%s1 + $0x38] sm:$0xff]
  %v56 = vld [vmem:[%s1 + $0x40] sm:$0xff]
  %v57 = vld [vmem:[%s1 + $0x48] sm:$0xff]
  %v58 = vld [vmem:[%s1 + $0x50] sm:$0xff]
  %v59 = vld [vmem:[%s1 + $0x58] sm:$0xff]
  %v60 = vld [vmem:[%s1 + $0x60] sm:$0xff]
  %v61 = vld [vmem:[%s1 + $0x68] sm:$0xff]
  %v62 = vld [vmem:[%s1 + $0x70] sm:$0xff]
  %v63 = vld [vmem:[%s1 + $0x78] sm:$0xff]
  %v64 = vld [vmem:[%s1 + $0x80] sm:$0xff]
  %v65 = vld [vmem:[%s1 + $0x88] sm:$0xff]
  %v66 = vld [vmem:[%s1 + $0x90] sm:$0xff]
  %v67 = vld [vmem:[%s1 + $0x98] sm:$0xff]
  %v68 = vld [vmem:[%s1 + $0xa0] sm:$0xff]
  %v69 = vld [vmem:[%s1 + $0xa8] sm:$0xff]
  %v70 = vld [vmem:[%s1 + $0xb0] sm:$0xff]
  %v71 = vld [vmem:[%s1 + $0xb8] sm:$0xff]
  %v72 = vld [vmem:[%s1 + $0xc0] sm:$0xff]
  %v73 = vld [vmem:[%s1 + $0xc8] sm:$0xff]
  %v74 = vld [vmem:[%s1 + $0xd0] sm:$0xff]
  %v75 = vld [vmem:[%s1 + $0xd8] sm:$0xff]
  %v76 = vld [vmem:[%s1 + $0xe0] sm:$0xff]
  %v77 = vld [vmem:[%s1 + $0xe8] sm:$0xff]
  %v78 = vld [vmem:[%s1 + $0xf0] sm:$0xff]
  %v79 = vld [vmem:[%s1 + $0xf8] sm:$0xff]
  %v80 = vld [vmem:[%s1 + $0x100] sm:$0xff]
  %v81 = vld [vmem:[%s1 + $0x108] sm:$0xff]
  %v82 = vld [vmem:[%s1 + $0x110] sm:$0xff]
  %v83 = vld [vmem:[%s1 + $0x118] sm:$0xff]
  %v84 = vld [vmem:[%s1 + $0x120] sm:$0xff]
  %v85 = vld [vmem:[%s1 + $0x128] sm:$0xff]
  %v86 = vld [vmem:[%s1 + $0x130] sm:$0xff]
  %v87 = vld [vmem:[%s1 + $0x138] sm:$0xff]
  %v88 = vld [vmem:[%s1 + $0x140] sm:$0xff]
  %v89 = vld [vmem:[%s1 + $0x148] sm:$0xff]
  %v90 = vld [vmem:[%s1 + $0x150] sm:$0xff]
  %v91 = vld [vmem:[%s1 + $0x158] sm:$0xff]
  %v92 = vld [vmem:[%s1 + $0x160] sm:$0xff]
  %v93 = vld [vmem:[%s1 + $0x168] sm:$0xff]
  %v94 = vld [vmem:[%s1 + $0x170] sm:$0xff]
  %v95 = vld [vmem:[%s1 + $0x178] sm:$0xff]
  %v96 = vld [vmem:[%s1 + $0x180] sm:$0xff]
  %v97 = vld [vmem:[%s1 + $0x188] sm:$0xff]
  %v98 = vld [vmem:[%s1 + $0x190] sm:$0xff]
  %v99 = vld [vmem:[%s1 + $0x198] sm:$0xff]
  %v100 = vld [vmem:[%s1 + $0x1a0] sm:$0xff]
  %v101 = vld [vmem:[%s1 + $0x1a8] sm:$0xff]
  %v102 = vld [vmem:[%s1 + $0x1b0] sm:$0xff]
  %v103 = vld [vmem:[%s1 + $0x1b8] sm:$0xff]
  %v104 = vld [vmem:[%s1 + $0x1c0] sm:$0xff]
  %v105 = vld [vmem:[%s1 + $0x1c8] sm:$0xff]
  %v106 = vld [vmem:[%s1 + $0x1d0] sm:$0xff]
  %v107 = vld [vmem:[%s1 + $0x1d8] sm:$0xff]
  %v108 = vld [vmem:[%s1 + $0x1e0] sm:$0xff]
  %v109 = vld [vmem:[%s1 + $0x1e8] sm:$0xff]
  %v110 = vld [vmem:[%s1 + $0x1f0] sm:$0xff]
  %v111 = vld [vmem:[%s1 + $0x1f8] sm:$0xff]
  %v112 = vld [vmem:[%s1 + $0x200] sm:$0xff]
  %v113 = vld [vmem:[%s1 + $0x208] sm:$0xff]
  %v114 = vld [vmem:[%s1 + $0x210] sm:$0xff]
  %v115 = vld [vmem:[%s1 + $0x218] sm:$0xff]
  %v116 = vld [vmem:[%s1 + $0x220] sm:$0xff]
  %v117 = vld [vmem:[%s1 + $0x228] sm:$0xff]
  %v118 = vld [vmem:[%s1 + $0x230] sm:$0xff]
  %v119 = vld [vmem:[%s1 + $0x238] sm:$0xff]
  %v120 = vld [vmem:[%s1 + $0x240] sm:$0xff]
  %v121 = vld [vmem:[%s1 + $0x248] sm:$0xff]
  %v122 = vld [vmem:[%s1 + $0x250] sm:$0xff]
  %v123 = vld [vmem:[%s1 + $0x258] sm:$0xff]
  %v124 = vld [vmem:[%s1 + $0x260] sm:$0xff]
  %v125 = vld [vmem:[%s1 + $0x268] sm:$0xff]
  %v126 = vld [vmem:[%s1 + $0x270] sm:$0xff]
  %v127 = vld [vmem:[%s1 + $0x278] sm:$0xff]
  %v128 = vld [vmem:[%s2] sm:$0x3]
  %v130 = vlaneseq
  %v131 = vshrl.u32 %v130, 7
  %v132 = vsub.s32 0, %v131
  %v133 = vrot.slane %v128, %v132
  %v134 = vlaneseq
  %v135 = vshrl.u32 %v134, 7
  %v136 = vsub.s32 1, %v135
  %v137 = vrot.slane %v128, %v136
  %v220 = vunpack.c.l.b16 %v48
  %v221 = vunpack.c.h.b16 %v48
  %v222 = vunpack.c.l.b16 %v49
  %v223 = vunpack.c.h.b16 %v49
  %v224 = vunpack.c.l.b16 %v50
  %v225 = vunpack.c.h.b16 %v50
  %v226 = vunpack.c.l.b16 %v51
  %v227 = vunpack.c.h.b16 %v51
  %v228 = vunpack.c.l.b16 %v52
  %v229 = vunpack.c.h.b16 %v52
  %v230 = vunpack.c.l.b16 %v53
  %v231 = vunpack.c.h.b16 %v53
  %v232 = vunpack.c.l.b16 %v54
  %v233 = vunpack.c.h.b16 %v54
  %v234 = vunpack.c.l.b16 %v55
  %v235 = vunpack.c.h.b16 %v55
  %v236 = vunpack.c.l.b16 %v56
  %v237 = vunpack.c.h.b16 %v56
  %v238 = vunpack.c.l.b16 %v57
  %v239 = vunpack.c.h.b16 %v57
  %v240 = vunpack.c.l.b16 %v58
  %v241 = vunpack.c.h.b16 %v58
  %v242 = vunpack.c.l.b16 %v59
  %v243 = vunpack.c.h.b16 %v59
  %v244 = vunpack.c.l.b16 %v60
  %v245 = vunpack.c.h.b16 %v60
  %v246 = vunpack.c.l.b16 %v61
  %v247 = vunpack.c.h.b16 %v61
  %v248 = vunpack.c.l.b16 %v62
  %v249 = vunpack.c.h.b16 %v62
  %v250 = vunpack.c.l.b16 %v63
  %v251 = vunpack.c.h.b16 %v63
  %v252 = vunpack.c.l.b16 %v64
  %v253 = vunpack.c.h.b16 %v64
  %v254 = vunpack.c.l.b16 %v65
  %v255 = vunpack.c.h.b16 %v65
  %v256 = vunpack.c.l.b16 %v66
  %v257 = vunpack.c.h.b16 %v66
  %v258 = vunpack.c.l.b16 %v67
  %v259 = vunpack.c.h.b16 %v67
  %v260 = vunpack.c.l.b16 %v68
  %v261 = vunpack.c.h.b16 %v68
  %v262 = vunpack.c.l.b16 %v69
  %v263 = vunpack.c.h.b16 %v69
  %v264 = vunpack.c.l.b16 %v70
  %v265 = vunpack.c.h.b16 %v70
  %v266 = vunpack.c.l.b16 %v71
  %v267 = vunpack.c.h.b16 %v71
  %v268 = vunpack.c.l.b16 %v72
  %v269 = vunpack.c.h.b16 %v72
  %v270 = vunpack.c.l.b16 %v73
  %v271 = vunpack.c.h.b16 %v73
  %v272 = vunpack.c.l.b16 %v74
  %v273 = vunpack.c.h.b16 %v74
  %v274 = vunpack.c.l.b16 %v75
  %v275 = vunpack.c.h.b16 %v75
  %v276 = vunpack.c.l.b16 %v76
  %v277 = vunpack.c.h.b16 %v76
  %v278 = vunpack.c.l.b16 %v77
  %v279 = vunpack.c.h.b16 %v77
  %v280 = vunpack.c.l.b16 %v78
  %v281 = vunpack.c.h.b16 %v78
  %v282 = vunpack.c.l.b16 %v79
  %v283 = vunpack.c.h.b16 %v79
  %v284 = vunpack.c.l.b16 %v80
  %v285 = vunpack.c.h.b16 %v80
  %v286 = vunpack.c.l.b16 %v81
  %v287 = vunpack.c.h.b16 %v81
  %v288 = vunpack.c.l.b16 %v82
  %v289 = vunpack.c.h.b16 %v82
  %v290 = vunpack.c.l.b16 %v83
  %v291 = vunpack.c.h.b16 %v83
  %v292 = vunpack.c.l.b16 %v84
  %v293 = vunpack.c.h.b16 %v84
  %v294 = vunpack.c.l.b16 %v85
  %v295 = vunpack.c.h.b16 %v85
  %v296 = vunpack.c.l.b16 %v86
  %v297 = vunpack.c.h.b16 %v86
  %v298 = vunpack.c.l.b16 %v87
  %v299 = vunpack.c.h.b16 %v87
  %v300 = vunpack.c.l.b16 %v88
  %v301 = vunpack.c.h.b16 %v88
  %v302 = vunpack.c.l.b16 %v89
  %v303 = vunpack.c.h.b16 %v89
  %v304 = vunpack.c.l.b16 %v90
  %v305 = vunpack.c.h.b16 %v90
  %v306 = vunpack.c.l.b16 %v91
  %v307 = vunpack.c.h.b16 %v91
  %v308 = vunpack.c.l.b16 %v92
  %v309 = vunpack.c.h.b16 %v92
  %v310 = vunpack.c.l.b16 %v93
  %v311 = vunpack.c.h.b16 %v93
  %v312 = vunpack.c.l.b16 %v94
  %v313 = vunpack.c.h.b16 %v94
  %v314 = vunpack.c.l.b16 %v95
  %v315 = vunpack.c.h.b16 %v95
  %v316 = vunpack.c.l.b16 %v96
  %v317 = vunpack.c.h.b16 %v96
  %v318 = vunpack.c.l.b16 %v97
  %v319 = vunpack.c.h.b16 %v97
  %v320 = vunpack.c.l.b16 %v98
  %v321 = vunpack.c.h.b16 %v98
  %v322 = vunpack.c.l.b16 %v99
  %v323 = vunpack.c.h.b16 %v99
  %v324 = vunpack.c.l.b16 %v100
  %v325 = vunpack.c.h.b16 %v100
  %v326 = vunpack.c.l.b16 %v101
  %v327 = vunpack.c.h.b16 %v101
  %v328 = vunpack.c.l.b16 %v102
  %v329 = vunpack.c.h.b16 %v102
  %v330 = vunpack.c.l.b16 %v103
  %v331 = vunpack.c.h.b16 %v103
  %v332 = vunpack.c.l.b16 %v104
  %v333 = vunpack.c.h.b16 %v104
  %v334 = vunpack.c.l.b16 %v105
  %v335 = vunpack.c.h.b16 %v105
  %v336 = vunpack.c.l.b16 %v106
  %v337 = vunpack.c.h.b16 %v106
  %v338 = vunpack.c.l.b16 %v107
  %v339 = vunpack.c.h.b16 %v107
  %v340 = vunpack.c.l.b16 %v108
  %v341 = vunpack.c.h.b16 %v108
  %v342 = vunpack.c.l.b16 %v109
  %v343 = vunpack.c.h.b16 %v109
  %v344 = vunpack.c.l.b16 %v110
  %v345 = vunpack.c.h.b16 %v110
  %v346 = vunpack.c.l.b16 %v111
  %v347 = vunpack.c.h.b16 %v111
  %v348 = vunpack.c.l.b16 %v112
  %v349 = vunpack.c.h.b16 %v112
  %v350 = vunpack.c.l.b16 %v113
  %v351 = vunpack.c.h.b16 %v113
  %v352 = vunpack.c.l.b16 %v114
  %v353 = vunpack.c.h.b16 %v114
  %v354 = vunpack.c.l.b16 %v115
  %v355 = vunpack.c.h.b16 %v115
  %v356 = vunpack.c.l.b16 %v116
  %v357 = vunpack.c.h.b16 %v116
  %v358 = vunpack.c.l.b16 %v117
  %v359 = vunpack.c.h.b16 %v117
  %v360 = vunpack.c.l.b16 %v118
  %v361 = vunpack.c.h.b16 %v118
  %v362 = vunpack.c.l.b16 %v119
  %v363 = vunpack.c.h.b16 %v119
  %v364 = vunpack.c.l.b16 %v120
  %v365 = vunpack.c.h.b16 %v120
  %v366 = vunpack.c.l.b16 %v121
  %v367 = vunpack.c.h.b16 %v121
  %v368 = vunpack.c.l.b16 %v122
  %v369 = vunpack.c.h.b16 %v122
  %v370 = vunpack.c.l.b16 %v123
  %v371 = vunpack.c.h.b16 %v123
  %v372 = vunpack.c.l.b16 %v124
  %v373 = vunpack.c.h.b16 %v124
  %v374 = vunpack.c.l.b16 %v125
  %v375 = vunpack.c.h.b16 %v125
  %v376 = vunpack.c.l.b16 %v126
  %v377 = vunpack.c.h.b16 %v126
  %v378 = vunpack.c.l.b16 %v127
  %v379 = vunpack.c.h.b16 %v127
  %v380 = vpack.c.b16 %v222, %v220
  %v381 = vpack.c.b16 %v223, %v221
  %v382 = vpack.c.b16 %v226, %v224
  %v383 = vpack.c.b16 %v227, %v225
  %v384 = vpack.c.b16 %v230, %v228
  %v385 = vpack.c.b16 %v231, %v229
  %v386 = vpack.c.b16 %v234, %v232
  %v387 = vpack.c.b16 %v235, %v233
  %v388 = vpack.c.b16 %v238, %v236
  %v389 = vpack.c.b16 %v239, %v237
  %v390 = vpack.c.b16 %v242, %v240
  %v391 = vpack.c.b16 %v243, %v241
  %v392 = vpack.c.b16 %v246, %v244
  %v393 = vpack.c.b16 %v247, %v245
  %v394 = vpack.c.b16 %v250, %v248
  %v395 = vpack.c.b16 %v251, %v249
  %v396 = vpack.c.b16 %v254, %v252
  %v397 = vpack.c.b16 %v255, %v253
  %v398 = vpack.c.b16 %v258, %v256
  %v399 = vpack.c.b16 %v259, %v257
  %v400 = vpack.c.b16 %v262, %v260
  %v401 = vpack.c.b16 %v263, %v261
  %v402 = vpack.c.b16 %v266, %v264
  %v403 = vpack.c.b16 %v267, %v265
  %v404 = vpack.c.b16 %v270, %v268
  %v405 = vpack.c.b16 %v271, %v269
  %v406 = vpack.c.b16 %v274, %v272
  %v407 = vpack.c.b16 %v275, %v273
  %v408 = vpack.c.b16 %v278, %v276
  %v409 = vpack.c.b16 %v279, %v277
  %v410 = vpack.c.b16 %v282, %v280
  %v411 = vpack.c.b16 %v283, %v281
  %v412 = vpack.c.b16 %v286, %v284
  %v413 = vpack.c.b16 %v287, %v285
  %v414 = vpack.c.b16 %v290, %v288
  %v415 = vpack.c.b16 %v291, %v289
  %v416 = vpack.c.b16 %v294, %v292
  %v417 = vpack.c.b16 %v295, %v293
  %v418 = vpack.c.b16 %v298, %v296
  %v419 = vpack.c.b16 %v299, %v297
  %v420 = vpack.c.b16 %v302, %v300
  %v421 = vpack.c.b16 %v303, %v301
  %v422 = vpack.c.b16 %v306, %v304
  %v423 = vpack.c.b16 %v307, %v305
  %v424 = vpack.c.b16 %v310, %v308
  %v425 = vpack.c.b16 %v311, %v309
  %v426 = vpack.c.b16 %v314, %v312
  %v427 = vpack.c.b16 %v315, %v313
  %v428 = vpack.c.b16 %v318, %v316
  %v429 = vpack.c.b16 %v319, %v317
  %v430 = vpack.c.b16 %v322, %v320
  %v431 = vpack.c.b16 %v323, %v321
  %v432 = vpack.c.b16 %v326, %v324
  %v433 = vpack.c.b16 %v327, %v325
  %v434 = vpack.c.b16 %v330, %v328
  %v435 = vpack.c.b16 %v331, %v329
  %v436 = vpack.c.b16 %v334, %v332
  %v437 = vpack.c.b16 %v335, %v333
  %v438 = vpack.c.b16 %v338, %v336
  %v439 = vpack.c.b16 %v339, %v337
  %v440 = vpack.c.b16 %v342, %v340
  %v441 = vpack.c.b16 %v343, %v341
  %v442 = vpack.c.b16 %v346, %v344
  %v443 = vpack.c.b16 %v347, %v345
  %v444 = vpack.c.b16 %v350, %v348
  %v445 = vpack.c.b16 %v351, %v349
  %v446 = vpack.c.b16 %v354, %v352
  %v447 = vpack.c.b16 %v355, %v353
  %v448 = vpack.c.b16 %v358, %v356
  %v449 = vpack.c.b16 %v359, %v357
  %v450 = vpack.c.b16 %v362, %v360
  %v451 = vpack.c.b16 %v363, %v361
  %v452 = vpack.c.b16 %v366, %v364
  %v453 = vpack.c.b16 %v367, %v365
  %v454 = vpack.c.b16 %v370, %v368
  %v455 = vpack.c.b16 %v371, %v369
  %v456 = vpack.c.b16 %v374, %v372
  %v457 = vpack.c.b16 %v375, %v373
  %v458 = vpack.c.b16 %v378, %v376
  %v459 = vpack.c.b16 %v379, %v377
  %540 = vmatprep.subr.bf16.mxu0 %v381
  %541 = vmatpush1.bf16.msra.mxu0 %v380
  %542 = vmatprep.subr.bf16.mxu0 %v383
  %543 = vmatpush1.bf16.msra.mxu0 %v382
  %544 = vmatprep.subr.bf16.mxu0 %v385
  %545 = vmatpush1.bf16.msra.mxu0 %v384
  %546 = vmatprep.subr.bf16.mxu0 %v387
  %547 = vmatpush1.bf16.msra.mxu0 %v386
  %548 = vmatprep.subr.bf16.mxu0 %v389
  %549 = vmatpush1.bf16.msra.mxu0 %v388
  %550 = vmatprep.subr.bf16.mxu0 %v391
  %551 = vmatpush1.bf16.msra.mxu0 %v390
  %552 = vmatprep.subr.bf16.mxu0 %v393
  %553 = vmatpush1.bf16.msra.mxu0 %v392
  %554 = vmatprep.subr.bf16.mxu0 %v395
  %555 = vmatpush1.bf16.msra.mxu0 %v394
  %556 = vmatprep.subr.bf16.mxu0 %v397
  %557 = vmatpush1.bf16.msra.mxu0 %v396
  %558 = vmatprep.subr.bf16.mxu0 %v399
  %559 = vmatpush1.bf16.msra.mxu0 %v398
  %560 = vmatprep.subr.bf16.mxu0 %v401
  %561 = vmatpush1.bf16.msra.mxu0 %v400
  %562 = vmatprep.subr.bf16.mxu0 %v403
  %563 = vmatpush1.bf16.msra.mxu0 %v402
  %564 = vmatprep.subr.bf16.mxu0 %v405
  %565 = vmatpush1.bf16.msra.mxu0 %v404
  %566 = vmatprep.subr.bf16.mxu0 %v407
  %567 = vmatpush1.bf16.msra.mxu0 %v406
  %568 = vmatprep.subr.bf16.mxu0 %v409
  %569 = vmatpush1.bf16.msra.mxu0 %v408
  %570 = vmatprep.subr.bf16.mxu0 %v411
  %571 = vmatpush1.bf16.msra.mxu0 %v410
  %572 = vmatprep.mubr.bf16.mxu0 %v44
  %573 = vmatmul.mubr.bf16.gmra.mrb[0].mxu0 %v43
  %v574 = vpop.f32.mrb[0].mxu0
  %v575 = vadd.f32 %v133, %v574
  %v576 = vpop.f32.mrb[0].mxu0
  %v577 = vadd.f32 %v137, %v576
  %v578 = vpop.f32.mrb[0].mxu0
  %v579 = vadd.f32 %v133, %v578
  %v580 = vpop.f32.mrb[0].mxu0
  %v581 = vadd.f32 %v137, %v580
  %582 = vdwg.mxu0
  %583 = vmatprep.subr.bf16.mxu0 %v413
  %584 = vmatpush1.bf16.msra.mxu0 %v412
  %585 = vmatprep.subr.bf16.mxu0 %v415
  %586 = vmatpush1.bf16.msra.mxu0 %v414
  %587 = vmatprep.subr.bf16.mxu0 %v417
  %588 = vmatpush1.bf16.msra.mxu0 %v416
  %589 = vmatprep.subr.bf16.mxu0 %v419
  %590 = vmatpush1.bf16.msra.mxu0 %v418
  %591 = vmatprep.subr.bf16.mxu0 %v421
  %592 = vmatpush1.bf16.msra.mxu0 %v420
  %593 = vmatprep.subr.bf16.mxu0 %v423
  %594 = vmatpush1.bf16.msra.mxu0 %v422
  %595 = vmatprep.subr.bf16.mxu0 %v425
  %596 = vmatpush1.bf16.msra.mxu0 %v424
  %597 = vmatprep.subr.bf16.mxu0 %v427
  %598 = vmatpush1.bf16.msra.mxu0 %v426
  %599 = vmatprep.subr.bf16.mxu0 %v429
  %600 = vmatpush1.bf16.msra.mxu0 %v428
  %601 = vmatprep.subr.bf16.mxu0 %v431
  %602 = vmatpush1.bf16.msra.mxu0 %v430
  %603 = vmatprep.subr.bf16.mxu0 %v433
  %604 = vmatpush1.bf16.msra.mxu0 %v432
  %605 = vmatprep.subr.bf16.mxu0 %v435
  %606 = vmatpush1.bf16.msra.mxu0 %v434
  %607 = vmatprep.subr.bf16.mxu0 %v437
  %608 = vmatpush1.bf16.msra.mxu0 %v436
  %609 = vmatprep.subr.bf16.mxu0 %v439
  %610 = vmatpush1.bf16.msra.mxu0 %v438
  %611 = vmatprep.subr.bf16.mxu0 %v441
  %612 = vmatpush1.bf16.msra.mxu0 %v440
  %613 = vmatprep.subr.bf16.mxu0 %v443
  %614 = vmatpush1.bf16.msra.mxu0 %v442
  %615 = vmatprep.mubr.bf16.mxu0 %v46
  %616 = vmatmul.mubr.bf16.gmra.mrb[0].mxu0 %v45
  %v617 = vpop.f32.mrb[0].mxu0
  %v618 = vadd.f32 %v575, %v617
  %v619 = vpop.f32.mrb[0].mxu0
  %v620 = vadd.f32 %v577, %v619
  %v621 = vpop.f32.mrb[0].mxu0
  %v622 = vadd.f32 %v579, %v621
  %v623 = vpop.f32.mrb[0].mxu0
  %v624 = vadd.f32 %v581, %v623
  %625 = vdwg.mxu0
  %626 = vmatprep.subr.bf16.mxu0 %v445
  %627 = vmatpush1.bf16.msra.mxu0 %v444
  %628 = vmatprep.subr.bf16.mxu0 %v447
  %629 = vmatpush1.bf16.msra.mxu0 %v446
  %630 = vmatprep.subr.bf16.mxu0 %v449
  %631 = vmatpush1.bf16.msra.mxu0 %v448
  %632 = vmatprep.subr.bf16.mxu0 %v451
  %633 = vmatpush1.bf16.msra.mxu0 %v450
  %634 = vmatprep.subr.bf16.mxu0 %v453
  %635 = vmatpush1.bf16.msra.mxu0 %v452
  %636 = vmatprep.subr.bf16.mxu0 %v455
  %637 = vmatpush1.bf16.msra.mxu0 %v454
  %638 = vmatprep.subr.bf16.mxu0 %v457
  %639 = vmatpush1.bf16.msra.mxu0 %v456
  %640 = vmatprep.subr.bf16.mxu0 %v459
  %641 = vmatpush1.bf16.msra.mxu0 %v458
  %642 = vmatprep.subr.bf16.mxu0 0
  %643 = vmatpush1.bf16.msra.mxu0 0
  %644 = vmatprep.subr.bf16.mxu0 0
  %645 = vmatpush1.bf16.msra.mxu0 0
  %646 = vmatprep.subr.bf16.mxu0 0
  %647 = vmatpush1.bf16.msra.mxu0 0
  %648 = vmatprep.subr.bf16.mxu0 0
  %649 = vmatpush1.bf16.msra.mxu0 0
  %650 = vmatprep.subr.bf16.mxu0 0
  %651 = vmatpush1.bf16.msra.mxu0 0
  %652 = vmatprep.subr.bf16.mxu0 0
  %653 = vmatpush1.bf16.msra.mxu0 0
  %654 = vmatprep.subr.bf16.mxu0 0
  %655 = vmatpush1.bf16.msra.mxu0 0
  %656 = vmatprep.subr.bf16.mxu0 0
  %657 = vmatpush1.bf16.msra.mxu0 0
  %658 = vmatprep.mubr.bf16.mxu0 0
  %659 = vmatmul.mubr.bf16.gmra.mrb[0].mxu0 %v47
  %v660 = vpop.f32.mrb[0].mxu0
  %v661 = vadd.f32 %v618, %v660
  %v662 = vpop.f32.mrb[0].mxu0
  %v663 = vadd.f32 %v620, %v662
  %v664 = vpop.f32.mrb[0].mxu0
  %v665 = vadd.f32 %v622, %v664
  %v666 = vpop.f32.mrb[0].mxu0
  %v667 = vadd.f32 %v624, %v666
  %668 = vdwg.mxu0
  %v669 = vpack.c.bf16 %v665, %v661
  %v670 = vpack.c.bf16 %v667, %v663
  %v673 = vunpack.c.l.b16 %v669
  %v674 = vunpack.c.l.b16 %v670
  %v675 = vunpack.c.h.b16 %v669
  %v676 = vunpack.c.h.b16 %v670
  %v677 = vpack.c.b16 %v674, %v673
  %v678 = vpack.c.b16 %v676, %v675
  %681 = vst [vmem:[%s3] sm:$0xff] %v677
  %682 = vst [vmem:[%s3 + $0x8] sm:$0xff] %v678
  %v683 = vadd.f32 %v661, %v665
  %v684 = vrot.slane %v683, 4
  %v685 = vadd.f32 %v683, %v684
  %v686 = vrot.slane %v685, 2
  %v687 = vadd.f32 %v685, %v686
  %v688 = vrot.slane %v687, 1
  %v689 = vadd.f32 %v687, %v688
  %v690 = vadd.f32 %v663, %v667
  %v691 = vrot.slane %v690, 4
  %v692 = vadd.f32 %v690, %v691
  %v693 = vrot.slane %v692, 2
  %v694 = vadd.f32 %v692, %v693
  %v695 = vrot.slane %v694, 1
  %v696 = vadd.f32 %v694, %v695
  %v697 = vmul.f32 %v661, %v661
  %v698 = vmul.f32 %v663, %v663
  %v699 = vmul.f32 %v665, %v665
  %v700 = vmul.f32 %v667, %v667
  %v701 = vadd.f32 %v697, %v699
  %v702 = vrot.slane %v701, 4
  %v703 = vadd.f32 %v701, %v702
  %v704 = vrot.slane %v703, 2
  %v705 = vadd.f32 %v703, %v704
  %v706 = vrot.slane %v705, 1
  %v707 = vadd.f32 %v705, %v706
  %v708 = vadd.f32 %v698, %v700
  %v709 = vrot.slane %v708, 4
  %v710 = vadd.f32 %v708, %v709
  %v711 = vrot.slane %v710, 2
  %v712 = vadd.f32 %v710, %v711
  %v713 = vrot.slane %v712, 1
  %v714 = vadd.f32 %v712, %v713
  %v715 = vlaneseq
  %v716 = vshrl.u32 %v715, 7
  %vm717 = vcmp.eq.s32.totalorder %v716, 0
  %vm718 = vcmp.eq.s32.totalorder %v716, 1
  %v719 = vsel %vm718, %v707, 0.0
  %v720 = vsel %vm718, %v714, 0.0
  %v721 = vsel %vm717, %v689, %v719
  %v722 = vsel %vm717, %v696, %v720
  %723 = vst [vmem:[%s4] sm:$0xff] %v721
  %724 = vst [vmem:[%s4 + $0x8] sm:$0xff] %v722
  // Predicated region
  $region14: #{_lambda_.15} parent=0 // pred_check
    _
  $region15: #{_lambda_.15} parent=0 // pred_check_branch
    %726 = sbr.rel (0) target = $region17
  $region16: #{_lambda_.15} parent=0 // pred_region
    _
  $region17: #{_lambda_.15} parent=0 // pred_fallthru
    _
  // Predicated region
  $region18: #{_lambda_.15} parent=0 // pred_check
    _
  $region19: #{_lambda_.15} parent=0 // pred_check_branch
    %728 = sbr.rel (0) target = $region21
  $region20: #{_lambda_.15} parent=0 // pred_region
    _
  $region21: #{_lambda_.15} parent=0 // pred_fallthru
    _
  // Predicated region
  $region22: #{_lambda_.15} parent=0 // pred_check
    _
  $region23: #{_lambda_.15} parent=0 // pred_check_branch
    %730 = sbr.rel (0) target = $region25
  $region24: #{_lambda_.15} parent=0 // pred_region
    _
  $region25: #{_lambda_.15} parent=0 // pred_fallthru
    _
  // Predicated region
  $region26: #{_lambda_.15} parent=0 // pred_check
    _
  $region27: #{_lambda_.15} parent=0 // pred_check_branch
    %732 = sbr.rel (0) target = $region29
  $region28: #{_lambda_.15} parent=0 // pred_region
    _
  $region29: #{_lambda_.15} parent=0 // pred_fallthru
    _

// kernel: tile.58
$region0: #{tile.58}
  #allocation0 [shape = 's32[1]{0}', space=sflag, size = 0x4, scoped, tag = 'scoped memory for tile.58']
  %s0 = inlined_call_operand.vmem [shape: f32[32], index: 0, kind: input, shape index: {}]
  %s1 = inlined_call_operand.vmem [shape: f32[4,32], index: 1, kind: output, shape index: {}]
  // Predicated region
  $region2: #{tile.58} parent=0 // pred_check
    _
  $region3: #{tile.58} parent=0 // pred_check_branch
    %3 = sbr.rel (0) target = $region5
  $region4: #{tile.58} parent=0 // pred_region
    _
  $region5: #{tile.58} parent=0 // pred_fallthru
    _
  %v4 = vld [vmem:[%s0] ss:$0 sm:$0xff]
  %5 = vst [vmem:[%s1] sm:$0xf] %v4

// kernel: _lambda_.14
$region0: #{_lambda_.14}
  #allocation0 [shape = 'u32[]', space=smem, size = 0x4, offset = 0x4, fixed_abs, tag = 'smem constant byte address 0x4 - core index']
  #allocation1 [shape = 'u32[144,128]{1,0:T(1,128)}', space=vmem, size = 0x12000, scoped, tag = 'internal scratch']
  %s0 = inlined_call_operand.vmem [shape: bf16[16,1024], index: 0, kind: input, shape index: {}]
  %s1 = inlined_call_operand.vmem [shape: bf16[1024,128], index: 1, kind: input, shape index: {}]
  %s2 = inlined_call_operand.vmem [shape: f32[1,128], index: 2, kind: input, shape index: {}]
  %s3 = inlined_call_operand.vmem [shape: bf16[16,128], index: 3, kind: output, shape index: {}]
  %s4 = sld [smem:[#allocation0]]
  $region22: #{_lambda_.14} parent=0
    _
  %s6 = ssub.s32 1, %s4
  %s7 = scalar_select 0, %s6, %s4
  // Predicated region
  $region2: #{_lambda_.14} parent=0 // pred_check
    _
  $region3: #{_lambda_.14} parent=0 // pred_check_branch
    %9 = sbr.rel (0) target = $region5
  $region4: #{_lambda_.14} parent=0 // pred_region
    _
  $region5: #{_lambda_.14} parent=0 // pred_fallthru
    _
  // Predicated region
  $region6: #{_lambda_.14} parent=0 // pred_check
    _
  $region7: #{_lambda_.14} parent=0 // pred_check_branch
    %11 = sbr.rel (0) target = $region9
  $region8: #{_lambda_.14} parent=0 // pred_region
    _
  $region9: #{_lambda_.14} parent=0 // pred_fallthru
    _
  // Predicated region
  $region10: #{_lambda_.14} parent=0 // pred_check
    _
  $region11: #{_lambda_.14} parent=0 // pred_check_branch
    %13 = sbr.rel (0) target = $region13
  $region12: #{_lambda_.14} parent=0 // pred_region
    _
  $region13: #{_lambda_.14} parent=0 // pred_fallthru
    _
  %v15 = vld [vmem:[%s0] sm:$0xff]
  %v16 = vld [vmem:[%s0 + $0x8] sm:$0xff]
  %v17 = vld [vmem:[%s0 + $0x10] sm:$0xff]
  %v18 = vld [vmem:[%s0 + $0x18] sm:$0xff]
  %v19 = vld [vmem:[%s0 + $0x20] sm:$0xff]
  %v20 = vld [vmem:[%s0 + $0x28] sm:$0xff]
  %v21 = vld [vmem:[%s0 + $0x30] sm:$0xff]
  %v22 = vld [vmem:[%s0 + $0x38] sm:$0xff]
  %v23 = vunpack.c.l.bf16 %v15
  %v24 = vunpack.c.h.bf16 %v15
  %v25 = vunpack.c.l.bf16 %v16
  %v26 = vunpack.c.h.bf16 %v16
  %v27 = vunpack.c.l.bf16 %v17
  %v28 = vunpack.c.h.bf16 %v17
  %v29 = vunpack.c.l.bf16 %v18
  %v30 = vunpack.c.h.bf16 %v18
  %v31 = vunpack.c.l.bf16 %v19
  %v32 = vunpack.c.h.bf16 %v19
  %v33 = vunpack.c.l.bf16 %v20
  %v34 = vunpack.c.h.bf16 %v20
  %v35 = vunpack.c.l.bf16 %v21
  %v36 = vunpack.c.h.bf16 %v21
  %v37 = vunpack.c.l.bf16 %v22
  %v38 = vunpack.c.h.bf16 %v22
  %vm39 = vcmp.gt.f32.partialorder %v23, 0.0
  %vm40 = vcmp.gt.f32.partialorder %v24, 0.0
  %vm41 = vcmp.gt.f32.partialorder %v25, 0.0
  %vm42 = vcmp.gt.f32.partialorder %v26, 0.0
  %vm43 = vcmp.gt.f32.partialorder %v27, 0.0
  %vm44 = vcmp.gt.f32.partialorder %v28, 0.0
  %vm45 = vcmp.gt.f32.partialorder %v29, 0.0
  %vm46 = vcmp.gt.f32.partialorder %v30, 0.0
  %vm47 = vcmp.gt.f32.partialorder %v31, 0.0
  %vm48 = vcmp.gt.f32.partialorder %v32, 0.0
  %vm49 = vcmp.gt.f32.partialorder %v33, 0.0
  %vm50 = vcmp.gt.f32.partialorder %v34, 0.0
  %vm51 = vcmp.gt.f32.partialorder %v35, 0.0
  %vm52 = vcmp.gt.f32.partialorder %v36, 0.0
  %vm53 = vcmp.gt.f32.partialorder %v37, 0.0
  %vm54 = vcmp.gt.f32.partialorder %v38, 0.0
  %v55 = vmul.f32 %v23, 0.2
  %v56 = vmul.f32 %v24, 0.2
  %v57 = vmul.f32 %v25, 0.2
  %v58 = vmul.f32 %v26, 0.2
  %v59 = vmul.f32 %v27, 0.2
  %v60 = vmul.f32 %v28, 0.2
  %v61 = vmul.f32 %v29, 0.2
  %v62 = vmul.f32 %v30, 0.2
  %v63 = vmul.f32 %v31, 0.2
  %v64 = vmul.f32 %v32, 0.2
  %v65 = vmul.f32 %v33, 0.2
  %v66 = vmul.f32 %v34, 0.2
  %v67 = vmul.f32 %v35, 0.2
  %v68 = vmul.f32 %v36, 0.2
  %v69 = vmul.f32 %v37, 0.2
  %v70 = vmul.f32 %v38, 0.2
  %v71 = vsel %vm39, %v23, %v55
  %v72 = vsel %vm40, %v24, %v56
  %v73 = vsel %vm41, %v25, %v57
  %v74 = vsel %vm42, %v26, %v58
  %v75 = vsel %vm43, %v27, %v59
  %v76 = vsel %vm44, %v28, %v60
  %v77 = vsel %vm45, %v29, %v61
  %v78 = vsel %vm46, %v30, %v62
  %v79 = vsel %vm47, %v31, %v63
  %v80 = vsel %vm48, %v32, %v64
  %v81 = vsel %vm49, %v33, %v65
  %v82 = vsel %vm50, %v34, %v66
  %v83 = vsel %vm51, %v35, %v67
  %v84 = vsel %vm52, %v36, %v68
  %v85 = vsel %vm53, %v37, %v69
  %v86 = vsel %vm54, %v38, %v70
  %v87 = vpack.c.bf16 %v79, %v71
  %v88 = vpack.c.bf16 %v80, %v72
  %v89 = vpack.c.bf16 %v81, %v73
  %v90 = vpack.c.bf16 %v82, %v74
  %v91 = vpack.c.bf16 %v83, %v75
  %v92 = vpack.c.bf16 %v84, %v76
  %v93 = vpack.c.bf16 %v85, %v77
  %v94 = vpack.c.bf16 %v86, %v78
  %v95 = vld [vmem:[%s1] sm:$0xf]
  %v96 = vld [vmem:[%s1 + $0x4] sm:$0xf]
  %v97 = vld [vmem:[%s1 + $0x8] sm:$0xf]
  %v98 = vld [vmem:[%s1 + $0xc] sm:$0xf]
  %v99 = vld [vmem:[%s1 + $0x10] sm:$0xf]
  %v100 = vld [vmem:[%s1 + $0x14] sm:$0xf]
  %v101 = vld [vmem:[%s1 + $0x18] sm:$0xf]
  %v102 = vld [vmem:[%s1 + $0x1c] sm:$0xf]
  %v103 = vld [vmem:[%s1 + $0x20] sm:$0xf]
  %v104 = vld [vmem:[%s1 + $0x24] sm:$0xf]
  %v105 = vld [vmem:[%s1 + $0x28] sm:$0xf]
  %v106 = vld [vmem:[%s1 + $0x2c] sm:$0xf]
  %v107 = vld [vmem:[%s1 + $0x30] sm:$0xf]
  %v108 = vld [vmem:[%s1 + $0x34] sm:$0xf]
  %v109 = vld [vmem:[%s1 + $0x38] sm:$0xf]
  %v110 = vld [vmem:[%s1 + $0x3c] sm:$0xf]
  %v111 = vld [vmem:[%s1 + $0x40] sm:$0xf]
  %v112 = vld [vmem:[%s1 + $0x44] sm:$0xf]
  %v113 = vld [vmem:[%s1 + $0x48] sm:$0xf]
  %v114 = vld [vmem:[%s1 + $0x4c] sm:$0xf]
  %v115 = vld [vmem:[%s1 + $0x50] sm:$0xf]
  %v116 = vld [vmem:[%s1 + $0x54] sm:$0xf]
  %v117 = vld [vmem:[%s1 + $0x58] sm:$0xf]
  %v118 = vld [vmem:[%s1 + $0x5c] sm:$0xf]
  %v119 = vld [vmem:[%s1 + $0x60] sm:$0xf]
  %v120 = vld [vmem:[%s1 + $0x64] sm:$0xf]
  %v121 = vld [vmem:[%s1 + $0x68] sm:$0xf]
  %v122 = vld [vmem:[%s1 + $0x6c] sm:$0xf]
  %v123 = vld [vmem:[%s1 + $0x70] sm:$0xf]
  %v124 = vld [vmem:[%s1 + $0x74] sm:$0xf]
  %v125 = vld [vmem:[%s1 + $0x78] sm:$0xf]
  %v126 = vld [vmem:[%s1 + $0x7c] sm:$0xf]
  %v127 = vld [vmem:[%s1 + $0x80] sm:$0xf]
  %v128 = vld [vmem:[%s1 + $0x84] sm:$0xf]
  %v129 = vld [vmem:[%s1 + $0x88] sm:$0xf]
  %v130 = vld [vmem:[%s1 + $0x8c] sm:$0xf]
  %v131 = vld [vmem:[%s1 + $0x90] sm:$0xf]
  %v132 = vld [vmem:[%s1 + $0x94] sm:$0xf]
  %v133 = vld [vmem:[%s1 + $0x98] sm:$0xf]
  %v134 = vld [vmem:[%s1 + $0x9c] sm:$0xf]
  %v135 = vld [vmem:[%s1 + $0xa0] sm:$0xf]
  %v136 = vld [vmem:[%s1 + $0xa4] sm:$0xf]
  %v137 = vld [vmem:[%s1 + $0xa8] sm:$0xf]
  %v138 = vld [vmem:[%s1 + $0xac] sm:$0xf]
  %v139 = vld [vmem:[%s1 + $0xb0] sm:$0xf]
  %v140 = vld [vmem:[%s1 + $0xb4] sm:$0xf]
  %v141 = vld [vmem:[%s1 + $0xb8] sm:$0xf]
  %v142 = vld [vmem:[%s1 + $0xbc] sm:$0xf]
  %v143 = vld [vmem:[%s1 + $0xc0] sm:$0xf]
  %v144 = vld [vmem:[%s1 + $0xc4] sm:$0xf]
  %v145 = vld [vmem:[%s1 + $0xc8] sm:$0xf]
  %v146 = vld [vmem:[%s1 + $0xcc] sm:$0xf]
  %v147 = vld [vmem:[%s1 + $0xd0] sm:$0xf]
  %v148 = vld [vmem:[%s1 + $0xd4] sm:$0xf]
  %v149 = vld [vmem:[%s1 + $0xd8] sm:$0xf]
  %v150 = vld [vmem:[%s1 + $0xdc] sm:$0xf]
  %v151 = vld [vmem:[%s1 + $0xe0] sm:$0xf]
  %v152 = vld [vmem:[%s1 + $0xe4] sm:$0xf]
  %v153 = vld [vmem:[%s1 + $0xe8] sm:$0xf]
  %v154 = vld [vmem:[%s1 + $0xec] sm:$0xf]
  %v155 = vld [vmem:[%s1 + $0xf0] sm:$0xf]
  %v156 = vld [vmem:[%s1 + $0xf4] sm:$0xf]
  %v157 = vld [vmem:[%s1 + $0xf8] sm:$0xf]
  %v158 = vld [vmem:[%s1 + $0xfc] sm:$0xf]
  %v159 = vld [vmem:[%s1 + $0x100] sm:$0xf]
  %v160 = vld [vmem:[%s1 + $0x104] sm:$0xf]
  %v161 = vld [vmem:[%s1 + $0x108] sm:$0xf]
  %v162 = vld [vmem:[%s1 + $0x10c] sm:$0xf]
  %v163 = vld [vmem:[%s1 + $0x110] sm:$0xf]
  %v164 = vld [vmem:[%s1 + $0x114] sm:$0xf]
  %v165 = vld [vmem:[%s1 + $0x118] sm:$0xf]
  %v166 = vld [vmem:[%s1 + $0x11c] sm:$0xf]
  %v167 = vld [vmem:[%s1 + $0x120] sm:$0xf]
  %v168 = vld [vmem:[%s1 + $0x124] sm:$0xf]
  %v169 = vld [vmem:[%s1 + $0x128] sm:$0xf]
  %v170 = vld [vmem:[%s1 + $0x12c] sm:$0xf]
  %v171 = vld [vmem:[%s1 + $0x130] sm:$0xf]
  %v172 = vld [vmem:[%s1 + $0x134] sm:$0xf]
  %v173 = vld [vmem:[%s1 + $0x138] sm:$0xf]
  %v174 = vld [vmem:[%s1 + $0x13c] sm:$0xf]
  %v175 = vld [vmem:[%s1 + $0x140] sm:$0xf]
  %v176 = vld [vmem:[%s1 + $0x144] sm:$0xf]
  %v177 = vld [vmem:[%s1 + $0x148] sm:$0xf]
  %v178 = vld [vmem:[%s1 + $0x14c] sm:$0xf]
  %v179 = vld [vmem:[%s1 + $0x150] sm:$0xf]
  %v180 = vld [vmem:[%s1 + $0x154] sm:$0xf]
  %v181 = vld [vmem:[%s1 + $0x158] sm:$0xf]
  %v182 = vld [vmem:[%s1 + $0x15c] sm:$0xf]
  %v183 = vld [vmem:[%s1 + $0x160] sm:$0xf]
  %v184 = vld [vmem:[%s1 + $0x164] sm:$0xf]
  %v185 = vld [vmem:[%s1 + $0x168] sm:$0xf]
  %v186 = vld [vmem:[%s1 + $0x16c] sm:$0xf]
  %v187 = vld [vmem:[%s1 + $0x170] sm:$0xf]
  %v188 = vld [vmem:[%s1 + $0x174] sm:$0xf]
  %v189 = vld [vmem:[%s1 + $0x178] sm:$0xf]
  %v190 = vld [vmem:[%s1 + $0x17c] sm:$0xf]
  %v191 = vld [vmem:[%s1 + $0x180] sm:$0xf]
  %v192 = vld [vmem:[%s1 + $0x184] sm:$0xf]
  %v193 = vld [vmem:[%s1 + $0x188] sm:$0xf]
  %v194 = vld [vmem:[%s1 + $0x18c] sm:$0xf]
  %v195 = vld [vmem:[%s1 + $0x190] sm:$0xf]
  %v196 = vld [vmem:[%s1 + $0x194] sm:$0xf]
  %v197 = vld [vmem:[%s1 + $0x198] sm:$0xf]
  %v198 = vld [vmem:[%s1 + $0x19c] sm:$0xf]
  %v199 = vld [vmem:[%s1 + $0x1a0] sm:$0xf]
  %v200 = vld [vmem:[%s1 + $0x1a4] sm:$0xf]
  %v201 = vld [vmem:[%s1 + $0x1a8] sm:$0xf]
  %v202 = vld [vmem:[%s1 + $0x1ac] sm:$0xf]
  %v203 = vld [vmem:[%s1 + $0x1b0] sm:$0xf]
  %v204 = vld [vmem:[%s1 + $0x1b4] sm:$0xf]
  %v205 = vld [vmem:[%s1 + $0x1b8] sm:$0xf]
  %v206 = vld [vmem:[%s1 + $0x1bc] sm:$0xf]
  %v207 = vld [vmem:[%s1 + $0x1c0] sm:$0xf]
  %v208 = vld [vmem:[%s1 + $0x1c4] sm:$0xf]
  %v209 = vld [vmem:[%s1 + $0x1c8] sm:$0xf]
  %v210 = vld [vmem:[%s1 + $0x1cc] sm:$0xf]
  %v211 = vld [vmem:[%s1 + $0x1d0] sm:$0xf]
  %v212 = vld [vmem:[%s1 + $0x1d4] sm:$0xf]
  %v213 = vld [vmem:[%s1 + $0x1d8] sm:$0xf]
  %v214 = vld [vmem:[%s1 + $0x1dc] sm:$0xf]
  %v215 = vld [vmem:[%s1 + $0x1e0] sm:$0xf]
  %v216 = vld [vmem:[%s1 + $0x1e4] sm:$0xf]
  %v217 = vld [vmem:[%s1 + $0x1e8] sm:$0xf]
  %v218 = vld [vmem:[%s1 + $0x1ec] sm:$0xf]
  %v219 = vld [vmem:[%s1 + $0x1f0] sm:$0xf]
  %v220 = vld [vmem:[%s1 + $0x1f4] sm:$0xf]
  %v221 = vld [vmem:[%s1 + $0x1f8] sm:$0xf]
  %v222 = vld [vmem:[%s1 + $0x1fc] sm:$0xf]
  %v223 = vld [vmem:[%s2] sm:$0x1]
  %v225 = vlaneseq
  %v226 = vshrl.u32 %v225, 7
  %v227 = vsub.s32 0, %v226
  %v228 = vrot.slane %v223, %v227
  %v358 = vunpack.c.l.b16 %v95
  %v359 = vunpack.c.l.b16 %v96
  %v360 = vunpack.c.l.b16 %v97
  %v361 = vunpack.c.l.b16 %v98
  %v362 = vunpack.c.l.b16 %v99
  %v363 = vunpack.c.l.b16 %v100
  %v364 = vunpack.c.l.b16 %v101
  %v365 = vunpack.c.l.b16 %v102
  %v366 = vunpack.c.l.b16 %v103
  %v367 = vunpack.c.l.b16 %v104
  %v368 = vunpack.c.l.b16 %v105
  %v369 = vunpack.c.l.b16 %v106
  %v370 = vunpack.c.l.b16 %v107
  %v371 = vunpack.c.l.b16 %v108
  %v372 = vunpack.c.l.b16 %v109
  %v373 = vunpack.c.l.b16 %v110
  %v374 = vunpack.c.l.b16 %v111
  %v375 = vunpack.c.l.b16 %v112
  %v376 = vunpack.c.l.b16 %v113
  %v377 = vunpack.c.l.b16 %v114
  %v378 = vunpack.c.l.b16 %v115
  %v379 = vunpack.c.l.b16 %v116
  %v380 = vunpack.c.l.b16 %v117
  %v381 = vunpack.c.l.b16 %v118
  %v382 = vunpack.c.l.b16 %v119
  %v383 = vunpack.c.l.b16 %v120
  %v384 = vunpack.c.l.b16 %v121
  %v385 = vunpack.c.l.b16 %v122
  %v386 = vunpack.c.l.b16 %v123
  %v387 = vunpack.c.l.b16 %v124
  %v388 = vunpack.c.l.b16 %v125
  %v389 = vunpack.c.l.b16 %v126
  %v390 = vunpack.c.l.b16 %v127
  %v391 = vunpack.c.l.b16 %v128
  %v392 = vunpack.c.l.b16 %v129
  %v393 = vunpack.c.l.b16 %v130
  %v394 = vunpack.c.l.b16 %v131
  %v395 = vunpack.c.l.b16 %v132
  %v396 = vunpack.c.l.b16 %v133
  %v397 = vunpack.c.l.b16 %v134
  %v398 = vunpack.c.l.b16 %v135
  %v399 = vunpack.c.l.b16 %v136
  %v400 = vunpack.c.l.b16 %v137
  %v401 = vunpack.c.l.b16 %v138
  %v402 = vunpack.c.l.b16 %v139
  %v403 = vunpack.c.l.b16 %v140
  %v404 = vunpack.c.l.b16 %v141
  %v405 = vunpack.c.l.b16 %v142
  %v406 = vunpack.c.l.b16 %v143
  %v407 = vunpack.c.l.b16 %v144
  %v408 = vunpack.c.l.b16 %v145
  %v409 = vunpack.c.l.b16 %v146
  %v410 = vunpack.c.l.b16 %v147
  %v411 = vunpack.c.l.b16 %v148
  %v412 = vunpack.c.l.b16 %v149
  %v413 = vunpack.c.l.b16 %v150
  %v414 = vunpack.c.l.b16 %v151
  %v415 = vunpack.c.l.b16 %v152
  %v416 = vunpack.c.l.b16 %v153
  %v417 = vunpack.c.l.b16 %v154
  %v418 = vunpack.c.l.b16 %v155
  %v419 = vunpack.c.l.b16 %v156
  %v420 = vunpack.c.l.b16 %v157
  %v421 = vunpack.c.l.b16 %v158
  %v422 = vunpack.c.l.b16 %v159
  %v423 = vunpack.c.l.b16 %v160
  %v424 = vunpack.c.l.b16 %v161
  %v425 = vunpack.c.l.b16 %v162
  %v426 = vunpack.c.l.b16 %v163
  %v427 = vunpack.c.l.b16 %v164
  %v428 = vunpack.c.l.b16 %v165
  %v429 = vunpack.c.l.b16 %v166
  %v430 = vunpack.c.l.b16 %v167
  %v431 = vunpack.c.l.b16 %v168
  %v432 = vunpack.c.l.b16 %v169
  %v433 = vunpack.c.l.b16 %v170
  %v434 = vunpack.c.l.b16 %v171
  %v435 = vunpack.c.l.b16 %v172
  %v436 = vunpack.c.l.b16 %v173
  %v437 = vunpack.c.l.b16 %v174
  %v438 = vunpack.c.l.b16 %v175
  %v439 = vunpack.c.l.b16 %v176
  %v440 = vunpack.c.l.b16 %v177
  %v441 = vunpack.c.l.b16 %v178
  %v442 = vunpack.c.l.b16 %v179
  %v443 = vunpack.c.l.b16 %v180
  %v444 = vunpack.c.l.b16 %v181
  %v445 = vunpack.c.l.b16 %v182
  %v446 = vunpack.c.l.b16 %v183
  %v447 = vunpack.c.l.b16 %v184
  %v448 = vunpack.c.l.b16 %v185
  %v449 = vunpack.c.l.b16 %v186
  %v450 = vunpack.c.l.b16 %v187
  %v451 = vunpack.c.l.b16 %v188
  %v452 = vunpack.c.l.b16 %v189
  %v453 = vunpack.c.l.b16 %v190
  %v454 = vunpack.c.l.b16 %v191
  %v455 = vunpack.c.l.b16 %v192
  %v456 = vunpack.c.l.b16 %v193
  %v457 = vunpack.c.l.b16 %v194
  %v458 = vunpack.c.l.b16 %v195
  %v459 = vunpack.c.l.b16 %v196
  %v460 = vunpack.c.l.b16 %v197
  %v461 = vunpack.c.l.b16 %v198
  %v462 = vunpack.c.l.b16 %v199
  %v463 = vunpack.c.l.b16 %v200
  %v464 = vunpack.c.l.b16 %v201
  %v465 = vunpack.c.l.b16 %v202
  %v466 = vunpack.c.l.b16 %v203
  %v467 = vunpack.c.l.b16 %v204
  %v468 = vunpack.c.l.b16 %v205
  %v469 = vunpack.c.l.b16 %v206
  %v470 = vunpack.c.l.b16 %v207
  %v471 = vunpack.c.l.b16 %v208
  %v472 = vunpack.c.l.b16 %v209
  %v473 = vunpack.c.l.b16 %v210
  %v474 = vunpack.c.l.b16 %v211
  %v475 = vunpack.c.l.b16 %v212
  %v476 = vunpack.c.l.b16 %v213
  %v477 = vunpack.c.l.b16 %v214
  %v478 = vunpack.c.l.b16 %v215
  %v479 = vunpack.c.l.b16 %v216
  %v480 = vunpack.c.l.b16 %v217
  %v481 = vunpack.c.l.b16 %v218
  %v482 = vunpack.c.l.b16 %v219
  %v483 = vunpack.c.l.b16 %v220
  %v484 = vunpack.c.l.b16 %v221
  %v485 = vunpack.c.l.b16 %v222
  %v486 = vpack.c.b16 %v359, %v358
  %v487 = vpack.c.b16 %v361, %v360
  %v488 = vpack.c.b16 %v363, %v362
  %v489 = vpack.c.b16 %v365, %v364
  %v490 = vpack.c.b16 %v367, %v366
  %v491 = vpack.c.b16 %v369, %v368
  %v492 = vpack.c.b16 %v371, %v370
  %v493 = vpack.c.b16 %v373, %v372
  %v494 = vpack.c.b16 %v375, %v374
  %v495 = vpack.c.b16 %v377, %v376
  %v496 = vpack.c.b16 %v379, %v378
  %v497 = vpack.c.b16 %v381, %v380
  %v498 = vpack.c.b16 %v383, %v382
  %v499 = vpack.c.b16 %v385, %v384
  %v500 = vpack.c.b16 %v387, %v386
  %v501 = vpack.c.b16 %v389, %v388
  %v502 = vpack.c.b16 %v391, %v390
  %v503 = vpack.c.b16 %v393, %v392
  %v504 = vpack.c.b16 %v395, %v394
  %v505 = vpack.c.b16 %v397, %v396
  %v506 = vpack.c.b16 %v399, %v398
  %v507 = vpack.c.b16 %v401, %v400
  %v508 = vpack.c.b16 %v403, %v402
  %v509 = vpack.c.b16 %v405, %v404
  %v510 = vpack.c.b16 %v407, %v406
  %v511 = vpack.c.b16 %v409, %v408
  %v512 = vpack.c.b16 %v411, %v410
  %v513 = vpack.c.b16 %v413, %v412
  %v514 = vpack.c.b16 %v415, %v414
  %v515 = vpack.c.b16 %v417, %v416
  %v516 = vpack.c.b16 %v419, %v418
  %v517 = vpack.c.b16 %v421, %v420
  %v518 = vpack.c.b16 %v423, %v422
  %v519 = vpack.c.b16 %v425, %v424
  %v520 = vpack.c.b16 %v427, %v426
  %v521 = vpack.c.b16 %v429, %v428
  %v522 = vpack.c.b16 %v431, %v430
  %v523 = vpack.c.b16 %v433, %v432
  %v524 = vpack.c.b16 %v435, %v434
  %v525 = vpack.c.b16 %v437, %v436
  %v526 = vpack.c.b16 %v439, %v438
  %v527 = vpack.c.b16 %v441, %v440
  %v528 = vpack.c.b16 %v443, %v442
  %v529 = vpack.c.b16 %v445, %v444
  %v530 = vpack.c.b16 %v447, %v446
  %v531 = vpack.c.b16 %v449, %v448
  %v532 = vpack.c.b16 %v451, %v450
  %v533 = vpack.c.b16 %v453, %v452
  %v534 = vpack.c.b16 %v455, %v454
  %v535 = vpack.c.b16 %v457, %v456
  %v536 = vpack.c.b16 %v459, %v458
  %v537 = vpack.c.b16 %v461, %v460
  %v538 = vpack.c.b16 %v463, %v462
  %v539 = vpack.c.b16 %v465, %v464
  %v540 = vpack.c.b16 %v467, %v466
  %v541 = vpack.c.b16 %v469, %v468
  %v542 = vpack.c.b16 %v471, %v470
  %v543 = vpack.c.b16 %v473, %v472
  %v544 = vpack.c.b16 %v475, %v474
  %v545 = vpack.c.b16 %v477, %v476
  %v546 = vpack.c.b16 %v479, %v478
  %v547 = vpack.c.b16 %v481, %v480
  %v548 = vpack.c.b16 %v483, %v482
  %v549 = vpack.c.b16 %v485, %v484
  %614 = vmatprep.subr.bf16.mxu0 0
  %615 = vmatpush1.bf16.msra.mxu0 %v486
  %616 = vmatprep.subr.bf16.mxu0 0
  %617 = vmatpush1.bf16.msra.mxu0 %v487
  %618 = vmatprep.subr.bf16.mxu0 0
  %619 = vmatpush1.bf16.msra.mxu0 %v488
  %620 = vmatprep.subr.bf16.mxu0 0
  %621 = vmatpush1.bf16.msra.mxu0 %v489
  %622 = vmatprep.subr.bf16.mxu0 0
  %623 = vmatpush1.bf16.msra.mxu0 %v490
  %624 = vmatprep.subr.bf16.mxu0 0
  %625 = vmatpush1.bf16.msra.mxu0 %v491
  %626 = vmatprep.subr.bf16.mxu0 0
  %627 = vmatpush1.bf16.msra.mxu0 %v492
  %628 = vmatprep.subr.bf16.mxu0 0
  %629 = vmatpush1.bf16.msra.mxu0 %v493
  %630 = vmatprep.subr.bf16.mxu0 0
  %631 = vmatpush1.bf16.msra.mxu0 %v494
  %632 = vmatprep.subr.bf16.mxu0 0
  %633 = vmatpush1.bf16.msra.mxu0 %v495
  %634 = vmatprep.subr.bf16.mxu0 0
  %635 = vmatpush1.bf16.msra.mxu0 %v496
  %636 = vmatprep.subr.bf16.mxu0 0
  %637 = vmatpush1.bf16.msra.mxu0 %v497
  %638 = vmatprep.subr.bf16.mxu0 0
  %639 = vmatpush1.bf16.msra.mxu0 %v498
  %640 = vmatprep.subr.bf16.mxu0 0
  %641 = vmatpush1.bf16.msra.mxu0 %v499
  %642 = vmatprep.subr.bf16.mxu0 0
  %643 = vmatpush1.bf16.msra.mxu0 %v500
  %644 = vmatprep.subr.bf16.mxu0 0
  %645 = vmatpush1.bf16.msra.mxu0 %v501
  %646 = vmatprep.mubr.bf16.mxu0 %v88
  %647 = vmatmul.mubr.bf16.gmra.mrb[0].mxu0 %v87
  %v648 = vpop.f32.mrb[0].mxu0
  %v649 = vadd.f32 %v228, %v648
  %v650 = vpop.f32.mrb[0].mxu0
  %v651 = vpop.f32.mrb[0].mxu0
  %v652 = vadd.f32 %v228, %v651
  %v653 = vpop.f32.mrb[0].mxu0
  %654 = vdwg.mxu0
  %655 = vmatprep.subr.bf16.mxu0 0
  %656 = vmatpush1.bf16.msra.mxu0 %v502
  %657 = vmatprep.subr.bf16.mxu0 0
  %658 = vmatpush1.bf16.msra.mxu0 %v503
  %659 = vmatprep.subr.bf16.mxu0 0
  %660 = vmatpush1.bf16.msra.mxu0 %v504
  %661 = vmatprep.subr.bf16.mxu0 0
  %662 = vmatpush1.bf16.msra.mxu0 %v505
  %663 = vmatprep.subr.bf16.mxu0 0
  %664 = vmatpush1.bf16.msra.mxu0 %v506
  %665 = vmatprep.subr.bf16.mxu0 0
  %666 = vmatpush1.bf16.msra.mxu0 %v507
  %667 = vmatprep.subr.bf16.mxu0 0
  %668 = vmatpush1.bf16.msra.mxu0 %v508
  %669 = vmatprep.subr.bf16.mxu0 0
  %670 = vmatpush1.bf16.msra.mxu0 %v509
  %671 = vmatprep.subr.bf16.mxu0 0
  %672 = vmatpush1.bf16.msra.mxu0 %v510
  %673 = vmatprep.subr.bf16.mxu0 0
  %674 = vmatpush1.bf16.msra.mxu0 %v511
  %675 = vmatprep.subr.bf16.mxu0 0
  %676 = vmatpush1.bf16.msra.mxu0 %v512
  %677 = vmatprep.subr.bf16.mxu0 0
  %678 = vmatpush1.bf16.msra.mxu0 %v513
  %679 = vmatprep.subr.bf16.mxu0 0
  %680 = vmatpush1.bf16.msra.mxu0 %v514
  %681 = vmatprep.subr.bf16.mxu0 0
  %682 = vmatpush1.bf16.msra.mxu0 %v515
  %683 = vmatprep.subr.bf16.mxu0 0
  %684 = vmatpush1.bf16.msra.mxu0 %v516
  %685 = vmatprep.subr.bf16.mxu0 0
  %686 = vmatpush1.bf16.msra.mxu0 %v517
  %687 = vmatprep.mubr.bf16.mxu0 %v90
  %688 = vmatmul.mubr.bf16.gmra.mrb[0].mxu0 %v89
  %v689 = vpop.f32.mrb[0].mxu0
  %v690 = vadd.f32 %v649, %v689
  %v691 = vpop.f32.mrb[0].mxu0
  %v692 = vpop.f32.mrb[0].mxu0
  %v693 = vadd.f32 %v652, %v692
  %v694 = vpop.f32.mrb[0].mxu0
  %695 = vdwg.mxu0
  %696 = vmatprep.subr.bf16.mxu0 0
  %697 = vmatpush1.bf16.msra.mxu0 %v518
  %698 = vmatprep.subr.bf16.mxu0 0
  %699 = vmatpush1.bf16.msra.mxu0 %v519
  %700 = vmatprep.subr.bf16.mxu0 0
  %701 = vmatpush1.bf16.msra.mxu0 %v520
  %702 = vmatprep.subr.bf16.mxu0 0
  %703 = vmatpush1.bf16.msra.mxu0 %v521
  %704 = vmatprep.subr.bf16.mxu0 0
  %705 = vmatpush1.bf16.msra.mxu0 %v522
  %706 = vmatprep.subr.bf16.mxu0 0
  %707 = vmatpush1.bf16.msra.mxu0 %v523
  %708 = vmatprep.subr.bf16.mxu0 0
  %709 = vmatpush1.bf16.msra.mxu0 %v524
  %710 = vmatprep.subr.bf16.mxu0 0
  %711 = vmatpush1.bf16.msra.mxu0 %v525
  %712 = vmatprep.subr.bf16.mxu0 0
  %713 = vmatpush1.bf16.msra.mxu0 %v526
  %714 = vmatprep.subr.bf16.mxu0 0
  %715 = vmatpush1.bf16.msra.mxu0 %v527
  %716 = vmatprep.subr.bf16.mxu0 0
  %717 = vmatpush1.bf16.msra.mxu0 %v528
  %718 = vmatprep.subr.bf16.mxu0 0
  %719 = vmatpush1.bf16.msra.mxu0 %v529
  %720 = vmatprep.subr.bf16.mxu0 0
  %721 = vmatpush1.bf16.msra.mxu0 %v530
  %722 = vmatprep.subr.bf16.mxu0 0
  %723 = vmatpush1.bf16.msra.mxu0 %v531
  %724 = vmatprep.subr.bf16.mxu0 0
  %725 = vmatpush1.bf16.msra.mxu0 %v532
  %726 = vmatprep.subr.bf16.mxu0 0
  %727 = vmatpush1.bf16.msra.mxu0 %v533
  %728 = vmatprep.mubr.bf16.mxu0 %v92
  %729 = vmatmul.mubr.bf16.gmra.mrb[0].mxu0 %v91
  %v730 = vpop.f32.mrb[0].mxu0
  %v731 = vadd.f32 %v690, %v730
  %v732 = vpop.f32.mrb[0].mxu0
  %v733 = vpop.f32.mrb[0].mxu0
  %v734 = vadd.f32 %v693, %v733
  %v735 = vpop.f32.mrb[0].mxu0
  %736 = vdwg.mxu0
  %737 = vmatprep.subr.bf16.mxu0 0
  %738 = vmatpush1.bf16.msra.mxu0 %v534
  %739 = vmatprep.subr.bf16.mxu0 0
  %740 = vmatpush1.bf16.msra.mxu0 %v535
  %741 = vmatprep.subr.bf16.mxu0 0
  %742 = vmatpush1.bf16.msra.mxu0 %v536
  %743 = vmatprep.subr.bf16.mxu0 0
  %744 = vmatpush1.bf16.msra.mxu0 %v537
  %745 = vmatprep.subr.bf16.mxu0 0
  %746 = vmatpush1.bf16.msra.mxu0 %v538
  %747 = vmatprep.subr.bf16.mxu0 0
  %748 = vmatpush1.bf16.msra.mxu0 %v539
  %749 = vmatprep.subr.bf16.mxu0 0
  %750 = vmatpush1.bf16.msra.mxu0 %v540
  %751 = vmatprep.subr.bf16.mxu0 0
  %752 = vmatpush1.bf16.msra.mxu0 %v541
  %753 = vmatprep.subr.bf16.mxu0 0
  %754 = vmatpush1.bf16.msra.mxu0 %v542
  %755 = vmatprep.subr.bf16.mxu0 0
  %756 = vmatpush1.bf16.msra.mxu0 %v543
  %757 = vmatprep.subr.bf16.mxu0 0
  %758 = vmatpush1.bf16.msra.mxu0 %v544
  %759 = vmatprep.subr.bf16.mxu0 0
  %760 = vmatpush1.bf16.msra.mxu0 %v545
  %761 = vmatprep.subr.bf16.mxu0 0
  %762 = vmatpush1.bf16.msra.mxu0 %v546
  %763 = vmatprep.subr.bf16.mxu0 0
  %764 = vmatpush1.bf16.msra.mxu0 %v547
  %765 = vmatprep.subr.bf16.mxu0 0
  %766 = vmatpush1.bf16.msra.mxu0 %v548
  %767 = vmatprep.subr.bf16.mxu0 0
  %768 = vmatpush1.bf16.msra.mxu0 %v549
  %769 = vmatprep.mubr.bf16.mxu0 %v94
  %770 = vmatmul.mubr.bf16.gmra.mrb[0].mxu0 %v93
  %v771 = vpop.f32.mrb[0].mxu0
  %v772 = vadd.f32 %v731, %v771
  %v773 = vpop.f32.mrb[0].mxu0
  %v774 = vpop.f32.mrb[0].mxu0
  %v775 = vadd.f32 %v734, %v774
  %v776 = vpop.f32.mrb[0].mxu0
  %777 = vdwg.mxu0
  %v778 = vpack.c.bf16 %v775, %v772
  %v780 = vunpack.c.l.b16 %v778
  %v781 = vunpack.c.h.b16 %v778
  %v782 = vpack.c.b16 %v780, %v780
  %v783 = vpack.c.b16 %v781, %v781
  %786 = vst [vmem:[%s3] sm:$0xf] %v782
  %787 = vst [vmem:[%s3 + $0x4] sm:$0xf] %v783
  // Predicated region
  $region14: #{_lambda_.14} parent=0 // pred_check
    _
  $region15: #{_lambda_.14} parent=0 // pred_check_branch
    %789 = sbr.rel (0) target = $region17
  $region16: #{_lambda_.14} parent=0 // pred_region
    _
  $region17: #{_lambda_.14} parent=0 // pred_fallthru
    _
  // Predicated region
  $region18: #{_lambda_.14} parent=0 // pred_check
    _
  $region19: #{_lambda_.14} parent=0 // pred_check_branch
    %791 = sbr.rel (0) target = $region21
  $region20: #{_lambda_.14} parent=0 // pred_region
    _
  $region21: #{_lambda_.14} parent=0 // pred_fallthru
    _

// kernel: _lambda_.16
$region0: #{_lambda_.16}
  #allocation0 [shape = 'u32[]', space=smem, size = 0x4, offset = 0x4, fixed_abs, tag = 'smem constant byte address 0x4 - core index']
  #allocation1 [shape = 'u32[144,128]{1,0:T(1,128)}', space=vmem, size = 0x12000, scoped, tag = 'internal scratch']
  %s0 = inlined_call_operand.vmem [shape: bf16[16,1152], index: 0, kind: input, shape index: {}]
  %s1 = inlined_call_operand.vmem [shape: bf16[1152,128], index: 1, kind: input, shape index: {}]
  %s2 = inlined_call_operand.vmem [shape: f32[1,128], index: 2, kind: input, shape index: {}]
  %s3 = inlined_call_operand.vmem [shape: bf16[16,128], index: 3, kind: output, shape index: {0}]
  %s4 = inlined_call_operand.vmem [shape: f32[1,8,128], index: 4, kind: output, shape index: {1}]
  %5 = xla_tuple %s3, %s4
  %s6 = sld [smem:[#allocation0]]
  $region30: #{_lambda_.16} parent=0
    _
  %s8 = ssub.s32 1, %s6
  %s9 = scalar_select 0, %s8, %s6
  // Predicated region
  $region2: #{_lambda_.16} parent=0 // pred_check
    _
  $region3: #{_lambda_.16} parent=0 // pred_check_branch
    %11 = sbr.rel (0) target = $region5
  $region4: #{_lambda_.16} parent=0 // pred_region
    _
  $region5: #{_lambda_.16} parent=0 // pred_fallthru
    _
  // Predicated region
  $region6: #{_lambda_.16} parent=0 // pred_check
    _
  $region7: #{_lambda_.16} parent=0 // pred_check_branch
    %13 = sbr.rel (0) target = $region9
  $region8: #{_lambda_.16} parent=0 // pred_region
    _
  $region9: #{_lambda_.16} parent=0 // pred_fallthru
    _
  // Predicated region
  $region10: #{_lambda_.16} parent=0 // pred_check
    _
  $region11: #{_lambda_.16} parent=0 // pred_check_branch
    %15 = sbr.rel (0) target = $region13
  $region12: #{_lambda_.16} parent=0 // pred_region
    _
  $region13: #{_lambda_.16} parent=0 // pred_fallthru
    _
  %v17 = vld [vmem:[%s0] sm:$0xff]
  %v18 = vld [vmem:[%s0 + $0x8] sm:$0xff]
  %v19 = vld [vmem:[%s0 + $0x10] sm:$0xff]
  %v20 = vld [vmem:[%s0 + $0x18] sm:$0xff]
  %v21 = vld [vmem:[%s0 + $0x20] sm:$0xf]
  %v22 = vld [vmem:[%s0 + $0x24] sm:$0xff]
  %v23 = vld [vmem:[%s0 + $0x2c] sm:$0xff]
  %v24 = vld [vmem:[%s0 + $0x34] sm:$0xff]
  %v25 = vld [vmem:[%s0 + $0x3c] sm:$0xff]
  %v26 = vld [vmem:[%s0 + $0x44] sm:$0xf]
  %v27 = vunpack.c.l.bf16 %v17
  %v28 = vunpack.c.h.bf16 %v17
  %v29 = vunpack.c.l.bf16 %v18
  %v30 = vunpack.c.h.bf16 %v18
  %v31 = vunpack.c.l.bf16 %v19
  %v32 = vunpack.c.h.bf16 %v19
  %v33 = vunpack.c.l.bf16 %v20
  %v34 = vunpack.c.h.bf16 %v20
  %v35 = vunpack.c.l.bf16 %v21
  %v36 = vunpack.c.l.bf16 %v22
  %v37 = vunpack.c.h.bf16 %v22
  %v38 = vunpack.c.l.bf16 %v23
  %v39 = vunpack.c.h.bf16 %v23
  %v40 = vunpack.c.l.bf16 %v24
  %v41 = vunpack.c.h.bf16 %v24
  %v42 = vunpack.c.l.bf16 %v25
  %v43 = vunpack.c.h.bf16 %v25
  %v44 = vunpack.c.l.bf16 %v26
  %v45 = vmax.f32 %v27, 0.0
  %v46 = vmax.f32 %v28, 0.0
  %v47 = vmax.f32 %v29, 0.0
  %v48 = vmax.f32 %v30, 0.0
  %v49 = vmax.f32 %v31, 0.0
  %v50 = vmax.f32 %v32, 0.0
  %v51 = vmax.f32 %v33, 0.0
  %v52 = vmax.f32 %v34, 0.0
  %v53 = vmax.f32 %v35, 0.0
  %v54 = vmax.f32 %v36, 0.0
  %v55 = vmax.f32 %v37, 0.0
  %v56 = vmax.f32 %v38, 0.0
  %v57 = vmax.f32 %v39, 0.0
  %v58 = vmax.f32 %v40, 0.0
  %v59 = vmax.f32 %v41, 0.0
  %v60 = vmax.f32 %v42, 0.0
  %v61 = vmax.f32 %v43, 0.0
  %v62 = vmax.f32 %v44, 0.0
  %v63 = vpack.c.bf16 %v54, %v45
  %v64 = vpack.c.bf16 %v55, %v46
  %v65 = vpack.c.bf16 %v56, %v47
  %v66 = vpack.c.bf16 %v57, %v48
  %v67 = vpack.c.bf16 %v58, %v49
  %v68 = vpack.c.bf16 %v59, %v50
  %v69 = vpack.c.bf16 %v60, %v51
  %v70 = vpack.c.bf16 %v61, %v52
  %v71 = vpack.c.bf16 %v62, %v53
  %v72 = vld [vmem:[%s1] sm:$0xf]
  %v73 = vld [vmem:[%s1 + $0x4] sm:$0xf]
  %v74 = vld [vmem:[%s1 + $0x8] sm:$0xf]
  %v75 = vld [vmem:[%s1 + $0xc] sm:$0xf]
  %v76 = vld [vmem:[%s1 + $0x10] sm:$0xf]
  %v77 = vld [vmem:[%s1 + $0x14] sm:$0xf]
  %v78 = vld [vmem:[%s1 + $0x18] sm:$0xf]
  %v79 = vld [vmem:[%s1 + $0x1c] sm:$0xf]
  %v80 = vld [vmem:[%s1 + $0x20] sm:$0xf]
  %v81 = vld [vmem:[%s1 + $0x24] sm:$0xf]
  %v82 = vld [vmem:[%s1 + $0x28] sm:$0xf]
  %v83 = vld [vmem:[%s1 + $0x2c] sm:$0xf]
  %v84 = vld [vmem:[%s1 + $0x30] sm:$0xf]
  %v85 = vld [vmem:[%s1 + $0x34] sm:$0xf]
  %v86 = vld [vmem:[%s1 + $0x38] sm:$0xf]
  %v87 = vld [vmem:[%s1 + $0x3c] sm:$0xf]
  %v88 = vld [vmem:[%s1 + $0x40] sm:$0xf]
  %v89 = vld [vmem:[%s1 + $0x44] sm:$0xf]
  %v90 = vld [vmem:[%s1 + $0x48] sm:$0xf]
  %v91 = vld [vmem:[%s1 + $0x4c] sm:$0xf]
  %v92 = vld [vmem:[%s1 + $0x50] sm:$0xf]
  %v93 = vld [vmem:[%s1 + $0x54] sm:$0xf]
  %v94 = vld [vmem:[%s1 + $0x58] sm:$0xf]
  %v95 = vld [vmem:[%s1 + $0x5c] sm:$0xf]
  %v96 = vld [vmem:[%s1 + $0x60] sm:$0xf]
  %v97 = vld [vmem:[%s1 + $0x64] sm:$0xf]
  %v98 = vld [vmem:[%s1 + $0x68] sm:$0xf]
  %v99 = vld [vmem:[%s1 + $0x6c] sm:$0xf]
  %v100 = vld [vmem:[%s1 + $0x70] sm:$0xf]
  %v101 = vld [vmem:[%s1 + $0x74] sm:$0xf]
  %v102 = vld [vmem:[%s1 + $0x78] sm:$0xf]
  %v103 = vld [vmem:[%s1 + $0x7c] sm:$0xf]
  %v104 = vld [vmem:[%s1 + $0x80] sm:$0xf]
  %v105 = vld [vmem:[%s1 + $0x84] sm:$0xf]
  %v106 = vld [vmem:[%s1 + $0x88] sm:$0xf]
  %v107 = vld [vmem:[%s1 + $0x8c] sm:$0xf]
  %v108 = vld [vmem:[%s1 + $0x90] sm:$0xf]
  %v109 = vld [vmem:[%s1 + $0x94] sm:$0xf]
  %v110 = vld [vmem:[%s1 + $0x98] sm:$0xf]
  %v111 = vld [vmem:[%s1 + $0x9c] sm:$0xf]
  %v112 = vld [vmem:[%s1 + $0xa0] sm:$0xf]
  %v113 = vld [vmem:[%s1 + $0xa4] sm:$0xf]
  %v114 = vld [vmem:[%s1 + $0xa8] sm:$0xf]
  %v115 = vld [vmem:[%s1 + $0xac] sm:$0xf]
  %v116 = vld [vmem:[%s1 + $0xb0] sm:$0xf]
  %v117 = vld [vmem:[%s1 + $0xb4] sm:$0xf]
  %v118 = vld [vmem:[%s1 + $0xb8] sm:$0xf]
  %v119 = vld [vmem:[%s1 + $0xbc] sm:$0xf]
  %v120 = vld [vmem:[%s1 + $0xc0] sm:$0xf]
  %v121 = vld [vmem:[%s1 + $0xc4] sm:$0xf]
  %v122 = vld [vmem:[%s1 + $0xc8] sm:$0xf]
  %v123 = vld [vmem:[%s1 + $0xcc] sm:$0xf]
  %v124 = vld [vmem:[%s1 + $0xd0] sm:$0xf]
  %v125 = vld [vmem:[%s1 + $0xd4] sm:$0xf]
  %v126 = vld [vmem:[%s1 + $0xd8] sm:$0xf]
  %v127 = vld [vmem:[%s1 + $0xdc] sm:$0xf]
  %v128 = vld [vmem:[%s1 + $0xe0] sm:$0xf]
  %v129 = vld [vmem:[%s1 + $0xe4] sm:$0xf]
  %v130 = vld [vmem:[%s1 + $0xe8] sm:$0xf]
  %v131 = vld [vmem:[%s1 + $0xec] sm:$0xf]
  %v132 = vld [vmem:[%s1 + $0xf0] sm:$0xf]
  %v133 = vld [vmem:[%s1 + $0xf4] sm:$0xf]
  %v134 = vld [vmem:[%s1 + $0xf8] sm:$0xf]
  %v135 = vld [vmem:[%s1 + $0xfc] sm:$0xf]
  %v136 = vld [vmem:[%s1 + $0x100] sm:$0xf]
  %v137 = vld [vmem:[%s1 + $0x104] sm:$0xf]
  %v138 = vld [vmem:[%s1 + $0x108] sm:$0xf]
  %v139 = vld [vmem:[%s1 + $0x10c] sm:$0xf]
  %v140 = vld [vmem:[%s1 + $0x110] sm:$0xf]
  %v141 = vld [vmem:[%s1 + $0x114] sm:$0xf]
  %v142 = vld [vmem:[%s1 + $0x118] sm:$0xf]
  %v143 = vld [vmem:[%s1 + $0x11c] sm:$0xf]
  %v144 = vld [vmem:[%s1 + $0x120] sm:$0xf]
  %v145 = vld [vmem:[%s1 + $0x124] sm:$0xf]
  %v146 = vld [vmem:[%s1 + $0x128] sm:$0xf]
  %v147 = vld [vmem:[%s1 + $0x12c] sm:$0xf]
  %v148 = vld [vmem:[%s1 + $0x130] sm:$0xf]
  %v149 = vld [vmem:[%s1 + $0x134] sm:$0xf]
  %v150 = vld [vmem:[%s1 + $0x138] sm:$0xf]
  %v151 = vld [vmem:[%s1 + $0x13c] sm:$0xf]
  %v152 = vld [vmem:[%s1 + $0x140] sm:$0xf]
  %v153 = vld [vmem:[%s1 + $0x144] sm:$0xf]
  %v154 = vld [vmem:[%s1 + $0x148] sm:$0xf]
  %v155 = vld [vmem:[%s1 + $0x14c] sm:$0xf]
  %v156 = vld [vmem:[%s1 + $0x150] sm:$0xf]
  %v157 = vld [vmem:[%s1 + $0x154] sm:$0xf]
  %v158 = vld [vmem:[%s1 + $0x158] sm:$0xf]
  %v159 = vld [vmem:[%s1 + $0x15c] sm:$0xf]
  %v160 = vld [vmem:[%s1 + $0x160] sm:$0xf]
  %v161 = vld [vmem:[%s1 + $0x164] sm:$0xf]
  %v162 = vld [vmem:[%s1 + $0x168] sm:$0xf]
  %v163 = vld [vmem:[%s1 + $0x16c] sm:$0xf]
  %v164 = vld [vmem:[%s1 + $0x170] sm:$0xf]
  %v165 = vld [vmem:[%s1 + $0x174] sm:$0xf]
  %v166 = vld [vmem:[%s1 + $0x178] sm:$0xf]
  %v167 = vld [vmem:[%s1 + $0x17c] sm:$0xf]
  %v168 = vld [vmem:[%s1 + $0x180] sm:$0xf]
  %v169 = vld [vmem:[%s1 + $0x184] sm:$0xf]
  %v170 = vld [vmem:[%s1 + $0x188] sm:$0xf]
  %v171 = vld [vmem:[%s1 + $0x18c] sm:$0xf]
  %v172 = vld [vmem:[%s1 + $0x190] sm:$0xf]
  %v173 = vld [vmem:[%s1 + $0x194] sm:$0xf]
  %v174 = vld [vmem:[%s1 + $0x198] sm:$0xf]
  %v175 = vld [vmem:[%s1 + $0x19c] sm:$0xf]
  %v176 = vld [vmem:[%s1 + $0x1a0] sm:$0xf]
  %v177 = vld [vmem:[%s1 + $0x1a4] sm:$0xf]
  %v178 = vld [vmem:[%s1 + $0x1a8] sm:$0xf]
  %v179 = vld [vmem:[%s1 + $0x1ac] sm:$0xf]
  %v180 = vld [vmem:[%s1 + $0x1b0] sm:$0xf]
  %v181 = vld [vmem:[%s1 + $0x1b4] sm:$0xf]
  %v182 = vld [vmem:[%s1 + $0x1b8] sm:$0xf]
  %v183 = vld [vmem:[%s1 + $0x1bc] sm:$0xf]
  %v184 = vld [vmem:[%s1 + $0x1c0] sm:$0xf]
  %v185 = vld [vmem:[%s1 + $0x1c4] sm:$0xf]
  %v186 = vld [vmem:[%s1 + $0x1c8] sm:$0xf]
  %v187 = vld [vmem:[%s1 + $0x1cc] sm:$0xf]
  %v188 = vld [vmem:[%s1 + $0x1d0] sm:$0xf]
  %v189 = vld [vmem:[%s1 + $0x1d4] sm:$0xf]
  %v190 = vld [vmem:[%s1 + $0x1d8] sm:$0xf]
  %v191 = vld [vmem:[%s1 + $0x1dc] sm:$0xf]
  %v192 = vld [vmem:[%s1 + $0x1e0] sm:$0xf]
  %v193 = vld [vmem:[%s1 + $0x1e4] sm:$0xf]
  %v194 = vld [vmem:[%s1 + $0x1e8] sm:$0xf]
  %v195 = vld [vmem:[%s1 + $0x1ec] sm:$0xf]
  %v196 = vld [vmem:[%s1 + $0x1f0] sm:$0xf]
  %v197 = vld [vmem:[%s1 + $0x1f4] sm:$0xf]
  %v198 = vld [vmem:[%s1 + $0x1f8] sm:$0xf]
  %v199 = vld [vmem:[%s1 + $0x1fc] sm:$0xf]
  %v200 = vld [vmem:[%s1 + $0x200] sm:$0xf]
  %v201 = vld [vmem:[%s1 + $0x204] sm:$0xf]
  %v202 = vld [vmem:[%s1 + $0x208] sm:$0xf]
  %v203 = vld [vmem:[%s1 + $0x20c] sm:$0xf]
  %v204 = vld [vmem:[%s1 + $0x210] sm:$0xf]
  %v205 = vld [vmem:[%s1 + $0x214] sm:$0xf]
  %v206 = vld [vmem:[%s1 + $0x218] sm:$0xf]
  %v207 = vld [vmem:[%s1 + $0x21c] sm:$0xf]
  %v208 = vld [vmem:[%s1 + $0x220] sm:$0xf]
  %v209 = vld [vmem:[%s1 + $0x224] sm:$0xf]
  %v210 = vld [vmem:[%s1 + $0x228] sm:$0xf]
  %v211 = vld [vmem:[%s1 + $0x22c] sm:$0xf]
  %v212 = vld [vmem:[%s1 + $0x230] sm:$0xf]
  %v213 = vld [vmem:[%s1 + $0x234] sm:$0xf]
  %v214 = vld [vmem:[%s1 + $0x238] sm:$0xf]
  %v215 = vld [vmem:[%s1 + $0x23c] sm:$0xf]
  %v216 = vld [vmem:[%s2] sm:$0x1]
  %v218 = vlaneseq
  %v219 = vshrl.u32 %v218, 7
  %v220 = vsub.s32 0, %v219
  %v221 = vrot.slane %v216, %v220
  %v367 = vunpack.c.l.b16 %v72
  %v368 = vunpack.c.l.b16 %v73
  %v369 = vunpack.c.l.b16 %v74
  %v370 = vunpack.c.l.b16 %v75
  %v371 = vunpack.c.l.b16 %v76
  %v372 = vunpack.c.l.b16 %v77
  %v373 = vunpack.c.l.b16 %v78
  %v374 = vunpack.c.l.b16 %v79
  %v375 = vunpack.c.l.b16 %v80
  %v376 = vunpack.c.l.b16 %v81
  %v377 = vunpack.c.l.b16 %v82
  %v378 = vunpack.c.l.b16 %v83
  %v379 = vunpack.c.l.b16 %v84
  %v380 = vunpack.c.l.b16 %v85
  %v381 = vunpack.c.l.b16 %v86
  %v382 = vunpack.c.l.b16 %v87
  %v383 = vunpack.c.l.b16 %v88
  %v384 = vunpack.c.l.b16 %v89
  %v385 = vunpack.c.l.b16 %v90
  %v386 = vunpack.c.l.b16 %v91
  %v387 = vunpack.c.l.b16 %v92
  %v388 = vunpack.c.l.b16 %v93
  %v389 = vunpack.c.l.b16 %v94
  %v390 = vunpack.c.l.b16 %v95
  %v391 = vunpack.c.l.b16 %v96
  %v392 = vunpack.c.l.b16 %v97
  %v393 = vunpack.c.l.b16 %v98
  %v394 = vunpack.c.l.b16 %v99
  %v395 = vunpack.c.l.b16 %v100
  %v396 = vunpack.c.l.b16 %v101
  %v397 = vunpack.c.l.b16 %v102
  %v398 = vunpack.c.l.b16 %v103
  %v399 = vunpack.c.l.b16 %v104
  %v400 = vunpack.c.l.b16 %v105
  %v401 = vunpack.c.l.b16 %v106
  %v402 = vunpack.c.l.b16 %v107
  %v403 = vunpack.c.l.b16 %v108
  %v404 = vunpack.c.l.b16 %v109
  %v405 = vunpack.c.l.b16 %v110
  %v406 = vunpack.c.l.b16 %v111
  %v407 = vunpack.c.l.b16 %v112
  %v408 = vunpack.c.l.b16 %v113
  %v409 = vunpack.c.l.b16 %v114
  %v410 = vunpack.c.l.b16 %v115
  %v411 = vunpack.c.l.b16 %v116
  %v412 = vunpack.c.l.b16 %v117
  %v413 = vunpack.c.l.b16 %v118
  %v414 = vunpack.c.l.b16 %v119
  %v415 = vunpack.c.l.b16 %v120
  %v416 = vunpack.c.l.b16 %v121
  %v417 = vunpack.c.l.b16 %v122
  %v418 = vunpack.c.l.b16 %v123
  %v419 = vunpack.c.l.b16 %v124
  %v420 = vunpack.c.l.b16 %v125
  %v421 = vunpack.c.l.b16 %v126
  %v422 = vunpack.c.l.b16 %v127
  %v423 = vunpack.c.l.b16 %v128
  %v424 = vunpack.c.l.b16 %v129
  %v425 = vunpack.c.l.b16 %v130
  %v426 = vunpack.c.l.b16 %v131
  %v427 = vunpack.c.l.b16 %v132
  %v428 = vunpack.c.l.b16 %v133
  %v429 = vunpack.c.l.b16 %v134
  %v430 = vunpack.c.l.b16 %v135
  %v431 = vunpack.c.l.b16 %v136
  %v432 = vunpack.c.l.b16 %v137
  %v433 = vunpack.c.l.b16 %v138
  %v434 = vunpack.c.l.b16 %v139
  %v435 = vunpack.c.l.b16 %v140
  %v436 = vunpack.c.l.b16 %v141
  %v437 = vunpack.c.l.b16 %v142
  %v438 = vunpack.c.l.b16 %v143
  %v439 = vunpack.c.l.b16 %v144
  %v440 = vunpack.c.l.b16 %v145
  %v441 = vunpack.c.l.b16 %v146
  %v442 = vunpack.c.l.b16 %v147
  %v443 = vunpack.c.l.b16 %v148
  %v444 = vunpack.c.l.b16 %v149
  %v445 = vunpack.c.l.b16 %v150
  %v446 = vunpack.c.l.b16 %v151
  %v447 = vunpack.c.l.b16 %v152
  %v448 = vunpack.c.l.b16 %v153
  %v449 = vunpack.c.l.b16 %v154
  %v450 = vunpack.c.l.b16 %v155
  %v451 = vunpack.c.l.b16 %v156
  %v452 = vunpack.c.l.b16 %v157
  %v453 = vunpack.c.l.b16 %v158
  %v454 = vunpack.c.l.b16 %v159
  %v455 = vunpack.c.l.b16 %v160
  %v456 = vunpack.c.l.b16 %v161
  %v457 = vunpack.c.l.b16 %v162
  %v458 = vunpack.c.l.b16 %v163
  %v459 = vunpack.c.l.b16 %v164
  %v460 = vunpack.c.l.b16 %v165
  %v461 = vunpack.c.l.b16 %v166
  %v462 = vunpack.c.l.b16 %v167
  %v463 = vunpack.c.l.b16 %v168
  %v464 = vunpack.c.l.b16 %v169
  %v465 = vunpack.c.l.b16 %v170
  %v466 = vunpack.c.l.b16 %v171
  %v467 = vunpack.c.l.b16 %v172
  %v468 = vunpack.c.l.b16 %v173
  %v469 = vunpack.c.l.b16 %v174
  %v470 = vunpack.c.l.b16 %v175
  %v471 = vunpack.c.l.b16 %v176
  %v472 = vunpack.c.l.b16 %v177
  %v473 = vunpack.c.l.b16 %v178
  %v474 = vunpack.c.l.b16 %v179
  %v475 = vunpack.c.l.b16 %v180
  %v476 = vunpack.c.l.b16 %v181
  %v477 = vunpack.c.l.b16 %v182
  %v478 = vunpack.c.l.b16 %v183
  %v479 = vunpack.c.l.b16 %v184
  %v480 = vunpack.c.l.b16 %v185
  %v481 = vunpack.c.l.b16 %v186
  %v482 = vunpack.c.l.b16 %v187
  %v483 = vunpack.c.l.b16 %v188
  %v484 = vunpack.c.l.b16 %v189
  %v485 = vunpack.c.l.b16 %v190
  %v486 = vunpack.c.l.b16 %v191
  %v487 = vunpack.c.l.b16 %v192
  %v488 = vunpack.c.l.b16 %v193
  %v489 = vunpack.c.l.b16 %v194
  %v490 = vunpack.c.l.b16 %v195
  %v491 = vunpack.c.l.b16 %v196
  %v492 = vunpack.c.l.b16 %v197
  %v493 = vunpack.c.l.b16 %v198
  %v494 = vunpack.c.l.b16 %v199
  %v495 = vunpack.c.l.b16 %v200
  %v496 = vunpack.c.l.b16 %v201
  %v497 = vunpack.c.l.b16 %v202
  %v498 = vunpack.c.l.b16 %v203
  %v499 = vunpack.c.l.b16 %v204
  %v500 = vunpack.c.l.b16 %v205
  %v501 = vunpack.c.l.b16 %v206
  %v502 = vunpack.c.l.b16 %v207
  %v503 = vunpack.c.l.b16 %v208
  %v504 = vunpack.c.l.b16 %v209
  %v505 = vunpack.c.l.b16 %v210
  %v506 = vunpack.c.l.b16 %v211
  %v507 = vunpack.c.l.b16 %v212
  %v508 = vunpack.c.l.b16 %v213
  %v509 = vunpack.c.l.b16 %v214
  %v510 = vunpack.c.l.b16 %v215
  %v511 = vpack.c.b16 %v368, %v367
  %v512 = vpack.c.b16 %v370, %v369
  %v513 = vpack.c.b16 %v372, %v371
  %v514 = vpack.c.b16 %v374, %v373
  %v515 = vpack.c.b16 %v376, %v375
  %v516 = vpack.c.b16 %v378, %v377
  %v517 = vpack.c.b16 %v380, %v379
  %v518 = vpack.c.b16 %v382, %v381
  %v519 = vpack.c.b16 %v384, %v383
  %v520 = vpack.c.b16 %v386, %v385
  %v521 = vpack.c.b16 %v388, %v387
  %v522 = vpack.c.b16 %v390, %v389
  %v523 = vpack.c.b16 %v392, %v391
  %v524 = vpack.c.b16 %v394, %v393
  %v525 = vpack.c.b16 %v396, %v395
  %v526 = vpack.c.b16 %v398, %v397
  %v527 = vpack.c.b16 %v400, %v399
  %v528 = vpack.c.b16 %v402, %v401
  %v529 = vpack.c.b16 %v404, %v403
  %v530 = vpack.c.b16 %v406, %v405
  %v531 = vpack.c.b16 %v408, %v407
  %v532 = vpack.c.b16 %v410, %v409
  %v533 = vpack.c.b16 %v412, %v411
  %v534 = vpack.c.b16 %v414, %v413
  %v535 = vpack.c.b16 %v416, %v415
  %v536 = vpack.c.b16 %v418, %v417
  %v537 = vpack.c.b16 %v420, %v419
  %v538 = vpack.c.b16 %v422, %v421
  %v539 = vpack.c.b16 %v424, %v423
  %v540 = vpack.c.b16 %v426, %v425
  %v541 = vpack.c.b16 %v428, %v427
  %v542 = vpack.c.b16 %v430, %v429
  %v543 = vpack.c.b16 %v432, %v431
  %v544 = vpack.c.b16 %v434, %v433
  %v545 = vpack.c.b16 %v436, %v435
  %v546 = vpack.c.b16 %v438, %v437
  %v547 = vpack.c.b16 %v440, %v439
  %v548 = vpack.c.b16 %v442, %v441
  %v549 = vpack.c.b16 %v444, %v443
  %v550 = vpack.c.b16 %v446, %v445
  %v551 = vpack.c.b16 %v448, %v447
  %v552 = vpack.c.b16 %v450, %v449
  %v553 = vpack.c.b16 %v452, %v451
  %v554 = vpack.c.b16 %v454, %v453
  %v555 = vpack.c.b16 %v456, %v455
  %v556 = vpack.c.b16 %v458, %v457
  %v557 = vpack.c.b16 %v460, %v459
  %v558 = vpack.c.b16 %v462, %v461
  %v559 = vpack.c.b16 %v464, %v463
  %v560 = vpack.c.b16 %v466, %v465
  %v561 = vpack.c.b16 %v468, %v467
  %v562 = vpack.c.b16 %v470, %v469
  %v563 = vpack.c.b16 %v472, %v471
  %v564 = vpack.c.b16 %v474, %v473
  %v565 = vpack.c.b16 %v476, %v475
  %v566 = vpack.c.b16 %v478, %v477
  %v567 = vpack.c.b16 %v480, %v479
  %v568 = vpack.c.b16 %v482, %v481
  %v569 = vpack.c.b16 %v484, %v483
  %v570 = vpack.c.b16 %v486, %v485
  %v571 = vpack.c.b16 %v488, %v487
  %v572 = vpack.c.b16 %v490, %v489
  %v573 = vpack.c.b16 %v492, %v491
  %v574 = vpack.c.b16 %v494, %v493
  %v575 = vpack.c.b16 %v496, %v495
  %v576 = vpack.c.b16 %v498, %v497
  %v577 = vpack.c.b16 %v500, %v499
  %v578 = vpack.c.b16 %v502, %v501
  %v579 = vpack.c.b16 %v504, %v503
  %v580 = vpack.c.b16 %v506, %v505
  %v581 = vpack.c.b16 %v508, %v507
  %v582 = vpack.c.b16 %v510, %v509
  %655 = vmatprep.subr.bf16.mxu0 0
  %656 = vmatpush1.bf16.msra.mxu0 %v511
  %657 = vmatprep.subr.bf16.mxu0 0
  %658 = vmatpush1.bf16.msra.mxu0 %v512
  %659 = vmatprep.subr.bf16.mxu0 0
  %660 = vmatpush1.bf16.msra.mxu0 %v513
  %661 = vmatprep.subr.bf16.mxu0 0
  %662 = vmatpush1.bf16.msra.mxu0 %v514
  %663 = vmatprep.subr.bf16.mxu0 0
  %664 = vmatpush1.bf16.msra.mxu0 %v515
  %665 = vmatprep.subr.bf16.mxu0 0
  %666 = vmatpush1.bf16.msra.mxu0 %v516
  %667 = vmatprep.subr.bf16.mxu0 0
  %668 = vmatpush1.bf16.msra.mxu0 %v517
  %669 = vmatprep.subr.bf16.mxu0 0
  %670 = vmatpush1.bf16.msra.mxu0 %v518
  %671 = vmatprep.subr.bf16.mxu0 0
  %672 = vmatpush1.bf16.msra.mxu0 %v519
  %673 = vmatprep.subr.bf16.mxu0 0
  %674 = vmatpush1.bf16.msra.mxu0 %v520
  %675 = vmatprep.subr.bf16.mxu0 0
  %676 = vmatpush1.bf16.msra.mxu0 %v521
  %677 = vmatprep.subr.bf16.mxu0 0
  %678 = vmatpush1.bf16.msra.mxu0 %v522
  %679 = vmatprep.subr.bf16.mxu0 0
  %680 = vmatpush1.bf16.msra.mxu0 %v523
  %681 = vmatprep.subr.bf16.mxu0 0
  %682 = vmatpush1.bf16.msra.mxu0 %v524
  %683 = vmatprep.subr.bf16.mxu0 0
  %684 = vmatpush1.bf16.msra.mxu0 %v525
  %685 = vmatprep.subr.bf16.mxu0 0
  %686 = vmatpush1.bf16.msra.mxu0 %v526
  %687 = vmatprep.mubr.bf16.mxu0 %v64
  %688 = vmatmul.mubr.bf16.gmra.mrb[0].mxu0 %v63
  %v689 = vpop.f32.mrb[0].mxu0
  %v690 = vadd.f32 %v221, %v689
  %v691 = vpop.f32.mrb[0].mxu0
  %v692 = vpop.f32.mrb[0].mxu0
  %v693 = vadd.f32 %v221, %v692
  %v694 = vpop.f32.mrb[0].mxu0
  %695 = vdwg.mxu0
  %696 = vmatprep.subr.bf16.mxu0 0
  %697 = vmatpush1.bf16.msra.mxu0 %v527
  %698 = vmatprep.subr.bf16.mxu0 0
  %699 = vmatpush1.bf16.msra.mxu0 %v528
  %700 = vmatprep.subr.bf16.mxu0 0
  %701 = vmatpush1.bf16.msra.mxu0 %v529
  %702 = vmatprep.subr.bf16.mxu0 0
  %703 = vmatpush1.bf16.msra.mxu0 %v530
  %704 = vmatprep.subr.bf16.mxu0 0
  %705 = vmatpush1.bf16.msra.mxu0 %v531
  %706 = vmatprep.subr.bf16.mxu0 0
  %707 = vmatpush1.bf16.msra.mxu0 %v532
  %708 = vmatprep.subr.bf16.mxu0 0
  %709 = vmatpush1.bf16.msra.mxu0 %v533
  %710 = vmatprep.subr.bf16.mxu0 0
  %711 = vmatpush1.bf16.msra.mxu0 %v534
  %712 = vmatprep.subr.bf16.mxu0 0
  %713 = vmatpush1.bf16.msra.mxu0 %v535
  %714 = vmatprep.subr.bf16.mxu0 0
  %715 = vmatpush1.bf16.msra.mxu0 %v536
  %716 = vmatprep.subr.bf16.mxu0 0
  %717 = vmatpush1.bf16.msra.mxu0 %v537
  %718 = vmatprep.subr.bf16.mxu0 0
  %719 = vmatpush1.bf16.msra.mxu0 %v538
  %720 = vmatprep.subr.bf16.mxu0 0
  %721 = vmatpush1.bf16.msra.mxu0 %v539
  %722 = vmatprep.subr.bf16.mxu0 0
  %723 = vmatpush1.bf16.msra.mxu0 %v540
  %724 = vmatprep.subr.bf16.mxu0 0
  %725 = vmatpush1.bf16.msra.mxu0 %v541
  %726 = vmatprep.subr.bf16.mxu0 0
  %727 = vmatpush1.bf16.msra.mxu0 %v542
  %728 = vmatprep.mubr.bf16.mxu0 %v66
  %729 = vmatmul.mubr.bf16.gmra.mrb[0].mxu0 %v65
  %v730 = vpop.f32.mrb[0].mxu0
  %v731 = vadd.f32 %v690, %v730
  %v732 = vpop.f32.mrb[0].mxu0
  %v733 = vpop.f32.mrb[0].mxu0
  %v734 = vadd.f32 %v693, %v733
  %v735 = vpop.f32.mrb[0].mxu0
  %736 = vdwg.mxu0
  %737 = vmatprep.subr.bf16.mxu0 0
  %738 = vmatpush1.bf16.msra.mxu0 %v543
  %739 = vmatprep.subr.bf16.mxu0 0
  %740 = vmatpush1.bf16.msra.mxu0 %v544
  %741 = vmatprep.subr.bf16.mxu0 0
  %742 = vmatpush1.bf16.msra.mxu0 %v545
  %743 = vmatprep.subr.bf16.mxu0 0
  %744 = vmatpush1.bf16.msra.mxu0 %v546
  %745 = vmatprep.subr.bf16.mxu0 0
  %746 = vmatpush1.bf16.msra.mxu0 %v547
  %747 = vmatprep.subr.bf16.mxu0 0
  %748 = vmatpush1.bf16.msra.mxu0 %v548
  %749 = vmatprep.subr.bf16.mxu0 0
  %750 = vmatpush1.bf16.msra.mxu0 %v549
  %751 = vmatprep.subr.bf16.mxu0 0
  %752 = vmatpush1.bf16.msra.mxu0 %v550
  %753 = vmatprep.subr.bf16.mxu0 0
  %754 = vmatpush1.bf16.msra.mxu0 %v551
  %755 = vmatprep.subr.bf16.mxu0 0
  %756 = vmatpush1.bf16.msra.mxu0 %v552
  %757 = vmatprep.subr.bf16.mxu0 0
  %758 = vmatpush1.bf16.msra.mxu0 %v553
  %759 = vmatprep.subr.bf16.mxu0 0
  %760 = vmatpush1.bf16.msra.mxu0 %v554
  %761 = vmatprep.subr.bf16.mxu0 0
  %762 = vmatpush1.bf16.msra.mxu0 %v555
  %763 = vmatprep.subr.bf16.mxu0 0
  %764 = vmatpush1.bf16.msra.mxu0 %v556
  %765 = vmatprep.subr.bf16.mxu0 0
  %766 = vmatpush1.bf16.msra.mxu0 %v557
  %767 = vmatprep.subr.bf16.mxu0 0
  %768 = vmatpush1.bf16.msra.mxu0 %v558
  %769 = vmatprep.mubr.bf16.mxu0 %v68
  %770 = vmatmul.mubr.bf16.gmra.mrb[0].mxu0 %v67
  %v771 = vpop.f32.mrb[0].mxu0
  %v772 = vadd.f32 %v731, %v771
  %v773 = vpop.f32.mrb[0].mxu0
  %v774 = vpop.f32.mrb[0].mxu0
  %v775 = vadd.f32 %v734, %v774
  %v776 = vpop.f32.mrb[0].mxu0
  %777 = vdwg.mxu0
  %778 = vmatprep.subr.bf16.mxu0 0
  %779 = vmatpush1.bf16.msra.mxu0 %v559
  %780 = vmatprep.subr.bf16.mxu0 0
  %781 = vmatpush1.bf16.msra.mxu0 %v560
  %782 = vmatprep.subr.bf16.mxu0 0
  %783 = vmatpush1.bf16.msra.mxu0 %v561
  %784 = vmatprep.subr.bf16.mxu0 0
  %785 = vmatpush1.bf16.msra.mxu0 %v562
  %786 = vmatprep.subr.bf16.mxu0 0
  %787 = vmatpush1.bf16.msra.mxu0 %v563
  %788 = vmatprep.subr.bf16.mxu0 0
  %789 = vmatpush1.bf16.msra.mxu0 %v564
  %790 = vmatprep.subr.bf16.mxu0 0
  %791 = vmatpush1.bf16.msra.mxu0 %v565
  %792 = vmatprep.subr.bf16.mxu0 0
  %793 = vmatpush1.bf16.msra.mxu0 %v566
  %794 = vmatprep.subr.bf16.mxu0 0
  %795 = vmatpush1.bf16.msra.mxu0 %v567
  %796 = vmatprep.subr.bf16.mxu0 0
  %797 = vmatpush1.bf16.msra.mxu0 %v568
  %798 = vmatprep.subr.bf16.mxu0 0
  %799 = vmatpush1.bf16.msra.mxu0 %v569
  %800 = vmatprep.subr.bf16.mxu0 0
  %801 = vmatpush1.bf16.msra.mxu0 %v570
  %802 = vmatprep.subr.bf16.mxu0 0
  %803 = vmatpush1.bf16.msra.mxu0 %v571
  %804 = vmatprep.subr.bf16.mxu0 0
  %805 = vmatpush1.bf16.msra.mxu0 %v572
  %806 = vmatprep.subr.bf16.mxu0 0
  %807 = vmatpush1.bf16.msra.mxu0 %v573
  %808 = vmatprep.subr.bf16.mxu0 0
  %809 = vmatpush1.bf16.msra.mxu0 %v574
  %810 = vmatprep.mubr.bf16.mxu0 %v70
  %811 = vmatmul.mubr.bf16.gmra.mrb[0].mxu0 %v69
  %v812 = vpop.f32.mrb[0].mxu0
  %v813 = vadd.f32 %v772, %v812
  %v814 = vpop.f32.mrb[0].mxu0
  %v815 = vpop.f32.mrb[0].mxu0
  %v816 = vadd.f32 %v775, %v815
  %v817 = vpop.f32.mrb[0].mxu0
  %818 = vdwg.mxu0
  %819 = vmatprep.subr.bf16.mxu0 0
  %820 = vmatpush1.bf16.msra.mxu0 %v575
  %821 = vmatprep.subr.bf16.mxu0 0
  %822 = vmatpush1.bf16.msra.mxu0 %v576
  %823 = vmatprep.subr.bf16.mxu0 0
  %824 = vmatpush1.bf16.msra.mxu0 %v577
  %825 = vmatprep.subr.bf16.mxu0 0
  %826 = vmatpush1.bf16.msra.mxu0 %v578
  %827 = vmatprep.subr.bf16.mxu0 0
  %828 = vmatpush1.bf16.msra.mxu0 %v579
  %829 = vmatprep.subr.bf16.mxu0 0
  %830 = vmatpush1.bf16.msra.mxu0 %v580
  %831 = vmatprep.subr.bf16.mxu0 0
  %832 = vmatpush1.bf16.msra.mxu0 %v581
  %833 = vmatprep.subr.bf16.mxu0 0
  %834 = vmatpush1.bf16.msra.mxu0 %v582
  %835 = vmatprep.subr.bf16.mxu0 0
  %836 = vmatpush1.bf16.msra.mxu0 0
  %837 = vmatprep.subr.bf16.mxu0 0
  %838 = vmatpush1.bf16.msra.mxu0 0
  %839 = vmatprep.subr.bf16.mxu0 0
  %840 = vmatpush1.bf16.msra.mxu0 0
  %841 = vmatprep.subr.bf16.mxu0 0
  %842 = vmatpush1.bf16.msra.mxu0 0
  %843 = vmatprep.subr.bf16.mxu0 0
  %844 = vmatpush1.bf16.msra.mxu0 0
  %845 = vmatprep.subr.bf16.mxu0 0
  %846 = vmatpush1.bf16.msra.mxu0 0
  %847 = vmatprep.subr.bf16.mxu0 0
  %848 = vmatpush1.bf16.msra.mxu0 0
  %849 = vmatprep.subr.bf16.mxu0 0
  %850 = vmatpush1.bf16.msra.mxu0 0
  %851 = vmatprep.mubr.bf16.mxu0 0
  %852 = vmatmul.mubr.bf16.gmra.mrb[0].mxu0 %v71
  %v853 = vpop.f32.mrb[0].mxu0
  %v854 = vadd.f32 %v813, %v853
  %v855 = vpop.f32.mrb[0].mxu0
  %v856 = vpop.f32.mrb[0].mxu0
  %v857 = vadd.f32 %v816, %v856
  %v858 = vpop.f32.mrb[0].mxu0
  %859 = vdwg.mxu0
  %v860 = vpack.c.bf16 %v857, %v854
  %v862 = vunpack.c.l.b16 %v860
  %v863 = vunpack.c.h.b16 %v860
  %v864 = vpack.c.b16 %v862, %v862
  %v865 = vpack.c.b16 %v863, %v863
  %868 = vst [vmem:[%s3] sm:$0xf] %v864
  %869 = vst [vmem:[%s3 + $0x4] sm:$0xf] %v865
  %v870 = vadd.f32 %v854, %v857
  %v871 = vrot.slane %v870, 4
  %v872 = vadd.f32 %v870, %v871
  %v873 = vrot.slane %v872, 2
  %v874 = vadd.f32 %v872, %v873
  %v875 = vrot.slane %v874, 1
  %v876 = vadd.f32 %v874, %v875
  %v877 = vmul.f32 %v854, %v854
  %v878 = vmul.f32 %v857, %v857
  %v879 = vadd.f32 %v877, %v878
  %v880 = vrot.slane %v879, 4
  %v881 = vadd.f32 %v879, %v880
  %v882 = vrot.slane %v881, 2
  %v883 = vadd.f32 %v881, %v882
  %v884 = vrot.slane %v883, 1
  %v885 = vadd.f32 %v883, %v884
  %v886 = vlaneseq
  %v887 = vshrl.u32 %v886, 7
  %vm888 = vcmp.eq.s32.totalorder %v887, 0
  %vm889 = vcmp.eq.s32.totalorder %v887, 1
  %v890 = vsel %vm889, %v885, 0.0
  %v891 = vsel %vm888, %v876, %v890
  %892 = vst [vmem:[%s4] sm:$0xff] %v891
  // Predicated region
  $region14: #{_lambda_.16} parent=0 // pred_check
    _
  $region15: #{_lambda_.16} parent=0 // pred_check_branch
    %894 = sbr.rel (0) target = $region17
  $region16: #{_lambda_.16} parent=0 // pred_region
    _
  $region17: #{_lambda_.16} parent=0 // pred_fallthru
    _
  // Predicated region
  $region18: #{_lambda_.16} parent=0 // pred_check
    _
  $region19: #{_lambda_.16} parent=0 // pred_check_branch
    %896 = sbr.rel (0) target = $region21
  $region20: #{_lambda_.16} parent=0 // pred_region
    _
  $region21: #{_lambda_.16} parent=0 // pred_fallthru
    _
  // Predicated region
  $region22: #{_lambda_.16} parent=0 // pred_check
    _
  $region23: #{_lambda_.16} parent=0 // pred_check_branch
    %898 = sbr.rel (0) target = $region25
  $region24: #{_lambda_.16} parent=0 // pred_region
    _
  $region25: #{_lambda_.16} parent=0 // pred_fallthru
    _
  // Predicated region
  $region26: #{_lambda_.16} parent=0 // pred_check
    _
  $region27: #{_lambda_.16} parent=0 // pred_check_branch
    %900 = sbr.rel (0) target = $region29
  $region28: #{_lambda_.16} parent=0 // pred_region
    _
  $region29: #{_lambda_.16} parent=0 // pred_fallthru
    _

// kernel: tile.68
$region0: #{tile.68}
  #allocation0 [shape = 's32[1]{0}', space=sflag, size = 0x4, scoped, tag = 'scoped memory for tile.68']
  %s0 = inlined_call_operand.vmem [shape: f32[16], index: 0, kind: input, shape index: {}]
  %s1 = inlined_call_operand.vmem [shape: f32[4,16], index: 1, kind: output, shape index: {}]
  // Predicated region
  $region2: #{tile.68} parent=0 // pred_check
    _
  $region3: #{tile.68} parent=0 // pred_check_branch
    %3 = sbr.rel (0) target = $region5
  $region4: #{tile.68} parent=0 // pred_region
    _
  $region5: #{tile.68} parent=0 // pred_fallthru
    _
  %v4 = vld [vmem:[%s0] ss:$0 sm:$0xff]
  %5 = vst [vmem:[%s1] sm:$0xf] %v4

// kernel: _lambda_.17
$region0: #{_lambda_.17}
  #allocation0 [shape = 'u32[]', space=smem, size = 0x4, offset = 0x4, fixed_abs, tag = 'smem constant byte address 0x4 - core index']
  #allocation1 [shape = 'u32[144,128]{1,0:T(1,128)}', space=vmem, size = 0x12000, scoped, tag = 'internal scratch']
  %s0 = inlined_call_operand.vmem [shape: bf16[32,640], index: 0, kind: input, shape index: {}]
  %s1 = inlined_call_operand.vmem [shape: bf16[640,128], index: 1, kind: input, shape index: {}]
  %s2 = inlined_call_operand.vmem [shape: f32[1,128], index: 2, kind: input, shape index: {}]
  %s3 = inlined_call_operand.vmem [shape: bf16[32,128], index: 3, kind: output, shape index: {0}]
  %s4 = inlined_call_operand.vmem [shape: f32[2,8,128], index: 4, kind: output, shape index: {1}]
  %5 = xla_tuple %s3, %s4
  %s6 = sld [smem:[#allocation0]]
  $region53: #{_lambda_.17} parent=0
    _
  %s8 = ssub.s32 1, %s6
  %s9 = scalar_select 0, %s8, %s6
  loop: start=0, step=1, limit=4
  $region2: #{_lambda_.17} parent=0 // loop_pre_header
    _
  $region3: #{_lambda_.17} parent=0 // loop_header
    %s11 = sphi 0, %s15
    %p12 = scmp.ge.s32.totalorder %s11, 4
    %s18 = sphi 0, %s30
    %s19 = sphi 0, %s26
    %s20 = sphi 0, %s18
    %s21 = sphi 0, %s19
    %s22 = sphi 0, %s20
    %s23 = sphi 0, %s21
    %s33 = sphi 0, %s35
    %s36 = sphi 0, %s33
    %s37 = sphi 0, %s36
    %s53 = sphi 0, %s37
    %s59 = sphi 0, %s61
    %s62 = sphi 0, %s59
    %s63 = sphi 0, %s62
    %s79 = sphi 0, %s63
    %s85 = sphi 0, %s87
    %s88 = sphi 0, %s85
    %s89 = sphi 0, %s88
    %s105 = sphi 0, %s89
    %s113 = sphi 0, %s115
    %s116 = sphi 0, %s113
    %s117 = sphi 0, %s116
    %s133 = sphi 0, %s117
    %s141 = sphi 0, %s143
    %s144 = sphi 0, %s141
    %s145 = sphi 0, %s144
    %s161 = sphi 0, %s145
  $region4: #{_lambda_.17} parent=0 // loop_header_branch
    %14 = sbr.rel (%p12) target = $region8
  $region5: #{_lambda_.17} parent=0 // loop_body
    %s16 = ssub.s32 %s11, 1
    %s17 = ssub.s32 %s11, 2
    %s24 = sadd.s32 1, %s19
    %p25 = scmp.ge.s32.totalorder %s24, 1
    %s26 = scalar_select %p25, 0, %s24
    %s27 = sadd.s32 1, %s18
    %s28 = scalar_select %p25, %s27, %s18
    %p29 = scmp.ge.s32.totalorder %s28, 2
    %s30 = scalar_select %p29, 0, %s28
    %s31 = ssub.s32 %s18, %s30
    %p32 = scmp.eq.s32.totalorder %s31, 0
    %s34 = sadd.s32 %s33, 1
    %s35 = scalar_select %p32, %s33, %s34
    %p38 = pneg %p32
    %p39 = scmp.eq.s32.totalorder %s11, 1
    %p40 = por %p38, %p39
    %p41 = scmp.ne.s32.totalorder %s33, %s36
    %p42 = scmp.eq.s32.totalorder %s11, 0
    %p43 = por %p41, %p42
    %p44 = scmp.ne.s32.totalorder %s33, %s36
    %p45 = scmp.eq.s32.totalorder %s16, 1
    %p46 = por %p44, %p45
    %p47 = scmp.ne.s32.totalorder %s36, %s37
    %p48 = scmp.eq.s32.totalorder %s16, 0
    %p49 = por %p47, %p48
    %p50 = scmp.ne.s32.totalorder %s36, %s37
    %p51 = scmp.eq.s32.totalorder %s17, 1
    %p52 = por %p50, %p51
    %p54 = scmp.ne.s32.totalorder %s37, %s53
    %p55 = scmp.eq.s32.totalorder %s17, 0
    %p56 = por %p54, %p55
    %s57 = ssub.s32 %s19, %s26
    %p58 = scmp.eq.s32.totalorder %s57, 0
    %s60 = sadd.s32 %s59, 1
    %s61 = scalar_select %p58, %s59, %s60
    %p64 = pneg %p58
    %p65 = scmp.eq.s32.totalorder %s11, 1
    %p66 = por %p64, %p65
    %p67 = scmp.ne.s32.totalorder %s59, %s62
    %p68 = scmp.eq.s32.totalorder %s11, 0
    %p69 = por %p67, %p68
    %p70 = scmp.ne.s32.totalorder %s59, %s62
    %p71 = scmp.eq.s32.totalorder %s16, 1
    %p72 = por %p70, %p71
    %p73 = scmp.ne.s32.totalorder %s62, %s63
    %p74 = scmp.eq.s32.totalorder %s16, 0
    %p75 = por %p73, %p74
    %p76 = scmp.ne.s32.totalorder %s62, %s63
    %p77 = scmp.eq.s32.totalorder %s17, 1
    %p78 = por %p76, %p77
    %p80 = scmp.ne.s32.totalorder %s63, %s79
    %p81 = scmp.eq.s32.totalorder %s17, 0
    %p82 = por %p80, %p81
    %s83 = ssub.s32 %s19, %s26
    %p84 = scmp.eq.s32.totalorder %s83, 0
    %s86 = sadd.s32 %s85, 1
    %s87 = scalar_select %p84, %s85, %s86
    %p90 = pneg %p84
    %p91 = scmp.eq.s32.totalorder %s11, 1
    %p92 = por %p90, %p91
    %p93 = scmp.ne.s32.totalorder %s85, %s88
    %p94 = scmp.eq.s32.totalorder %s11, 0
    %p95 = por %p93, %p94
    %p96 = scmp.ne.s32.totalorder %s85, %s88
    %p97 = scmp.eq.s32.totalorder %s16, 1
    %p98 = por %p96, %p97
    %p99 = scmp.ne.s32.totalorder %s88, %s89
    %p100 = scmp.eq.s32.totalorder %s16, 0
    %p101 = por %p99, %p100
    %p102 = scmp.ne.s32.totalorder %s88, %s89
    %p103 = scmp.eq.s32.totalorder %s17, 1
    %p104 = por %p102, %p103
    %p106 = scmp.ne.s32.totalorder %s89, %s105
    %p107 = scmp.eq.s32.totalorder %s17, 0
    %p108 = por %p106, %p107
    %s109 = ssub.s32 %s18, %s30
    %s110 = ssub.s32 %s19, %s26
    %s111 = sor.u32 %s109, %s110
    %p112 = scmp.eq.s32.totalorder %s111, 0
    %s114 = sadd.s32 %s113, 1
    %s115 = scalar_select %p112, %s113, %s114
    %p118 = pneg %p112
    %p119 = scmp.eq.s32.totalorder %s11, 1
    %p120 = por %p118, %p119
    %p121 = scmp.ne.s32.totalorder %s113, %s116
    %p122 = scmp.eq.s32.totalorder %s11, 0
    %p123 = por %p121, %p122
    %p124 = scmp.ne.s32.totalorder %s113, %s116
    %p125 = scmp.eq.s32.totalorder %s16, 1
    %p126 = por %p124, %p125
    %p127 = scmp.ne.s32.totalorder %s116, %s117
    %p128 = scmp.eq.s32.totalorder %s16, 0
    %p129 = por %p127, %p128
    %p130 = scmp.ne.s32.totalorder %s116, %s117
    %p131 = scmp.eq.s32.totalorder %s17, 1
    %p132 = por %p130, %p131
    %p134 = scmp.ne.s32.totalorder %s117, %s133
    %p135 = scmp.eq.s32.totalorder %s17, 0
    %p136 = por %p134, %p135
    %s137 = ssub.s32 %s18, %s30
    %s138 = ssub.s32 %s19, %s26
    %s139 = sor.u32 %s137, %s138
    %p140 = scmp.eq.s32.totalorder %s139, 0
    %s142 = sadd.s32 %s141, 1
    %s143 = scalar_select %p140, %s141, %s142
    %p146 = pneg %p140
    %p147 = scmp.eq.s32.totalorder %s11, 1
    %p148 = por %p146, %p147
    %p149 = scmp.ne.s32.totalorder %s141, %s144
    %p150 = scmp.eq.s32.totalorder %s11, 0
    %p151 = por %p149, %p150
    %p152 = scmp.ne.s32.totalorder %s141, %s144
    %p153 = scmp.eq.s32.totalorder %s16, 1
    %p154 = por %p152, %p153
    %p155 = scmp.ne.s32.totalorder %s144, %s145
    %p156 = scmp.eq.s32.totalorder %s16, 0
    %p157 = por %p155, %p156
    %p158 = scmp.ne.s32.totalorder %s144, %s145
    %p159 = scmp.eq.s32.totalorder %s17, 1
    %p160 = por %p158, %p159
    %p162 = scmp.ne.s32.totalorder %s145, %s161
    %p163 = scmp.eq.s32.totalorder %s17, 0
    %p164 = por %p162, %p163
    %p165 = scmp.le.s32.totalorder 1, %s11
    %p166 = scmp.lt.s32.totalorder %s11, 3
    %p167 = pnand %p165, %p166
    %p168 = pneg %p167
    // Predicated region
    $region9: #{_lambda_.17} parent=5 // pred_check
      _
    $region10: #{_lambda_.17} parent=5 // pred_check_branch
      %170 = sbr.rel (%p167) target = $region12
    $region11: #{_lambda_.17} parent=5 // pred_region
      %s171 = ssub.s32 %s11, 1
      // Predicated region
      $region13: #{_lambda_.17} parent=11 // pred_check
        %p172 = pneg %p75
      $region14: #{_lambda_.17} parent=11 // pred_check_branch
        %174 = sbr.rel (%p172) target = $region16
      $region15: #{_lambda_.17} parent=11 // pred_region
        %p175 = scmp.lt.s32.totalorder %s21, 0
        %s176 = scalar_select %p175, %s21, 0
        %s177 = smul.addr %s176, 4
        %s178 = scalar_lea.vmem %s1, %s177
      $region16: #{_lambda_.17} parent=11 // pred_fallthru
        _
      // Predicated region
      $region17: #{_lambda_.17} parent=11 // pred_check
        %p179 = pneg %p101
      $region18: #{_lambda_.17} parent=11 // pred_check_branch
        %181 = sbr.rel (%p179) target = $region20
      $region19: #{_lambda_.17} parent=11 // pred_region
        %p182 = scmp.lt.s32.totalorder %s21, 0
        %s183 = scalar_select %p182, %s21, 0
        %s184 = scalar_lea.vmem %s2, %s183
      $region20: #{_lambda_.17} parent=11 // pred_fallthru
        _
    $region12: #{_lambda_.17} parent=5 // pred_fallthru
      _
    %p185 = scmp.lt.s32.totalorder %s11, 2
    // Predicated region
    $region21: #{_lambda_.17} parent=5 // pred_check
      %p186 = pneg %p185
    $region22: #{_lambda_.17} parent=5 // pred_check_branch
      %188 = sbr.rel (%p186) target = $region24
    $region23: #{_lambda_.17} parent=5 // pred_region
      // Predicated region
      $region25: #{_lambda_.17} parent=23 // pred_check
        %p189 = pneg %p43
      $region26: #{_lambda_.17} parent=23 // pred_check_branch
        %191 = sbr.rel (%p189) target = $region28
      $region27: #{_lambda_.17} parent=23 // pred_region
        %s192 = smul.u32 2, %s18
        %p193 = scmp.lt.s32.totalorder %s192, 3
        %s194 = scalar_select %p193, %s192, 3
        %s195 = smul.addr %s194, 5
        %s196 = smul.addr %s195, 4
        %s197 = scalar_lea.vmem %s0, %s196
        %s198 = smul.u32 2, %s18
      $region28: #{_lambda_.17} parent=23 // pred_fallthru
        _
    $region24: #{_lambda_.17} parent=5 // pred_fallthru
      _
    %p199 = scmp.le.s32.totalorder 1, %s11
    %p200 = scmp.lt.s32.totalorder %s11, 3
    %p201 = pnand %p199, %p200
    %p202 = pneg %p201
    // Predicated region
    $region29: #{_lambda_.17} parent=5 // pred_check
      _
    $region30: #{_lambda_.17} parent=5 // pred_check_branch
      %204 = sbr.rel (%p201) target = $region32
    $region31: #{_lambda_.17} parent=5 // pred_region
      %s205 = ssub.s32 %s11, 1
      %s206 = smul.u32 2, %s20
      %p207 = scmp.lt.s32.totalorder %s206, 3
      %s208 = scalar_select %p207, %s206, 3
      %s209 = smul.addr %s208, 5
      %s210 = smul.addr %s209, 4
      %s211 = scalar_lea.vmem %s0, %s210
      %p212 = pneg %p49
      %p213 = pneg %p46
      %p214 = scmp.lt.s32.totalorder %s21, 0
      %s215 = scalar_select %p214, %s21, 0
      %s216 = smul.addr %s215, 4
      %s217 = scalar_lea.vmem %s1, %s216
      %p218 = pneg %p75
      %p219 = pneg %p72
      %p220 = scmp.lt.s32.totalorder %s21, 0
      %s221 = scalar_select %p220, %s21, 0
      %s222 = scalar_lea.vmem %s2, %s221
      %p223 = pneg %p101
      %p224 = pneg %p98
      %p225 = pneg %p129
      %p226 = pneg %p126
      %s227 = smul.u32 2, %s20
      %p228 = scmp.lt.s32.totalorder %s227, 3
      %s229 = scalar_select %p228, %s227, 3
      %p230 = scmp.lt.s32.totalorder %s21, 0
      %s231 = scalar_select %p230, %s21, 0
      %s232 = sadd.s32 %s231, %s229
      %s233 = smul.addr %s232, 4
      %s234 = scalar_lea.vmem %s3, %s233
      %p235 = pneg %p157
      %p236 = pneg %p154
      %p237 = scmp.lt.s32.totalorder %s20, 1
      %s238 = scalar_select %p237, %s20, 1
      %p239 = scmp.lt.s32.totalorder %s21, 0
      %s240 = scalar_select %p239, %s21, 0
      %s241 = sadd.s32 %s240, %s238
      %s242 = smul.addr %s241, 8
      %s243 = scalar_lea.vmem %s4, %s242
      %s244 = smul.u32 2, %s20
      %p245 = scmp.lt.s32.totalorder %s244, 3
      %s246 = scalar_select %p245, %s244, 3
      %s247 = smul.addr %s246, 5
      %s248 = smul.addr %s247, 4
      %s249 = scalar_lea.vmem %s0, %s248
      %s250 = smul.u32 2, %s20
      %p251 = scmp.lt.s32.totalorder %s21, 0
      %s252 = scalar_select %p251, %s21, 0
      %s253 = smul.addr %s252, 4
      %s254 = scalar_lea.vmem %s1, %s253
      %p255 = scmp.lt.s32.totalorder %s21, 0
      %s256 = scalar_select %p255, %s21, 0
      %s257 = scalar_lea.vmem %s2, %s256
      %s258 = smul.u32 2, %s20
      %p259 = scmp.lt.s32.totalorder %s258, 3
      %s260 = scalar_select %p259, %s258, 3
      %p261 = scmp.lt.s32.totalorder %s21, 0
      %s262 = scalar_select %p261, %s21, 0
      %s263 = sadd.s32 %s262, %s260
      %s264 = smul.addr %s263, 4
      %s265 = scalar_lea.vmem %s3, %s264
      %s266 = smul.u32 2, %s20
      %p267 = scmp.lt.s32.totalorder %s20, 1
      %s268 = scalar_select %p267, %s20, 1
      %p269 = scmp.lt.s32.totalorder %s21, 0
      %s270 = scalar_select %p269, %s21, 0
      %s271 = sadd.s32 %s270, %s268
      %s272 = smul.addr %s271, 8
      %s273 = scalar_lea.vmem %s4, %s272
      %v275 = vld [vmem:[%s249] sm:$0xff]
      %v276 = vld [vmem:[%s249 + $0x8] sm:$0xff]
      %v277 = vld [vmem:[%s249 + $0x10] sm:$0xf]
      %v278 = vld [vmem:[%s249 + $0x14] sm:$0xff]
      %v279 = vld [vmem:[%s249 + $0x1c] sm:$0xff]
      %v280 = vld [vmem:[%s249 + $0x24] sm:$0xf]
      %v281 = vunpack.c.l.bf16 %v275
      %v282 = vunpack.c.h.bf16 %v275
      %v283 = vunpack.c.l.bf16 %v276
      %v284 = vunpack.c.h.bf16 %v276
      %v285 = vunpack.c.l.bf16 %v277
      %v286 = vunpack.c.l.bf16 %v278
      %v287 = vunpack.c.h.bf16 %v278
      %v288 = vunpack.c.l.bf16 %v279
      %v289 = vunpack.c.h.bf16 %v279
      %v290 = vunpack.c.l.bf16 %v280
      %v291 = vmax.f32 %v281, 0.0
      %v292 = vmax.f32 %v282, 0.0
      %v293 = vmax.f32 %v283, 0.0
      %v294 = vmax.f32 %v284, 0.0
      %v295 = vmax.f32 %v285, 0.0
      %v296 = vmax.f32 %v286, 0.0
      %v297 = vmax.f32 %v287, 0.0
      %v298 = vmax.f32 %v288, 0.0
      %v299 = vmax.f32 %v289, 0.0
      %v300 = vmax.f32 %v290, 0.0
      %v301 = vpack.c.bf16 %v296, %v291
      %v302 = vpack.c.bf16 %v297, %v292
      %v303 = vpack.c.bf16 %v298, %v293
      %v304 = vpack.c.bf16 %v299, %v294
      %v305 = vpack.c.bf16 %v300, %v295
      %v306 = vld [vmem:[%s254] sm:$0xf]
      %v307 = vld [vmem:[%s254 + $0x4] sm:$0xf]
      %v308 = vld [vmem:[%s254 + $0x8] sm:$0xf]
      %v309 = vld [vmem:[%s254 + $0xc] sm:$0xf]
      %v310 = vld [vmem:[%s254 + $0x10] sm:$0xf]
      %v311 = vld [vmem:[%s254 + $0x14] sm:$0xf]
      %v312 = vld [vmem:[%s254 + $0x18] sm:$0xf]
      %v313 = vld [vmem:[%s254 + $0x1c] sm:$0xf]
      %v314 = vld [vmem:[%s254 + $0x20] sm:$0xf]
      %v315 = vld [vmem:[%s254 + $0x24] sm:$0xf]
      %v316 = vld [vmem:[%s254 + $0x28] sm:$0xf]
      %v317 = vld [vmem:[%s254 + $0x2c] sm:$0xf]
      %v318 = vld [vmem:[%s254 + $0x30] sm:$0xf]
      %v319 = vld [vmem:[%s254 + $0x34] sm:$0xf]
      %v320 = vld [vmem:[%s254 + $0x38] sm:$0xf]
      %v321 = vld [vmem:[%s254 + $0x3c] sm:$0xf]
      %v322 = vld [vmem:[%s254 + $0x40] sm:$0xf]
      %v323 = vld [vmem:[%s254 + $0x44] sm:$0xf]
      %v324 = vld [vmem:[%s254 + $0x48] sm:$0xf]
      %v325 = vld [vmem:[%s254 + $0x4c] sm:$0xf]
      %v326 = vld [vmem:[%s254 + $0x50] sm:$0xf]
      %v327 = vld [vmem:[%s254 + $0x54] sm:$0xf]
      %v328 = vld [vmem:[%s254 + $0x58] sm:$0xf]
      %v329 = vld [vmem:[%s254 + $0x5c] sm:$0xf]
      %v330 = vld [vmem:[%s254 + $0x60] sm:$0xf]
      %v331 = vld [vmem:[%s254 + $0x64] sm:$0xf]
      %v332 = vld [vmem:[%s254 + $0x68] sm:$0xf]
      %v333 = vld [vmem:[%s254 + $0x6c] sm:$0xf]
      %v334 = vld [vmem:[%s254 + $0x70] sm:$0xf]
      %v335 = vld [vmem:[%s254 + $0x74] sm:$0xf]
      %v336 = vld [vmem:[%s254 + $0x78] sm:$0xf]
      %v337 = vld [vmem:[%s254 + $0x7c] sm:$0xf]
      %v338 = vld [vmem:[%s254 + $0x80] sm:$0xf]
      %v339 = vld [vmem:[%s254 + $0x84] sm:$0xf]
      %v340 = vld [vmem:[%s254 + $0x88] sm:$0xf]
      %v341 = vld [vmem:[%s254 + $0x8c] sm:$0xf]
      %v342 = vld [vmem:[%s254 + $0x90] sm:$0xf]
      %v343 = vld [vmem:[%s254 + $0x94] sm:$0xf]
      %v344 = vld [vmem:[%s254 + $0x98] sm:$0xf]
      %v345 = vld [vmem:[%s254 + $0x9c] sm:$0xf]
      %v346 = vld [vmem:[%s254 + $0xa0] sm:$0xf]
      %v347 = vld [vmem:[%s254 + $0xa4] sm:$0xf]
      %v348 = vld [vmem:[%s254 + $0xa8] sm:$0xf]
      %v349 = vld [vmem:[%s254 + $0xac] sm:$0xf]
      %v350 = vld [vmem:[%s254 + $0xb0] sm:$0xf]
      %v351 = vld [vmem:[%s254 + $0xb4] sm:$0xf]
      %v352 = vld [vmem:[%s254 + $0xb8] sm:$0xf]
      %v353 = vld [vmem:[%s254 + $0xbc] sm:$0xf]
      %v354 = vld [vmem:[%s254 + $0xc0] sm:$0xf]
      %v355 = vld [vmem:[%s254 + $0xc4] sm:$0xf]
      %v356 = vld [vmem:[%s254 + $0xc8] sm:$0xf]
      %v357 = vld [vmem:[%s254 + $0xcc] sm:$0xf]
      %v358 = vld [vmem:[%s254 + $0xd0] sm:$0xf]
      %v359 = vld [vmem:[%s254 + $0xd4] sm:$0xf]
      %v360 = vld [vmem:[%s254 + $0xd8] sm:$0xf]
      %v361 = vld [vmem:[%s254 + $0xdc] sm:$0xf]
      %v362 = vld [vmem:[%s254 + $0xe0] sm:$0xf]
      %v363 = vld [vmem:[%s254 + $0xe4] sm:$0xf]
      %v364 = vld [vmem:[%s254 + $0xe8] sm:$0xf]
      %v365 = vld [vmem:[%s254 + $0xec] sm:$0xf]
      %v366 = vld [vmem:[%s254 + $0xf0] sm:$0xf]
      %v367 = vld [vmem:[%s254 + $0xf4] sm:$0xf]
      %v368 = vld [vmem:[%s254 + $0xf8] sm:$0xf]
      %v369 = vld [vmem:[%s254 + $0xfc] sm:$0xf]
      %v370 = vld [vmem:[%s254 + $0x100] sm:$0xf]
      %v371 = vld [vmem:[%s254 + $0x104] sm:$0xf]
      %v372 = vld [vmem:[%s254 + $0x108] sm:$0xf]
      %v373 = vld [vmem:[%s254 + $0x10c] sm:$0xf]
      %v374 = vld [vmem:[%s254 + $0x110] sm:$0xf]
      %v375 = vld [vmem:[%s254 + $0x114] sm:$0xf]
      %v376 = vld [vmem:[%s254 + $0x118] sm:$0xf]
      %v377 = vld [vmem:[%s254 + $0x11c] sm:$0xf]
      %v378 = vld [vmem:[%s254 + $0x120] sm:$0xf]
      %v379 = vld [vmem:[%s254 + $0x124] sm:$0xf]
      %v380 = vld [vmem:[%s254 + $0x128] sm:$0xf]
      %v381 = vld [vmem:[%s254 + $0x12c] sm:$0xf]
      %v382 = vld [vmem:[%s254 + $0x130] sm:$0xf]
      %v383 = vld [vmem:[%s254 + $0x134] sm:$0xf]
      %v384 = vld [vmem:[%s254 + $0x138] sm:$0xf]
      %v385 = vld [vmem:[%s254 + $0x13c] sm:$0xf]
      %v386 = vld [vmem:[%s257] sm:$0x1]
      %v388 = vlaneseq
      %v389 = vshrl.u32 %v388, 7
      %v390 = vsub.s32 0, %v389
      %v391 = vrot.slane %v386, %v390
      %v473 = vunpack.c.l.b16 %v306
      %v474 = vunpack.c.l.b16 %v307
      %v475 = vunpack.c.l.b16 %v308
      %v476 = vunpack.c.l.b16 %v309
      %v477 = vunpack.c.l.b16 %v310
      %v478 = vunpack.c.l.b16 %v311
      %v479 = vunpack.c.l.b16 %v312
      %v480 = vunpack.c.l.b16 %v313
      %v481 = vunpack.c.l.b16 %v314
      %v482 = vunpack.c.l.b16 %v315
      %v483 = vunpack.c.l.b16 %v316
      %v484 = vunpack.c.l.b16 %v317
      %v485 = vunpack.c.l.b16 %v318
      %v486 = vunpack.c.l.b16 %v319
      %v487 = vunpack.c.l.b16 %v320
      %v488 = vunpack.c.l.b16 %v321
      %v489 = vunpack.c.l.b16 %v322
      %v490 = vunpack.c.l.b16 %v323
      %v491 = vunpack.c.l.b16 %v324
      %v492 = vunpack.c.l.b16 %v325
      %v493 = vunpack.c.l.b16 %v326
      %v494 = vunpack.c.l.b16 %v327
      %v495 = vunpack.c.l.b16 %v328
      %v496 = vunpack.c.l.b16 %v329
      %v497 = vunpack.c.l.b16 %v330
      %v498 = vunpack.c.l.b16 %v331
      %v499 = vunpack.c.l.b16 %v332
      %v500 = vunpack.c.l.b16 %v333
      %v501 = vunpack.c.l.b16 %v334
      %v502 = vunpack.c.l.b16 %v335
      %v503 = vunpack.c.l.b16 %v336
      %v504 = vunpack.c.l.b16 %v337
      %v505 = vunpack.c.l.b16 %v338
      %v506 = vunpack.c.l.b16 %v339
      %v507 = vunpack.c.l.b16 %v340
      %v508 = vunpack.c.l.b16 %v341
      %v509 = vunpack.c.l.b16 %v342
      %v510 = vunpack.c.l.b16 %v343
      %v511 = vunpack.c.l.b16 %v344
      %v512 = vunpack.c.l.b16 %v345
      %v513 = vunpack.c.l.b16 %v346
      %v514 = vunpack.c.l.b16 %v347
      %v515 = vunpack.c.l.b16 %v348
      %v516 = vunpack.c.l.b16 %v349
      %v517 = vunpack.c.l.b16 %v350
      %v518 = vunpack.c.l.b16 %v351
      %v519 = vunpack.c.l.b16 %v352
      %v520 = vunpack.c.l.b16 %v353
      %v521 = vunpack.c.l.b16 %v354
      %v522 = vunpack.c.l.b16 %v355
      %v523 = vunpack.c.l.b16 %v356
      %v524 = vunpack.c.l.b16 %v357
      %v525 = vunpack.c.l.b16 %v358
      %v526 = vunpack.c.l.b16 %v359
      %v527 = vunpack.c.l.b16 %v360
      %v528 = vunpack.c.l.b16 %v361
      %v529 = vunpack.c.l.b16 %v362
      %v530 = vunpack.c.l.b16 %v363
      %v531 = vunpack.c.l.b16 %v364
      %v532 = vunpack.c.l.b16 %v365
      %v533 = vunpack.c.l.b16 %v366
      %v534 = vunpack.c.l.b16 %v367
      %v535 = vunpack.c.l.b16 %v368
      %v536 = vunpack.c.l.b16 %v369
      %v537 = vunpack.c.l.b16 %v370
      %v538 = vunpack.c.l.b16 %v371
      %v539 = vunpack.c.l.b16 %v372
      %v540 = vunpack.c.l.b16 %v373
      %v541 = vunpack.c.l.b16 %v374
      %v542 = vunpack.c.l.b16 %v375
      %v543 = vunpack.c.l.b16 %v376
      %v544 = vunpack.c.l.b16 %v377
      %v545 = vunpack.c.l.b16 %v378
      %v546 = vunpack.c.l.b16 %v379
      %v547 = vunpack.c.l.b16 %v380
      %v548 = vunpack.c.l.b16 %v381
      %v549 = vunpack.c.l.b16 %v382
      %v550 = vunpack.c.l.b16 %v383
      %v551 = vunpack.c.l.b16 %v384
      %v552 = vunpack.c.l.b16 %v385
      %v553 = vpack.c.b16 %v474, %v473
      %v554 = vpack.c.b16 %v476, %v475
      %v555 = vpack.c.b16 %v478, %v477
      %v556 = vpack.c.b16 %v480, %v479
      %v557 = vpack.c.b16 %v482, %v481
      %v558 = vpack.c.b16 %v484, %v483
      %v559 = vpack.c.b16 %v486, %v485
      %v560 = vpack.c.b16 %v488, %v487
      %v561 = vpack.c.b16 %v490, %v489
      %v562 = vpack.c.b16 %v492, %v491
      %v563 = vpack.c.b16 %v494, %v493
      %v564 = vpack.c.b16 %v496, %v495
      %v565 = vpack.c.b16 %v498, %v497
      %v566 = vpack.c.b16 %v500, %v499
      %v567 = vpack.c.b16 %v502, %v501
      %v568 = vpack.c.b16 %v504, %v503
      %v569 = vpack.c.b16 %v506, %v505
      %v570 = vpack.c.b16 %v508, %v507
      %v571 = vpack.c.b16 %v510, %v509
      %v572 = vpack.c.b16 %v512, %v511
      %v573 = vpack.c.b16 %v514, %v513
      %v574 = vpack.c.b16 %v516, %v515
      %v575 = vpack.c.b16 %v518, %v517
      %v576 = vpack.c.b16 %v520, %v519
      %v577 = vpack.c.b16 %v522, %v521
      %v578 = vpack.c.b16 %v524, %v523
      %v579 = vpack.c.b16 %v526, %v525
      %v580 = vpack.c.b16 %v528, %v527
      %v581 = vpack.c.b16 %v530, %v529
      %v582 = vpack.c.b16 %v532, %v531
      %v583 = vpack.c.b16 %v534, %v533
      %v584 = vpack.c.b16 %v536, %v535
      %v585 = vpack.c.b16 %v538, %v537
      %v586 = vpack.c.b16 %v540, %v539
      %v587 = vpack.c.b16 %v542, %v541
      %v588 = vpack.c.b16 %v544, %v543
      %v589 = vpack.c.b16 %v546, %v545
      %v590 = vpack.c.b16 %v548, %v547
      %v591 = vpack.c.b16 %v550, %v549
      %v592 = vpack.c.b16 %v552, %v551
      %633 = vmatprep.subr.bf16.mxu0 0
      %634 = vmatpush1.bf16.msra.mxu0 %v553
      %635 = vmatprep.subr.bf16.mxu0 0
      %636 = vmatpush1.bf16.msra.mxu0 %v554
      %637 = vmatprep.subr.bf16.mxu0 0
      %638 = vmatpush1.bf16.msra.mxu0 %v555
      %639 = vmatprep.subr.bf16.mxu0 0
      %640 = vmatpush1.bf16.msra.mxu0 %v556
      %641 = vmatprep.subr.bf16.mxu0 0
      %642 = vmatpush1.bf16.msra.mxu0 %v557
      %643 = vmatprep.subr.bf16.mxu0 0
      %644 = vmatpush1.bf16.msra.mxu0 %v558
      %645 = vmatprep.subr.bf16.mxu0 0
      %646 = vmatpush1.bf16.msra.mxu0 %v559
      %647 = vmatprep.subr.bf16.mxu0 0
      %648 = vmatpush1.bf16.msra.mxu0 %v560
      %649 = vmatprep.subr.bf16.mxu0 0
      %650 = vmatpush1.bf16.msra.mxu0 %v561
      %651 = vmatprep.subr.bf16.mxu0 0
      %652 = vmatpush1.bf16.msra.mxu0 %v562
      %653 = vmatprep.subr.bf16.mxu0 0
      %654 = vmatpush1.bf16.msra.mxu0 %v563
      %655 = vmatprep.subr.bf16.mxu0 0
      %656 = vmatpush1.bf16.msra.mxu0 %v564
      %657 = vmatprep.subr.bf16.mxu0 0
      %658 = vmatpush1.bf16.msra.mxu0 %v565
      %659 = vmatprep.subr.bf16.mxu0 0
      %660 = vmatpush1.bf16.msra.mxu0 %v566
      %661 = vmatprep.subr.bf16.mxu0 0
      %662 = vmatpush1.bf16.msra.mxu0 %v567
      %663 = vmatprep.subr.bf16.mxu0 0
      %664 = vmatpush1.bf16.msra.mxu0 %v568
      %665 = vmatprep.mubr.bf16.mxu0 %v302
      %666 = vmatmul.mubr.bf16.gmra.mrb[0].mxu0 %v301
      %v667 = vpop.f32.mrb[0].mxu0
      %v668 = vadd.f32 %v391, %v667
      %v669 = vpop.f32.mrb[0].mxu0
      %v670 = vpop.f32.mrb[0].mxu0
      %v671 = vadd.f32 %v391, %v670
      %v672 = vpop.f32.mrb[0].mxu0
      %673 = vdwg.mxu0
      %674 = vmatprep.subr.bf16.mxu0 0
      %675 = vmatpush1.bf16.msra.mxu0 %v569
      %676 = vmatprep.subr.bf16.mxu0 0
      %677 = vmatpush1.bf16.msra.mxu0 %v570
      %678 = vmatprep.subr.bf16.mxu0 0
      %679 = vmatpush1.bf16.msra.mxu0 %v571
      %680 = vmatprep.subr.bf16.mxu0 0
      %681 = vmatpush1.bf16.msra.mxu0 %v572
      %682 = vmatprep.subr.bf16.mxu0 0
      %683 = vmatpush1.bf16.msra.mxu0 %v573
      %684 = vmatprep.subr.bf16.mxu0 0
      %685 = vmatpush1.bf16.msra.mxu0 %v574
      %686 = vmatprep.subr.bf16.mxu0 0
      %687 = vmatpush1.bf16.msra.mxu0 %v575
      %688 = vmatprep.subr.bf16.mxu0 0
      %689 = vmatpush1.bf16.msra.mxu0 %v576
      %690 = vmatprep.subr.bf16.mxu0 0
      %691 = vmatpush1.bf16.msra.mxu0 %v577
      %692 = vmatprep.subr.bf16.mxu0 0
      %693 = vmatpush1.bf16.msra.mxu0 %v578
      %694 = vmatprep.subr.bf16.mxu0 0
      %695 = vmatpush1.bf16.msra.mxu0 %v579
      %696 = vmatprep.subr.bf16.mxu0 0
      %697 = vmatpush1.bf16.msra.mxu0 %v580
      %698 = vmatprep.subr.bf16.mxu0 0
      %699 = vmatpush1.bf16.msra.mxu0 %v581
      %700 = vmatprep.subr.bf16.mxu0 0
      %701 = vmatpush1.bf16.msra.mxu0 %v582
      %702 = vmatprep.subr.bf16.mxu0 0
      %703 = vmatpush1.bf16.msra.mxu0 %v583
      %704 = vmatprep.subr.bf16.mxu0 0
      %705 = vmatpush1.bf16.msra.mxu0 %v584
      %706 = vmatprep.mubr.bf16.mxu0 %v304
      %707 = vmatmul.mubr.bf16.gmra.mrb[0].mxu0 %v303
      %v708 = vpop.f32.mrb[0].mxu0
      %v709 = vadd.f32 %v668, %v708
      %v710 = vpop.f32.mrb[0].mxu0
      %v711 = vpop.f32.mrb[0].mxu0
      %v712 = vadd.f32 %v671, %v711
      %v713 = vpop.f32.mrb[0].mxu0
      %714 = vdwg.mxu0
      %715 = vmatprep.subr.bf16.mxu0 0
      %716 = vmatpush1.bf16.msra.mxu0 %v585
      %717 = vmatprep.subr.bf16.mxu0 0
      %718 = vmatpush1.bf16.msra.mxu0 %v586
      %719 = vmatprep.subr.bf16.mxu0 0
      %720 = vmatpush1.bf16.msra.mxu0 %v587
      %721 = vmatprep.subr.bf16.mxu0 0
      %722 = vmatpush1.bf16.msra.mxu0 %v588
      %723 = vmatprep.subr.bf16.mxu0 0
      %724 = vmatpush1.bf16.msra.mxu0 %v589
      %725 = vmatprep.subr.bf16.mxu0 0
      %726 = vmatpush1.bf16.msra.mxu0 %v590
      %727 = vmatprep.subr.bf16.mxu0 0
      %728 = vmatpush1.bf16.msra.mxu0 %v591
      %729 = vmatprep.subr.bf16.mxu0 0
      %730 = vmatpush1.bf16.msra.mxu0 %v592
      %731 = vmatprep.subr.bf16.mxu0 0
      %732 = vmatpush1.bf16.msra.mxu0 0
      %733 = vmatprep.subr.bf16.mxu0 0
      %734 = vmatpush1.bf16.msra.mxu0 0
      %735 = vmatprep.subr.bf16.mxu0 0
      %736 = vmatpush1.bf16.msra.mxu0 0
      %737 = vmatprep.subr.bf16.mxu0 0
      %738 = vmatpush1.bf16.msra.mxu0 0
      %739 = vmatprep.subr.bf16.mxu0 0
      %740 = vmatpush1.bf16.msra.mxu0 0
      %741 = vmatprep.subr.bf16.mxu0 0
      %742 = vmatpush1.bf16.msra.mxu0 0
      %743 = vmatprep.subr.bf16.mxu0 0
      %744 = vmatpush1.bf16.msra.mxu0 0
      %745 = vmatprep.subr.bf16.mxu0 0
      %746 = vmatpush1.bf16.msra.mxu0 0
      %747 = vmatprep.mubr.bf16.mxu0 0
      %748 = vmatmul.mubr.bf16.gmra.mrb[0].mxu0 %v305
      %v749 = vpop.f32.mrb[0].mxu0
      %v750 = vadd.f32 %v709, %v749
      %v751 = vpop.f32.mrb[0].mxu0
      %v752 = vpop.f32.mrb[0].mxu0
      %v753 = vadd.f32 %v712, %v752
      %v754 = vpop.f32.mrb[0].mxu0
      %755 = vdwg.mxu0
      %v756 = vpack.c.bf16 %v753, %v750
      %v758 = vunpack.c.l.b16 %v756
      %v759 = vunpack.c.h.b16 %v756
      %v760 = vpack.c.b16 %v758, %v758
      %v761 = vpack.c.b16 %v759, %v759
      %764 = vst [vmem:[%s265] sm:$0xf] %v760
      %765 = vst [vmem:[%s265 + $0x4] sm:$0xf] %v761
      %v766 = vadd.f32 %v750, %v753
      %v767 = vrot.slane %v766, 4
      %v768 = vadd.f32 %v766, %v767
      %v769 = vrot.slane %v768, 2
      %v770 = vadd.f32 %v768, %v769
      %v771 = vrot.slane %v770, 1
      %v772 = vadd.f32 %v770, %v771
      %v773 = vmul.f32 %v750, %v750
      %v774 = vmul.f32 %v753, %v753
      %v775 = vadd.f32 %v773, %v774
      %v776 = vrot.slane %v775, 4
      %v777 = vadd.f32 %v775, %v776
      %v778 = vrot.slane %v777, 2
      %v779 = vadd.f32 %v777, %v778
      %v780 = vrot.slane %v779, 1
      %v781 = vadd.f32 %v779, %v780
      %v782 = vlaneseq
      %v783 = vshrl.u32 %v782, 7
      %vm784 = vcmp.eq.s32.totalorder %v783, 0
      %vm785 = vcmp.eq.s32.totalorder %v783, 1
      %v786 = vsel %vm785, %v781, 0.0
      %v787 = vsel %vm784, %v772, %v786
      %788 = vst [vmem:[%s273] sm:$0xff] %v787
      %s789 = smul.u32 2, %s20
      %p790 = scmp.lt.s32.totalorder %s789, 3
      %s791 = scalar_select %p790, %s789, 3
      %p792 = scmp.lt.s32.totalorder %s21, 0
      %s793 = scalar_select %p792, %s21, 0
      %s794 = sadd.s32 %s793, %s791
      %s795 = smul.addr %s794, 4
      %s796 = scalar_lea.vmem %s3, %s795
      %p797 = scmp.lt.s32.totalorder %s20, 1
      %s798 = scalar_select %p797, %s20, 1
      %p799 = scmp.lt.s32.totalorder %s21, 0
      %s800 = scalar_select %p799, %s21, 0
      %s801 = sadd.s32 %s800, %s798
      %s802 = smul.addr %s801, 8
      %s803 = scalar_lea.vmem %s4, %s802
      // Predicated region
      $region33: #{_lambda_.17} parent=31 // pred_check
        %p804 = pneg %p126
      $region34: #{_lambda_.17} parent=31 // pred_check_branch
        %806 = sbr.rel (%p804) target = $region36
      $region35: #{_lambda_.17} parent=31 // pred_region
        %s807 = smul.u32 2, %s20
      $region36: #{_lambda_.17} parent=31 // pred_fallthru
        _
      // Predicated region
      $region37: #{_lambda_.17} parent=31 // pred_check
        %p808 = pneg %p154
      $region38: #{_lambda_.17} parent=31 // pred_check_branch
        %810 = sbr.rel (%p808) target = $region40
      $region39: #{_lambda_.17} parent=31 // pred_region
        _
      $region40: #{_lambda_.17} parent=31 // pred_fallthru
        _
    $region32: #{_lambda_.17} parent=5 // pred_fallthru
      _
    %p811 = scmp.le.s32.totalorder 2, %s11
    // Predicated region
    $region41: #{_lambda_.17} parent=5 // pred_check
      %p812 = pneg %p811
    $region42: #{_lambda_.17} parent=5 // pred_check_branch
      %814 = sbr.rel (%p812) target = $region44
    $region43: #{_lambda_.17} parent=5 // pred_region
      %s815 = ssub.s32 %s11, 2
      // Predicated region
      $region45: #{_lambda_.17} parent=43 // pred_check
        %p816 = pneg %p132
      $region46: #{_lambda_.17} parent=43 // pred_check_branch
        %818 = sbr.rel (%p816) target = $region48
      $region47: #{_lambda_.17} parent=43 // pred_region
        %s819 = smul.u32 2, %s22
        %p820 = scmp.lt.s32.totalorder %s819, 3
        %s821 = scalar_select %p820, %s819, 3
        %p822 = scmp.lt.s32.totalorder %s23, 0
        %s823 = scalar_select %p822, %s23, 0
        %s824 = sadd.s32 %s823, %s821
        %s825 = smul.addr %s824, 4
        %s826 = scalar_lea.vmem %s3, %s825
      $region48: #{_lambda_.17} parent=43 // pred_fallthru
        _
      // Predicated region
      $region49: #{_lambda_.17} parent=43 // pred_check
        %p827 = pneg %p160
      $region50: #{_lambda_.17} parent=43 // pred_check_branch
        %829 = sbr.rel (%p827) target = $region52
      $region51: #{_lambda_.17} parent=43 // pred_region
        %p830 = scmp.lt.s32.totalorder %s22, 1
        %s831 = scalar_select %p830, %s22, 1
        %p832 = scmp.lt.s32.totalorder %s23, 0
        %s833 = scalar_select %p832, %s23, 0
        %s834 = sadd.s32 %s833, %s831
        %s835 = smul.addr %s834, 8
        %s836 = scalar_lea.vmem %s4, %s835
      $region52: #{_lambda_.17} parent=43 // pred_fallthru
        _
    $region44: #{_lambda_.17} parent=5 // pred_fallthru
      _
  $region6: #{_lambda_.17} parent=0 // loop_footer
    %s15 = sadd.s32 1, %s11
  $region7: #{_lambda_.17} parent=0 // loop_footer_branch
    %10 = sbr.rel target = $region3
  $region8: #{_lambda_.17} parent=0 // loop_exit
    _

// kernel: tile.78
$region0: #{tile.78}
  #allocation0 [shape = 's32[1]{0}', space=sflag, size = 0x4, scoped, tag = 'scoped memory for tile.78']
  %s0 = inlined_call_operand.vmem [shape: f32[8], index: 0, kind: input, shape index: {}]
  %s1 = inlined_call_operand.vmem [shape: f32[4,8], index: 1, kind: output, shape index: {}]
  // Predicated region
  $region2: #{tile.78} parent=0 // pred_check
    _
  $region3: #{tile.78} parent=0 // pred_check_branch
    %3 = sbr.rel (0) target = $region5
  $region4: #{tile.78} parent=0 // pred_region
    _
  $region5: #{tile.78} parent=0 // pred_fallthru
    _
  %v4 = vld [vmem:[%s0] ss:$0 sm:$0xff]
  %5 = vst [vmem:[%s1] sm:$0xf] %v4

// kernel: _lambda_.18
$region0: #{_lambda_.18}
  #allocation0 [shape = 'u32[]', space=smem, size = 0x4, offset = 0x4, fixed_abs, tag = 'smem constant byte address 0x4 - core index']
  #allocation1 [shape = 'u32[144,128]{1,0:T(1,128)}', space=vmem, size = 0x12000, scoped, tag = 'internal scratch']
  %s0 = inlined_call_operand.vmem [shape: bf16[128,384], index: 0, kind: input, shape index: {}]
  %s1 = inlined_call_operand.vmem [shape: bf16[384,128], index: 1, kind: input, shape index: {}]
  %s2 = inlined_call_operand.vmem [shape: f32[1,128], index: 2, kind: input, shape index: {}]
  %s3 = inlined_call_operand.vmem [shape: bf16[128,128], index: 3, kind: output, shape index: {0}]
  %s4 = inlined_call_operand.vmem [shape: f32[2,8,128], index: 4, kind: output, shape index: {1}]
  %5 = xla_tuple %s3, %s4
  %s6 = sld [smem:[#allocation0]]
  $region53: #{_lambda_.18} parent=0
    _
  %s8 = ssub.s32 1, %s6
  %s9 = scalar_select 0, %s8, %s6
  loop: start=0, step=1, limit=4
  $region2: #{_lambda_.18} parent=0 // loop_pre_header
    _
  $region3: #{_lambda_.18} parent=0 // loop_header
    %s11 = sphi 0, %s15
    %p12 = scmp.ge.s32.totalorder %s11, 4
    %s18 = sphi 0, %s30
    %s19 = sphi 0, %s26
    %s20 = sphi 0, %s18
    %s21 = sphi 0, %s19
    %s22 = sphi 0, %s20
    %s23 = sphi 0, %s21
    %s33 = sphi 0, %s35
    %s36 = sphi 0, %s33
    %s37 = sphi 0, %s36
    %s53 = sphi 0, %s37
    %s59 = sphi 0, %s61
    %s62 = sphi 0, %s59
    %s63 = sphi 0, %s62
    %s79 = sphi 0, %s63
    %s85 = sphi 0, %s87
    %s88 = sphi 0, %s85
    %s89 = sphi 0, %s88
    %s105 = sphi 0, %s89
    %s113 = sphi 0, %s115
    %s116 = sphi 0, %s113
    %s117 = sphi 0, %s116
    %s133 = sphi 0, %s117
    %s141 = sphi 0, %s143
    %s144 = sphi 0, %s141
    %s145 = sphi 0, %s144
    %s161 = sphi 0, %s145
  $region4: #{_lambda_.18} parent=0 // loop_header_branch
    %14 = sbr.rel (%p12) target = $region8
  $region5: #{_lambda_.18} parent=0 // loop_body
    %s16 = ssub.s32 %s11, 1
    %s17 = ssub.s32 %s11, 2
    %s24 = sadd.s32 1, %s19
    %p25 = scmp.ge.s32.totalorder %s24, 1
    %s26 = scalar_select %p25, 0, %s24
    %s27 = sadd.s32 1, %s18
    %s28 = scalar_select %p25, %s27, %s18
    %p29 = scmp.ge.s32.totalorder %s28, 2
    %s30 = scalar_select %p29, 0, %s28
    %s31 = ssub.s32 %s18, %s30
    %p32 = scmp.eq.s32.totalorder %s31, 0
    %s34 = sadd.s32 %s33, 1
    %s35 = scalar_select %p32, %s33, %s34
    %p38 = pneg %p32
    %p39 = scmp.eq.s32.totalorder %s11, 1
    %p40 = por %p38, %p39
    %p41 = scmp.ne.s32.totalorder %s33, %s36
    %p42 = scmp.eq.s32.totalorder %s11, 0
    %p43 = por %p41, %p42
    %p44 = scmp.ne.s32.totalorder %s33, %s36
    %p45 = scmp.eq.s32.totalorder %s16, 1
    %p46 = por %p44, %p45
    %p47 = scmp.ne.s32.totalorder %s36, %s37
    %p48 = scmp.eq.s32.totalorder %s16, 0
    %p49 = por %p47, %p48
    %p50 = scmp.ne.s32.totalorder %s36, %s37
    %p51 = scmp.eq.s32.totalorder %s17, 1
    %p52 = por %p50, %p51
    %p54 = scmp.ne.s32.totalorder %s37, %s53
    %p55 = scmp.eq.s32.totalorder %s17, 0
    %p56 = por %p54, %p55
    %s57 = ssub.s32 %s19, %s26
    %p58 = scmp.eq.s32.totalorder %s57, 0
    %s60 = sadd.s32 %s59, 1
    %s61 = scalar_select %p58, %s59, %s60
    %p64 = pneg %p58
    %p65 = scmp.eq.s32.totalorder %s11, 1
    %p66 = por %p64, %p65
    %p67 = scmp.ne.s32.totalorder %s59, %s62
    %p68 = scmp.eq.s32.totalorder %s11, 0
    %p69 = por %p67, %p68
    %p70 = scmp.ne.s32.totalorder %s59, %s62
    %p71 = scmp.eq.s32.totalorder %s16, 1
    %p72 = por %p70, %p71
    %p73 = scmp.ne.s32.totalorder %s62, %s63
    %p74 = scmp.eq.s32.totalorder %s16, 0
    %p75 = por %p73, %p74
    %p76 = scmp.ne.s32.totalorder %s62, %s63
    %p77 = scmp.eq.s32.totalorder %s17, 1
    %p78 = por %p76, %p77
    %p80 = scmp.ne.s32.totalorder %s63, %s79
    %p81 = scmp.eq.s32.totalorder %s17, 0
    %p82 = por %p80, %p81
    %s83 = ssub.s32 %s19, %s26
    %p84 = scmp.eq.s32.totalorder %s83, 0
    %s86 = sadd.s32 %s85, 1
    %s87 = scalar_select %p84, %s85, %s86
    %p90 = pneg %p84
    %p91 = scmp.eq.s32.totalorder %s11, 1
    %p92 = por %p90, %p91
    %p93 = scmp.ne.s32.totalorder %s85, %s88
    %p94 = scmp.eq.s32.totalorder %s11, 0
    %p95 = por %p93, %p94
    %p96 = scmp.ne.s32.totalorder %s85, %s88
    %p97 = scmp.eq.s32.totalorder %s16, 1
    %p98 = por %p96, %p97
    %p99 = scmp.ne.s32.totalorder %s88, %s89
    %p100 = scmp.eq.s32.totalorder %s16, 0
    %p101 = por %p99, %p100
    %p102 = scmp.ne.s32.totalorder %s88, %s89
    %p103 = scmp.eq.s32.totalorder %s17, 1
    %p104 = por %p102, %p103
    %p106 = scmp.ne.s32.totalorder %s89, %s105
    %p107 = scmp.eq.s32.totalorder %s17, 0
    %p108 = por %p106, %p107
    %s109 = ssub.s32 %s18, %s30
    %s110 = ssub.s32 %s19, %s26
    %s111 = sor.u32 %s109, %s110
    %p112 = scmp.eq.s32.totalorder %s111, 0
    %s114 = sadd.s32 %s113, 1
    %s115 = scalar_select %p112, %s113, %s114
    %p118 = pneg %p112
    %p119 = scmp.eq.s32.totalorder %s11, 1
    %p120 = por %p118, %p119
    %p121 = scmp.ne.s32.totalorder %s113, %s116
    %p122 = scmp.eq.s32.totalorder %s11, 0
    %p123 = por %p121, %p122
    %p124 = scmp.ne.s32.totalorder %s113, %s116
    %p125 = scmp.eq.s32.totalorder %s16, 1
    %p126 = por %p124, %p125
    %p127 = scmp.ne.s32.totalorder %s116, %s117
    %p128 = scmp.eq.s32.totalorder %s16, 0
    %p129 = por %p127, %p128
    %p130 = scmp.ne.s32.totalorder %s116, %s117
    %p131 = scmp.eq.s32.totalorder %s17, 1
    %p132 = por %p130, %p131
    %p134 = scmp.ne.s32.totalorder %s117, %s133
    %p135 = scmp.eq.s32.totalorder %s17, 0
    %p136 = por %p134, %p135
    %s137 = ssub.s32 %s18, %s30
    %s138 = ssub.s32 %s19, %s26
    %s139 = sor.u32 %s137, %s138
    %p140 = scmp.eq.s32.totalorder %s139, 0
    %s142 = sadd.s32 %s141, 1
    %s143 = scalar_select %p140, %s141, %s142
    %p146 = pneg %p140
    %p147 = scmp.eq.s32.totalorder %s11, 1
    %p148 = por %p146, %p147
    %p149 = scmp.ne.s32.totalorder %s141, %s144
    %p150 = scmp.eq.s32.totalorder %s11, 0
    %p151 = por %p149, %p150
    %p152 = scmp.ne.s32.totalorder %s141, %s144
    %p153 = scmp.eq.s32.totalorder %s16, 1
    %p154 = por %p152, %p153
    %p155 = scmp.ne.s32.totalorder %s144, %s145
    %p156 = scmp.eq.s32.totalorder %s16, 0
    %p157 = por %p155, %p156
    %p158 = scmp.ne.s32.totalorder %s144, %s145
    %p159 = scmp.eq.s32.totalorder %s17, 1
    %p160 = por %p158, %p159
    %p162 = scmp.ne.s32.totalorder %s145, %s161
    %p163 = scmp.eq.s32.totalorder %s17, 0
    %p164 = por %p162, %p163
    %p165 = scmp.le.s32.totalorder 1, %s11
    %p166 = scmp.lt.s32.totalorder %s11, 3
    %p167 = pnand %p165, %p166
    %p168 = pneg %p167
    // Predicated region
    $region9: #{_lambda_.18} parent=5 // pred_check
      _
    $region10: #{_lambda_.18} parent=5 // pred_check_branch
      %170 = sbr.rel (%p167) target = $region12
    $region11: #{_lambda_.18} parent=5 // pred_region
      %s171 = ssub.s32 %s11, 1
      // Predicated region
      $region13: #{_lambda_.18} parent=11 // pred_check
        %p172 = pneg %p75
      $region14: #{_lambda_.18} parent=11 // pred_check_branch
        %174 = sbr.rel (%p172) target = $region16
      $region15: #{_lambda_.18} parent=11 // pred_region
        %p175 = scmp.lt.s32.totalorder %s21, 0
        %s176 = scalar_select %p175, %s21, 0
        %s177 = smul.addr %s176, 4
        %s178 = scalar_lea.vmem %s1, %s177
      $region16: #{_lambda_.18} parent=11 // pred_fallthru
        _
      // Predicated region
      $region17: #{_lambda_.18} parent=11 // pred_check
        %p179 = pneg %p101
      $region18: #{_lambda_.18} parent=11 // pred_check_branch
        %181 = sbr.rel (%p179) target = $region20
      $region19: #{_lambda_.18} parent=11 // pred_region
        %p182 = scmp.lt.s32.totalorder %s21, 0
        %s183 = scalar_select %p182, %s21, 0
        %s184 = scalar_lea.vmem %s2, %s183
      $region20: #{_lambda_.18} parent=11 // pred_fallthru
        _
    $region12: #{_lambda_.18} parent=5 // pred_fallthru
      _
    %p185 = scmp.lt.s32.totalorder %s11, 2
    // Predicated region
    $region21: #{_lambda_.18} parent=5 // pred_check
      %p186 = pneg %p185
    $region22: #{_lambda_.18} parent=5 // pred_check_branch
      %188 = sbr.rel (%p186) target = $region24
    $region23: #{_lambda_.18} parent=5 // pred_region
      // Predicated region
      $region25: #{_lambda_.18} parent=23 // pred_check
        %p189 = pneg %p43
      $region26: #{_lambda_.18} parent=23 // pred_check_branch
        %191 = sbr.rel (%p189) target = $region28
      $region27: #{_lambda_.18} parent=23 // pred_region
        %s192 = smul.u32 8, %s18
        %p193 = scmp.lt.s32.totalorder %s192, 15
        %s194 = scalar_select %p193, %s192, 15
        %s195 = smul.addr %s194, 3
        %s196 = smul.addr %s195, 4
        %s197 = scalar_lea.vmem %s0, %s196
        %s198 = smul.u32 8, %s18
      $region28: #{_lambda_.18} parent=23 // pred_fallthru
        _
    $region24: #{_lambda_.18} parent=5 // pred_fallthru
      _
    %p199 = scmp.le.s32.totalorder 1, %s11
    %p200 = scmp.lt.s32.totalorder %s11, 3
    %p201 = pnand %p199, %p200
    %p202 = pneg %p201
    // Predicated region
    $region29: #{_lambda_.18} parent=5 // pred_check
      _
    $region30: #{_lambda_.18} parent=5 // pred_check_branch
      %204 = sbr.rel (%p201) target = $region32
    $region31: #{_lambda_.18} parent=5 // pred_region
      %s205 = ssub.s32 %s11, 1
      %s206 = smul.u32 8, %s20
      %p207 = scmp.lt.s32.totalorder %s206, 15
      %s208 = scalar_select %p207, %s206, 15
      %s209 = smul.addr %s208, 3
      %s210 = smul.addr %s209, 4
      %s211 = scalar_lea.vmem %s0, %s210
      %p212 = pneg %p49
      %p213 = pneg %p46
      %p214 = scmp.lt.s32.totalorder %s21, 0
      %s215 = scalar_select %p214, %s21, 0
      %s216 = smul.addr %s215, 4
      %s217 = scalar_lea.vmem %s1, %s216
      %p218 = pneg %p75
      %p219 = pneg %p72
      %p220 = scmp.lt.s32.totalorder %s21, 0
      %s221 = scalar_select %p220, %s21, 0
      %s222 = scalar_lea.vmem %s2, %s221
      %p223 = pneg %p101
      %p224 = pneg %p98
      %p225 = pneg %p129
      %p226 = pneg %p126
      %s227 = smul.u32 8, %s20
      %p228 = scmp.lt.s32.totalorder %s227, 15
      %s229 = scalar_select %p228, %s227, 15
      %p230 = scmp.lt.s32.totalorder %s21, 0
      %s231 = scalar_select %p230, %s21, 0
      %s232 = sadd.s32 %s231, %s229
      %s233 = smul.addr %s232, 4
      %s234 = scalar_lea.vmem %s3, %s233
      %p235 = pneg %p157
      %p236 = pneg %p154
      %p237 = scmp.lt.s32.totalorder %s20, 1
      %s238 = scalar_select %p237, %s20, 1
      %p239 = scmp.lt.s32.totalorder %s21, 0
      %s240 = scalar_select %p239, %s21, 0
      %s241 = sadd.s32 %s240, %s238
      %s242 = smul.addr %s241, 8
      %s243 = scalar_lea.vmem %s4, %s242
      %s244 = smul.u32 8, %s20
      %p245 = scmp.lt.s32.totalorder %s244, 15
      %s246 = scalar_select %p245, %s244, 15
      %s247 = smul.addr %s246, 3
      %s248 = smul.addr %s247, 4
      %s249 = scalar_lea.vmem %s0, %s248
      %s250 = smul.u32 8, %s20
      %p251 = scmp.lt.s32.totalorder %s21, 0
      %s252 = scalar_select %p251, %s21, 0
      %s253 = smul.addr %s252, 4
      %s254 = scalar_lea.vmem %s1, %s253
      %p255 = scmp.lt.s32.totalorder %s21, 0
      %s256 = scalar_select %p255, %s21, 0
      %s257 = scalar_lea.vmem %s2, %s256
      %s258 = smul.u32 8, %s20
      %p259 = scmp.lt.s32.totalorder %s258, 15
      %s260 = scalar_select %p259, %s258, 15
      %p261 = scmp.lt.s32.totalorder %s21, 0
      %s262 = scalar_select %p261, %s21, 0
      %s263 = sadd.s32 %s262, %s260
      %s264 = smul.addr %s263, 4
      %s265 = scalar_lea.vmem %s3, %s264
      %s266 = smul.u32 8, %s20
      %p267 = scmp.lt.s32.totalorder %s20, 1
      %s268 = scalar_select %p267, %s20, 1
      %p269 = scmp.lt.s32.totalorder %s21, 0
      %s270 = scalar_select %p269, %s21, 0
      %s271 = sadd.s32 %s270, %s268
      %s272 = smul.addr %s271, 8
      %s273 = scalar_lea.vmem %s4, %s272
      %v275 = vld [vmem:[%s249] sm:$0xff]
      %v276 = vld [vmem:[%s249 + $0x8] sm:$0xf]
      %v277 = vld [vmem:[%s249 + $0xc] sm:$0xff]
      %v278 = vld [vmem:[%s249 + $0x14] sm:$0xf]
      %v279 = vld [vmem:[%s249 + $0x18] sm:$0xff]
      %v280 = vld [vmem:[%s249 + $0x20] sm:$0xf]
      %v281 = vld [vmem:[%s249 + $0x24] sm:$0xff]
      %v282 = vld [vmem:[%s249 + $0x2c] sm:$0xf]
      %v283 = vld [vmem:[%s249 + $0x30] sm:$0xff]
      %v284 = vld [vmem:[%s249 + $0x38] sm:$0xf]
      %v285 = vld [vmem:[%s249 + $0x3c] sm:$0xff]
      %v286 = vld [vmem:[%s249 + $0x44] sm:$0xf]
      %v287 = vld [vmem:[%s249 + $0x48] sm:$0xff]
      %v288 = vld [vmem:[%s249 + $0x50] sm:$0xf]
      %v289 = vld [vmem:[%s249 + $0x54] sm:$0xff]
      %v290 = vld [vmem:[%s249 + $0x5c] sm:$0xf]
      %v291 = vunpack.c.l.bf16 %v275
      %v292 = vunpack.c.h.bf16 %v275
      %v293 = vunpack.c.l.bf16 %v276
      %v294 = vunpack.c.l.bf16 %v277
      %v295 = vunpack.c.h.bf16 %v277
      %v296 = vunpack.c.l.bf16 %v278
      %v297 = vunpack.c.l.bf16 %v279
      %v298 = vunpack.c.h.bf16 %v279
      %v299 = vunpack.c.l.bf16 %v280
      %v300 = vunpack.c.l.bf16 %v281
      %v301 = vunpack.c.h.bf16 %v281
      %v302 = vunpack.c.l.bf16 %v282
      %v303 = vunpack.c.l.bf16 %v283
      %v304 = vunpack.c.h.bf16 %v283
      %v305 = vunpack.c.l.bf16 %v284
      %v306 = vunpack.c.l.bf16 %v285
      %v307 = vunpack.c.h.bf16 %v285
      %v308 = vunpack.c.l.bf16 %v286
      %v309 = vunpack.c.l.bf16 %v287
      %v310 = vunpack.c.h.bf16 %v287
      %v311 = vunpack.c.l.bf16 %v288
      %v312 = vunpack.c.l.bf16 %v289
      %v313 = vunpack.c.h.bf16 %v289
      %v314 = vunpack.c.l.bf16 %v290
      %v315 = vmax.f32 %v291, 0.0
      %v316 = vmax.f32 %v292, 0.0
      %v317 = vmax.f32 %v293, 0.0
      %v318 = vmax.f32 %v294, 0.0
      %v319 = vmax.f32 %v295, 0.0
      %v320 = vmax.f32 %v296, 0.0
      %v321 = vmax.f32 %v297, 0.0
      %v322 = vmax.f32 %v298, 0.0
      %v323 = vmax.f32 %v299, 0.0
      %v324 = vmax.f32 %v300, 0.0
      %v325 = vmax.f32 %v301, 0.0
      %v326 = vmax.f32 %v302, 0.0
      %v327 = vmax.f32 %v303, 0.0
      %v328 = vmax.f32 %v304, 0.0
      %v329 = vmax.f32 %v305, 0.0
      %v330 = vmax.f32 %v306, 0.0
      %v331 = vmax.f32 %v307, 0.0
      %v332 = vmax.f32 %v308, 0.0
      %v333 = vmax.f32 %v309, 0.0
      %v334 = vmax.f32 %v310, 0.0
      %v335 = vmax.f32 %v311, 0.0
      %v336 = vmax.f32 %v312, 0.0
      %v337 = vmax.f32 %v313, 0.0
      %v338 = vmax.f32 %v314, 0.0
      %v339 = vpack.c.bf16 %v318, %v315
      %v340 = vpack.c.bf16 %v319, %v316
      %v341 = vpack.c.bf16 %v320, %v317
      %v342 = vpack.c.bf16 %v324, %v321
      %v343 = vpack.c.bf16 %v325, %v322
      %v344 = vpack.c.bf16 %v326, %v323
      %v345 = vpack.c.bf16 %v330, %v327
      %v346 = vpack.c.bf16 %v331, %v328
      %v347 = vpack.c.bf16 %v332, %v329
      %v348 = vpack.c.bf16 %v336, %v333
      %v349 = vpack.c.bf16 %v337, %v334
      %v350 = vpack.c.bf16 %v338, %v335
      %v351 = vld [vmem:[%s254] sm:$0xf]
      %v352 = vld [vmem:[%s254 + $0x4] sm:$0xf]
      %v353 = vld [vmem:[%s254 + $0x8] sm:$0xf]
      %v354 = vld [vmem:[%s254 + $0xc] sm:$0xf]
      %v355 = vld [vmem:[%s254 + $0x10] sm:$0xf]
      %v356 = vld [vmem:[%s254 + $0x14] sm:$0xf]
      %v357 = vld [vmem:[%s254 + $0x18] sm:$0xf]
      %v358 = vld [vmem:[%s254 + $0x1c] sm:$0xf]
      %v359 = vld [vmem:[%s254 + $0x20] sm:$0xf]
      %v360 = vld [vmem:[%s254 + $0x24] sm:$0xf]
      %v361 = vld [vmem:[%s254 + $0x28] sm:$0xf]
      %v362 = vld [vmem:[%s254 + $0x2c] sm:$0xf]
      %v363 = vld [vmem:[%s254 + $0x30] sm:$0xf]
      %v364 = vld [vmem:[%s254 + $0x34] sm:$0xf]
      %v365 = vld [vmem:[%s254 + $0x38] sm:$0xf]
      %v366 = vld [vmem:[%s254 + $0x3c] sm:$0xf]
      %v367 = vld [vmem:[%s254 + $0x40] sm:$0xf]
      %v368 = vld [vmem:[%s254 + $0x44] sm:$0xf]
      %v369 = vld [vmem:[%s254 + $0x48] sm:$0xf]
      %v370 = vld [vmem:[%s254 + $0x4c] sm:$0xf]
      %v371 = vld [vmem:[%s254 + $0x50] sm:$0xf]
      %v372 = vld [vmem:[%s254 + $0x54] sm:$0xf]
      %v373 = vld [vmem:[%s254 + $0x58] sm:$0xf]
      %v374 = vld [vmem:[%s254 + $0x5c] sm:$0xf]
      %v375 = vld [vmem:[%s254 + $0x60] sm:$0xf]
      %v376 = vld [vmem:[%s254 + $0x64] sm:$0xf]
      %v377 = vld [vmem:[%s254 + $0x68] sm:$0xf]
      %v378 = vld [vmem:[%s254 + $0x6c] sm:$0xf]
      %v379 = vld [vmem:[%s254 + $0x70] sm:$0xf]
      %v380 = vld [vmem:[%s254 + $0x74] sm:$0xf]
      %v381 = vld [vmem:[%s254 + $0x78] sm:$0xf]
      %v382 = vld [vmem:[%s254 + $0x7c] sm:$0xf]
      %v383 = vld [vmem:[%s254 + $0x80] sm:$0xf]
      %v384 = vld [vmem:[%s254 + $0x84] sm:$0xf]
      %v385 = vld [vmem:[%s254 + $0x88] sm:$0xf]
      %v386 = vld [vmem:[%s254 + $0x8c] sm:$0xf]
      %v387 = vld [vmem:[%s254 + $0x90] sm:$0xf]
      %v388 = vld [vmem:[%s254 + $0x94] sm:$0xf]
      %v389 = vld [vmem:[%s254 + $0x98] sm:$0xf]
      %v390 = vld [vmem:[%s254 + $0x9c] sm:$0xf]
      %v391 = vld [vmem:[%s254 + $0xa0] sm:$0xf]
      %v392 = vld [vmem:[%s254 + $0xa4] sm:$0xf]
      %v393 = vld [vmem:[%s254 + $0xa8] sm:$0xf]
      %v394 = vld [vmem:[%s254 + $0xac] sm:$0xf]
      %v395 = vld [vmem:[%s254 + $0xb0] sm:$0xf]
      %v396 = vld [vmem:[%s254 + $0xb4] sm:$0xf]
      %v397 = vld [vmem:[%s254 + $0xb8] sm:$0xf]
      %v398 = vld [vmem:[%s254 + $0xbc] sm:$0xf]
      %v399 = vld [vmem:[%s257] sm:$0x1]
      %v401 = vlaneseq
      %v402 = vshrl.u32 %v401, 7
      %v403 = vsub.s32 0, %v402
      %v404 = vrot.slane %v399, %v403
      %v454 = vunpack.c.l.b16 %v351
      %v455 = vunpack.c.l.b16 %v352
      %v456 = vunpack.c.l.b16 %v353
      %v457 = vunpack.c.l.b16 %v354
      %v458 = vunpack.c.l.b16 %v355
      %v459 = vunpack.c.l.b16 %v356
      %v460 = vunpack.c.l.b16 %v357
      %v461 = vunpack.c.l.b16 %v358
      %v462 = vunpack.c.l.b16 %v359
      %v463 = vunpack.c.l.b16 %v360
      %v464 = vunpack.c.l.b16 %v361
      %v465 = vunpack.c.l.b16 %v362
      %v466 = vunpack.c.l.b16 %v363
      %v467 = vunpack.c.l.b16 %v364
      %v468 = vunpack.c.l.b16 %v365
      %v469 = vunpack.c.l.b16 %v366
      %v470 = vunpack.c.l.b16 %v367
      %v471 = vunpack.c.l.b16 %v368
      %v472 = vunpack.c.l.b16 %v369
      %v473 = vunpack.c.l.b16 %v370
      %v474 = vunpack.c.l.b16 %v371
      %v475 = vunpack.c.l.b16 %v372
      %v476 = vunpack.c.l.b16 %v373
      %v477 = vunpack.c.l.b16 %v374
      %v478 = vunpack.c.l.b16 %v375
      %v479 = vunpack.c.l.b16 %v376
      %v480 = vunpack.c.l.b16 %v377
      %v481 = vunpack.c.l.b16 %v378
      %v482 = vunpack.c.l.b16 %v379
      %v483 = vunpack.c.l.b16 %v380
      %v484 = vunpack.c.l.b16 %v381
      %v485 = vunpack.c.l.b16 %v382
      %v486 = vunpack.c.l.b16 %v383
      %v487 = vunpack.c.l.b16 %v384
      %v488 = vunpack.c.l.b16 %v385
      %v489 = vunpack.c.l.b16 %v386
      %v490 = vunpack.c.l.b16 %v387
      %v491 = vunpack.c.l.b16 %v388
      %v492 = vunpack.c.l.b16 %v389
      %v493 = vunpack.c.l.b16 %v390
      %v494 = vunpack.c.l.b16 %v391
      %v495 = vunpack.c.l.b16 %v392
      %v496 = vunpack.c.l.b16 %v393
      %v497 = vunpack.c.l.b16 %v394
      %v498 = vunpack.c.l.b16 %v395
      %v499 = vunpack.c.l.b16 %v396
      %v500 = vunpack.c.l.b16 %v397
      %v501 = vunpack.c.l.b16 %v398
      %v502 = vpack.c.b16 %v455, %v454
      %v503 = vpack.c.b16 %v457, %v456
      %v504 = vpack.c.b16 %v459, %v458
      %v505 = vpack.c.b16 %v461, %v460
      %v506 = vpack.c.b16 %v463, %v462
      %v507 = vpack.c.b16 %v465, %v464
      %v508 = vpack.c.b16 %v467, %v466
      %v509 = vpack.c.b16 %v469, %v468
      %v510 = vpack.c.b16 %v471, %v470
      %v511 = vpack.c.b16 %v473, %v472
      %v512 = vpack.c.b16 %v475, %v474
      %v513 = vpack.c.b16 %v477, %v476
      %v514 = vpack.c.b16 %v479, %v478
      %v515 = vpack.c.b16 %v481, %v480
      %v516 = vpack.c.b16 %v483, %v482
      %v517 = vpack.c.b16 %v485, %v484
      %v518 = vpack.c.b16 %v487, %v486
      %v519 = vpack.c.b16 %v489, %v488
      %v520 = vpack.c.b16 %v491, %v490
      %v521 = vpack.c.b16 %v493, %v492
      %v522 = vpack.c.b16 %v495, %v494
      %v523 = vpack.c.b16 %v497, %v496
      %v524 = vpack.c.b16 %v499, %v498
      %v525 = vpack.c.b16 %v501, %v500
      %550 = vmatprep.subr.bf16.mxu0 0
      %551 = vmatpush1.bf16.msra.mxu0 %v502
      %552 = vmatprep.subr.bf16.mxu0 0
      %553 = vmatpush1.bf16.msra.mxu0 %v503
      %554 = vmatprep.subr.bf16.mxu0 0
      %555 = vmatpush1.bf16.msra.mxu0 %v504
      %556 = vmatprep.subr.bf16.mxu0 0
      %557 = vmatpush1.bf16.msra.mxu0 %v505
      %558 = vmatprep.subr.bf16.mxu0 0
      %559 = vmatpush1.bf16.msra.mxu0 %v506
      %560 = vmatprep.subr.bf16.mxu0 0
      %561 = vmatpush1.bf16.msra.mxu0 %v507
      %562 = vmatprep.subr.bf16.mxu0 0
      %563 = vmatpush1.bf16.msra.mxu0 %v508
      %564 = vmatprep.subr.bf16.mxu0 0
      %565 = vmatpush1.bf16.msra.mxu0 %v509
      %566 = vmatprep.subr.bf16.mxu0 0
      %567 = vmatpush1.bf16.msra.mxu0 %v510
      %568 = vmatprep.subr.bf16.mxu0 0
      %569 = vmatpush1.bf16.msra.mxu0 %v511
      %570 = vmatprep.subr.bf16.mxu0 0
      %571 = vmatpush1.bf16.msra.mxu0 %v512
      %572 = vmatprep.subr.bf16.mxu0 0
      %573 = vmatpush1.bf16.msra.mxu0 %v513
      %574 = vmatprep.subr.bf16.mxu0 0
      %575 = vmatpush1.bf16.msra.mxu0 %v514
      %576 = vmatprep.subr.bf16.mxu0 0
      %577 = vmatpush1.bf16.msra.mxu0 %v515
      %578 = vmatprep.subr.bf16.mxu0 0
      %579 = vmatpush1.bf16.msra.mxu0 %v516
      %580 = vmatprep.subr.bf16.mxu0 0
      %581 = vmatpush1.bf16.msra.mxu0 %v517
      %582 = vmatprep.mubr.bf16.mxu0 %v340
      %583 = vmatmul.mubr.bf16.gmra.mrb[0].mxu0 %v339
      %v584 = vpop.f32.mrb[0].mxu0
      %v585 = vadd.f32 %v404, %v584
      %v586 = vpop.f32.mrb[0].mxu0
      %v587 = vpop.f32.mrb[0].mxu0
      %v588 = vadd.f32 %v404, %v587
      %v589 = vpop.f32.mrb[0].mxu0
      %590 = vmatprep.mubr.bf16.mxu0 %v343
      %591 = vmatmul.mubr.bf16.gmra.mrb[0].mxu0 %v342
      %v592 = vpop.f32.mrb[0].mxu0
      %v593 = vadd.f32 %v404, %v592
      %v594 = vpop.f32.mrb[0].mxu0
      %v595 = vpop.f32.mrb[0].mxu0
      %v596 = vadd.f32 %v404, %v595
      %v597 = vpop.f32.mrb[0].mxu0
      %598 = vmatprep.mubr.bf16.mxu0 %v346
      %599 = vmatmul.mubr.bf16.gmra.mrb[0].mxu0 %v345
      %v600 = vpop.f32.mrb[0].mxu0
      %v601 = vadd.f32 %v404, %v600
      %v602 = vpop.f32.mrb[0].mxu0
      %v603 = vpop.f32.mrb[0].mxu0
      %v604 = vadd.f32 %v404, %v603
      %v605 = vpop.f32.mrb[0].mxu0
      %606 = vmatprep.mubr.bf16.mxu0 %v349
      %607 = vmatmul.mubr.bf16.gmra.mrb[0].mxu0 %v348
      %v608 = vpop.f32.mrb[0].mxu0
      %v609 = vadd.f32 %v404, %v608
      %v610 = vpop.f32.mrb[0].mxu0
      %v611 = vpop.f32.mrb[0].mxu0
      %v612 = vadd.f32 %v404, %v611
      %v613 = vpop.f32.mrb[0].mxu0
      %614 = vdwg.mxu0
      %615 = vmatprep.subr.bf16.mxu0 0
      %616 = vmatpush1.bf16.msra.mxu0 %v518
      %617 = vmatprep.subr.bf16.mxu0 0
      %618 = vmatpush1.bf16.msra.mxu0 %v519
      %619 = vmatprep.subr.bf16.mxu0 0
      %620 = vmatpush1.bf16.msra.mxu0 %v520
      %621 = vmatprep.subr.bf16.mxu0 0
      %622 = vmatpush1.bf16.msra.mxu0 %v521
      %623 = vmatprep.subr.bf16.mxu0 0
      %624 = vmatpush1.bf16.msra.mxu0 %v522
      %625 = vmatprep.subr.bf16.mxu0 0
      %626 = vmatpush1.bf16.msra.mxu0 %v523
      %627 = vmatprep.subr.bf16.mxu0 0
      %628 = vmatpush1.bf16.msra.mxu0 %v524
      %629 = vmatprep.subr.bf16.mxu0 0
      %630 = vmatpush1.bf16.msra.mxu0 %v525
      %631 = vmatprep.subr.bf16.mxu0 0
      %632 = vmatpush1.bf16.msra.mxu0 0
      %633 = vmatprep.subr.bf16.mxu0 0
      %634 = vmatpush1.bf16.msra.mxu0 0
      %635 = vmatprep.subr.bf16.mxu0 0
      %636 = vmatpush1.bf16.msra.mxu0 0
      %637 = vmatprep.subr.bf16.mxu0 0
      %638 = vmatpush1.bf16.msra.mxu0 0
      %639 = vmatprep.subr.bf16.mxu0 0
      %640 = vmatpush1.bf16.msra.mxu0 0
      %641 = vmatprep.subr.bf16.mxu0 0
      %642 = vmatpush1.bf16.msra.mxu0 0
      %643 = vmatprep.subr.bf16.mxu0 0
      %644 = vmatpush1.bf16.msra.mxu0 0
      %645 = vmatprep.subr.bf16.mxu0 0
      %646 = vmatpush1.bf16.msra.mxu0 0
      %647 = vmatprep.mubr.bf16.mxu0 0
      %648 = vmatmul.mubr.bf16.gmra.mrb[0].mxu0 %v341
      %v649 = vpop.f32.mrb[0].mxu0
      %v650 = vadd.f32 %v585, %v649
      %v651 = vpop.f32.mrb[0].mxu0
      %v652 = vpop.f32.mrb[0].mxu0
      %v653 = vadd.f32 %v588, %v652
      %v654 = vpop.f32.mrb[0].mxu0
      %655 = vmatprep.mubr.bf16.mxu0 0
      %656 = vmatmul.mubr.bf16.gmra.mrb[0].mxu0 %v344
      %v657 = vpop.f32.mrb[0].mxu0
      %v658 = vadd.f32 %v593, %v657
      %v659 = vpop.f32.mrb[0].mxu0
      %v660 = vpop.f32.mrb[0].mxu0
      %v661 = vadd.f32 %v596, %v660
      %v662 = vpop.f32.mrb[0].mxu0
      %663 = vmatprep.mubr.bf16.mxu0 0
      %664 = vmatmul.mubr.bf16.gmra.mrb[0].mxu0 %v347
      %v665 = vpop.f32.mrb[0].mxu0
      %v666 = vadd.f32 %v601, %v665
      %v667 = vpop.f32.mrb[0].mxu0
      %v668 = vpop.f32.mrb[0].mxu0
      %v669 = vadd.f32 %v604, %v668
      %v670 = vpop.f32.mrb[0].mxu0
      %671 = vmatprep.mubr.bf16.mxu0 0
      %672 = vmatmul.mubr.bf16.gmra.mrb[0].mxu0 %v350
      %v673 = vpop.f32.mrb[0].mxu0
      %v674 = vadd.f32 %v609, %v673
      %v675 = vpop.f32.mrb[0].mxu0
      %v676 = vpop.f32.mrb[0].mxu0
      %v677 = vadd.f32 %v612, %v676
      %v678 = vpop.f32.mrb[0].mxu0
      %679 = vdwg.mxu0
      %v680 = vpack.c.bf16 %v653, %v650
      %v681 = vpack.c.bf16 %v661, %v658
      %v682 = vpack.c.bf16 %v669, %v666
      %v683 = vpack.c.bf16 %v677, %v674
      %v688 = vunpack.c.l.b16 %v680
      %v689 = vunpack.c.h.b16 %v680
      %v690 = vunpack.c.l.b16 %v681
      %v691 = vunpack.c.h.b16 %v681
      %v692 = vunpack.c.l.b16 %v682
      %v693 = vunpack.c.h.b16 %v682
      %v694 = vunpack.c.l.b16 %v683
      %v695 = vunpack.c.h.b16 %v683
      %v696 = vpack.c.b16 %v688, %v688
      %v697 = vpack.c.b16 %v689, %v689
      %v698 = vpack.c.b16 %v690, %v690
      %v699 = vpack.c.b16 %v691, %v691
      %v700 = vpack.c.b16 %v692, %v692
      %v701 = vpack.c.b16 %v693, %v693
      %v702 = vpack.c.b16 %v694, %v694
      %v703 = vpack.c.b16 %v695, %v695
      %712 = vst [vmem:[%s265] sm:$0xf] %v696
      %713 = vst [vmem:[%s265 + $0x4] sm:$0xf] %v697
      %714 = vst [vmem:[%s265 + $0x8] sm:$0xf] %v698
      %715 = vst [vmem:[%s265 + $0xc] sm:$0xf] %v699
      %716 = vst [vmem:[%s265 + $0x10] sm:$0xf] %v700
      %717 = vst [vmem:[%s265 + $0x14] sm:$0xf] %v701
      %718 = vst [vmem:[%s265 + $0x18] sm:$0xf] %v702
      %719 = vst [vmem:[%s265 + $0x1c] sm:$0xf] %v703
      %v720 = vadd.f32 %v650, %v653
      %v721 = vadd.f32 %v720, %v658
      %v722 = vadd.f32 %v721, %v661
      %v723 = vadd.f32 %v722, %v666
      %v724 = vadd.f32 %v723, %v669
      %v725 = vadd.f32 %v724, %v674
      %v726 = vadd.f32 %v725, %v677
      %v727 = vrot.slane %v726, 4
      %v728 = vadd.f32 %v726, %v727
      %v729 = vrot.slane %v728, 2
      %v730 = vadd.f32 %v728, %v729
      %v731 = vrot.slane %v730, 1
      %v732 = vadd.f32 %v730, %v731
      %v733 = vmul.f32 %v650, %v650
      %v734 = vmul.f32 %v653, %v653
      %v735 = vmul.f32 %v658, %v658
      %v736 = vmul.f32 %v661, %v661
      %v737 = vmul.f32 %v666, %v666
      %v738 = vmul.f32 %v669, %v669
      %v739 = vmul.f32 %v674, %v674
      %v740 = vmul.f32 %v677, %v677
      %v741 = vadd.f32 %v733, %v734
      %v742 = vadd.f32 %v741, %v735
      %v743 = vadd.f32 %v742, %v736
      %v744 = vadd.f32 %v743, %v737
      %v745 = vadd.f32 %v744, %v738
      %v746 = vadd.f32 %v745, %v739
      %v747 = vadd.f32 %v746, %v740
      %v748 = vrot.slane %v747, 4
      %v749 = vadd.f32 %v747, %v748
      %v750 = vrot.slane %v749, 2
      %v751 = vadd.f32 %v749, %v750
      %v752 = vrot.slane %v751, 1
      %v753 = vadd.f32 %v751, %v752
      %v754 = vlaneseq
      %v755 = vshrl.u32 %v754, 7
      %vm756 = vcmp.eq.s32.totalorder %v755, 0
      %vm757 = vcmp.eq.s32.totalorder %v755, 1
      %v758 = vsel %vm757, %v753, 0.0
      %v759 = vsel %vm756, %v732, %v758
      %760 = vst [vmem:[%s273] sm:$0xff] %v759
      %s761 = smul.u32 8, %s20
      %p762 = scmp.lt.s32.totalorder %s761, 15
      %s763 = scalar_select %p762, %s761, 15
      %p764 = scmp.lt.s32.totalorder %s21, 0
      %s765 = scalar_select %p764, %s21, 0
      %s766 = sadd.s32 %s765, %s763
      %s767 = smul.addr %s766, 4
      %s768 = scalar_lea.vmem %s3, %s767
      %p769 = scmp.lt.s32.totalorder %s20, 1
      %s770 = scalar_select %p769, %s20, 1
      %p771 = scmp.lt.s32.totalorder %s21, 0
      %s772 = scalar_select %p771, %s21, 0
      %s773 = sadd.s32 %s772, %s770
      %s774 = smul.addr %s773, 8
      %s775 = scalar_lea.vmem %s4, %s774
      // Predicated region
      $region33: #{_lambda_.18} parent=31 // pred_check
        %p776 = pneg %p126
      $region34: #{_lambda_.18} parent=31 // pred_check_branch
        %778 = sbr.rel (%p776) target = $region36
      $region35: #{_lambda_.18} parent=31 // pred_region
        %s779 = smul.u32 8, %s20
      $region36: #{_lambda_.18} parent=31 // pred_fallthru
        _
      // Predicated region
      $region37: #{_lambda_.18} parent=31 // pred_check
        %p780 = pneg %p154
      $region38: #{_lambda_.18} parent=31 // pred_check_branch
        %782 = sbr.rel (%p780) target = $region40
      $region39: #{_lambda_.18} parent=31 // pred_region
        _
      $region40: #{_lambda_.18} parent=31 // pred_fallthru
        _
    $region32: #{_lambda_.18} parent=5 // pred_fallthru
      _
    %p783 = scmp.le.s32.totalorder 2, %s11
    // Predicated region
    $region41: #{_lambda_.18} parent=5 // pred_check
      %p784 = pneg %p783
    $region42: #{_lambda_.18} parent=5 // pred_check_branch
      %786 = sbr.rel (%p784) target = $region44
    $region43: #{_lambda_.18} parent=5 // pred_region
      %s787 = ssub.s32 %s11, 2
      // Predicated region
      $region45: #{_lambda_.18} parent=43 // pred_check
        %p788 = pneg %p132
      $region46: #{_lambda_.18} parent=43 // pred_check_branch
        %790 = sbr.rel (%p788) target = $region48
      $region47: #{_lambda_.18} parent=43 // pred_region
        %s791 = smul.u32 8, %s22
        %p792 = scmp.lt.s32.totalorder %s791, 15
        %s793 = scalar_select %p792, %s791, 15
        %p794 = scmp.lt.s32.totalorder %s23, 0
        %s795 = scalar_select %p794, %s23, 0
        %s796 = sadd.s32 %s795, %s793
        %s797 = smul.addr %s796, 4
        %s798 = scalar_lea.vmem %s3, %s797
      $region48: #{_lambda_.18} parent=43 // pred_fallthru
        _
      // Predicated region
      $region49: #{_lambda_.18} parent=43 // pred_check
        %p799 = pneg %p160
      $region50: #{_lambda_.18} parent=43 // pred_check_branch
        %801 = sbr.rel (%p799) target = $region52
      $region51: #{_lambda_.18} parent=43 // pred_region
        %p802 = scmp.lt.s32.totalorder %s22, 1
        %s803 = scalar_select %p802, %s22, 1
        %p804 = scmp.lt.s32.totalorder %s23, 0
        %s805 = scalar_select %p804, %s23, 0
        %s806 = sadd.s32 %s805, %s803
        %s807 = smul.addr %s806, 8
        %s808 = scalar_lea.vmem %s4, %s807
      $region52: #{_lambda_.18} parent=43 // pred_fallthru
        _
    $region44: #{_lambda_.18} parent=5 // pred_fallthru
      _
  $region6: #{_lambda_.18} parent=0 // loop_footer
    %s15 = sadd.s32 1, %s11
  $region7: #{_lambda_.18} parent=0 // loop_footer_branch
    %10 = sbr.rel target = $region3
  $region8: #{_lambda_.18} parent=0 // loop_exit
    _

// kernel: _lambda_.19
$region0: #{_lambda_.19}
  #allocation0 [shape = 'u32[]', space=smem, size = 0x4, offset = 0x4, fixed_abs, tag = 'smem constant byte address 0x4 - core index']
  #allocation1 [shape = 'u32[144,128]{1,0:T(1,128)}', space=vmem, size = 0x12000, scoped, tag = 'internal scratch']
  %s0 = inlined_call_operand.vmem [shape: bf16[512,256], index: 0, kind: input, shape index: {}]
  %s1 = inlined_call_operand.vmem [shape: bf16[256,128], index: 1, kind: input, shape index: {}]
  %s2 = inlined_call_operand.vmem [shape: f32[1,128], index: 2, kind: input, shape index: {}]
  %s3 = inlined_call_operand.vmem [shape: f32[1,128], index: 3, kind: input, shape index: {}]
  %s4 = inlined_call_operand.vmem [shape: f32[512,128], index: 4, kind: output, shape index: {}]
  %s5 = sld [smem:[#allocation0]]
  $region49: #{_lambda_.19} parent=0
    _
  %s7 = ssub.s32 1, %s5
  %s8 = scalar_select 0, %s7, %s5
  loop: start=0, step=1, limit=4
  $region2: #{_lambda_.19} parent=0 // loop_pre_header
    _
  $region3: #{_lambda_.19} parent=0 // loop_header
    %s10 = sphi 0, %s14
    %p11 = scmp.ge.s32.totalorder %s10, 4
    %s17 = sphi 0, %s29
    %s18 = sphi 0, %s25
    %s19 = sphi 0, %s17
    %s20 = sphi 0, %s18
    %s21 = sphi 0, %s19
    %s22 = sphi 0, %s20
    %s32 = sphi 0, %s34
    %s35 = sphi 0, %s32
    %s36 = sphi 0, %s35
    %s52 = sphi 0, %s36
    %s58 = sphi 0, %s60
    %s61 = sphi 0, %s58
    %s62 = sphi 0, %s61
    %s78 = sphi 0, %s62
    %s84 = sphi 0, %s86
    %s87 = sphi 0, %s84
    %s88 = sphi 0, %s87
    %s104 = sphi 0, %s88
    %s110 = sphi 0, %s112
    %s113 = sphi 0, %s110
    %s114 = sphi 0, %s113
    %s130 = sphi 0, %s114
    %s138 = sphi 0, %s140
    %s141 = sphi 0, %s138
    %s142 = sphi 0, %s141
    %s158 = sphi 0, %s142
  $region4: #{_lambda_.19} parent=0 // loop_header_branch
    %13 = sbr.rel (%p11) target = $region8
  $region5: #{_lambda_.19} parent=0 // loop_body
    %s15 = ssub.s32 %s10, 1
    %s16 = ssub.s32 %s10, 2
    %s23 = sadd.s32 1, %s18
    %p24 = scmp.ge.s32.totalorder %s23, 1
    %s25 = scalar_select %p24, 0, %s23
    %s26 = sadd.s32 1, %s17
    %s27 = scalar_select %p24, %s26, %s17
    %p28 = scmp.ge.s32.totalorder %s27, 2
    %s29 = scalar_select %p28, 0, %s27
    %s30 = ssub.s32 %s17, %s29
    %p31 = scmp.eq.s32.totalorder %s30, 0
    %s33 = sadd.s32 %s32, 1
    %s34 = scalar_select %p31, %s32, %s33
    %p37 = pneg %p31
    %p38 = scmp.eq.s32.totalorder %s10, 1
    %p39 = por %p37, %p38
    %p40 = scmp.ne.s32.totalorder %s32, %s35
    %p41 = scmp.eq.s32.totalorder %s10, 0
    %p42 = por %p40, %p41
    %p43 = scmp.ne.s32.totalorder %s32, %s35
    %p44 = scmp.eq.s32.totalorder %s15, 1
    %p45 = por %p43, %p44
    %p46 = scmp.ne.s32.totalorder %s35, %s36
    %p47 = scmp.eq.s32.totalorder %s15, 0
    %p48 = por %p46, %p47
    %p49 = scmp.ne.s32.totalorder %s35, %s36
    %p50 = scmp.eq.s32.totalorder %s16, 1
    %p51 = por %p49, %p50
    %p53 = scmp.ne.s32.totalorder %s36, %s52
    %p54 = scmp.eq.s32.totalorder %s16, 0
    %p55 = por %p53, %p54
    %s56 = ssub.s32 %s18, %s25
    %p57 = scmp.eq.s32.totalorder %s56, 0
    %s59 = sadd.s32 %s58, 1
    %s60 = scalar_select %p57, %s58, %s59
    %p63 = pneg %p57
    %p64 = scmp.eq.s32.totalorder %s10, 1
    %p65 = por %p63, %p64
    %p66 = scmp.ne.s32.totalorder %s58, %s61
    %p67 = scmp.eq.s32.totalorder %s10, 0
    %p68 = por %p66, %p67
    %p69 = scmp.ne.s32.totalorder %s58, %s61
    %p70 = scmp.eq.s32.totalorder %s15, 1
    %p71 = por %p69, %p70
    %p72 = scmp.ne.s32.totalorder %s61, %s62
    %p73 = scmp.eq.s32.totalorder %s15, 0
    %p74 = por %p72, %p73
    %p75 = scmp.ne.s32.totalorder %s61, %s62
    %p76 = scmp.eq.s32.totalorder %s16, 1
    %p77 = por %p75, %p76
    %p79 = scmp.ne.s32.totalorder %s62, %s78
    %p80 = scmp.eq.s32.totalorder %s16, 0
    %p81 = por %p79, %p80
    %s82 = ssub.s32 %s18, %s25
    %p83 = scmp.eq.s32.totalorder %s82, 0
    %s85 = sadd.s32 %s84, 1
    %s86 = scalar_select %p83, %s84, %s85
    %p89 = pneg %p83
    %p90 = scmp.eq.s32.totalorder %s10, 1
    %p91 = por %p89, %p90
    %p92 = scmp.ne.s32.totalorder %s84, %s87
    %p93 = scmp.eq.s32.totalorder %s10, 0
    %p94 = por %p92, %p93
    %p95 = scmp.ne.s32.totalorder %s84, %s87
    %p96 = scmp.eq.s32.totalorder %s15, 1
    %p97 = por %p95, %p96
    %p98 = scmp.ne.s32.totalorder %s87, %s88
    %p99 = scmp.eq.s32.totalorder %s15, 0
    %p100 = por %p98, %p99
    %p101 = scmp.ne.s32.totalorder %s87, %s88
    %p102 = scmp.eq.s32.totalorder %s16, 1
    %p103 = por %p101, %p102
    %p105 = scmp.ne.s32.totalorder %s88, %s104
    %p106 = scmp.eq.s32.totalorder %s16, 0
    %p107 = por %p105, %p106
    %s108 = ssub.s32 %s18, %s25
    %p109 = scmp.eq.s32.totalorder %s108, 0
    %s111 = sadd.s32 %s110, 1
    %s112 = scalar_select %p109, %s110, %s111
    %p115 = pneg %p109
    %p116 = scmp.eq.s32.totalorder %s10, 1
    %p117 = por %p115, %p116
    %p118 = scmp.ne.s32.totalorder %s110, %s113
    %p119 = scmp.eq.s32.totalorder %s10, 0
    %p120 = por %p118, %p119
    %p121 = scmp.ne.s32.totalorder %s110, %s113
    %p122 = scmp.eq.s32.totalorder %s15, 1
    %p123 = por %p121, %p122
    %p124 = scmp.ne.s32.totalorder %s113, %s114
    %p125 = scmp.eq.s32.totalorder %s15, 0
    %p126 = por %p124, %p125
    %p127 = scmp.ne.s32.totalorder %s113, %s114
    %p128 = scmp.eq.s32.totalorder %s16, 1
    %p129 = por %p127, %p128
    %p131 = scmp.ne.s32.totalorder %s114, %s130
    %p132 = scmp.eq.s32.totalorder %s16, 0
    %p133 = por %p131, %p132
    %s134 = ssub.s32 %s17, %s29
    %s135 = ssub.s32 %s18, %s25
    %s136 = sor.u32 %s134, %s135
    %p137 = scmp.eq.s32.totalorder %s136, 0
    %s139 = sadd.s32 %s138, 1
    %s140 = scalar_select %p137, %s138, %s139
    %p143 = pneg %p137
    %p144 = scmp.eq.s32.totalorder %s10, 1
    %p145 = por %p143, %p144
    %p146 = scmp.ne.s32.totalorder %s138, %s141
    %p147 = scmp.eq.s32.totalorder %s10, 0
    %p148 = por %p146, %p147
    %p149 = scmp.ne.s32.totalorder %s138, %s141
    %p150 = scmp.eq.s32.totalorder %s15, 1
    %p151 = por %p149, %p150
    %p152 = scmp.ne.s32.totalorder %s141, %s142
    %p153 = scmp.eq.s32.totalorder %s15, 0
    %p154 = por %p152, %p153
    %p155 = scmp.ne.s32.totalorder %s141, %s142
    %p156 = scmp.eq.s32.totalorder %s16, 1
    %p157 = por %p155, %p156
    %p159 = scmp.ne.s32.totalorder %s142, %s158
    %p160 = scmp.eq.s32.totalorder %s16, 0
    %p161 = por %p159, %p160
    %p162 = scmp.le.s32.totalorder 1, %s10
    %p163 = scmp.lt.s32.totalorder %s10, 3
    %p164 = pnand %p162, %p163
    %p165 = pneg %p164
    // Predicated region
    $region9: #{_lambda_.19} parent=5 // pred_check
      _
    $region10: #{_lambda_.19} parent=5 // pred_check_branch
      %167 = sbr.rel (%p164) target = $region12
    $region11: #{_lambda_.19} parent=5 // pred_region
      %s168 = ssub.s32 %s10, 1
      // Predicated region
      $region13: #{_lambda_.19} parent=11 // pred_check
        %p169 = pneg %p74
      $region14: #{_lambda_.19} parent=11 // pred_check_branch
        %171 = sbr.rel (%p169) target = $region16
      $region15: #{_lambda_.19} parent=11 // pred_region
        %p172 = scmp.lt.s32.totalorder %s20, 0
        %s173 = scalar_select %p172, %s20, 0
        %s174 = smul.addr %s173, 4
        %s175 = scalar_lea.vmem %s1, %s174
      $region16: #{_lambda_.19} parent=11 // pred_fallthru
        _
      // Predicated region
      $region17: #{_lambda_.19} parent=11 // pred_check
        %p176 = pneg %p100
      $region18: #{_lambda_.19} parent=11 // pred_check_branch
        %178 = sbr.rel (%p176) target = $region20
      $region19: #{_lambda_.19} parent=11 // pred_region
        %p179 = scmp.lt.s32.totalorder %s20, 0
        %s180 = scalar_select %p179, %s20, 0
        %s181 = scalar_lea.vmem %s2, %s180
      $region20: #{_lambda_.19} parent=11 // pred_fallthru
        _
      // Predicated region
      $region21: #{_lambda_.19} parent=11 // pred_check
        %p182 = pneg %p126
      $region22: #{_lambda_.19} parent=11 // pred_check_branch
        %184 = sbr.rel (%p182) target = $region24
      $region23: #{_lambda_.19} parent=11 // pred_region
        %p185 = scmp.lt.s32.totalorder %s20, 0
        %s186 = scalar_select %p185, %s20, 0
        %s187 = scalar_lea.vmem %s3, %s186
      $region24: #{_lambda_.19} parent=11 // pred_fallthru
        _
    $region12: #{_lambda_.19} parent=5 // pred_fallthru
      _
    %p188 = scmp.lt.s32.totalorder %s10, 2
    // Predicated region
    $region25: #{_lambda_.19} parent=5 // pred_check
      %p189 = pneg %p188
    $region26: #{_lambda_.19} parent=5 // pred_check_branch
      %191 = sbr.rel (%p189) target = $region28
    $region27: #{_lambda_.19} parent=5 // pred_region
      // Predicated region
      $region29: #{_lambda_.19} parent=27 // pred_check
        %p192 = pneg %p42
      $region30: #{_lambda_.19} parent=27 // pred_check_branch
        %194 = sbr.rel (%p192) target = $region32
      $region31: #{_lambda_.19} parent=27 // pred_region
        %s195 = smul.u32 32, %s17
        %p196 = scmp.lt.s32.totalorder %s195, 63
        %s197 = scalar_select %p196, %s195, 63
        %s198 = smul.addr %s197, 2
        %s199 = smul.addr %s198, 4
        %s200 = scalar_lea.vmem %s0, %s199
        %s201 = smul.u32 32, %s17
      $region32: #{_lambda_.19} parent=27 // pred_fallthru
        _
    $region28: #{_lambda_.19} parent=5 // pred_fallthru
      _
    %p202 = scmp.le.s32.totalorder 1, %s10
    %p203 = scmp.lt.s32.totalorder %s10, 3
    %p204 = pnand %p202, %p203
    %p205 = pneg %p204
    // Predicated region
    $region33: #{_lambda_.19} parent=5 // pred_check
      _
    $region34: #{_lambda_.19} parent=5 // pred_check_branch
      %207 = sbr.rel (%p204) target = $region36
    $region35: #{_lambda_.19} parent=5 // pred_region
      %s208 = ssub.s32 %s10, 1
      %s209 = smul.u32 32, %s19
      %p210 = scmp.lt.s32.totalorder %s209, 63
      %s211 = scalar_select %p210, %s209, 63
      %s212 = smul.addr %s211, 2
      %s213 = smul.addr %s212, 4
      %s214 = scalar_lea.vmem %s0, %s213
      %p215 = pneg %p48
      %p216 = pneg %p45
      %p217 = scmp.lt.s32.totalorder %s20, 0
      %s218 = scalar_select %p217, %s20, 0
      %s219 = smul.addr %s218, 4
      %s220 = scalar_lea.vmem %s1, %s219
      %p221 = pneg %p74
      %p222 = pneg %p71
      %p223 = scmp.lt.s32.totalorder %s20, 0
      %s224 = scalar_select %p223, %s20, 0
      %s225 = scalar_lea.vmem %s2, %s224
      %p226 = pneg %p100
      %p227 = pneg %p97
      %p228 = scmp.lt.s32.totalorder %s20, 0
      %s229 = scalar_select %p228, %s20, 0
      %s230 = scalar_lea.vmem %s3, %s229
      %p231 = pneg %p126
      %p232 = pneg %p123
      %p233 = pneg %p154
      %p234 = pneg %p151
      %s235 = smul.u32 32, %s19
      %p236 = scmp.lt.s32.totalorder %s235, 63
      %s237 = scalar_select %p236, %s235, 63
      %p238 = scmp.lt.s32.totalorder %s20, 0
      %s239 = scalar_select %p238, %s20, 0
      %s240 = sadd.s32 %s239, %s237
      %s241 = smul.addr %s240, 8
      %s242 = scalar_lea.vmem %s4, %s241
      %s243 = smul.u32 32, %s19
      %p244 = scmp.lt.s32.totalorder %s243, 63
      %s245 = scalar_select %p244, %s243, 63
      %s246 = smul.addr %s245, 2
      %s247 = smul.addr %s246, 4
      %s248 = scalar_lea.vmem %s0, %s247
      %s249 = smul.u32 32, %s19
      %p250 = scmp.lt.s32.totalorder %s20, 0
      %s251 = scalar_select %p250, %s20, 0
      %s252 = smul.addr %s251, 4
      %s253 = scalar_lea.vmem %s1, %s252
      %p254 = scmp.lt.s32.totalorder %s20, 0
      %s255 = scalar_select %p254, %s20, 0
      %s256 = scalar_lea.vmem %s2, %s255
      %p257 = scmp.lt.s32.totalorder %s20, 0
      %s258 = scalar_select %p257, %s20, 0
      %s259 = scalar_lea.vmem %s3, %s258
      %s260 = smul.u32 32, %s19
      %p261 = scmp.lt.s32.totalorder %s260, 63
      %s262 = scalar_select %p261, %s260, 63
      %p263 = scmp.lt.s32.totalorder %s20, 0
      %s264 = scalar_select %p263, %s20, 0
      %s265 = sadd.s32 %s264, %s262
      %s266 = smul.addr %s265, 8
      %s267 = scalar_lea.vmem %s4, %s266
      %s268 = smul.u32 32, %s19
      %v270 = vld [vmem:[%s248] sm:$0xff]
      %v271 = vld [vmem:[%s248 + $0x8] sm:$0xff]
      %v272 = vld [vmem:[%s248 + $0x10] sm:$0xff]
      %v273 = vld [vmem:[%s248 + $0x18] sm:$0xff]
      %v274 = vld [vmem:[%s248 + $0x20] sm:$0xff]
      %v275 = vld [vmem:[%s248 + $0x28] sm:$0xff]
      %v276 = vld [vmem:[%s248 + $0x30] sm:$0xff]
      %v277 = vld [vmem:[%s248 + $0x38] sm:$0xff]
      %v278 = vld [vmem:[%s248 + $0x40] sm:$0xff]
      %v279 = vld [vmem:[%s248 + $0x48] sm:$0xff]
      %v280 = vld [vmem:[%s248 + $0x50] sm:$0xff]
      %v281 = vld [vmem:[%s248 + $0x58] sm:$0xff]
      %v282 = vld [vmem:[%s248 + $0x60] sm:$0xff]
      %v283 = vld [vmem:[%s248 + $0x68] sm:$0xff]
      %v284 = vld [vmem:[%s248 + $0x70] sm:$0xff]
      %v285 = vld [vmem:[%s248 + $0x78] sm:$0xff]
      %v286 = vld [vmem:[%s248 + $0x80] sm:$0xff]
      %v287 = vld [vmem:[%s248 + $0x88] sm:$0xff]
      %v288 = vld [vmem:[%s248 + $0x90] sm:$0xff]
      %v289 = vld [vmem:[%s248 + $0x98] sm:$0xff]
      %v290 = vld [vmem:[%s248 + $0xa0] sm:$0xff]
      %v291 = vld [vmem:[%s248 + $0xa8] sm:$0xff]
      %v292 = vld [vmem:[%s248 + $0xb0] sm:$0xff]
      %v293 = vld [vmem:[%s248 + $0xb8] sm:$0xff]
      %v294 = vld [vmem:[%s248 + $0xc0] sm:$0xff]
      %v295 = vld [vmem:[%s248 + $0xc8] sm:$0xff]
      %v296 = vld [vmem:[%s248 + $0xd0] sm:$0xff]
      %v297 = vld [vmem:[%s248 + $0xd8] sm:$0xff]
      %v298 = vld [vmem:[%s248 + $0xe0] sm:$0xff]
      %v299 = vld [vmem:[%s248 + $0xe8] sm:$0xff]
      %v300 = vld [vmem:[%s248 + $0xf0] sm:$0xff]
      %v301 = vld [vmem:[%s248 + $0xf8] sm:$0xff]
      %v302 = vunpack.c.l.bf16 %v270
      %v303 = vunpack.c.h.bf16 %v270
      %v304 = vunpack.c.l.bf16 %v271
      %v305 = vunpack.c.h.bf16 %v271
      %v306 = vunpack.c.l.bf16 %v272
      %v307 = vunpack.c.h.bf16 %v272
      %v308 = vunpack.c.l.bf16 %v273
      %v309 = vunpack.c.h.bf16 %v273
      %v310 = vunpack.c.l.bf16 %v274
      %v311 = vunpack.c.h.bf16 %v274
      %v312 = vunpack.c.l.bf16 %v275
      %v313 = vunpack.c.h.bf16 %v275
      %v314 = vunpack.c.l.bf16 %v276
      %v315 = vunpack.c.h.bf16 %v276
      %v316 = vunpack.c.l.bf16 %v277
      %v317 = vunpack.c.h.bf16 %v277
      %v318 = vunpack.c.l.bf16 %v278
      %v319 = vunpack.c.h.bf16 %v278
      %v320 = vunpack.c.l.bf16 %v279
      %v321 = vunpack.c.h.bf16 %v279
      %v322 = vunpack.c.l.bf16 %v280
      %v323 = vunpack.c.h.bf16 %v280
      %v324 = vunpack.c.l.bf16 %v281
      %v325 = vunpack.c.h.bf16 %v281
      %v326 = vunpack.c.l.bf16 %v282
      %v327 = vunpack.c.h.bf16 %v282
      %v328 = vunpack.c.l.bf16 %v283
      %v329 = vunpack.c.h.bf16 %v283
      %v330 = vunpack.c.l.bf16 %v284
      %v331 = vunpack.c.h.bf16 %v284
      %v332 = vunpack.c.l.bf16 %v285
      %v333 = vunpack.c.h.bf16 %v285
      %v334 = vunpack.c.l.bf16 %v286
      %v335 = vunpack.c.h.bf16 %v286
      %v336 = vunpack.c.l.bf16 %v287
      %v337 = vunpack.c.h.bf16 %v287
      %v338 = vunpack.c.l.bf16 %v288
      %v339 = vunpack.c.h.bf16 %v288
      %v340 = vunpack.c.l.bf16 %v289
      %v341 = vunpack.c.h.bf16 %v289
      %v342 = vunpack.c.l.bf16 %v290
      %v343 = vunpack.c.h.bf16 %v290
      %v344 = vunpack.c.l.bf16 %v291
      %v345 = vunpack.c.h.bf16 %v291
      %v346 = vunpack.c.l.bf16 %v292
      %v347 = vunpack.c.h.bf16 %v292
      %v348 = vunpack.c.l.bf16 %v293
      %v349 = vunpack.c.h.bf16 %v293
      %v350 = vunpack.c.l.bf16 %v294
      %v351 = vunpack.c.h.bf16 %v294
      %v352 = vunpack.c.l.bf16 %v295
      %v353 = vunpack.c.h.bf16 %v295
      %v354 = vunpack.c.l.bf16 %v296
      %v355 = vunpack.c.h.bf16 %v296
      %v356 = vunpack.c.l.bf16 %v297
      %v357 = vunpack.c.h.bf16 %v297
      %v358 = vunpack.c.l.bf16 %v298
      %v359 = vunpack.c.h.bf16 %v298
      %v360 = vunpack.c.l.bf16 %v299
      %v361 = vunpack.c.h.bf16 %v299
      %v362 = vunpack.c.l.bf16 %v300
      %v363 = vunpack.c.h.bf16 %v300
      %v364 = vunpack.c.l.bf16 %v301
      %v365 = vunpack.c.h.bf16 %v301
      %v366 = vmax.f32 %v302, 0.0
      %v367 = vmax.f32 %v303, 0.0
      %v368 = vmax.f32 %v304, 0.0
      %v369 = vmax.f32 %v305, 0.0
      %v370 = vmax.f32 %v306, 0.0
      %v371 = vmax.f32 %v307, 0.0
      %v372 = vmax.f32 %v308, 0.0
      %v373 = vmax.f32 %v309, 0.0
      %v374 = vmax.f32 %v310, 0.0
      %v375 = vmax.f32 %v311, 0.0
      %v376 = vmax.f32 %v312, 0.0
      %v377 = vmax.f32 %v313, 0.0
      %v378 = vmax.f32 %v314, 0.0
      %v379 = vmax.f32 %v315, 0.0
      %v380 = vmax.f32 %v316, 0.0
      %v381 = vmax.f32 %v317, 0.0
      %v382 = vmax.f32 %v318, 0.0
      %v383 = vmax.f32 %v319, 0.0
      %v384 = vmax.f32 %v320, 0.0
      %v385 = vmax.f32 %v321, 0.0
      %v386 = vmax.f32 %v322, 0.0
      %v387 = vmax.f32 %v323, 0.0
      %v388 = vmax.f32 %v324, 0.0
      %v389 = vmax.f32 %v325, 0.0
      %v390 = vmax.f32 %v326, 0.0
      %v391 = vmax.f32 %v327, 0.0
      %v392 = vmax.f32 %v328, 0.0
      %v393 = vmax.f32 %v329, 0.0
      %v394 = vmax.f32 %v330, 0.0
      %v395 = vmax.f32 %v331, 0.0
      %v396 = vmax.f32 %v332, 0.0
      %v397 = vmax.f32 %v333, 0.0
      %v398 = vmax.f32 %v334, 0.0
      %v399 = vmax.f32 %v335, 0.0
      %v400 = vmax.f32 %v336, 0.0
      %v401 = vmax.f32 %v337, 0.0
      %v402 = vmax.f32 %v338, 0.0
      %v403 = vmax.f32 %v339, 0.0
      %v404 = vmax.f32 %v340, 0.0
      %v405 = vmax.f32 %v341, 0.0
      %v406 = vmax.f32 %v342, 0.0
      %v407 = vmax.f32 %v343, 0.0
      %v408 = vmax.f32 %v344, 0.0
      %v409 = vmax.f32 %v345, 0.0
      %v410 = vmax.f32 %v346, 0.0
      %v411 = vmax.f32 %v347, 0.0
      %v412 = vmax.f32 %v348, 0.0
      %v413 = vmax.f32 %v349, 0.0
      %v414 = vmax.f32 %v350, 0.0
      %v415 = vmax.f32 %v351, 0.0
      %v416 = vmax.f32 %v352, 0.0
      %v417 = vmax.f32 %v353, 0.0
      %v418 = vmax.f32 %v354, 0.0
      %v419 = vmax.f32 %v355, 0.0
      %v420 = vmax.f32 %v356, 0.0
      %v421 = vmax.f32 %v357, 0.0
      %v422 = vmax.f32 %v358, 0.0
      %v423 = vmax.f32 %v359, 0.0
      %v424 = vmax.f32 %v360, 0.0
      %v425 = vmax.f32 %v361, 0.0
      %v426 = vmax.f32 %v362, 0.0
      %v427 = vmax.f32 %v363, 0.0
      %v428 = vmax.f32 %v364, 0.0
      %v429 = vmax.f32 %v365, 0.0
      %v430 = vpack.c.bf16 %v368, %v366
      %v431 = vpack.c.bf16 %v369, %v367
      %v432 = vpack.c.bf16 %v372, %v370
      %v433 = vpack.c.bf16 %v373, %v371
      %v434 = vpack.c.bf16 %v376, %v374
      %v435 = vpack.c.bf16 %v377, %v375
      %v436 = vpack.c.bf16 %v380, %v378
      %v437 = vpack.c.bf16 %v381, %v379
      %v438 = vpack.c.bf16 %v384, %v382
      %v439 = vpack.c.bf16 %v385, %v383
      %v440 = vpack.c.bf16 %v388, %v386
      %v441 = vpack.c.bf16 %v389, %v387
      %v442 = vpack.c.bf16 %v392, %v390
      %v443 = vpack.c.bf16 %v393, %v391
      %v444 = vpack.c.bf16 %v396, %v394
      %v445 = vpack.c.bf16 %v397, %v395
      %v446 = vpack.c.bf16 %v400, %v398
      %v447 = vpack.c.bf16 %v401, %v399
      %v448 = vpack.c.bf16 %v404, %v402
      %v449 = vpack.c.bf16 %v405, %v403
      %v450 = vpack.c.bf16 %v408, %v406
      %v451 = vpack.c.bf16 %v409, %v407
      %v452 = vpack.c.bf16 %v412, %v410
      %v453 = vpack.c.bf16 %v413, %v411
      %v454 = vpack.c.bf16 %v416, %v414
      %v455 = vpack.c.bf16 %v417, %v415
      %v456 = vpack.c.bf16 %v420, %v418
      %v457 = vpack.c.bf16 %v421, %v419
      %v458 = vpack.c.bf16 %v424, %v422
      %v459 = vpack.c.bf16 %v425, %v423
      %v460 = vpack.c.bf16 %v428, %v426
      %v461 = vpack.c.bf16 %v429, %v427
      %v462 = vld [vmem:[%s253] sm:$0xf]
      %v463 = vld [vmem:[%s253 + $0x4] sm:$0xf]
      %v464 = vld [vmem:[%s253 + $0x8] sm:$0xf]
      %v465 = vld [vmem:[%s253 + $0xc] sm:$0xf]
      %v466 = vld [vmem:[%s253 + $0x10] sm:$0xf]
      %v467 = vld [vmem:[%s253 + $0x14] sm:$0xf]
      %v468 = vld [vmem:[%s253 + $0x18] sm:$0xf]
      %v469 = vld [vmem:[%s253 + $0x1c] sm:$0xf]
      %v470 = vld [vmem:[%s253 + $0x20] sm:$0xf]
      %v471 = vld [vmem:[%s253 + $0x24] sm:$0xf]
      %v472 = vld [vmem:[%s253 + $0x28] sm:$0xf]
      %v473 = vld [vmem:[%s253 + $0x2c] sm:$0xf]
      %v474 = vld [vmem:[%s253 + $0x30] sm:$0xf]
      %v475 = vld [vmem:[%s253 + $0x34] sm:$0xf]
      %v476 = vld [vmem:[%s253 + $0x38] sm:$0xf]
      %v477 = vld [vmem:[%s253 + $0x3c] sm:$0xf]
      %v478 = vld [vmem:[%s253 + $0x40] sm:$0xf]
      %v479 = vld [vmem:[%s253 + $0x44] sm:$0xf]
      %v480 = vld [vmem:[%s253 + $0x48] sm:$0xf]
      %v481 = vld [vmem:[%s253 + $0x4c] sm:$0xf]
      %v482 = vld [vmem:[%s253 + $0x50] sm:$0xf]
      %v483 = vld [vmem:[%s253 + $0x54] sm:$0xf]
      %v484 = vld [vmem:[%s253 + $0x58] sm:$0xf]
      %v485 = vld [vmem:[%s253 + $0x5c] sm:$0xf]
      %v486 = vld [vmem:[%s253 + $0x60] sm:$0xf]
      %v487 = vld [vmem:[%s253 + $0x64] sm:$0xf]
      %v488 = vld [vmem:[%s253 + $0x68] sm:$0xf]
      %v489 = vld [vmem:[%s253 + $0x6c] sm:$0xf]
      %v490 = vld [vmem:[%s253 + $0x70] sm:$0xf]
      %v491 = vld [vmem:[%s253 + $0x74] sm:$0xf]
      %v492 = vld [vmem:[%s253 + $0x78] sm:$0xf]
      %v493 = vld [vmem:[%s253 + $0x7c] sm:$0xf]
      %v494 = vld [vmem:[%s256] sm:$0x1]
      %v496 = vlaneseq
      %v497 = vshrl.u32 %v496, 7
      %v498 = vsub.s32 0, %v497
      %v499 = vrot.slane %v494, %v498
      %v533 = vunpack.c.l.b16 %v462
      %v534 = vunpack.c.l.b16 %v463
      %v535 = vunpack.c.l.b16 %v464
      %v536 = vunpack.c.l.b16 %v465
      %v537 = vunpack.c.l.b16 %v466
      %v538 = vunpack.c.l.b16 %v467
      %v539 = vunpack.c.l.b16 %v468
      %v540 = vunpack.c.l.b16 %v469
      %v541 = vunpack.c.l.b16 %v470
      %v542 = vunpack.c.l.b16 %v471
      %v543 = vunpack.c.l.b16 %v472
      %v544 = vunpack.c.l.b16 %v473
      %v545 = vunpack.c.l.b16 %v474
      %v546 = vunpack.c.l.b16 %v475
      %v547 = vunpack.c.l.b16 %v476
      %v548 = vunpack.c.l.b16 %v477
      %v549 = vunpack.c.l.b16 %v478
      %v550 = vunpack.c.l.b16 %v479
      %v551 = vunpack.c.l.b16 %v480
      %v552 = vunpack.c.l.b16 %v481
      %v553 = vunpack.c.l.b16 %v482
      %v554 = vunpack.c.l.b16 %v483
      %v555 = vunpack.c.l.b16 %v484
      %v556 = vunpack.c.l.b16 %v485
      %v557 = vunpack.c.l.b16 %v486
      %v558 = vunpack.c.l.b16 %v487
      %v559 = vunpack.c.l.b16 %v488
      %v560 = vunpack.c.l.b16 %v489
      %v561 = vunpack.c.l.b16 %v490
      %v562 = vunpack.c.l.b16 %v491
      %v563 = vunpack.c.l.b16 %v492
      %v564 = vunpack.c.l.b16 %v493
      %v565 = vpack.c.b16 %v534, %v533
      %v566 = vpack.c.b16 %v536, %v535
      %v567 = vpack.c.b16 %v538, %v537
      %v568 = vpack.c.b16 %v540, %v539
      %v569 = vpack.c.b16 %v542, %v541
      %v570 = vpack.c.b16 %v544, %v543
      %v571 = vpack.c.b16 %v546, %v545
      %v572 = vpack.c.b16 %v548, %v547
      %v573 = vpack.c.b16 %v550, %v549
      %v574 = vpack.c.b16 %v552, %v551
      %v575 = vpack.c.b16 %v554, %v553
      %v576 = vpack.c.b16 %v556, %v555
      %v577 = vpack.c.b16 %v558, %v557
      %v578 = vpack.c.b16 %v560, %v559
      %v579 = vpack.c.b16 %v562, %v561
      %v580 = vpack.c.b16 %v564, %v563
      %597 = vmatprep.subr.bf16.mxu0 0
      %598 = vmatpush1.bf16.msra.mxu0 %v565
      %599 = vmatprep.subr.bf16.mxu0 0
      %600 = vmatpush1.bf16.msra.mxu0 %v566
      %601 = vmatprep.subr.bf16.mxu0 0
      %602 = vmatpush1.bf16.msra.mxu0 %v567
      %603 = vmatprep.subr.bf16.mxu0 0
      %604 = vmatpush1.bf16.msra.mxu0 %v568
      %605 = vmatprep.subr.bf16.mxu0 0
      %606 = vmatpush1.bf16.msra.mxu0 %v569
      %607 = vmatprep.subr.bf16.mxu0 0
      %608 = vmatpush1.bf16.msra.mxu0 %v570
      %609 = vmatprep.subr.bf16.mxu0 0
      %610 = vmatpush1.bf16.msra.mxu0 %v571
      %611 = vmatprep.subr.bf16.mxu0 0
      %612 = vmatpush1.bf16.msra.mxu0 %v572
      %613 = vmatprep.subr.bf16.mxu0 0
      %614 = vmatpush1.bf16.msra.mxu0 %v573
      %615 = vmatprep.subr.bf16.mxu0 0
      %616 = vmatpush1.bf16.msra.mxu0 %v574
      %617 = vmatprep.subr.bf16.mxu0 0
      %618 = vmatpush1.bf16.msra.mxu0 %v575
      %619 = vmatprep.subr.bf16.mxu0 0
      %620 = vmatpush1.bf16.msra.mxu0 %v576
      %621 = vmatprep.subr.bf16.mxu0 0
      %622 = vmatpush1.bf16.msra.mxu0 %v577
      %623 = vmatprep.subr.bf16.mxu0 0
      %624 = vmatpush1.bf16.msra.mxu0 %v578
      %625 = vmatprep.subr.bf16.mxu0 0
      %626 = vmatpush1.bf16.msra.mxu0 %v579
      %627 = vmatprep.subr.bf16.mxu0 0
      %628 = vmatpush1.bf16.msra.mxu0 %v580
      %629 = vmatprep.mubr.bf16.mxu0 %v431
      %630 = vmatmul.mubr.bf16.gmra.mrb[0].mxu0 %v430
      %v631 = vpop.f32.mrb[0].mxu0
      %v632 = vadd.f32 %v499, %v631
      %v633 = vpop.f32.mrb[0].mxu0
      %v634 = vpop.f32.mrb[0].mxu0
      %v635 = vadd.f32 %v499, %v634
      %v636 = vpop.f32.mrb[0].mxu0
      %637 = vmatprep.mubr.bf16.mxu0 %v433
      %638 = vmatmul.mubr.bf16.gmra.mrb[0].mxu0 %v432
      %v639 = vpop.f32.mrb[0].mxu0
      %v640 = vadd.f32 %v499, %v639
      %v641 = vpop.f32.mrb[0].mxu0
      %v642 = vpop.f32.mrb[0].mxu0
      %v643 = vadd.f32 %v499, %v642
      %v644 = vpop.f32.mrb[0].mxu0
      %645 = vmatprep.mubr.bf16.mxu0 %v435
      %646 = vmatmul.mubr.bf16.gmra.mrb[0].mxu0 %v434
      %v647 = vpop.f32.mrb[0].mxu0
      %v648 = vadd.f32 %v499, %v647
      %v649 = vpop.f32.mrb[0].mxu0
      %v650 = vpop.f32.mrb[0].mxu0
      %v651 = vadd.f32 %v499, %v650
      %v652 = vpop.f32.mrb[0].mxu0
      %653 = vmatprep.mubr.bf16.mxu0 %v437
      %654 = vmatmul.mubr.bf16.gmra.mrb[0].mxu0 %v436
      %v655 = vpop.f32.mrb[0].mxu0
      %v656 = vadd.f32 %v499, %v655
      %v657 = vpop.f32.mrb[0].mxu0
      %v658 = vpop.f32.mrb[0].mxu0
      %v659 = vadd.f32 %v499, %v658
      %v660 = vpop.f32.mrb[0].mxu0
      %661 = vmatprep.mubr.bf16.mxu0 %v439
      %662 = vmatmul.mubr.bf16.gmra.mrb[0].mxu0 %v438
      %v663 = vpop.f32.mrb[0].mxu0
      %v664 = vadd.f32 %v499, %v663
      %v665 = vpop.f32.mrb[0].mxu0
      %v666 = vpop.f32.mrb[0].mxu0
      %v667 = vadd.f32 %v499, %v666
      %v668 = vpop.f32.mrb[0].mxu0
      %669 = vmatprep.mubr.bf16.mxu0 %v441
      %670 = vmatmul.mubr.bf16.gmra.mrb[0].mxu0 %v440
      %v671 = vpop.f32.mrb[0].mxu0
      %v672 = vadd.f32 %v499, %v671
      %v673 = vpop.f32.mrb[0].mxu0
      %v674 = vpop.f32.mrb[0].mxu0
      %v675 = vadd.f32 %v499, %v674
      %v676 = vpop.f32.mrb[0].mxu0
      %677 = vmatprep.mubr.bf16.mxu0 %v443
      %678 = vmatmul.mubr.bf16.gmra.mrb[0].mxu0 %v442
      %v679 = vpop.f32.mrb[0].mxu0
      %v680 = vadd.f32 %v499, %v679
      %v681 = vpop.f32.mrb[0].mxu0
      %v682 = vpop.f32.mrb[0].mxu0
      %v683 = vadd.f32 %v499, %v682
      %v684 = vpop.f32.mrb[0].mxu0
      %685 = vmatprep.mubr.bf16.mxu0 %v445
      %686 = vmatmul.mubr.bf16.gmra.mrb[0].mxu0 %v444
      %v687 = vpop.f32.mrb[0].mxu0
      %v688 = vadd.f32 %v499, %v687
      %v689 = vpop.f32.mrb[0].mxu0
      %v690 = vpop.f32.mrb[0].mxu0
      %v691 = vadd.f32 %v499, %v690
      %v692 = vpop.f32.mrb[0].mxu0
      %693 = vmatprep.mubr.bf16.mxu0 %v447
      %694 = vmatmul.mubr.bf16.gmra.mrb[0].mxu0 %v446
      %v695 = vpop.f32.mrb[0].mxu0
      %v696 = vadd.f32 %v499, %v695
      %v697 = vpop.f32.mrb[0].mxu0
      %v698 = vpop.f32.mrb[0].mxu0
      %v699 = vadd.f32 %v499, %v698
      %v700 = vpop.f32.mrb[0].mxu0
      %701 = vmatprep.mubr.bf16.mxu0 %v449
      %702 = vmatmul.mubr.bf16.gmra.mrb[0].mxu0 %v448
      %v703 = vpop.f32.mrb[0].mxu0
      %v704 = vadd.f32 %v499, %v703
      %v705 = vpop.f32.mrb[0].mxu0
      %v706 = vpop.f32.mrb[0].mxu0
      %v707 = vadd.f32 %v499, %v706
      %v708 = vpop.f32.mrb[0].mxu0
      %709 = vmatprep.mubr.bf16.mxu0 %v451
      %710 = vmatmul.mubr.bf16.gmra.mrb[0].mxu0 %v450
      %v711 = vpop.f32.mrb[0].mxu0
      %v712 = vadd.f32 %v499, %v711
      %v713 = vpop.f32.mrb[0].mxu0
      %v714 = vpop.f32.mrb[0].mxu0
      %v715 = vadd.f32 %v499, %v714
      %v716 = vpop.f32.mrb[0].mxu0
      %717 = vmatprep.mubr.bf16.mxu0 %v453
      %718 = vmatmul.mubr.bf16.gmra.mrb[0].mxu0 %v452
      %v719 = vpop.f32.mrb[0].mxu0
      %v720 = vadd.f32 %v499, %v719
      %v721 = vpop.f32.mrb[0].mxu0
      %v722 = vpop.f32.mrb[0].mxu0
      %v723 = vadd.f32 %v499, %v722
      %v724 = vpop.f32.mrb[0].mxu0
      %725 = vmatprep.mubr.bf16.mxu0 %v455
      %726 = vmatmul.mubr.bf16.gmra.mrb[0].mxu0 %v454
      %v727 = vpop.f32.mrb[0].mxu0
      %v728 = vadd.f32 %v499, %v727
      %v729 = vpop.f32.mrb[0].mxu0
      %v730 = vpop.f32.mrb[0].mxu0
      %v731 = vadd.f32 %v499, %v730
      %v732 = vpop.f32.mrb[0].mxu0
      %733 = vmatprep.mubr.bf16.mxu0 %v457
      %734 = vmatmul.mubr.bf16.gmra.mrb[0].mxu0 %v456
      %v735 = vpop.f32.mrb[0].mxu0
      %v736 = vadd.f32 %v499, %v735
      %v737 = vpop.f32.mrb[0].mxu0
      %v738 = vpop.f32.mrb[0].mxu0
      %v739 = vadd.f32 %v499, %v738
      %v740 = vpop.f32.mrb[0].mxu0
      %741 = vmatprep.mubr.bf16.mxu0 %v459
      %742 = vmatmul.mubr.bf16.gmra.mrb[0].mxu0 %v458
      %v743 = vpop.f32.mrb[0].mxu0
      %v744 = vadd.f32 %v499, %v743
      %v745 = vpop.f32.mrb[0].mxu0
      %v746 = vpop.f32.mrb[0].mxu0
      %v747 = vadd.f32 %v499, %v746
      %v748 = vpop.f32.mrb[0].mxu0
      %749 = vmatprep.mubr.bf16.mxu0 %v461
      %750 = vmatmul.mubr.bf16.gmra.mrb[0].mxu0 %v460
      %v751 = vpop.f32.mrb[0].mxu0
      %v752 = vadd.f32 %v499, %v751
      %v753 = vpop.f32.mrb[0].mxu0
      %v754 = vpop.f32.mrb[0].mxu0
      %v755 = vadd.f32 %v499, %v754
      %v756 = vpop.f32.mrb[0].mxu0
      %757 = vdwg.mxu0
      %v758 = vld [vmem:[%s259] sm:$0x1]
      %vm759 = vcmp.gt.f32.partialorder %v758, 0.0
      %v760 = vtanh.pop %v632
      %v761 = vtanh.pop %v635
      %v762 = vtanh.pop %v640
      %v763 = vtanh.pop %v643
      %v764 = vtanh.pop %v648
      %v765 = vtanh.pop %v651
      %v766 = vtanh.pop %v656
      %v767 = vtanh.pop %v659
      %v768 = vtanh.pop %v664
      %v769 = vtanh.pop %v667
      %v770 = vtanh.pop %v672
      %v771 = vtanh.pop %v675
      %v772 = vtanh.pop %v680
      %v773 = vtanh.pop %v683
      %v774 = vtanh.pop %v688
      %v775 = vtanh.pop %v691
      %v776 = vtanh.pop %v696
      %v777 = vtanh.pop %v699
      %v778 = vtanh.pop %v704
      %v779 = vtanh.pop %v707
      %v780 = vtanh.pop %v712
      %v781 = vtanh.pop %v715
      %v782 = vtanh.pop %v720
      %v783 = vtanh.pop %v723
      %v784 = vtanh.pop %v728
      %v785 = vtanh.pop %v731
      %v786 = vtanh.pop %v736
      %v787 = vtanh.pop %v739
      %v788 = vtanh.pop %v744
      %v789 = vtanh.pop %v747
      %v790 = vtanh.pop %v752
      %v791 = vtanh.pop %v755
      %v792 = vsel %vm759, 1, 0
      %v793 = vlaneseq
      %v794 = vshrl.u32 %v793, 7
      %v795 = vsub.s32 0, %v794
      %v796 = vrot.slane %v792, %v795
      %vm797 = vcmp.eq.s32.totalorder %v796, 1
      %v798 = vsel %vm797, %v760, %v632
      %v799 = vsel %vm797, %v761, %v635
      %v800 = vsel %vm797, %v762, %v640
      %v801 = vsel %vm797, %v763, %v643
      %v802 = vsel %vm797, %v764, %v648
      %v803 = vsel %vm797, %v765, %v651
      %v804 = vsel %vm797, %v766, %v656
      %v805 = vsel %vm797, %v767, %v659
      %v806 = vsel %vm797, %v768, %v664
      %v807 = vsel %vm797, %v769, %v667
      %v808 = vsel %vm797, %v770, %v672
      %v809 = vsel %vm797, %v771, %v675
      %v810 = vsel %vm797, %v772, %v680
      %v811 = vsel %vm797, %v773, %v683
      %v812 = vsel %vm797, %v774, %v688
      %v813 = vsel %vm797, %v775, %v691
      %v814 = vsel %vm797, %v776, %v696
      %v815 = vsel %vm797, %v777, %v699
      %v816 = vsel %vm797, %v778, %v704
      %v817 = vsel %vm797, %v779, %v707
      %v818 = vsel %vm797, %v780, %v712
      %v819 = vsel %vm797, %v781, %v715
      %v820 = vsel %vm797, %v782, %v720
      %v821 = vsel %vm797, %v783, %v723
      %v822 = vsel %vm797, %v784, %v728
      %v823 = vsel %vm797, %v785, %v731
      %v824 = vsel %vm797, %v786, %v736
      %v825 = vsel %vm797, %v787, %v739
      %v826 = vsel %vm797, %v788, %v744
      %v827 = vsel %vm797, %v789, %v747
      %v828 = vsel %vm797, %v790, %v752
      %v829 = vsel %vm797, %v791, %v755
      %830 = vst [vmem:[%s267] sm:$0xff] %v798
      %831 = vst [vmem:[%s267 + $0x8] sm:$0xff] %v799
      %832 = vst [vmem:[%s267 + $0x10] sm:$0xff] %v800
      %833 = vst [vmem:[%s267 + $0x18] sm:$0xff] %v801
      %834 = vst [vmem:[%s267 + $0x20] sm:$0xff] %v802
      %835 = vst [vmem:[%s267 + $0x28] sm:$0xff] %v803
      %836 = vst [vmem:[%s267 + $0x30] sm:$0xff] %v804
      %837 = vst [vmem:[%s267 + $0x38] sm:$0xff] %v805
      %838 = vst [vmem:[%s267 + $0x40] sm:$0xff] %v806
      %839 = vst [vmem:[%s267 + $0x48] sm:$0xff] %v807
      %840 = vst [vmem:[%s267 + $0x50] sm:$0xff] %v808
      %841 = vst [vmem:[%s267 + $0x58] sm:$0xff] %v809
      %842 = vst [vmem:[%s267 + $0x60] sm:$0xff] %v810
      %843 = vst [vmem:[%s267 + $0x68] sm:$0xff] %v811
      %844 = vst [vmem:[%s267 + $0x70] sm:$0xff] %v812
      %845 = vst [vmem:[%s267 + $0x78] sm:$0xff] %v813
      %846 = vst [vmem:[%s267 + $0x80] sm:$0xff] %v814
      %847 = vst [vmem:[%s267 + $0x88] sm:$0xff] %v815
      %848 = vst [vmem:[%s267 + $0x90] sm:$0xff] %v816
      %849 = vst [vmem:[%s267 + $0x98] sm:$0xff] %v817
      %850 = vst [vmem:[%s267 + $0xa0] sm:$0xff] %v818
      %851 = vst [vmem:[%s267 + $0xa8] sm:$0xff] %v819
      %852 = vst [vmem:[%s267 + $0xb0] sm:$0xff] %v820
      %853 = vst [vmem:[%s267 + $0xb8] sm:$0xff] %v821
      %854 = vst [vmem:[%s267 + $0xc0] sm:$0xff] %v822
      %855 = vst [vmem:[%s267 + $0xc8] sm:$0xff] %v823
      %856 = vst [vmem:[%s267 + $0xd0] sm:$0xff] %v824
      %857 = vst [vmem:[%s267 + $0xd8] sm:$0xff] %v825
      %858 = vst [vmem:[%s267 + $0xe0] sm:$0xff] %v826
      %859 = vst [vmem:[%s267 + $0xe8] sm:$0xff] %v827
      %860 = vst [vmem:[%s267 + $0xf0] sm:$0xff] %v828
      %861 = vst [vmem:[%s267 + $0xf8] sm:$0xff] %v829
      %s862 = smul.u32 32, %s19
      %p863 = scmp.lt.s32.totalorder %s862, 63
      %s864 = scalar_select %p863, %s862, 63
      %p865 = scmp.lt.s32.totalorder %s20, 0
      %s866 = scalar_select %p865, %s20, 0
      %s867 = sadd.s32 %s866, %s864
      %s868 = smul.addr %s867, 8
      %s869 = scalar_lea.vmem %s4, %s868
      // Predicated region
      $region37: #{_lambda_.19} parent=35 // pred_check
        %p870 = pneg %p151
      $region38: #{_lambda_.19} parent=35 // pred_check_branch
        %872 = sbr.rel (%p870) target = $region40
      $region39: #{_lambda_.19} parent=35 // pred_region
        %s873 = smul.u32 32, %s19
      $region40: #{_lambda_.19} parent=35 // pred_fallthru
        _
    $region36: #{_lambda_.19} parent=5 // pred_fallthru
      _
    %p874 = scmp.le.s32.totalorder 2, %s10
    // Predicated region
    $region41: #{_lambda_.19} parent=5 // pred_check
      %p875 = pneg %p874
    $region42: #{_lambda_.19} parent=5 // pred_check_branch
      %877 = sbr.rel (%p875) target = $region44
    $region43: #{_lambda_.19} parent=5 // pred_region
      %s878 = ssub.s32 %s10, 2
      // Predicated region
      $region45: #{_lambda_.19} parent=43 // pred_check
        %p879 = pneg %p157
      $region46: #{_lambda_.19} parent=43 // pred_check_branch
        %881 = sbr.rel (%p879) target = $region48
      $region47: #{_lambda_.19} parent=43 // pred_region
        %s882 = smul.u32 32, %s21
        %p883 = scmp.lt.s32.totalorder %s882, 63
        %s884 = scalar_select %p883, %s882, 63
        %p885 = scmp.lt.s32.totalorder %s22, 0
        %s886 = scalar_select %p885, %s22, 0
        %s887 = sadd.s32 %s886, %s884
        %s888 = smul.addr %s887, 8
        %s889 = scalar_lea.vmem %s4, %s888
      $region48: #{_lambda_.19} parent=43 // pred_fallthru
        _
    $region44: #{_lambda_.19} parent=5 // pred_fallthru
      _
  $region6: #{_lambda_.19} parent=0 // loop_footer
    %s14 = sadd.s32 1, %s10
  $region7: #{_lambda_.19} parent=0 // loop_footer_branch
    %9 = sbr.rel target = $region3
  $region8: #{_lambda_.19} parent=0 // loop_exit
    _

</llo_original>
